<compile_context>
chip_gen: v7x
topology: tpu7x:2x2x1
jax: 0.10.0
libtpu: 0.0.40
codegen_flags: <defaults>
</compile_context>

<pallas_src>
import functools

import jax
import jax.numpy as jnp
from jax.experimental import pallas as pl
from jax.experimental.pallas import tpu as pltpu

C_OUT = 96                  # logical conv / encoder-linear output channels (module constant)
C_PAD = 128                 # lane-padded channel width used inside the kernels
K = 3                       # Conv1d kernel size (module constant)
BLOCK_LAYERS = (1, 2, 3)    # TargetRepresentation(block_num=3): StackCNN depths
N_BLOCKS = len(BLOCK_LAYERS)
N_CONV = sum(BLOCK_LAYERS)  # conv layers per encoder
FC1_OUT = 256 * 8           # out_fc1 width


# ---------------------------------------------------------------------------
# Encoder kernel: one TargetRepresentation over a block of `block_b` examples
# ---------------------------------------------------------------------------
def _encoder_kernel(block_b, L, x_ref, wf_ref, bf_ref,
                    w_b1l1_ref, b_b1l1_ref, w_b2l1_ref, b_b2l1_ref,
                    w_b2l2_ref, b_b2l2_ref, lin_w_ref, lin_b_ref, out_ref):
    x = x_ref[0]                                            # (S, E) bf16, S = block_b * L

    def conv(h, w_ref, b_ref):
        """k=3 'valid' conv + bias + ReLU as three accumulating MXU dots (f32 accumulate).

        No h_cat materialization; the slab simply shrinks by K-1 rows.
        """
        m = h.shape[0] - (K - 1)
        acc = jnp.dot(h[0:m], w_ref[0], preferred_element_type=jnp.float32)
        acc = acc + jnp.dot(h[1:1 + m], w_ref[1], preferred_element_type=jnp.float32)
        acc = acc + jnp.dot(h[2:2 + m], w_ref[2], preferred_element_type=jnp.float32)
        return jnp.maximum(acc + b_ref[...], 0.0)           # (m, n_out) f32

    def pool(h, n_convs):
        """Per-example AdaptiveMaxPool1d(1) over the valid L - 2*n_convs positions."""
        c = h.shape[1]
        shrink = (K - 1) * n_convs
        valid = L - shrink
        # Pad the shrunk slab back to block_b*L rows (once per block, not per conv layer),
        # then mask invalid / cross-example rows. Mask-to-0 is exact: ReLU outputs >= 0.
        h = jnp.concatenate([h, jnp.zeros((shrink, c), jnp.float32)], axis=0)
        h = h.reshape(block_b, L, c)
        pos = jax.lax.broadcasted_iota(jnp.int32, (block_b, L, 1), 1)
        h = jnp.where(pos < valid, h, 0.0)
        return jnp.max(h, axis=1)                           # (block_b, c) f32

    # First conv of all three StackCNN blocks fused along the output-lane dim (N = 3*C_PAD):
    # all three blocks read the same embedding slab, and N=384 fills the MXU on v6e/v7x.
    h1 = conv(x, wf_ref, bf_ref)                            # (S-2, 3*C_PAD) f32

    # Block 0 (1 conv layer): pool directly from its lane slice of the fused output.
    f0 = pool(h1[:, 0:C_PAD], 1)
    # Block 1 (2 conv layers).
    h = conv(h1[:, C_PAD:2 * C_PAD].astype(jnp.bfloat16), w_b1l1_ref, b_b1l1_ref)
    f1 = pool(h, 2)
    # Block 2 (3 conv layers).
    h = conv(h1[:, 2 * C_PAD:3 * C_PAD].astype(jnp.bfloat16), w_b2l1_ref, b_b2l1_ref)
    h = conv(h.astype(jnp.bfloat16), w_b2l2_ref, b_b2l2_ref)
    f2 = pool(h, 3)

    feat = jnp.concatenate([f0, f1, f2], axis=-1).astype(jnp.bfloat16)   # (block_b, 3*C_PAD)
    out_ref[0] = (jnp.dot(feat, lin_w_ref[...], preferred_element_type=jnp.float32)
                  + lin_b_ref[...])                         # (block_b, C_PAD) lane-dense


def _const_spec(a):
    # Weights: full-array block, constant index_map -> stays VMEM-resident across grid steps.
    return pl.BlockSpec(a.shape, lambda i, _nd=a.ndim: (0,) * _nd)


def _run_encoder(enc, tokens, block_b):
    """TargetRepresentation encoder, gridded over the batch dimension."""
    B, L = tokens.shape
    E = enc["embed"].shape[1]
    if B % block_b != 0:
        raise ValueError("batch must be divisible by block_b")
    n_grid = B // block_b
    S = block_b * L

    # Embedding gather is glue, kept in plain JAX; table and slab are bf16 (half HBM traffic).
    # TODO(synk): move the gather in-kernel as a one-hot bf16 matmul over a (vocab_pad, E)
    # resident table so input HBM traffic drops to 4 B/token instead of 2*E B/token.
    x = enc["embed"][tokens].reshape(n_grid, S, E)          # (n_grid, S, E) bf16

    weights = [enc["wf"], enc["bf"],
               enc["w_rest"][0], enc["b_rest"][0],
               enc["w_rest"][1], enc["b_rest"][1],
               enc["w_rest"][2], enc["b_rest"][2],
               enc["lin_w"], enc["lin_b"]]

    # Advisory cost estimate for XLA scheduling around the custom call.
    m1, m2, m3 = L - 2, L - 4, L - 6
    flops = 2 * B * K * (m1 * E * N_BLOCKS * C_PAD + 2 * m2 * C_PAD * C_PAD
                         + m3 * C_PAD * C_PAD) + 2 * B * N_BLOCKS * C_PAD * C_PAD
    weight_bytes = sum(int(w.size) * w.dtype.itemsize for w in weights)
    bytes_accessed = int(x.size) * 2 + weight_bytes + B * C_PAD * 4

    out = pl.pallas_call(
        functools.partial(_encoder_kernel, block_b, L),
        grid_spec=pltpu.PrefetchScalarGridSpec(
            num_scalar_prefetch=0,
            grid=(n_grid,),
            in_specs=[pl.BlockSpec((1, S, E), lambda i: (i, 0, 0))]
                     + [_const_spec(w) for w in weights],
            out_specs=pl.BlockSpec((1, block_b, C_PAD), lambda i: (i, 0, 0)),
        ),
        out_shape=jax.ShapeDtypeStruct((n_grid, block_b, C_PAD), jnp.float32),
        compiler_params=pltpu.CompilerParams(
            # "parallel" batch axis: shards grid steps across v7x's 2 TensorCores.
            dimension_semantics=("parallel",),
            # Above the 16/32 MiB scoped defaults, below v7x's 64 MiB physical VMEM.
            vmem_limit_bytes=48 * 1024 * 1024),
        cost_estimate=pl.CostEstimate(flops=int(flops), transcendentals=0,
                                      bytes_accessed=int(bytes_accessed)),
    )(x, *weights)
    return out.reshape(B, C_PAD)


# ---------------------------------------------------------------------------
# Head kernel: fc1 + ReLU -> fc2 + ReLU -> fc3 -> L2 norm, once over the whole batch
# ---------------------------------------------------------------------------
def _head_kernel(sm_ref, pr_ref, w1_ref, b1_ref, w2_ref, b2_ref, w3_ref, b3_ref, out_ref):
    sm = sm_ref[...].astype(jnp.bfloat16)                   # (B, C_PAD)
    pr = pr_ref[...].astype(jnp.bfloat16)
    # fc1 over the padded concat [sm | pr] as two row-sliced dots (128-aligned, no copy).
    h = jnp.dot(sm, w1_ref[0:C_PAD], preferred_element_type=jnp.float32)
    h = h + jnp.dot(pr, w1_ref[C_PAD:2 * C_PAD], preferred_element_type=jnp.float32)
    h = jnp.maximum(h + b1_ref[...], 0.0).astype(jnp.bfloat16)
    h = jnp.maximum(jnp.dot(h, w2_ref[...], preferred_element_type=jnp.float32)
                    + b2_ref[...], 0.0).astype(jnp.bfloat16)
    y = jnp.dot(h, w3_ref[...], preferred_element_type=jnp.float32) + b3_ref[...]
    out_ref[...] = jnp.sqrt(jnp.sum(y * y, axis=-1, keepdims=True))   # torch.norm(dim=-1)


def tfusion_forward(kparams, smiles_tokens, protein_tokens, *, block_b=None):
    B, l_sm = smiles_tokens.shape
    Bp, l_pr = protein_tokens.shape
    if Bp != B:
        raise ValueError("smiles / protein batch mismatch")
    if min(l_sm, l_pr) <= (K - 1) * max(BLOCK_LAYERS):
        raise ValueError("sequence length must exceed 2 * block_num")
    if block_b is None:
        block_b = next(b for b in (8, 4, 2, 1) if B % b == 0)

    sm_feat = _run_encoder(kparams["smiles"], smiles_tokens, block_b)   # (B, C_PAD) f32
    pr_feat = _run_encoder(kparams["protein"], protein_tokens, block_b)

    hd = kparams["head"]
    args = [sm_feat, pr_feat, hd["fc1_w"], hd["fc1_b"], hd["fc2_w"], hd["fc2_b"],
            hd["fc3_w"], hd["fc3_b"]]
    out = pl.pallas_call(
        _head_kernel,
        in_specs=[pl.BlockSpec(memory_space=pltpu.MemorySpace.VMEM)] * len(args),
        out_specs=pl.BlockSpec(memory_space=pltpu.MemorySpace.VMEM),
        out_shape=jax.ShapeDtypeStruct((B, 1), jnp.float32),
    )(*args)
    return out.reshape(-1)                                  # .view(-1) in the module


# ---------------------------------------------------------------------------
# Deterministic parameter construction (logical layout = the PyTorch module's shapes)
# ---------------------------------------------------------------------------
def _bf16_round(x):
    # Store weights as bf16-representable f32 so kernel (bf16) and reference (f32) agree.
    return x.astype(jnp.bfloat16).astype(jnp.float32)


def _init_encoder(key, vocab_size, emb_dim):
    keys = jax.random.split(key, 2 * N_CONV + 3)
    embed = jax.random.normal(keys[0], (vocab_size, emb_dim), jnp.float32) * 0.1
    embed = embed.at[0].set(0.0).astype(jnp.bfloat16)       # padding_idx=0
    blocks, ki = [], 1
    for n_layers in BLOCK_LAYERS:
        layers, c_in = [], emb_dim
        for _ in range(n_layers):
            scale = 1.0 / jnp.sqrt(jnp.float32(c_in * K))
            w = _bf16_round(jax.random.normal(keys[ki], (K, c_in, C_OUT), jnp.float32) * scale)
            b = _bf16_round(jax.random.normal(keys[ki + 1], (C_OUT,), jnp.float32) * 0.01)
            layers.append((w, b))
            ki += 2
            c_in = C_OUT
        blocks.append(layers)
    d_in = N_BLOCKS * C_OUT
    lin_w = _bf16_round(jax.random.normal(keys[ki], (d_in, C_OUT), jnp.float32)
                        / jnp.sqrt(jnp.float32(d_in)))
    lin_b = _bf16_round(jax.random.normal(keys[ki + 1], (C_OUT,), jnp.float32) * 0.01)
    return {"embed": embed, "blocks": blocks, "lin_w": lin_w, "lin_b": lin_b}


def _init_head(key, hidden_dim):
    ks = jax.random.split(key, 6)
    d2 = 2 * hidden_dim
    return {
        "fc1_w": _bf16_round(jax.random.normal(ks[0], (2 * C_OUT, FC1_OUT), jnp.float32)
                             / jnp.sqrt(jnp.float32(2 * C_OUT))),
        "fc1_b": _bf16_round(jax.random.normal(ks[1], (FC1_OUT,), jnp.float32) * 0.01),
        "fc2_w": _bf16_round(jax.random.normal(ks[2], (FC1_OUT, d2), jnp.float32)
                             / jnp.sqrt(jnp.float32(FC1_OUT))),
        "fc2_b": _bf16_round(jax.random.normal(ks[3], (d2,), jnp.float32) * 0.01),
        "fc3_w": _bf16_round(jax.random.normal(ks[4], (d2, 256), jnp.float32)
                             / jnp.sqrt(jnp.float32(d2))),
        "fc3_b": _bf16_round(jax.random.normal(ks[5], (256,), jnp.float32) * 0.01),
    }


def init_params(key, *, embedding_dim=128, smile_vocab=45, protein_vocab=26, hidden_dim=128):
    k_sm, k_pr, k_head = jax.random.split(key, 3)
    return {"smiles": _init_encoder(k_sm, smile_vocab, embedding_dim),
            "protein": _init_encoder(k_pr, protein_vocab, embedding_dim),
            "head": _init_head(k_head, hidden_dim)}


# ---------------------------------------------------------------------------
# Pack logical params into the kernels' lane-dense / fused layout
# ---------------------------------------------------------------------------
def pack_params(params):
    def pack_encoder(enc):
        E = enc["embed"].shape[1]
        # Fused first conv of all 3 blocks: per-tap (E, 3*C_PAD), 96->128 lane-padded per block.
        wf = jnp.zeros((K, E, N_BLOCKS * C_PAD), jnp.float32)
        bf = jnp.zeros((1, N_BLOCKS * C_PAD), jnp.float32)
        for bi, block in enumerate(enc["blocks"]):
            w0, b0 = block[0]
            wf = wf.at[:, :, bi * C_PAD: bi * C_PAD + C_OUT].set(w0)
            bf = bf.at[0, bi * C_PAD: bi * C_PAD + C_OUT].set(b0)
        # Remaining conv layers (block1 layer2, block2 layers 2 & 3), zero-padded 96->128.
        w_rest, b_rest = [], []
        for block in enc["blocks"]:
            for (w, b) in block[1:]:
                wp = jnp.zeros((K, C_PAD, C_PAD), jnp.float32).at[:, :C_OUT, :C_OUT].set(w)
                bp = jnp.zeros((1, C_PAD), jnp.float32).at[0, :C_OUT].set(b)
                w_rest.append(wp.astype(jnp.bfloat16))
                b_rest.append(bp)
        # Encoder linear (3*96 -> 96), re-indexed into the lane-padded pooled-feature slab.
        lw = jnp.zeros((N_BLOCKS * C_PAD, C_PAD), jnp.float32)
        for bi in range(N_BLOCKS):
            lw = lw.at[bi * C_PAD: bi * C_PAD + C_OUT, :C_OUT].set(
                enc["lin_w"][bi * C_OUT:(bi + 1) * C_OUT])
        lb = jnp.zeros((1, C_PAD), jnp.float32).at[0, :C_OUT].set(enc["lin_b"])
        return {"embed": enc["embed"], "wf": wf.astype(jnp.bfloat16), "bf": bf,
                "w_rest": w_rest, "b_rest": b_rest,
                "lin_w": lw.astype(jnp.bfloat16), "lin_b": lb}

    def pack_head(hd):
        w1 = jnp.zeros((2 * C_PAD, FC1_OUT), jnp.float32)
        w1 = w1.at[:C_OUT].set(hd["fc1_w"][:C_OUT])                 # smiles feature rows
        w1 = w1.at[C_PAD:C_PAD + C_OUT].set(hd["fc1_w"][C_OUT:])    # protein feature rows
        return {"fc1_w": w1.astype(jnp.bfloat16), "fc1_b": hd["fc1_b"].reshape(1, -1),
                "fc2_w": hd["fc2_w"].astype(jnp.bfloat16), "fc2_b": hd["fc2_b"].reshape(1, -1),
                "fc3_w": hd["fc3_w"].astype(jnp.bfloat16), "fc3_b": hd["fc3_b"].reshape(1, -1)}

    return {"smiles": pack_encoder(params["smiles"]),
            "protein": pack_encoder(params["protein"]),
            "head": pack_head(params["head"])}


# ---------------------------------------------------------------------------
# Pure-JAX f32 reference on the logical (unpacked, unfused) parameters
# ---------------------------------------------------------------------------
def _reference_forward(params, smiles_tokens, protein_tokens):
    def encoder(p, toks):
        x = p["embed"][toks].astype(jnp.float32)            # (B, L, E)
        feats = []
        for block in p["blocks"]:
            h = x
            for (w, b) in block:                            # w: (K, c_in, 96), b: (96,)
                m = h.shape[1] - (K - 1)
                h = jnp.maximum(
                    sum(jnp.einsum("blc,co->blo", h[:, k:k + m, :], w[k]) for k in range(K))
                    + b, 0.0)
            feats.append(jnp.max(h, axis=1))                # AdaptiveMaxPool1d(1)
        feat = jnp.concatenate(feats, axis=-1)
        return feat @ p["lin_w"] + p["lin_b"]

    sm = encoder(params["smiles"], smiles_tokens)
    pr = encoder(params["protein"], protein_tokens)
    hd = params["head"]
    h = jnp.concatenate([sm, pr], axis=-1)
    h = jnp.maximum(h @ hd["fc1_w"] + hd["fc1_b"], 0.0)
    h = jnp.maximum(h @ hd["fc2_w"] + hd["fc2_b"], 0.0)
    y = h @ hd["fc3_w"] + hd["fc3_b"]
    return jnp.linalg.norm(y, axis=-1)


if __name__ == "__main__":
    batch = 4
    l_smiles, l_protein = 24, 32        # small stand-ins for sm_len=536 / tar_len=2600

    key = jax.random.PRNGKey(0)
    k_par, k_tok_sm, k_tok_pr = jax.random.split(key, 3)
    params = init_params(k_par)
    kparams = pack_params(params)
    smiles_tokens = jax.random.randint(k_tok_sm, (batch, l_smiles), 0, 45, dtype=jnp.int32)
    protein_tokens = jax.random.randint(k_tok_pr, (batch, l_protein), 0, 26, dtype=jnp.int32)

    fwd = jax.jit(functools.partial(tfusion_forward, block_b=2))   # grid of 2 batch blocks
    out = jax.block_until_ready(fwd(kparams, smiles_tokens, protein_tokens))
    ref = _reference_forward(params, smiles_tokens, protein_tokens)

    assert out.shape == (batch,), out.shape
    assert bool(jnp.all(jnp.isfinite(out)))
    assert jnp.allclose(out, ref, rtol=5e-2, atol=5e-2), (out, ref)
    print("KERNEL_OK")
</pallas_src>

<mosaic_0001>
module attributes {stable_mosaic.version = 11 : i64} {
  func.func @_encoder_kernel(%arg0: i32, %arg1: memref<1x64x128xbf16, #tpu.memory_space<vmem>>, %arg2: memref<3x128x384xbf16, #tpu.memory_space<vmem>>, %arg3: memref<1x384xf32, #tpu.memory_space<vmem>>, %arg4: memref<3x128x128xbf16, #tpu.memory_space<vmem>>, %arg5: memref<1x128xf32, #tpu.memory_space<vmem>>, %arg6: memref<3x128x128xbf16, #tpu.memory_space<vmem>>, %arg7: memref<1x128xf32, #tpu.memory_space<vmem>>, %arg8: memref<3x128x128xbf16, #tpu.memory_space<vmem>>, %arg9: memref<1x128xf32, #tpu.memory_space<vmem>>, %arg10: memref<384x128xbf16, #tpu.memory_space<vmem>>, %arg11: memref<1x128xf32, #tpu.memory_space<vmem>>, %arg12: memref<1x2x128xf32, #tpu.memory_space<vmem>>) attributes {dimension_semantics = [#tpu.dimension_semantics<parallel>], iteration_bounds = array<i64: 2>, scalar_prefetch = 0 : i64, scratch_operands = 0 : i64, tpu.core_type = #tpu.core_type<tc>, window_params = [{transform_indices = @transform_0, window_bounds = array<i64: 1, 64, 128>}, {pipeline_mode = #tpu.pipeline_mode<synchronous>, transform_indices = @transform_1, window_bounds = array<i64: 3, 128, 384>}, {pipeline_mode = #tpu.pipeline_mode<synchronous>, transform_indices = @transform_2, window_bounds = array<i64: 1, 384>}, {pipeline_mode = #tpu.pipeline_mode<synchronous>, transform_indices = @transform_3, window_bounds = array<i64: 3, 128, 128>}, {pipeline_mode = #tpu.pipeline_mode<synchronous>, transform_indices = @transform_4, window_bounds = array<i64: 1, 128>}, {pipeline_mode = #tpu.pipeline_mode<synchronous>, transform_indices = @transform_5, window_bounds = array<i64: 3, 128, 128>}, {pipeline_mode = #tpu.pipeline_mode<synchronous>, transform_indices = @transform_6, window_bounds = array<i64: 1, 128>}, {pipeline_mode = #tpu.pipeline_mode<synchronous>, transform_indices = @transform_7, window_bounds = array<i64: 3, 128, 128>}, {pipeline_mode = #tpu.pipeline_mode<synchronous>, transform_indices = @transform_8, window_bounds = array<i64: 1, 128>}, {pipeline_mode = #tpu.pipeline_mode<synchronous>, transform_indices = @transform_9, window_bounds = array<i64: 384, 128>}, {pipeline_mode = #tpu.pipeline_mode<synchronous>, transform_indices = @transform_10, window_bounds = array<i64: 1, 128>}, {transform_indices = @transform_11, window_bounds = array<i64: 1, 2, 128>}]} {
    %c0 = arith.constant 0 : index
    %c0_0 = arith.constant 0 : index
    %c0_1 = arith.constant 0 : index
    %0 = vector.load %arg1[%c0, %c0_0, %c0_1] : memref<1x64x128xbf16, #tpu.memory_space<vmem>>, vector<1x64x128xbf16>
    %1 = vector.shape_cast %0 : vector<1x64x128xbf16> to vector<64x128xbf16>
    %2 = vector.extract_strided_slice %1 {offsets = [0, 0], sizes = [62, 128], strides = [1, 1]} : vector<64x128xbf16> to vector<62x128xbf16>
    %c0_2 = arith.constant 0 : index
    %c0_3 = arith.constant 0 : index
    %c0_4 = arith.constant 0 : index
    %3 = vector.load %arg2[%c0_2, %c0_3, %c0_4] : memref<3x128x384xbf16, #tpu.memory_space<vmem>>, vector<1x128x384xbf16>
    %4 = vector.shape_cast %3 : vector<1x128x384xbf16> to vector<128x384xbf16>
    %cst = arith.constant dense<0.000000e+00> : vector<62x384xf32>
    %5 = tpu.matmul %2, %4, %cst {dimension_numbers = #tpu.dot_dimension_numbers<[1], [0], [0], [1], [0, 0, 1, 1], [], []>} : vector<62x128xbf16>, vector<128x384xbf16>, vector<62x384xf32> -> vector<62x384xf32>
    %6 = vector.extract_strided_slice %1 {offsets = [1, 0], sizes = [62, 128], strides = [1, 1]} : vector<64x128xbf16> to vector<62x128xbf16>
    %c1 = arith.constant 1 : index
    %c0_5 = arith.constant 0 : index
    %c0_6 = arith.constant 0 : index
    %7 = vector.load %arg2[%c1, %c0_5, %c0_6] : memref<3x128x384xbf16, #tpu.memory_space<vmem>>, vector<1x128x384xbf16>
    %8 = vector.shape_cast %7 : vector<1x128x384xbf16> to vector<128x384xbf16>
    %cst_7 = arith.constant dense<0.000000e+00> : vector<62x384xf32>
    %9 = tpu.matmul %6, %8, %cst_7 {dimension_numbers = #tpu.dot_dimension_numbers<[1], [0], [0], [1], [0, 0, 1, 1], [], []>} : vector<62x128xbf16>, vector<128x384xbf16>, vector<62x384xf32> -> vector<62x384xf32>
    %10 = arith.addf %5, %9 : vector<62x384xf32>
    %11 = vector.extract_strided_slice %1 {offsets = [2, 0], sizes = [62, 128], strides = [1, 1]} : vector<64x128xbf16> to vector<62x128xbf16>
    %c2 = arith.constant 2 : index
    %c0_8 = arith.constant 0 : index
    %c0_9 = arith.constant 0 : index
    %12 = vector.load %arg2[%c2, %c0_8, %c0_9] : memref<3x128x384xbf16, #tpu.memory_space<vmem>>, vector<1x128x384xbf16>
    %13 = vector.shape_cast %12 : vector<1x128x384xbf16> to vector<128x384xbf16>
    %cst_10 = arith.constant dense<0.000000e+00> : vector<62x384xf32>
    %14 = tpu.matmul %11, %13, %cst_10 {dimension_numbers = #tpu.dot_dimension_numbers<[1], [0], [0], [1], [0, 0, 1, 1], [], []>} : vector<62x128xbf16>, vector<128x384xbf16>, vector<62x384xf32> -> vector<62x384xf32>
    %15 = arith.addf %10, %14 : vector<62x384xf32>
    %c0_11 = arith.constant 0 : index
    %c0_12 = arith.constant 0 : index
    %16 = vector.load %arg3[%c0_11, %c0_12] : memref<1x384xf32, #tpu.memory_space<vmem>>, vector<1x384xf32>
    %17 = vector.broadcast %16 : vector<1x384xf32> to vector<62x384xf32>
    %18 = arith.addf %15, %17 : vector<62x384xf32>
    %cst_13 = arith.constant 0.000000e+00 : f32
    %19 = vector.broadcast %cst_13 : f32 to vector<62x384xf32>
    %20 = arith.maximumf %18, %19 : vector<62x384xf32>
    %21 = vector.extract_strided_slice %20 {offsets = [0, 0], sizes = [62, 128], strides = [1, 1]} : vector<62x384xf32> to vector<62x128xf32>
    %cst_14 = arith.constant 0.000000e+00 : f32
    %22 = vector.broadcast %cst_14 : f32 to vector<2x128xf32>
    %23 = tpu.concatenate %21, %22 in 0 : vector<62x128xf32>, vector<2x128xf32> -> vector<64x128xf32>
    %24 = vector.shape_cast %23 : vector<64x128xf32> to vector<2x32x128xf32>
    %25 = tpu.iota {dimensions = array<i32: 1>} : vector<2x32x1xi32>
    %c30_i32 = arith.constant 30 : i32
    %26 = vector.broadcast %c30_i32 : i32 to vector<2x32x1xi32>
    %27 = arith.cmpi slt, %25, %26 : vector<2x32x1xi32>
    %cst_15 = arith.constant 0.000000e+00 : f32
    %28 = vector.shape_cast %27 : vector<2x32x1xi1> to vector<2x32x1xi1>
    %29 = vector.broadcast %28 : vector<2x32x1xi1> to vector<2x32x128xi1>
    %30 = vector.broadcast %cst_15 : f32 to vector<2x32x128xf32>
    %31 = arith.select %29, %24, %30 : vector<2x32x128xi1>, vector<2x32x128xf32>
    %cst_16 = arith.constant dense<0xFF800000> : vector<2x128xf32>
    %32 = vector.multi_reduction <maximumf>, %31, %cst_16 [1] : vector<2x32x128xf32> to vector<2x128xf32>
    %33 = vector.extract_strided_slice %20 {offsets = [0, 128], sizes = [62, 128], strides = [1, 1]} : vector<62x384xf32> to vector<62x128xf32>
    %34 = arith.truncf %33 : vector<62x128xf32> to vector<62x128xbf16>
    %35 = vector.extract_strided_slice %34 {offsets = [0, 0], sizes = [60, 128], strides = [1, 1]} : vector<62x128xbf16> to vector<60x128xbf16>
    %c0_17 = arith.constant 0 : index
    %c0_18 = arith.constant 0 : index
    %c0_19 = arith.constant 0 : index
    %36 = vector.load %arg4[%c0_17, %c0_18, %c0_19] : memref<3x128x128xbf16, #tpu.memory_space<vmem>>, vector<1x128x128xbf16>
    %37 = vector.shape_cast %36 : vector<1x128x128xbf16> to vector<128x128xbf16>
    %cst_20 = arith.constant dense<0.000000e+00> : vector<60x128xf32>
    %38 = tpu.matmul %35, %37, %cst_20 {dimension_numbers = #tpu.dot_dimension_numbers<[1], [0], [0], [1], [0, 0, 1, 1], [], []>} : vector<60x128xbf16>, vector<128x128xbf16>, vector<60x128xf32> -> vector<60x128xf32>
    %39 = vector.extract_strided_slice %34 {offsets = [1, 0], sizes = [60, 128], strides = [1, 1]} : vector<62x128xbf16> to vector<60x128xbf16>
    %c1_21 = arith.constant 1 : index
    %c0_22 = arith.constant 0 : index
    %c0_23 = arith.constant 0 : index
    %40 = vector.load %arg4[%c1_21, %c0_22, %c0_23] : memref<3x128x128xbf16, #tpu.memory_space<vmem>>, vector<1x128x128xbf16>
    %41 = vector.shape_cast %40 : vector<1x128x128xbf16> to vector<128x128xbf16>
    %cst_24 = arith.constant dense<0.000000e+00> : vector<60x128xf32>
    %42 = tpu.matmul %39, %41, %cst_24 {dimension_numbers = #tpu.dot_dimension_numbers<[1], [0], [0], [1], [0, 0, 1, 1], [], []>} : vector<60x128xbf16>, vector<128x128xbf16>, vector<60x128xf32> -> vector<60x128xf32>
    %43 = arith.addf %38, %42 : vector<60x128xf32>
    %44 = vector.extract_strided_slice %34 {offsets = [2, 0], sizes = [60, 128], strides = [1, 1]} : vector<62x128xbf16> to vector<60x128xbf16>
    %c2_25 = arith.constant 2 : index
    %c0_26 = arith.constant 0 : index
    %c0_27 = arith.constant 0 : index
    %45 = vector.load %arg4[%c2_25, %c0_26, %c0_27] : memref<3x128x128xbf16, #tpu.memory_space<vmem>>, vector<1x128x128xbf16>
    %46 = vector.shape_cast %45 : vector<1x128x128xbf16> to vector<128x128xbf16>
    %cst_28 = arith.constant dense<0.000000e+00> : vector<60x128xf32>
    %47 = tpu.matmul %44, %46, %cst_28 {dimension_numbers = #tpu.dot_dimension_numbers<[1], [0], [0], [1], [0, 0, 1, 1], [], []>} : vector<60x128xbf16>, vector<128x128xbf16>, vector<60x128xf32> -> vector<60x128xf32>
    %48 = arith.addf %43, %47 : vector<60x128xf32>
    %c0_29 = arith.constant 0 : index
    %c0_30 = arith.constant 0 : index
    %49 = vector.load %arg5[%c0_29, %c0_30] : memref<1x128xf32, #tpu.memory_space<vmem>>, vector<1x128xf32>
    %50 = vector.broadcast %49 : vector<1x128xf32> to vector<60x128xf32>
    %51 = arith.addf %48, %50 : vector<60x128xf32>
    %cst_31 = arith.constant 0.000000e+00 : f32
    %52 = vector.broadcast %cst_31 : f32 to vector<60x128xf32>
    %53 = arith.maximumf %51, %52 : vector<60x128xf32>
    %cst_32 = arith.constant 0.000000e+00 : f32
    %54 = vector.broadcast %cst_32 : f32 to vector<4x128xf32>
    %55 = tpu.concatenate %53, %54 in 0 : vector<60x128xf32>, vector<4x128xf32> -> vector<64x128xf32>
    %56 = vector.shape_cast %55 : vector<64x128xf32> to vector<2x32x128xf32>
    %57 = tpu.iota {dimensions = array<i32: 1>} : vector<2x32x1xi32>
    %c28_i32 = arith.constant 28 : i32
    %58 = vector.broadcast %c28_i32 : i32 to vector<2x32x1xi32>
    %59 = arith.cmpi slt, %57, %58 : vector<2x32x1xi32>
    %cst_33 = arith.constant 0.000000e+00 : f32
    %60 = vector.shape_cast %59 : vector<2x32x1xi1> to vector<2x32x1xi1>
    %61 = vector.broadcast %60 : vector<2x32x1xi1> to vector<2x32x128xi1>
    %62 = vector.broadcast %cst_33 : f32 to vector<2x32x128xf32>
    %63 = arith.select %61, %56, %62 : vector<2x32x128xi1>, vector<2x32x128xf32>
    %cst_34 = arith.constant dense<0xFF800000> : vector<2x128xf32>
    %64 = vector.multi_reduction <maximumf>, %63, %cst_34 [1] : vector<2x32x128xf32> to vector<2x128xf32>
    %65 = vector.extract_strided_slice %20 {offsets = [0, 256], sizes = [62, 128], strides = [1, 1]} : vector<62x384xf32> to vector<62x128xf32>
    %66 = arith.truncf %65 : vector<62x128xf32> to vector<62x128xbf16>
    %67 = vector.extract_strided_slice %66 {offsets = [0, 0], sizes = [60, 128], strides = [1, 1]} : vector<62x128xbf16> to vector<60x128xbf16>
    %c0_35 = arith.constant 0 : index
    %c0_36 = arith.constant 0 : index
    %c0_37 = arith.constant 0 : index
    %68 = vector.load %arg6[%c0_35, %c0_36, %c0_37] : memref<3x128x128xbf16, #tpu.memory_space<vmem>>, vector<1x128x128xbf16>
    %69 = vector.shape_cast %68 : vector<1x128x128xbf16> to vector<128x128xbf16>
    %cst_38 = arith.constant dense<0.000000e+00> : vector<60x128xf32>
    %70 = tpu.matmul %67, %69, %cst_38 {dimension_numbers = #tpu.dot_dimension_numbers<[1], [0], [0], [1], [0, 0, 1, 1], [], []>} : vector<60x128xbf16>, vector<128x128xbf16>, vector<60x128xf32> -> vector<60x128xf32>
    %71 = vector.extract_strided_slice %66 {offsets = [1, 0], sizes = [60, 128], strides = [1, 1]} : vector<62x128xbf16> to vector<60x128xbf16>
    %c1_39 = arith.constant 1 : index
    %c0_40 = arith.constant 0 : index
    %c0_41 = arith.constant 0 : index
    %72 = vector.load %arg6[%c1_39, %c0_40, %c0_41] : memref<3x128x128xbf16, #tpu.memory_space<vmem>>, vector<1x128x128xbf16>
    %73 = vector.shape_cast %72 : vector<1x128x128xbf16> to vector<128x128xbf16>
    %cst_42 = arith.constant dense<0.000000e+00> : vector<60x128xf32>
    %74 = tpu.matmul %71, %73, %cst_42 {dimension_numbers = #tpu.dot_dimension_numbers<[1], [0], [0], [1], [0, 0, 1, 1], [], []>} : vector<60x128xbf16>, vector<128x128xbf16>, vector<60x128xf32> -> vector<60x128xf32>
    %75 = arith.addf %70, %74 : vector<60x128xf32>
    %76 = vector.extract_strided_slice %66 {offsets = [2, 0], sizes = [60, 128], strides = [1, 1]} : vector<62x128xbf16> to vector<60x128xbf16>
    %c2_43 = arith.constant 2 : index
    %c0_44 = arith.constant 0 : index
    %c0_45 = arith.constant 0 : index
    %77 = vector.load %arg6[%c2_43, %c0_44, %c0_45] : memref<3x128x128xbf16, #tpu.memory_space<vmem>>, vector<1x128x128xbf16>
    %78 = vector.shape_cast %77 : vector<1x128x128xbf16> to vector<128x128xbf16>
    %cst_46 = arith.constant dense<0.000000e+00> : vector<60x128xf32>
    %79 = tpu.matmul %76, %78, %cst_46 {dimension_numbers = #tpu.dot_dimension_numbers<[1], [0], [0], [1], [0, 0, 1, 1], [], []>} : vector<60x128xbf16>, vector<128x128xbf16>, vector<60x128xf32> -> vector<60x128xf32>
    %80 = arith.addf %75, %79 : vector<60x128xf32>
    %c0_47 = arith.constant 0 : index
    %c0_48 = arith.constant 0 : index
    %81 = vector.load %arg7[%c0_47, %c0_48] : memref<1x128xf32, #tpu.memory_space<vmem>>, vector<1x128xf32>
    %82 = vector.broadcast %81 : vector<1x128xf32> to vector<60x128xf32>
    %83 = arith.addf %80, %82 : vector<60x128xf32>
    %cst_49 = arith.constant 0.000000e+00 : f32
    %84 = vector.broadcast %cst_49 : f32 to vector<60x128xf32>
    %85 = arith.maximumf %83, %84 : vector<60x128xf32>
    %86 = arith.truncf %85 : vector<60x128xf32> to vector<60x128xbf16>
    %87 = vector.extract_strided_slice %86 {offsets = [0, 0], sizes = [58, 128], strides = [1, 1]} : vector<60x128xbf16> to vector<58x128xbf16>
    %c0_50 = arith.constant 0 : index
    %c0_51 = arith.constant 0 : index
    %c0_52 = arith.constant 0 : index
    %88 = vector.load %arg8[%c0_50, %c0_51, %c0_52] : memref<3x128x128xbf16, #tpu.memory_space<vmem>>, vector<1x128x128xbf16>
    %89 = vector.shape_cast %88 : vector<1x128x128xbf16> to vector<128x128xbf16>
    %cst_53 = arith.constant dense<0.000000e+00> : vector<58x128xf32>
    %90 = tpu.matmul %87, %89, %cst_53 {dimension_numbers = #tpu.dot_dimension_numbers<[1], [0], [0], [1], [0, 0, 1, 1], [], []>} : vector<58x128xbf16>, vector<128x128xbf16>, vector<58x128xf32> -> vector<58x128xf32>
    %91 = vector.extract_strided_slice %86 {offsets = [1, 0], sizes = [58, 128], strides = [1, 1]} : vector<60x128xbf16> to vector<58x128xbf16>
    %c1_54 = arith.constant 1 : index
    %c0_55 = arith.constant 0 : index
    %c0_56 = arith.constant 0 : index
    %92 = vector.load %arg8[%c1_54, %c0_55, %c0_56] : memref<3x128x128xbf16, #tpu.memory_space<vmem>>, vector<1x128x128xbf16>
    %93 = vector.shape_cast %92 : vector<1x128x128xbf16> to vector<128x128xbf16>
    %cst_57 = arith.constant dense<0.000000e+00> : vector<58x128xf32>
    %94 = tpu.matmul %91, %93, %cst_57 {dimension_numbers = #tpu.dot_dimension_numbers<[1], [0], [0], [1], [0, 0, 1, 1], [], []>} : vector<58x128xbf16>, vector<128x128xbf16>, vector<58x128xf32> -> vector<58x128xf32>
    %95 = arith.addf %90, %94 : vector<58x128xf32>
    %96 = vector.extract_strided_slice %86 {offsets = [2, 0], sizes = [58, 128], strides = [1, 1]} : vector<60x128xbf16> to vector<58x128xbf16>
    %c2_58 = arith.constant 2 : index
    %c0_59 = arith.constant 0 : index
    %c0_60 = arith.constant 0 : index
    %97 = vector.load %arg8[%c2_58, %c0_59, %c0_60] : memref<3x128x128xbf16, #tpu.memory_space<vmem>>, vector<1x128x128xbf16>
    %98 = vector.shape_cast %97 : vector<1x128x128xbf16> to vector<128x128xbf16>
    %cst_61 = arith.constant dense<0.000000e+00> : vector<58x128xf32>
    %99 = tpu.matmul %96, %98, %cst_61 {dimension_numbers = #tpu.dot_dimension_numbers<[1], [0], [0], [1], [0, 0, 1, 1], [], []>} : vector<58x128xbf16>, vector<128x128xbf16>, vector<58x128xf32> -> vector<58x128xf32>
    %100 = arith.addf %95, %99 : vector<58x128xf32>
    %c0_62 = arith.constant 0 : index
    %c0_63 = arith.constant 0 : index
    %101 = vector.load %arg9[%c0_62, %c0_63] : memref<1x128xf32, #tpu.memory_space<vmem>>, vector<1x128xf32>
    %102 = vector.broadcast %101 : vector<1x128xf32> to vector<58x128xf32>
    %103 = arith.addf %100, %102 : vector<58x128xf32>
    %cst_64 = arith.constant 0.000000e+00 : f32
    %104 = vector.broadcast %cst_64 : f32 to vector<58x128xf32>
    %105 = arith.maximumf %103, %104 : vector<58x128xf32>
    %cst_65 = arith.constant 0.000000e+00 : f32
    %106 = vector.broadcast %cst_65 : f32 to vector<6x128xf32>
    %107 = tpu.concatenate %105, %106 in 0 : vector<58x128xf32>, vector<6x128xf32> -> vector<64x128xf32>
    %108 = vector.shape_cast %107 : vector<64x128xf32> to vector<2x32x128xf32>
    %109 = tpu.iota {dimensions = array<i32: 1>} : vector<2x32x1xi32>
    %c26_i32 = arith.constant 26 : i32
    %110 = vector.broadcast %c26_i32 : i32 to vector<2x32x1xi32>
    %111 = arith.cmpi slt, %109, %110 : vector<2x32x1xi32>
    %cst_66 = arith.constant 0.000000e+00 : f32
    %112 = vector.shape_cast %111 : vector<2x32x1xi1> to vector<2x32x1xi1>
    %113 = vector.broadcast %112 : vector<2x32x1xi1> to vector<2x32x128xi1>
    %114 = vector.broadcast %cst_66 : f32 to vector<2x32x128xf32>
    %115 = arith.select %113, %108, %114 : vector<2x32x128xi1>, vector<2x32x128xf32>
    %cst_67 = arith.constant dense<0xFF800000> : vector<2x128xf32>
    %116 = vector.multi_reduction <maximumf>, %115, %cst_67 [1] : vector<2x32x128xf32> to vector<2x128xf32>
    %117 = tpu.concatenate %32, %64, %116 in 1 : vector<2x128xf32>, vector<2x128xf32>, vector<2x128xf32> -> vector<2x384xf32>
    %118 = arith.truncf %117 : vector<2x384xf32> to vector<2x384xbf16>
    %c0_68 = arith.constant 0 : index
    %c0_69 = arith.constant 0 : index
    %119 = vector.load %arg10[%c0_68, %c0_69] : memref<384x128xbf16, #tpu.memory_space<vmem>>, vector<384x128xbf16>
    %cst_70 = arith.constant dense<0.000000e+00> : vector<2x128xf32>
    %120 = tpu.matmul %118, %119, %cst_70 {dimension_numbers = #tpu.dot_dimension_numbers<[1], [0], [0], [1], [0, 0, 1, 1], [], []>} : vector<2x384xbf16>, vector<384x128xbf16>, vector<2x128xf32> -> vector<2x128xf32>
    %c0_71 = arith.constant 0 : index
    %c0_72 = arith.constant 0 : index
    %121 = vector.load %arg11[%c0_71, %c0_72] : memref<1x128xf32, #tpu.memory_space<vmem>>, vector<1x128xf32>
    %122 = vector.broadcast %121 : vector<1x128xf32> to vector<2x128xf32>
    %123 = arith.addf %120, %122 : vector<2x128xf32>
    %c0_73 = arith.constant 0 : index
    %c0_74 = arith.constant 0 : index
    %c0_75 = arith.constant 0 : index
    %124 = vector.load %arg12[%c0_73, %c0_74, %c0_75] : memref<1x2x128xf32, #tpu.memory_space<vmem>>, vector<1x2x128xf32>
    %125 = vector.shape_cast %124 : vector<1x2x128xf32> to vector<2x128xf32>
    %126 = vector.shape_cast %123 : vector<2x128xf32> to vector<1x2x128xf32>
    tpu.vector_store %arg12[%c0_73, %c0_74, %c0_75], %126 {strides = array<i32>} : memref<1x2x128xf32, #tpu.memory_space<vmem>>, vector<1x2x128xf32>,
    return
  }
  func.func @transform_0(%arg0: i32) -> (i32, i32, i32) {
    %c0_i32 = arith.constant 0 : i32
    %c0_i32_0 = arith.constant 0 : i32
    %c0_i32_1 = arith.constant 0 : i32
    return %arg0, %c0_i32, %c0_i32_0 : i32, i32, i32
  }
  func.func @transform_1(%arg0: i32) -> (i32, i32, i32) {
    %c0_i32 = arith.constant 0 : i32
    %c0_i32_0 = arith.constant 0 : i32
    %c0_i32_1 = arith.constant 0 : i32
    %c0_i32_2 = arith.constant 0 : i32
    return %c0_i32, %c0_i32_0, %c0_i32_1 : i32, i32, i32
  }
  func.func @transform_2(%arg0: i32) -> (i32, i32) {
    %c0_i32 = arith.constant 0 : i32
    %c0_i32_0 = arith.constant 0 : i32
    %c0_i32_1 = arith.constant 0 : i32
    return %c0_i32, %c0_i32_0 : i32, i32
  }
  func.func @transform_3(%arg0: i32) -> (i32, i32, i32) {
    %c0_i32 = arith.constant 0 : i32
    %c0_i32_0 = arith.constant 0 : i32
    %c0_i32_1 = arith.constant 0 : i32
    %c0_i32_2 = arith.constant 0 : i32
    return %c0_i32, %c0_i32_0, %c0_i32_1 : i32, i32, i32
  }
  func.func @transform_4(%arg0: i32) -> (i32, i32) {
    %c0_i32 = arith.constant 0 : i32
    %c0_i32_0 = arith.constant 0 : i32
    %c0_i32_1 = arith.constant 0 : i32
    return %c0_i32, %c0_i32_0 : i32, i32
  }
  func.func @transform_5(%arg0: i32) -> (i32, i32, i32) {
    %c0_i32 = arith.constant 0 : i32
    %c0_i32_0 = arith.constant 0 : i32
    %c0_i32_1 = arith.constant 0 : i32
    %c0_i32_2 = arith.constant 0 : i32
    return %c0_i32, %c0_i32_0, %c0_i32_1 : i32, i32, i32
  }
  func.func @transform_6(%arg0: i32) -> (i32, i32) {
    %c0_i32 = arith.constant 0 : i32
    %c0_i32_0 = arith.constant 0 : i32
    %c0_i32_1 = arith.constant 0 : i32
    return %c0_i32, %c0_i32_0 : i32, i32
  }
  func.func @transform_7(%arg0: i32) -> (i32, i32, i32) {
    %c0_i32 = arith.constant 0 : i32
    %c0_i32_0 = arith.constant 0 : i32
    %c0_i32_1 = arith.constant 0 : i32
    %c0_i32_2 = arith.constant 0 : i32
    return %c0_i32, %c0_i32_0, %c0_i32_1 : i32, i32, i32
  }
  func.func @transform_8(%arg0: i32) -> (i32, i32) {
    %c0_i32 = arith.constant 0 : i32
    %c0_i32_0 = arith.constant 0 : i32
    %c0_i32_1 = arith.constant 0 : i32
    return %c0_i32, %c0_i32_0 : i32, i32
  }
  func.func @transform_9(%arg0: i32) -> (i32, i32) {
    %c0_i32 = arith.constant 0 : i32
    %c0_i32_0 = arith.constant 0 : i32
    %c0_i32_1 = arith.constant 0 : i32
    return %c0_i32, %c0_i32_0 : i32, i32
  }
  func.func @transform_10(%arg0: i32) -> (i32, i32) {
    %c0_i32 = arith.constant 0 : i32
    %c0_i32_0 = arith.constant 0 : i32
    %c0_i32_1 = arith.constant 0 : i32
    return %c0_i32, %c0_i32_0 : i32, i32
  }
  func.func @transform_11(%arg0: i32) -> (i32, i32, i32) {
    %c0_i32 = arith.constant 0 : i32
    %c0_i32_0 = arith.constant 0 : i32
    %c0_i32_1 = arith.constant 0 : i32
    return %arg0, %c0_i32, %c0_i32_0 : i32, i32, i32
  }
}

module attributes {stable_mosaic.version = 11 : i64} {
  func.func @_head_kernel(%arg0: memref<4x128xf32, #tpu.memory_space<vmem>>, %arg1: memref<4x128xf32, #tpu.memory_space<vmem>>, %arg2: memref<256x2048xbf16, #tpu.memory_space<vmem>>, %arg3: memref<1x2048xf32, #tpu.memory_space<vmem>>, %arg4: memref<2048x256xbf16, #tpu.memory_space<vmem>>, %arg5: memref<1x256xf32, #tpu.memory_space<vmem>>, %arg6: memref<256x256xbf16, #tpu.memory_space<vmem>>, %arg7: memref<1x256xf32, #tpu.memory_space<vmem>>, %arg8: memref<4x1xf32, #tpu.memory_space<vmem>>) attributes {dimension_semantics = [], scalar_prefetch = 0 : i64, scratch_operands = 0 : i64, tpu.core_type = #tpu.core_type<tc>} {
    %c0 = arith.constant 0 : index
    %c0_0 = arith.constant 0 : index
    %0 = vector.load %arg0[%c0, %c0_0] : memref<4x128xf32, #tpu.memory_space<vmem>>, vector<4x128xf32>
    %1 = arith.truncf %0 : vector<4x128xf32> to vector<4x128xbf16>
    %c0_1 = arith.constant 0 : index
    %c0_2 = arith.constant 0 : index
    %2 = vector.load %arg1[%c0_1, %c0_2] : memref<4x128xf32, #tpu.memory_space<vmem>>, vector<4x128xf32>
    %3 = arith.truncf %2 : vector<4x128xf32> to vector<4x128xbf16>
    %c0_3 = arith.constant 0 : index
    %c0_4 = arith.constant 0 : index
    %4 = vector.load %arg2[%c0_3, %c0_4] : memref<256x2048xbf16, #tpu.memory_space<vmem>>, vector<128x2048xbf16>
    %cst = arith.constant dense<0.000000e+00> : vector<4x2048xf32>
    %5 = tpu.matmul %1, %4, %cst {dimension_numbers = #tpu.dot_dimension_numbers<[1], [0], [0], [1], [0, 0, 1, 1], [], []>} : vector<4x128xbf16>, vector<128x2048xbf16>, vector<4x2048xf32> -> vector<4x2048xf32>
    %c128 = arith.constant 128 : index
    %c0_5 = arith.constant 0 : index
    %6 = vector.load %arg2[%c128, %c0_5] : memref<256x2048xbf16, #tpu.memory_space<vmem>>, vector<128x2048xbf16>
    %cst_6 = arith.constant dense<0.000000e+00> : vector<4x2048xf32>
    %7 = tpu.matmul %3, %6, %cst_6 {dimension_numbers = #tpu.dot_dimension_numbers<[1], [0], [0], [1], [0, 0, 1, 1], [], []>} : vector<4x128xbf16>, vector<128x2048xbf16>, vector<4x2048xf32> -> vector<4x2048xf32>
    %8 = arith.addf %5, %7 : vector<4x2048xf32>
    %c0_7 = arith.constant 0 : index
    %c0_8 = arith.constant 0 : index
    %9 = vector.load %arg3[%c0_7, %c0_8] : memref<1x2048xf32, #tpu.memory_space<vmem>>, vector<1x2048xf32>
    %10 = vector.broadcast %9 : vector<1x2048xf32> to vector<4x2048xf32>
    %11 = arith.addf %8, %10 : vector<4x2048xf32>
    %cst_9 = arith.constant 0.000000e+00 : f32
    %12 = vector.broadcast %cst_9 : f32 to vector<4x2048xf32>
    %13 = arith.maximumf %11, %12 : vector<4x2048xf32>
    %14 = arith.truncf %13 : vector<4x2048xf32> to vector<4x2048xbf16>
    %c0_10 = arith.constant 0 : index
    %c0_11 = arith.constant 0 : index
    %15 = vector.load %arg4[%c0_10, %c0_11] : memref<2048x256xbf16, #tpu.memory_space<vmem>>, vector<2048x256xbf16>
    %cst_12 = arith.constant dense<0.000000e+00> : vector<4x256xf32>
    %16 = tpu.matmul %14, %15, %cst_12 {dimension_numbers = #tpu.dot_dimension_numbers<[1], [0], [0], [1], [0, 0, 1, 1], [], []>} : vector<4x2048xbf16>, vector<2048x256xbf16>, vector<4x256xf32> -> vector<4x256xf32>
    %c0_13 = arith.constant 0 : index
    %c0_14 = arith.constant 0 : index
    %17 = vector.load %arg5[%c0_13, %c0_14] : memref<1x256xf32, #tpu.memory_space<vmem>>, vector<1x256xf32>
    %18 = vector.broadcast %17 : vector<1x256xf32> to vector<4x256xf32>
    %19 = arith.addf %16, %18 : vector<4x256xf32>
    %cst_15 = arith.constant 0.000000e+00 : f32
    %20 = vector.broadcast %cst_15 : f32 to vector<4x256xf32>
    %21 = arith.maximumf %19, %20 : vector<4x256xf32>
    %22 = arith.truncf %21 : vector<4x256xf32> to vector<4x256xbf16>
    %c0_16 = arith.constant 0 : index
    %c0_17 = arith.constant 0 : index
    %23 = vector.load %arg6[%c0_16, %c0_17] : memref<256x256xbf16, #tpu.memory_space<vmem>>, vector<256x256xbf16>
    %cst_18 = arith.constant dense<0.000000e+00> : vector<4x256xf32>
    %24 = tpu.matmul %22, %23, %cst_18 {dimension_numbers = #tpu.dot_dimension_numbers<[1], [0], [0], [1], [0, 0, 1, 1], [], []>} : vector<4x256xbf16>, vector<256x256xbf16>, vector<4x256xf32> -> vector<4x256xf32>
    %c0_19 = arith.constant 0 : index
    %c0_20 = arith.constant 0 : index
    %25 = vector.load %arg7[%c0_19, %c0_20] : memref<1x256xf32, #tpu.memory_space<vmem>>, vector<1x256xf32>
    %26 = vector.broadcast %25 : vector<1x256xf32> to vector<4x256xf32>
    %27 = arith.addf %24, %26 : vector<4x256xf32>
    %28 = arith.mulf %27, %27 : vector<4x256xf32>
    %cst_21 = arith.constant dense<0.000000e+00> : vector<4xf32>
    %29 = vector.multi_reduction <add>, %28, %cst_21 [1] : vector<4x256xf32> to vector<4xf32>
    %30 = vector.shape_cast %29 : vector<4xf32> to vector<4x1xf32>
    %31 = math.sqrt %30 : vector<4x1xf32>
    %c0_22 = arith.constant 0 : index
    %c0_23 = arith.constant 0 : index
    %32 = vector.load %arg8[%c0_22, %c0_23] : memref<4x1xf32, #tpu.memory_space<vmem>>, vector<4x1xf32>
    tpu.vector_store %arg8[%c0_22, %c0_23], %31 {strides = array<i32>} : memref<4x1xf32, #tpu.memory_space<vmem>>, vector<4x1xf32>,
    return
  }
}

module attributes {stable_mosaic.version = 11 : i64} {
  func.func @_encoder_kernel(%arg0: i32, %arg1: memref<1x48x128xbf16, #tpu.memory_space<vmem>>, %arg2: memref<3x128x384xbf16, #tpu.memory_space<vmem>>, %arg3: memref<1x384xf32, #tpu.memory_space<vmem>>, %arg4: memref<3x128x128xbf16, #tpu.memory_space<vmem>>, %arg5: memref<1x128xf32, #tpu.memory_space<vmem>>, %arg6: memref<3x128x128xbf16, #tpu.memory_space<vmem>>, %arg7: memref<1x128xf32, #tpu.memory_space<vmem>>, %arg8: memref<3x128x128xbf16, #tpu.memory_space<vmem>>, %arg9: memref<1x128xf32, #tpu.memory_space<vmem>>, %arg10: memref<384x128xbf16, #tpu.memory_space<vmem>>, %arg11: memref<1x128xf32, #tpu.memory_space<vmem>>, %arg12: memref<1x2x128xf32, #tpu.memory_space<vmem>>) attributes {dimension_semantics = [#tpu.dimension_semantics<parallel>], iteration_bounds = array<i64: 2>, scalar_prefetch = 0 : i64, scratch_operands = 0 : i64, tpu.core_type = #tpu.core_type<tc>, window_params = [{transform_indices = @transform_0, window_bounds = array<i64: 1, 48, 128>}, {pipeline_mode = #tpu.pipeline_mode<synchronous>, transform_indices = @transform_1, window_bounds = array<i64: 3, 128, 384>}, {pipeline_mode = #tpu.pipeline_mode<synchronous>, transform_indices = @transform_2, window_bounds = array<i64: 1, 384>}, {pipeline_mode = #tpu.pipeline_mode<synchronous>, transform_indices = @transform_3, window_bounds = array<i64: 3, 128, 128>}, {pipeline_mode = #tpu.pipeline_mode<synchronous>, transform_indices = @transform_4, window_bounds = array<i64: 1, 128>}, {pipeline_mode = #tpu.pipeline_mode<synchronous>, transform_indices = @transform_5, window_bounds = array<i64: 3, 128, 128>}, {pipeline_mode = #tpu.pipeline_mode<synchronous>, transform_indices = @transform_6, window_bounds = array<i64: 1, 128>}, {pipeline_mode = #tpu.pipeline_mode<synchronous>, transform_indices = @transform_7, window_bounds = array<i64: 3, 128, 128>}, {pipeline_mode = #tpu.pipeline_mode<synchronous>, transform_indices = @transform_8, window_bounds = array<i64: 1, 128>}, {pipeline_mode = #tpu.pipeline_mode<synchronous>, transform_indices = @transform_9, window_bounds = array<i64: 384, 128>}, {pipeline_mode = #tpu.pipeline_mode<synchronous>, transform_indices = @transform_10, window_bounds = array<i64: 1, 128>}, {transform_indices = @transform_11, window_bounds = array<i64: 1, 2, 128>}]} {
    %c0 = arith.constant 0 : index
    %c0_0 = arith.constant 0 : index
    %c0_1 = arith.constant 0 : index
    %0 = vector.load %arg1[%c0, %c0_0, %c0_1] : memref<1x48x128xbf16, #tpu.memory_space<vmem>>, vector<1x48x128xbf16>
    %1 = vector.shape_cast %0 : vector<1x48x128xbf16> to vector<48x128xbf16>
    %2 = vector.extract_strided_slice %1 {offsets = [0, 0], sizes = [46, 128], strides = [1, 1]} : vector<48x128xbf16> to vector<46x128xbf16>
    %c0_2 = arith.constant 0 : index
    %c0_3 = arith.constant 0 : index
    %c0_4 = arith.constant 0 : index
    %3 = vector.load %arg2[%c0_2, %c0_3, %c0_4] : memref<3x128x384xbf16, #tpu.memory_space<vmem>>, vector<1x128x384xbf16>
    %4 = vector.shape_cast %3 : vector<1x128x384xbf16> to vector<128x384xbf16>
    %cst = arith.constant dense<0.000000e+00> : vector<46x384xf32>
    %5 = tpu.matmul %2, %4, %cst {dimension_numbers = #tpu.dot_dimension_numbers<[1], [0], [0], [1], [0, 0, 1, 1], [], []>} : vector<46x128xbf16>, vector<128x384xbf16>, vector<46x384xf32> -> vector<46x384xf32>
    %6 = vector.extract_strided_slice %1 {offsets = [1, 0], sizes = [46, 128], strides = [1, 1]} : vector<48x128xbf16> to vector<46x128xbf16>
    %c1 = arith.constant 1 : index
    %c0_5 = arith.constant 0 : index
    %c0_6 = arith.constant 0 : index
    %7 = vector.load %arg2[%c1, %c0_5, %c0_6] : memref<3x128x384xbf16, #tpu.memory_space<vmem>>, vector<1x128x384xbf16>
    %8 = vector.shape_cast %7 : vector<1x128x384xbf16> to vector<128x384xbf16>
    %cst_7 = arith.constant dense<0.000000e+00> : vector<46x384xf32>
    %9 = tpu.matmul %6, %8, %cst_7 {dimension_numbers = #tpu.dot_dimension_numbers<[1], [0], [0], [1], [0, 0, 1, 1], [], []>} : vector<46x128xbf16>, vector<128x384xbf16>, vector<46x384xf32> -> vector<46x384xf32>
    %10 = arith.addf %5, %9 : vector<46x384xf32>
    %11 = vector.extract_strided_slice %1 {offsets = [2, 0], sizes = [46, 128], strides = [1, 1]} : vector<48x128xbf16> to vector<46x128xbf16>
    %c2 = arith.constant 2 : index
    %c0_8 = arith.constant 0 : index
    %c0_9 = arith.constant 0 : index
    %12 = vector.load %arg2[%c2, %c0_8, %c0_9] : memref<3x128x384xbf16, #tpu.memory_space<vmem>>, vector<1x128x384xbf16>
    %13 = vector.shape_cast %12 : vector<1x128x384xbf16> to vector<128x384xbf16>
    %cst_10 = arith.constant dense<0.000000e+00> : vector<46x384xf32>
    %14 = tpu.matmul %11, %13, %cst_10 {dimension_numbers = #tpu.dot_dimension_numbers<[1], [0], [0], [1], [0, 0, 1, 1], [], []>} : vector<46x128xbf16>, vector<128x384xbf16>, vector<46x384xf32> -> vector<46x384xf32>
    %15 = arith.addf %10, %14 : vector<46x384xf32>
    %c0_11 = arith.constant 0 : index
    %c0_12 = arith.constant 0 : index
    %16 = vector.load %arg3[%c0_11, %c0_12] : memref<1x384xf32, #tpu.memory_space<vmem>>, vector<1x384xf32>
    %17 = vector.broadcast %16 : vector<1x384xf32> to vector<46x384xf32>
    %18 = arith.addf %15, %17 : vector<46x384xf32>
    %cst_13 = arith.constant 0.000000e+00 : f32
    %19 = vector.broadcast %cst_13 : f32 to vector<46x384xf32>
    %20 = arith.maximumf %18, %19 : vector<46x384xf32>
    %21 = vector.extract_strided_slice %20 {offsets = [0, 0], sizes = [46, 128], strides = [1, 1]} : vector<46x384xf32> to vector<46x128xf32>
    %cst_14 = arith.constant 0.000000e+00 : f32
    %22 = vector.broadcast %cst_14 : f32 to vector<2x128xf32>
    %23 = tpu.concatenate %21, %22 in 0 : vector<46x128xf32>, vector<2x128xf32> -> vector<48x128xf32>
    %24 = vector.shape_cast %23 : vector<48x128xf32> to vector<2x24x128xf32>
    %25 = tpu.iota {dimensions = array<i32: 1>} : vector<2x24x1xi32>
    %c22_i32 = arith.constant 22 : i32
    %26 = vector.broadcast %c22_i32 : i32 to vector<2x24x1xi32>
    %27 = arith.cmpi slt, %25, %26 : vector<2x24x1xi32>
    %cst_15 = arith.constant 0.000000e+00 : f32
    %28 = vector.shape_cast %27 : vector<2x24x1xi1> to vector<2x24x1xi1>
    %29 = vector.broadcast %28 : vector<2x24x1xi1> to vector<2x24x128xi1>
    %30 = vector.broadcast %cst_15 : f32 to vector<2x24x128xf32>
    %31 = arith.select %29, %24, %30 : vector<2x24x128xi1>, vector<2x24x128xf32>
    %cst_16 = arith.constant dense<0xFF800000> : vector<2x128xf32>
    %32 = vector.multi_reduction <maximumf>, %31, %cst_16 [1] : vector<2x24x128xf32> to vector<2x128xf32>
    %33 = vector.extract_strided_slice %20 {offsets = [0, 128], sizes = [46, 128], strides = [1, 1]} : vector<46x384xf32> to vector<46x128xf32>
    %34 = arith.truncf %33 : vector<46x128xf32> to vector<46x128xbf16>
    %35 = vector.extract_strided_slice %34 {offsets = [0, 0], sizes = [44, 128], strides = [1, 1]} : vector<46x128xbf16> to vector<44x128xbf16>
    %c0_17 = arith.constant 0 : index
    %c0_18 = arith.constant 0 : index
    %c0_19 = arith.constant 0 : index
    %36 = vector.load %arg4[%c0_17, %c0_18, %c0_19] : memref<3x128x128xbf16, #tpu.memory_space<vmem>>, vector<1x128x128xbf16>
    %37 = vector.shape_cast %36 : vector<1x128x128xbf16> to vector<128x128xbf16>
    %cst_20 = arith.constant dense<0.000000e+00> : vector<44x128xf32>
    %38 = tpu.matmul %35, %37, %cst_20 {dimension_numbers = #tpu.dot_dimension_numbers<[1], [0], [0], [1], [0, 0, 1, 1], [], []>} : vector<44x128xbf16>, vector<128x128xbf16>, vector<44x128xf32> -> vector<44x128xf32>
    %39 = vector.extract_strided_slice %34 {offsets = [1, 0], sizes = [44, 128], strides = [1, 1]} : vector<46x128xbf16> to vector<44x128xbf16>
    %c1_21 = arith.constant 1 : index
    %c0_22 = arith.constant 0 : index
    %c0_23 = arith.constant 0 : index
    %40 = vector.load %arg4[%c1_21, %c0_22, %c0_23] : memref<3x128x128xbf16, #tpu.memory_space<vmem>>, vector<1x128x128xbf16>
    %41 = vector.shape_cast %40 : vector<1x128x128xbf16> to vector<128x128xbf16>
    %cst_24 = arith.constant dense<0.000000e+00> : vector<44x128xf32>
    %42 = tpu.matmul %39, %41, %cst_24 {dimension_numbers = #tpu.dot_dimension_numbers<[1], [0], [0], [1], [0, 0, 1, 1], [], []>} : vector<44x128xbf16>, vector<128x128xbf16>, vector<44x128xf32> -> vector<44x128xf32>
    %43 = arith.addf %38, %42 : vector<44x128xf32>
    %44 = vector.extract_strided_slice %34 {offsets = [2, 0], sizes = [44, 128], strides = [1, 1]} : vector<46x128xbf16> to vector<44x128xbf16>
    %c2_25 = arith.constant 2 : index
    %c0_26 = arith.constant 0 : index
    %c0_27 = arith.constant 0 : index
    %45 = vector.load %arg4[%c2_25, %c0_26, %c0_27] : memref<3x128x128xbf16, #tpu.memory_space<vmem>>, vector<1x128x128xbf16>
    %46 = vector.shape_cast %45 : vector<1x128x128xbf16> to vector<128x128xbf16>
    %cst_28 = arith.constant dense<0.000000e+00> : vector<44x128xf32>
    %47 = tpu.matmul %44, %46, %cst_28 {dimension_numbers = #tpu.dot_dimension_numbers<[1], [0], [0], [1], [0, 0, 1, 1], [], []>} : vector<44x128xbf16>, vector<128x128xbf16>, vector<44x128xf32> -> vector<44x128xf32>
    %48 = arith.addf %43, %47 : vector<44x128xf32>
    %c0_29 = arith.constant 0 : index
    %c0_30 = arith.constant 0 : index
    %49 = vector.load %arg5[%c0_29, %c0_30] : memref<1x128xf32, #tpu.memory_space<vmem>>, vector<1x128xf32>
    %50 = vector.broadcast %49 : vector<1x128xf32> to vector<44x128xf32>
    %51 = arith.addf %48, %50 : vector<44x128xf32>
    %cst_31 = arith.constant 0.000000e+00 : f32
    %52 = vector.broadcast %cst_31 : f32 to vector<44x128xf32>
    %53 = arith.maximumf %51, %52 : vector<44x128xf32>
    %cst_32 = arith.constant 0.000000e+00 : f32
    %54 = vector.broadcast %cst_32 : f32 to vector<4x128xf32>
    %55 = tpu.concatenate %53, %54 in 0 : vector<44x128xf32>, vector<4x128xf32> -> vector<48x128xf32>
    %56 = vector.shape_cast %55 : vector<48x128xf32> to vector<2x24x128xf32>
    %57 = tpu.iota {dimensions = array<i32: 1>} : vector<2x24x1xi32>
    %c20_i32 = arith.constant 20 : i32
    %58 = vector.broadcast %c20_i32 : i32 to vector<2x24x1xi32>
    %59 = arith.cmpi slt, %57, %58 : vector<2x24x1xi32>
    %cst_33 = arith.constant 0.000000e+00 : f32
    %60 = vector.shape_cast %59 : vector<2x24x1xi1> to vector<2x24x1xi1>
    %61 = vector.broadcast %60 : vector<2x24x1xi1> to vector<2x24x128xi1>
    %62 = vector.broadcast %cst_33 : f32 to vector<2x24x128xf32>
    %63 = arith.select %61, %56, %62 : vector<2x24x128xi1>, vector<2x24x128xf32>
    %cst_34 = arith.constant dense<0xFF800000> : vector<2x128xf32>
    %64 = vector.multi_reduction <maximumf>, %63, %cst_34 [1] : vector<2x24x128xf32> to vector<2x128xf32>
    %65 = vector.extract_strided_slice %20 {offsets = [0, 256], sizes = [46, 128], strides = [1, 1]} : vector<46x384xf32> to vector<46x128xf32>
    %66 = arith.truncf %65 : vector<46x128xf32> to vector<46x128xbf16>
    %67 = vector.extract_strided_slice %66 {offsets = [0, 0], sizes = [44, 128], strides = [1, 1]} : vector<46x128xbf16> to vector<44x128xbf16>
    %c0_35 = arith.constant 0 : index
    %c0_36 = arith.constant 0 : index
    %c0_37 = arith.constant 0 : index
    %68 = vector.load %arg6[%c0_35, %c0_36, %c0_37] : memref<3x128x128xbf16, #tpu.memory_space<vmem>>, vector<1x128x128xbf16>
    %69 = vector.shape_cast %68 : vector<1x128x128xbf16> to vector<128x128xbf16>
    %cst_38 = arith.constant dense<0.000000e+00> : vector<44x128xf32>
    %70 = tpu.matmul %67, %69, %cst_38 {dimension_numbers = #tpu.dot_dimension_numbers<[1], [0], [0], [1], [0, 0, 1, 1], [], []>} : vector<44x128xbf16>, vector<128x128xbf16>, vector<44x128xf32> -> vector<44x128xf32>
    %71 = vector.extract_strided_slice %66 {offsets = [1, 0], sizes = [44, 128], strides = [1, 1]} : vector<46x128xbf16> to vector<44x128xbf16>
    %c1_39 = arith.constant 1 : index
    %c0_40 = arith.constant 0 : index
    %c0_41 = arith.constant 0 : index
    %72 = vector.load %arg6[%c1_39, %c0_40, %c0_41] : memref<3x128x128xbf16, #tpu.memory_space<vmem>>, vector<1x128x128xbf16>
    %73 = vector.shape_cast %72 : vector<1x128x128xbf16> to vector<128x128xbf16>
    %cst_42 = arith.constant dense<0.000000e+00> : vector<44x128xf32>
    %74 = tpu.matmul %71, %73, %cst_42 {dimension_numbers = #tpu.dot_dimension_numbers<[1], [0], [0], [1], [0, 0, 1, 1], [], []>} : vector<44x128xbf16>, vector<128x128xbf16>, vector<44x128xf32> -> vector<44x128xf32>
    %75 = arith.addf %70, %74 : vector<44x128xf32>
    %76 = vector.extract_strided_slice %66 {offsets = [2, 0], sizes = [44, 128], strides = [1, 1]} : vector<46x128xbf16> to vector<44x128xbf16>
    %c2_43 = arith.constant 2 : index
    %c0_44 = arith.constant 0 : index
    %c0_45 = arith.constant 0 : index
    %77 = vector.load %arg6[%c2_43, %c0_44, %c0_45] : memref<3x128x128xbf16, #tpu.memory_space<vmem>>, vector<1x128x128xbf16>
    %78 = vector.shape_cast %77 : vector<1x128x128xbf16> to vector<128x128xbf16>
    %cst_46 = arith.constant dense<0.000000e+00> : vector<44x128xf32>
    %79 = tpu.matmul %76, %78, %cst_46 {dimension_numbers = #tpu.dot_dimension_numbers<[1], [0], [0], [1], [0, 0, 1, 1], [], []>} : vector<44x128xbf16>, vector<128x128xbf16>, vector<44x128xf32> -> vector<44x128xf32>
    %80 = arith.addf %75, %79 : vector<44x128xf32>
    %c0_47 = arith.constant 0 : index
    %c0_48 = arith.constant 0 : index
    %81 = vector.load %arg7[%c0_47, %c0_48] : memref<1x128xf32, #tpu.memory_space<vmem>>, vector<1x128xf32>
    %82 = vector.broadcast %81 : vector<1x128xf32> to vector<44x128xf32>
    %83 = arith.addf %80, %82 : vector<44x128xf32>
    %cst_49 = arith.constant 0.000000e+00 : f32
    %84 = vector.broadcast %cst_49 : f32 to vector<44x128xf32>
    %85 = arith.maximumf %83, %84 : vector<44x128xf32>
    %86 = arith.truncf %85 : vector<44x128xf32> to vector<44x128xbf16>
    %87 = vector.extract_strided_slice %86 {offsets = [0, 0], sizes = [42, 128], strides = [1, 1]} : vector<44x128xbf16> to vector<42x128xbf16>
    %c0_50 = arith.constant 0 : index
    %c0_51 = arith.constant 0 : index
    %c0_52 = arith.constant 0 : index
    %88 = vector.load %arg8[%c0_50, %c0_51, %c0_52] : memref<3x128x128xbf16, #tpu.memory_space<vmem>>, vector<1x128x128xbf16>
    %89 = vector.shape_cast %88 : vector<1x128x128xbf16> to vector<128x128xbf16>
    %cst_53 = arith.constant dense<0.000000e+00> : vector<42x128xf32>
    %90 = tpu.matmul %87, %89, %cst_53 {dimension_numbers = #tpu.dot_dimension_numbers<[1], [0], [0], [1], [0, 0, 1, 1], [], []>} : vector<42x128xbf16>, vector<128x128xbf16>, vector<42x128xf32> -> vector<42x128xf32>
    %91 = vector.extract_strided_slice %86 {offsets = [1, 0], sizes = [42, 128], strides = [1, 1]} : vector<44x128xbf16> to vector<42x128xbf16>
    %c1_54 = arith.constant 1 : index
    %c0_55 = arith.constant 0 : index
    %c0_56 = arith.constant 0 : index
    %92 = vector.load %arg8[%c1_54, %c0_55, %c0_56] : memref<3x128x128xbf16, #tpu.memory_space<vmem>>, vector<1x128x128xbf16>
    %93 = vector.shape_cast %92 : vector<1x128x128xbf16> to vector<128x128xbf16>
    %cst_57 = arith.constant dense<0.000000e+00> : vector<42x128xf32>
    %94 = tpu.matmul %91, %93, %cst_57 {dimension_numbers = #tpu.dot_dimension_numbers<[1], [0], [0], [1], [0, 0, 1, 1], [], []>} : vector<42x128xbf16>, vector<128x128xbf16>, vector<42x128xf32> -> vector<42x128xf32>
    %95 = arith.addf %90, %94 : vector<42x128xf32>
    %96 = vector.extract_strided_slice %86 {offsets = [2, 0], sizes = [42, 128], strides = [1, 1]} : vector<44x128xbf16> to vector<42x128xbf16>
    %c2_58 = arith.constant 2 : index
    %c0_59 = arith.constant 0 : index
    %c0_60 = arith.constant 0 : index
    %97 = vector.load %arg8[%c2_58, %c0_59, %c0_60] : memref<3x128x128xbf16, #tpu.memory_space<vmem>>, vector<1x128x128xbf16>
    %98 = vector.shape_cast %97 : vector<1x128x128xbf16> to vector<128x128xbf16>
    %cst_61 = arith.constant dense<0.000000e+00> : vector<42x128xf32>
    %99 = tpu.matmul %96, %98, %cst_61 {dimension_numbers = #tpu.dot_dimension_numbers<[1], [0], [0], [1], [0, 0, 1, 1], [], []>} : vector<42x128xbf16>, vector<128x128xbf16>, vector<42x128xf32> -> vector<42x128xf32>
    %100 = arith.addf %95, %99 : vector<42x128xf32>
    %c0_62 = arith.constant 0 : index
    %c0_63 = arith.constant 0 : index
    %101 = vector.load %arg9[%c0_62, %c0_63] : memref<1x128xf32, #tpu.memory_space<vmem>>, vector<1x128xf32>
    %102 = vector.broadcast %101 : vector<1x128xf32> to vector<42x128xf32>
    %103 = arith.addf %100, %102 : vector<42x128xf32>
    %cst_64 = arith.constant 0.000000e+00 : f32
    %104 = vector.broadcast %cst_64 : f32 to vector<42x128xf32>
    %105 = arith.maximumf %103, %104 : vector<42x128xf32>
    %cst_65 = arith.constant 0.000000e+00 : f32
    %106 = vector.broadcast %cst_65 : f32 to vector<6x128xf32>
    %107 = tpu.concatenate %105, %106 in 0 : vector<42x128xf32>, vector<6x128xf32> -> vector<48x128xf32>
    %108 = vector.shape_cast %107 : vector<48x128xf32> to vector<2x24x128xf32>
    %109 = tpu.iota {dimensions = array<i32: 1>} : vector<2x24x1xi32>
    %c18_i32 = arith.constant 18 : i32
    %110 = vector.broadcast %c18_i32 : i32 to vector<2x24x1xi32>
    %111 = arith.cmpi slt, %109, %110 : vector<2x24x1xi32>
    %cst_66 = arith.constant 0.000000e+00 : f32
    %112 = vector.shape_cast %111 : vector<2x24x1xi1> to vector<2x24x1xi1>
    %113 = vector.broadcast %112 : vector<2x24x1xi1> to vector<2x24x128xi1>
    %114 = vector.broadcast %cst_66 : f32 to vector<2x24x128xf32>
    %115 = arith.select %113, %108, %114 : vector<2x24x128xi1>, vector<2x24x128xf32>
    %cst_67 = arith.constant dense<0xFF800000> : vector<2x128xf32>
    %116 = vector.multi_reduction <maximumf>, %115, %cst_67 [1] : vector<2x24x128xf32> to vector<2x128xf32>
    %117 = tpu.concatenate %32, %64, %116 in 1 : vector<2x128xf32>, vector<2x128xf32>, vector<2x128xf32> -> vector<2x384xf32>
    %118 = arith.truncf %117 : vector<2x384xf32> to vector<2x384xbf16>
    %c0_68 = arith.constant 0 : index
    %c0_69 = arith.constant 0 : index
    %119 = vector.load %arg10[%c0_68, %c0_69] : memref<384x128xbf16, #tpu.memory_space<vmem>>, vector<384x128xbf16>
    %cst_70 = arith.constant dense<0.000000e+00> : vector<2x128xf32>
    %120 = tpu.matmul %118, %119, %cst_70 {dimension_numbers = #tpu.dot_dimension_numbers<[1], [0], [0], [1], [0, 0, 1, 1], [], []>} : vector<2x384xbf16>, vector<384x128xbf16>, vector<2x128xf32> -> vector<2x128xf32>
    %c0_71 = arith.constant 0 : index
    %c0_72 = arith.constant 0 : index
    %121 = vector.load %arg11[%c0_71, %c0_72] : memref<1x128xf32, #tpu.memory_space<vmem>>, vector<1x128xf32>
    %122 = vector.broadcast %121 : vector<1x128xf32> to vector<2x128xf32>
    %123 = arith.addf %120, %122 : vector<2x128xf32>
    %c0_73 = arith.constant 0 : index
    %c0_74 = arith.constant 0 : index
    %c0_75 = arith.constant 0 : index
    %124 = vector.load %arg12[%c0_73, %c0_74, %c0_75] : memref<1x2x128xf32, #tpu.memory_space<vmem>>, vector<1x2x128xf32>
    %125 = vector.shape_cast %124 : vector<1x2x128xf32> to vector<2x128xf32>
    %126 = vector.shape_cast %123 : vector<2x128xf32> to vector<1x2x128xf32>
    tpu.vector_store %arg12[%c0_73, %c0_74, %c0_75], %126 {strides = array<i32>} : memref<1x2x128xf32, #tpu.memory_space<vmem>>, vector<1x2x128xf32>,
    return
  }
  func.func @transform_0(%arg0: i32) -> (i32, i32, i32) {
    %c0_i32 = arith.constant 0 : i32
    %c0_i32_0 = arith.constant 0 : i32
    %c0_i32_1 = arith.constant 0 : i32
    return %arg0, %c0_i32, %c0_i32_0 : i32, i32, i32
  }
  func.func @transform_1(%arg0: i32) -> (i32, i32, i32) {
    %c0_i32 = arith.constant 0 : i32
    %c0_i32_0 = arith.constant 0 : i32
    %c0_i32_1 = arith.constant 0 : i32
    %c0_i32_2 = arith.constant 0 : i32
    return %c0_i32, %c0_i32_0, %c0_i32_1 : i32, i32, i32
  }
  func.func @transform_2(%arg0: i32) -> (i32, i32) {
    %c0_i32 = arith.constant 0 : i32
    %c0_i32_0 = arith.constant 0 : i32
    %c0_i32_1 = arith.constant 0 : i32
    return %c0_i32, %c0_i32_0 : i32, i32
  }
  func.func @transform_3(%arg0: i32) -> (i32, i32, i32) {
    %c0_i32 = arith.constant 0 : i32
    %c0_i32_0 = arith.constant 0 : i32
    %c0_i32_1 = arith.constant 0 : i32
    %c0_i32_2 = arith.constant 0 : i32
    return %c0_i32, %c0_i32_0, %c0_i32_1 : i32, i32, i32
  }
  func.func @transform_4(%arg0: i32) -> (i32, i32) {
    %c0_i32 = arith.constant 0 : i32
    %c0_i32_0 = arith.constant 0 : i32
    %c0_i32_1 = arith.constant 0 : i32
    return %c0_i32, %c0_i32_0 : i32, i32
  }
  func.func @transform_5(%arg0: i32) -> (i32, i32, i32) {
    %c0_i32 = arith.constant 0 : i32
    %c0_i32_0 = arith.constant 0 : i32
    %c0_i32_1 = arith.constant 0 : i32
    %c0_i32_2 = arith.constant 0 : i32
    return %c0_i32, %c0_i32_0, %c0_i32_1 : i32, i32, i32
  }
  func.func @transform_6(%arg0: i32) -> (i32, i32) {
    %c0_i32 = arith.constant 0 : i32
    %c0_i32_0 = arith.constant 0 : i32
    %c0_i32_1 = arith.constant 0 : i32
    return %c0_i32, %c0_i32_0 : i32, i32
  }
  func.func @transform_7(%arg0: i32) -> (i32, i32, i32) {
    %c0_i32 = arith.constant 0 : i32
    %c0_i32_0 = arith.constant 0 : i32
    %c0_i32_1 = arith.constant 0 : i32
    %c0_i32_2 = arith.constant 0 : i32
    return %c0_i32, %c0_i32_0, %c0_i32_1 : i32, i32, i32
  }
  func.func @transform_8(%arg0: i32) -> (i32, i32) {
    %c0_i32 = arith.constant 0 : i32
    %c0_i32_0 = arith.constant 0 : i32
    %c0_i32_1 = arith.constant 0 : i32
    return %c0_i32, %c0_i32_0 : i32, i32
  }
  func.func @transform_9(%arg0: i32) -> (i32, i32) {
    %c0_i32 = arith.constant 0 : i32
    %c0_i32_0 = arith.constant 0 : i32
    %c0_i32_1 = arith.constant 0 : i32
    return %c0_i32, %c0_i32_0 : i32, i32
  }
  func.func @transform_10(%arg0: i32) -> (i32, i32) {
    %c0_i32 = arith.constant 0 : i32
    %c0_i32_0 = arith.constant 0 : i32
    %c0_i32_1 = arith.constant 0 : i32
    return %c0_i32, %c0_i32_0 : i32, i32
  }
  func.func @transform_11(%arg0: i32) -> (i32, i32, i32) {
    %c0_i32 = arith.constant 0 : i32
    %c0_i32_0 = arith.constant 0 : i32
    %c0_i32_1 = arith.constant 0 : i32
    return %arg0, %c0_i32, %c0_i32_0 : i32, i32, i32
  }
}

</mosaic_0001>

<llo_original>
// kernel: tfusion_forward.4
$region0: #{tfusion_forward.4}
  #allocation0 [shape = 'u32[]', space=smem, size = 0x4, offset = 0x4, fixed_abs, tag = 'smem constant byte address 0x4 - core index']
  #allocation1 [shape = 'u32[144,128]{1,0:T(1,128)}', space=vmem, size = 0x12000, scoped, tag = 'internal scratch']
  %s0 = inlined_call_operand.vmem [shape: bf16[2,64,128], index: 0, kind: input, shape index: {}]
  %s1 = inlined_call_operand.hbm [shape: bf16[3,128,384], index: 1, kind: input, shape index: {}]
  %s2 = inlined_call_operand.vmem [shape: f32[1,384], index: 2, kind: input, shape index: {}]
  %s3 = inlined_call_operand.hbm [shape: bf16[3,128,128], index: 3, kind: input, shape index: {}]
  %s4 = inlined_call_operand.vmem [shape: f32[1,128], index: 4, kind: input, shape index: {}]
  %s5 = inlined_call_operand.hbm [shape: bf16[3,128,128], index: 5, kind: input, shape index: {}]
  %s6 = inlined_call_operand.vmem [shape: f32[1,128], index: 6, kind: input, shape index: {}]
  %s7 = inlined_call_operand.hbm [shape: bf16[3,128,128], index: 7, kind: input, shape index: {}]
  %s8 = inlined_call_operand.vmem [shape: f32[1,128], index: 8, kind: input, shape index: {}]
  %s9 = inlined_call_operand.hbm [shape: bf16[384,128], index: 9, kind: input, shape index: {}]
  %s10 = inlined_call_operand.vmem [shape: f32[1,128], index: 10, kind: input, shape index: {}]
  %s11 = inlined_call_operand.vmem [shape: f32[2,2,128], index: 11, kind: output, shape index: {}]
  %s12 = sld [smem:[#allocation0]]
  $region97: #{tfusion_forward.4} parent=0
    _
  %s14 = ssub.s32 1, %s12
  %s15 = scalar_select 0, %s14, %s12
  $region1: #{tfusion_forward.4} parent=0
    #allocation2 [shape = 'u8[294912]{0}', space=vmem, size = 0x48000, scoped, tag = 'input window, operand 1, single buffered']
    #allocation3 [shape = 's32[2]{0}', space=sflag, size = 0x8, scoped, tag = 'scoped memory for tfusion_forward.4']
    #allocation4 [shape = 'u8[98304]{0}', space=vmem, size = 0x18000, scoped, tag = 'input window, operand 3, single buffered']
    #allocation5 [shape = 's32[1]{0}', space=sflag, size = 0x4, scoped, tag = 'scoped memory for tfusion_forward.4']
    #allocation6 [shape = 'u8[98304]{0}', space=vmem, size = 0x18000, scoped, tag = 'input window, operand 5, single buffered']
    #allocation7 [shape = 'u8[98304]{0}', space=vmem, size = 0x18000, scoped, tag = 'input window, operand 7, single buffered']
    #allocation8 [shape = 's32[1]{0}', space=sflag, size = 0x4, scoped, tag = 'scoped memory for tfusion_forward.4']
    #allocation9 [shape = 'u8[98304]{0}', space=vmem, size = 0x18000, scoped, tag = 'input window, operand 9, single buffered']
    %16 = vsyncpa [#allocation3], 0
    %17 = vsyncpa [#allocation5], 0
    %18 = vsyncpa [#allocation8], 0
    loop: start=0, step=1, limit=4
    $region2: #{tfusion_forward.4} parent=1 // loop_pre_header
      _
    $region3: #{tfusion_forward.4} parent=1 // loop_header
      %s20 = sphi 0, %s24
      %p21 = scmp.ge.s32.totalorder %s20, 4
      %s30 = sphi 0, %s32
      %s33 = sphi 0, %s30
      %s34 = sphi 0, %s33
      %s50 = sphi 0, %s34
      %s54 = sphi 0, %s54
      %s56 = sphi 0, %s54
      %s57 = sphi 0, %s56
      %s71 = sphi 0, %s57
      %s75 = sphi 0, %s75
      %s77 = sphi 0, %s75
      %s78 = sphi 0, %s77
      %s92 = sphi 0, %s78
      %s96 = sphi 0, %s96
      %s98 = sphi 0, %s96
      %s99 = sphi 0, %s98
      %s113 = sphi 0, %s99
      %s117 = sphi 0, %s117
      %s119 = sphi 0, %s117
      %s120 = sphi 0, %s119
      %s134 = sphi 0, %s120
      %s138 = sphi 0, %s138
      %s140 = sphi 0, %s138
      %s141 = sphi 0, %s140
      %s155 = sphi 0, %s141
      %s159 = sphi 0, %s159
      %s161 = sphi 0, %s159
      %s162 = sphi 0, %s161
      %s176 = sphi 0, %s162
      %s180 = sphi 0, %s180
      %s182 = sphi 0, %s180
      %s183 = sphi 0, %s182
      %s197 = sphi 0, %s183
      %s201 = sphi 0, %s201
      %s203 = sphi 0, %s201
      %s204 = sphi 0, %s203
      %s218 = sphi 0, %s204
      %s222 = sphi 0, %s222
      %s224 = sphi 0, %s222
      %s225 = sphi 0, %s224
      %s239 = sphi 0, %s225
      %s243 = sphi 0, %s243
      %s245 = sphi 0, %s243
      %s246 = sphi 0, %s245
      %s260 = sphi 0, %s246
      %s266 = sphi 0, %s268
      %s269 = sphi 0, %s266
      %s270 = sphi 0, %s269
      %s286 = sphi 0, %s270
    $region4: #{tfusion_forward.4} parent=1 // loop_header_branch
      %23 = sbr.rel (%p21) target = $region8
    $region5: #{tfusion_forward.4} parent=1 // loop_body
      %s25 = ssub.s32 %s20, 1
      %s26 = ssub.s32 %s20, 2
      %s27 = sadd.s32 %s20, 1
      %s28 = ssub.s32 %s20, %s27
      %p29 = scmp.eq.s32.totalorder %s28, 0
      %s31 = sadd.s32 %s30, 1
      %s32 = scalar_select %p29, %s30, %s31
      %p35 = pneg %p29
      %p36 = scmp.eq.s32.totalorder %s20, 1
      %p37 = por %p35, %p36
      %p38 = scmp.ne.s32.totalorder %s30, %s33
      %p39 = scmp.eq.s32.totalorder %s20, 0
      %p40 = por %p38, %p39
      %p41 = scmp.ne.s32.totalorder %s30, %s33
      %p42 = scmp.eq.s32.totalorder %s25, 1
      %p43 = por %p41, %p42
      %p44 = scmp.ne.s32.totalorder %s33, %s34
      %p45 = scmp.eq.s32.totalorder %s25, 0
      %p46 = por %p44, %p45
      %p47 = scmp.ne.s32.totalorder %s33, %s34
      %p48 = scmp.eq.s32.totalorder %s26, 1
      %p49 = por %p47, %p48
      %p51 = scmp.ne.s32.totalorder %s34, %s50
      %p52 = scmp.eq.s32.totalorder %s26, 0
      %p53 = por %p51, %p52
      %s55 = sadd.s32 %s54, 1
      %p58 = scmp.eq.s32.totalorder %s20, 1
      %p59 = scmp.ne.s32.totalorder %s54, %s56
      %p60 = scmp.eq.s32.totalorder %s20, 0
      %p61 = por %p59, %p60
      %p62 = scmp.ne.s32.totalorder %s54, %s56
      %p63 = scmp.eq.s32.totalorder %s25, 1
      %p64 = por %p62, %p63
      %p65 = scmp.ne.s32.totalorder %s56, %s57
      %p66 = scmp.eq.s32.totalorder %s25, 0
      %p67 = por %p65, %p66
      %p68 = scmp.ne.s32.totalorder %s56, %s57
      %p69 = scmp.eq.s32.totalorder %s26, 1
      %p70 = por %p68, %p69
      %p72 = scmp.ne.s32.totalorder %s57, %s71
      %p73 = scmp.eq.s32.totalorder %s26, 0
      %p74 = por %p72, %p73
      %s76 = sadd.s32 %s75, 1
      %p79 = scmp.eq.s32.totalorder %s20, 1
      %p80 = scmp.ne.s32.totalorder %s75, %s77
      %p81 = scmp.eq.s32.totalorder %s20, 0
      %p82 = por %p80, %p81
      %p83 = scmp.ne.s32.totalorder %s75, %s77
      %p84 = scmp.eq.s32.totalorder %s25, 1
      %p85 = por %p83, %p84
      %p86 = scmp.ne.s32.totalorder %s77, %s78
      %p87 = scmp.eq.s32.totalorder %s25, 0
      %p88 = por %p86, %p87
      %p89 = scmp.ne.s32.totalorder %s77, %s78
      %p90 = scmp.eq.s32.totalorder %s26, 1
      %p91 = por %p89, %p90
      %p93 = scmp.ne.s32.totalorder %s78, %s92
      %p94 = scmp.eq.s32.totalorder %s26, 0
      %p95 = por %p93, %p94
      %s97 = sadd.s32 %s96, 1
      %p100 = scmp.eq.s32.totalorder %s20, 1
      %p101 = scmp.ne.s32.totalorder %s96, %s98
      %p102 = scmp.eq.s32.totalorder %s20, 0
      %p103 = por %p101, %p102
      %p104 = scmp.ne.s32.totalorder %s96, %s98
      %p105 = scmp.eq.s32.totalorder %s25, 1
      %p106 = por %p104, %p105
      %p107 = scmp.ne.s32.totalorder %s98, %s99
      %p108 = scmp.eq.s32.totalorder %s25, 0
      %p109 = por %p107, %p108
      %p110 = scmp.ne.s32.totalorder %s98, %s99
      %p111 = scmp.eq.s32.totalorder %s26, 1
      %p112 = por %p110, %p111
      %p114 = scmp.ne.s32.totalorder %s99, %s113
      %p115 = scmp.eq.s32.totalorder %s26, 0
      %p116 = por %p114, %p115
      %s118 = sadd.s32 %s117, 1
      %p121 = scmp.eq.s32.totalorder %s20, 1
      %p122 = scmp.ne.s32.totalorder %s117, %s119
      %p123 = scmp.eq.s32.totalorder %s20, 0
      %p124 = por %p122, %p123
      %p125 = scmp.ne.s32.totalorder %s117, %s119
      %p126 = scmp.eq.s32.totalorder %s25, 1
      %p127 = por %p125, %p126
      %p128 = scmp.ne.s32.totalorder %s119, %s120
      %p129 = scmp.eq.s32.totalorder %s25, 0
      %p130 = por %p128, %p129
      %p131 = scmp.ne.s32.totalorder %s119, %s120
      %p132 = scmp.eq.s32.totalorder %s26, 1
      %p133 = por %p131, %p132
      %p135 = scmp.ne.s32.totalorder %s120, %s134
      %p136 = scmp.eq.s32.totalorder %s26, 0
      %p137 = por %p135, %p136
      %s139 = sadd.s32 %s138, 1
      %p142 = scmp.eq.s32.totalorder %s20, 1
      %p143 = scmp.ne.s32.totalorder %s138, %s140
      %p144 = scmp.eq.s32.totalorder %s20, 0
      %p145 = por %p143, %p144
      %p146 = scmp.ne.s32.totalorder %s138, %s140
      %p147 = scmp.eq.s32.totalorder %s25, 1
      %p148 = por %p146, %p147
      %p149 = scmp.ne.s32.totalorder %s140, %s141
      %p150 = scmp.eq.s32.totalorder %s25, 0
      %p151 = por %p149, %p150
      %p152 = scmp.ne.s32.totalorder %s140, %s141
      %p153 = scmp.eq.s32.totalorder %s26, 1
      %p154 = por %p152, %p153
      %p156 = scmp.ne.s32.totalorder %s141, %s155
      %p157 = scmp.eq.s32.totalorder %s26, 0
      %p158 = por %p156, %p157
      %s160 = sadd.s32 %s159, 1
      %p163 = scmp.eq.s32.totalorder %s20, 1
      %p164 = scmp.ne.s32.totalorder %s159, %s161
      %p165 = scmp.eq.s32.totalorder %s20, 0
      %p166 = por %p164, %p165
      %p167 = scmp.ne.s32.totalorder %s159, %s161
      %p168 = scmp.eq.s32.totalorder %s25, 1
      %p169 = por %p167, %p168
      %p170 = scmp.ne.s32.totalorder %s161, %s162
      %p171 = scmp.eq.s32.totalorder %s25, 0
      %p172 = por %p170, %p171
      %p173 = scmp.ne.s32.totalorder %s161, %s162
      %p174 = scmp.eq.s32.totalorder %s26, 1
      %p175 = por %p173, %p174
      %p177 = scmp.ne.s32.totalorder %s162, %s176
      %p178 = scmp.eq.s32.totalorder %s26, 0
      %p179 = por %p177, %p178
      %s181 = sadd.s32 %s180, 1
      %p184 = scmp.eq.s32.totalorder %s20, 1
      %p185 = scmp.ne.s32.totalorder %s180, %s182
      %p186 = scmp.eq.s32.totalorder %s20, 0
      %p187 = por %p185, %p186
      %p188 = scmp.ne.s32.totalorder %s180, %s182
      %p189 = scmp.eq.s32.totalorder %s25, 1
      %p190 = por %p188, %p189
      %p191 = scmp.ne.s32.totalorder %s182, %s183
      %p192 = scmp.eq.s32.totalorder %s25, 0
      %p193 = por %p191, %p192
      %p194 = scmp.ne.s32.totalorder %s182, %s183
      %p195 = scmp.eq.s32.totalorder %s26, 1
      %p196 = por %p194, %p195
      %p198 = scmp.ne.s32.totalorder %s183, %s197
      %p199 = scmp.eq.s32.totalorder %s26, 0
      %p200 = por %p198, %p199
      %s202 = sadd.s32 %s201, 1
      %p205 = scmp.eq.s32.totalorder %s20, 1
      %p206 = scmp.ne.s32.totalorder %s201, %s203
      %p207 = scmp.eq.s32.totalorder %s20, 0
      %p208 = por %p206, %p207
      %p209 = scmp.ne.s32.totalorder %s201, %s203
      %p210 = scmp.eq.s32.totalorder %s25, 1
      %p211 = por %p209, %p210
      %p212 = scmp.ne.s32.totalorder %s203, %s204
      %p213 = scmp.eq.s32.totalorder %s25, 0
      %p214 = por %p212, %p213
      %p215 = scmp.ne.s32.totalorder %s203, %s204
      %p216 = scmp.eq.s32.totalorder %s26, 1
      %p217 = por %p215, %p216
      %p219 = scmp.ne.s32.totalorder %s204, %s218
      %p220 = scmp.eq.s32.totalorder %s26, 0
      %p221 = por %p219, %p220
      %s223 = sadd.s32 %s222, 1
      %p226 = scmp.eq.s32.totalorder %s20, 1
      %p227 = scmp.ne.s32.totalorder %s222, %s224
      %p228 = scmp.eq.s32.totalorder %s20, 0
      %p229 = por %p227, %p228
      %p230 = scmp.ne.s32.totalorder %s222, %s224
      %p231 = scmp.eq.s32.totalorder %s25, 1
      %p232 = por %p230, %p231
      %p233 = scmp.ne.s32.totalorder %s224, %s225
      %p234 = scmp.eq.s32.totalorder %s25, 0
      %p235 = por %p233, %p234
      %p236 = scmp.ne.s32.totalorder %s224, %s225
      %p237 = scmp.eq.s32.totalorder %s26, 1
      %p238 = por %p236, %p237
      %p240 = scmp.ne.s32.totalorder %s225, %s239
      %p241 = scmp.eq.s32.totalorder %s26, 0
      %p242 = por %p240, %p241
      %s244 = sadd.s32 %s243, 1
      %p247 = scmp.eq.s32.totalorder %s20, 1
      %p248 = scmp.ne.s32.totalorder %s243, %s245
      %p249 = scmp.eq.s32.totalorder %s20, 0
      %p250 = por %p248, %p249
      %p251 = scmp.ne.s32.totalorder %s243, %s245
      %p252 = scmp.eq.s32.totalorder %s25, 1
      %p253 = por %p251, %p252
      %p254 = scmp.ne.s32.totalorder %s245, %s246
      %p255 = scmp.eq.s32.totalorder %s25, 0
      %p256 = por %p254, %p255
      %p257 = scmp.ne.s32.totalorder %s245, %s246
      %p258 = scmp.eq.s32.totalorder %s26, 1
      %p259 = por %p257, %p258
      %p261 = scmp.ne.s32.totalorder %s246, %s260
      %p262 = scmp.eq.s32.totalorder %s26, 0
      %p263 = por %p261, %p262
      %s264 = ssub.s32 %s20, %s27
      %p265 = scmp.eq.s32.totalorder %s264, 0
      %s267 = sadd.s32 %s266, 1
      %s268 = scalar_select %p265, %s266, %s267
      %p271 = pneg %p265
      %p272 = scmp.eq.s32.totalorder %s20, 1
      %p273 = por %p271, %p272
      %p274 = scmp.ne.s32.totalorder %s266, %s269
      %p275 = scmp.eq.s32.totalorder %s20, 0
      %p276 = por %p274, %p275
      %p277 = scmp.ne.s32.totalorder %s266, %s269
      %p278 = scmp.eq.s32.totalorder %s25, 1
      %p279 = por %p277, %p278
      %p280 = scmp.ne.s32.totalorder %s269, %s270
      %p281 = scmp.eq.s32.totalorder %s25, 0
      %p282 = por %p280, %p281
      %p283 = scmp.ne.s32.totalorder %s269, %s270
      %p284 = scmp.eq.s32.totalorder %s26, 1
      %p285 = por %p283, %p284
      %p287 = scmp.ne.s32.totalorder %s270, %s286
      %p288 = scmp.eq.s32.totalorder %s26, 0
      %p289 = por %p287, %p288
      %p290 = scmp.le.s32.totalorder 1, %s20
      %p291 = scmp.lt.s32.totalorder %s20, 3
      %p292 = pnand %p290, %p291
      %p293 = pneg %p292
      // Predicated region
      $region9: #{tfusion_forward.4} parent=5 // pred_check
        _
      $region10: #{tfusion_forward.4} parent=5 // pred_check_branch
        %295 = sbr.rel (%p292) target = $region12
      $region11: #{tfusion_forward.4} parent=5 // pred_region
        %s296 = ssub.s32 %s20, 1
        // Predicated region
        $region13: #{tfusion_forward.4} parent=11 // pred_check
          %p297 = pneg %p67
        $region14: #{tfusion_forward.4} parent=11 // pred_check_branch
          %299 = sbr.rel (%p297) target = $region16
        $region15: #{tfusion_forward.4} parent=11 // pred_region
          %s301 = ssub.s32 9216, 9216
          %302 = vsyncadd [#allocation3], %s301
          %s303 = sshll.u32 [#allocation2], 4
          %s304 = int_to_ptr.vmem [resolvable:$true] %s303
          %309 = dma.hbm_to_vmem [thread:$0]  %s1, 9216, %s304, [#allocation3], 192, 192, 12
        $region16: #{tfusion_forward.4} parent=11 // pred_fallthru
          _
        // Predicated region
        $region17: #{tfusion_forward.4} parent=11 // pred_check
          %p310 = pneg %p88
        $region18: #{tfusion_forward.4} parent=11 // pred_check_branch
          %312 = sbr.rel (%p310) target = $region20
        $region19: #{tfusion_forward.4} parent=11 // pred_region
          _
        $region20: #{tfusion_forward.4} parent=11 // pred_fallthru
          _
        // Predicated region
        $region21: #{tfusion_forward.4} parent=11 // pred_check
          %p313 = pneg %p109
        $region22: #{tfusion_forward.4} parent=11 // pred_check_branch
          %315 = sbr.rel (%p313) target = $region24
        $region23: #{tfusion_forward.4} parent=11 // pred_region
          %s317 = ssub.s32 3072, 3072
          %318 = vsyncadd [#allocation5], %s317
          %s319 = sshll.u32 [#allocation4], 4
          %s320 = int_to_ptr.vmem [resolvable:$true] %s319
          %325 = dma.hbm_to_vmem [thread:$0]  %s3, 3072, %s320, [#allocation5], 64, 64, 4
        $region24: #{tfusion_forward.4} parent=11 // pred_fallthru
          _
        // Predicated region
        $region25: #{tfusion_forward.4} parent=11 // pred_check
          %p326 = pneg %p130
        $region26: #{tfusion_forward.4} parent=11 // pred_check_branch
          %328 = sbr.rel (%p326) target = $region28
        $region27: #{tfusion_forward.4} parent=11 // pred_region
          _
        $region28: #{tfusion_forward.4} parent=11 // pred_fallthru
          _
        // Predicated region
        $region29: #{tfusion_forward.4} parent=11 // pred_check
          %p329 = pneg %p151
        $region30: #{tfusion_forward.4} parent=11 // pred_check_branch
          %331 = sbr.rel (%p329) target = $region32
        $region31: #{tfusion_forward.4} parent=11 // pred_region
          %s333 = ssub.s32 3072, 3072
          %334 = vsyncadd [#allocation5], %s333
          %s335 = sshll.u32 [#allocation6], 4
          %s336 = int_to_ptr.vmem [resolvable:$true] %s335
          %341 = dma.hbm_to_vmem [thread:$0]  %s5, 3072, %s336, [#allocation5], 64, 64, 4
        $region32: #{tfusion_forward.4} parent=11 // pred_fallthru
          _
        // Predicated region
        $region33: #{tfusion_forward.4} parent=11 // pred_check
          %p342 = pneg %p172
        $region34: #{tfusion_forward.4} parent=11 // pred_check_branch
          %344 = sbr.rel (%p342) target = $region36
        $region35: #{tfusion_forward.4} parent=11 // pred_region
          _
        $region36: #{tfusion_forward.4} parent=11 // pred_fallthru
          _
        // Predicated region
        $region37: #{tfusion_forward.4} parent=11 // pred_check
          %p345 = pneg %p193
        $region38: #{tfusion_forward.4} parent=11 // pred_check_branch
          %347 = sbr.rel (%p345) target = $region40
        $region39: #{tfusion_forward.4} parent=11 // pred_region
          %s349 = ssub.s32 3072, 3072
          %350 = vsyncadd [#allocation8], %s349
          %s351 = sshll.u32 [#allocation7], 4
          %s352 = int_to_ptr.vmem [resolvable:$true] %s351
          %357 = dma.hbm_to_vmem [thread:$0]  %s7, 3072, %s352, [#allocation8], 64, 64, 4
        $region40: #{tfusion_forward.4} parent=11 // pred_fallthru
          _
        // Predicated region
        $region41: #{tfusion_forward.4} parent=11 // pred_check
          %p358 = pneg %p214
        $region42: #{tfusion_forward.4} parent=11 // pred_check_branch
          %360 = sbr.rel (%p358) target = $region44
        $region43: #{tfusion_forward.4} parent=11 // pred_region
          _
        $region44: #{tfusion_forward.4} parent=11 // pred_fallthru
          _
        // Predicated region
        $region45: #{tfusion_forward.4} parent=11 // pred_check
          %p361 = pneg %p235
        $region46: #{tfusion_forward.4} parent=11 // pred_check_branch
          %363 = sbr.rel (%p361) target = $region48
        $region47: #{tfusion_forward.4} parent=11 // pred_region
          %s365 = ssub.s32 3072, 3072
          %366 = vsyncadd [#allocation8], %s365
          %s367 = sshll.u32 [#allocation9], 4
          %s368 = int_to_ptr.vmem [resolvable:$true] %s367
          %373 = dma.hbm_to_vmem [thread:$0]  %s9, 3072, %s368, [#allocation8], 64, 64, 4
        $region48: #{tfusion_forward.4} parent=11 // pred_fallthru
          _
        // Predicated region
        $region49: #{tfusion_forward.4} parent=11 // pred_check
          %p374 = pneg %p256
        $region50: #{tfusion_forward.4} parent=11 // pred_check_branch
          %376 = sbr.rel (%p374) target = $region52
        $region51: #{tfusion_forward.4} parent=11 // pred_region
          _
        $region52: #{tfusion_forward.4} parent=11 // pred_fallthru
          _
      $region12: #{tfusion_forward.4} parent=5 // pred_fallthru
        _
      %p377 = scmp.lt.s32.totalorder %s20, 2
      // Predicated region
      $region53: #{tfusion_forward.4} parent=5 // pred_check
        %p378 = pneg %p377
      $region54: #{tfusion_forward.4} parent=5 // pred_check_branch
        %380 = sbr.rel (%p378) target = $region56
      $region55: #{tfusion_forward.4} parent=5 // pred_region
        // Predicated region
        $region57: #{tfusion_forward.4} parent=55 // pred_check
          %p381 = pneg %p40
        $region58: #{tfusion_forward.4} parent=55 // pred_check_branch
          %383 = sbr.rel (%p381) target = $region60
        $region59: #{tfusion_forward.4} parent=55 // pred_region
          %p384 = scmp.lt.s32.totalorder %s20, 1
          %s385 = scalar_select %p384, %s20, 1
          %s386 = smul.addr %s385, 8
          %s387 = smul.addr %s386, 4
          %s388 = scalar_lea.vmem %s0, %s387
        $region60: #{tfusion_forward.4} parent=55 // pred_fallthru
          _
      $region56: #{tfusion_forward.4} parent=5 // pred_fallthru
        _
      %p389 = scmp.le.s32.totalorder 1, %s20
      %p390 = scmp.lt.s32.totalorder %s20, 3
      %p391 = pnand %p389, %p390
      %p392 = pneg %p391
      // Predicated region
      $region61: #{tfusion_forward.4} parent=5 // pred_check
        _
      $region62: #{tfusion_forward.4} parent=5 // pred_check_branch
        %394 = sbr.rel (%p391) target = $region64
      $region63: #{tfusion_forward.4} parent=5 // pred_region
        %s395 = ssub.s32 %s20, 1
        // Predicated region
        $region65: #{tfusion_forward.4} parent=63 // pred_check
          %p396 = pneg %p67
        $region66: #{tfusion_forward.4} parent=63 // pred_check_branch
          %398 = sbr.rel (%p396) target = $region68
        $region67: #{tfusion_forward.4} parent=63 // pred_region
          %399 = dma.done [#allocation3], 9216
        $region68: #{tfusion_forward.4} parent=63 // pred_fallthru
          _
        // Predicated region
        $region69: #{tfusion_forward.4} parent=63 // pred_check
          %p400 = pneg %p109
        $region70: #{tfusion_forward.4} parent=63 // pred_check_branch
          %402 = sbr.rel (%p400) target = $region72
        $region71: #{tfusion_forward.4} parent=63 // pred_region
          %403 = dma.done [#allocation5], 3072
        $region72: #{tfusion_forward.4} parent=63 // pred_fallthru
          _
        // Predicated region
        $region73: #{tfusion_forward.4} parent=63 // pred_check
          %p404 = pneg %p151
        $region74: #{tfusion_forward.4} parent=63 // pred_check_branch
          %406 = sbr.rel (%p404) target = $region76
        $region75: #{tfusion_forward.4} parent=63 // pred_region
          %407 = dma.done [#allocation5], 3072
        $region76: #{tfusion_forward.4} parent=63 // pred_fallthru
          _
        // Predicated region
        $region77: #{tfusion_forward.4} parent=63 // pred_check
          %p408 = pneg %p193
        $region78: #{tfusion_forward.4} parent=63 // pred_check_branch
          %410 = sbr.rel (%p408) target = $region80
        $region79: #{tfusion_forward.4} parent=63 // pred_region
          %411 = dma.done [#allocation8], 3072
        $region80: #{tfusion_forward.4} parent=63 // pred_fallthru
          _
        // Predicated region
        $region81: #{tfusion_forward.4} parent=63 // pred_check
          %p412 = pneg %p235
        $region82: #{tfusion_forward.4} parent=63 // pred_check_branch
          %414 = sbr.rel (%p412) target = $region84
        $region83: #{tfusion_forward.4} parent=63 // pred_region
          %415 = dma.done [#allocation8], 3072
        $region84: #{tfusion_forward.4} parent=63 // pred_fallthru
          _
        %p416 = scmp.lt.s32.totalorder %s25, 1
        %s417 = scalar_select %p416, %s25, 1
        %s418 = smul.addr %s417, 8
        %s419 = smul.addr %s418, 4
        %s420 = scalar_lea.vmem %s0, %s419
        %p421 = pneg %p46
        %p422 = pneg %p43
        %p423 = pneg %p67
        %p424 = pneg %p64
        %p425 = pneg %p88
        %p426 = pneg %p85
        %p427 = pneg %p109
        %p428 = pneg %p106
        %p429 = pneg %p130
        %p430 = pneg %p127
        %p431 = pneg %p151
        %p432 = pneg %p148
        %p433 = pneg %p172
        %p434 = pneg %p169
        %p435 = pneg %p193
        %p436 = pneg %p190
        %p437 = pneg %p214
        %p438 = pneg %p211
        %p439 = pneg %p235
        %p440 = pneg %p232
        %p441 = pneg %p256
        %p442 = pneg %p253
        %p443 = pneg %p282
        %p444 = pneg %p279
        %p445 = scmp.lt.s32.totalorder %s25, 1
        %s446 = scalar_select %p445, %s25, 1
        %s447 = smul.addr %s446, 2
        %s448 = scalar_lea.vmem %s11, %s447
        %p449 = scmp.lt.s32.totalorder %s25, 1
        %s450 = scalar_select %p449, %s25, 1
        %s451 = smul.addr %s450, 8
        %s452 = smul.addr %s451, 4
        %s453 = scalar_lea.vmem %s0, %s452
        %p454 = scmp.lt.s32.totalorder %s25, 1
        %s455 = scalar_select %p454, %s25, 1
        %s456 = smul.addr %s455, 2
        %s457 = scalar_lea.vmem %s11, %s456
        %v459 = vld [vmem:[%s453] sm:$0xf]
        %v460 = vld [vmem:[%s453 + $0x4] sm:$0xf]
        %v461 = vld [vmem:[%s453 + $0x8] sm:$0xf]
        %v462 = vld [vmem:[%s453 + $0xc] sm:$0xf]
        %v463 = vld [vmem:[%s453 + $0x10] sm:$0xf]
        %v464 = vld [vmem:[%s453 + $0x14] sm:$0xf]
        %v465 = vld [vmem:[%s453 + $0x18] sm:$0xf]
        %v466 = vld [vmem:[%s453 + $0x1c] sm:$0xf]
        %v467 = vld [vmem:[#allocation2] sm:$0xff]
        %v468 = vld [vmem:[#allocation2 + $0x8] sm:$0xf]
        %v469 = vld [vmem:[#allocation2 + $0xc] sm:$0xff]
        %v470 = vld [vmem:[#allocation2 + $0x14] sm:$0xf]
        %v471 = vld [vmem:[#allocation2 + $0x18] sm:$0xff]
        %v472 = vld [vmem:[#allocation2 + $0x20] sm:$0xf]
        %v473 = vld [vmem:[#allocation2 + $0x24] sm:$0xff]
        %v474 = vld [vmem:[#allocation2 + $0x2c] sm:$0xf]
        %v475 = vld [vmem:[#allocation2 + $0x30] sm:$0xff]
        %v476 = vld [vmem:[#allocation2 + $0x38] sm:$0xf]
        %v477 = vld [vmem:[#allocation2 + $0x3c] sm:$0xff]
        %v478 = vld [vmem:[#allocation2 + $0x44] sm:$0xf]
        %v479 = vld [vmem:[#allocation2 + $0x48] sm:$0xff]
        %v480 = vld [vmem:[#allocation2 + $0x50] sm:$0xf]
        %v481 = vld [vmem:[#allocation2 + $0x54] sm:$0xff]
        %v482 = vld [vmem:[#allocation2 + $0x5c] sm:$0xf]
        %v483 = vld [vmem:[#allocation2 + $0x60] sm:$0xff]
        %v484 = vld [vmem:[#allocation2 + $0x68] sm:$0xf]
        %v485 = vld [vmem:[#allocation2 + $0x6c] sm:$0xff]
        %v486 = vld [vmem:[#allocation2 + $0x74] sm:$0xf]
        %v487 = vld [vmem:[#allocation2 + $0x78] sm:$0xff]
        %v488 = vld [vmem:[#allocation2 + $0x80] sm:$0xf]
        %v489 = vld [vmem:[#allocation2 + $0x84] sm:$0xff]
        %v490 = vld [vmem:[#allocation2 + $0x8c] sm:$0xf]
        %v491 = vld [vmem:[#allocation2 + $0x90] sm:$0xff]
        %v492 = vld [vmem:[#allocation2 + $0x98] sm:$0xf]
        %v493 = vld [vmem:[#allocation2 + $0x9c] sm:$0xff]
        %v494 = vld [vmem:[#allocation2 + $0xa4] sm:$0xf]
        %v495 = vld [vmem:[#allocation2 + $0xa8] sm:$0xff]
        %v496 = vld [vmem:[#allocation2 + $0xb0] sm:$0xf]
        %v497 = vld [vmem:[#allocation2 + $0xb4] sm:$0xff]
        %v498 = vld [vmem:[#allocation2 + $0xbc] sm:$0xf]
        %s499 = scalar_lea.vmem [#allocation2], 192
        %v500 = vld [vmem:[%s499] sm:$0xff]
        %v501 = vld [vmem:[%s499 + $0x8] sm:$0xf]
        %v502 = vld [vmem:[%s499 + $0xc] sm:$0xff]
        %v503 = vld [vmem:[%s499 + $0x14] sm:$0xf]
        %v504 = vld [vmem:[%s499 + $0x18] sm:$0xff]
        %v505 = vld [vmem:[%s499 + $0x20] sm:$0xf]
        %v506 = vld [vmem:[%s499 + $0x24] sm:$0xff]
        %v507 = vld [vmem:[%s499 + $0x2c] sm:$0xf]
        %v508 = vld [vmem:[%s499 + $0x30] sm:$0xff]
        %v509 = vld [vmem:[%s499 + $0x38] sm:$0xf]
        %v510 = vld [vmem:[%s499 + $0x3c] sm:$0xff]
        %v511 = vld [vmem:[%s499 + $0x44] sm:$0xf]
        %v512 = vld [vmem:[%s499 + $0x48] sm:$0xff]
        %v513 = vld [vmem:[%s499 + $0x50] sm:$0xf]
        %v514 = vld [vmem:[%s499 + $0x54] sm:$0xff]
        %v515 = vld [vmem:[%s499 + $0x5c] sm:$0xf]
        %v516 = vld [vmem:[%s499 + $0x60] sm:$0xff]
        %v517 = vld [vmem:[%s499 + $0x68] sm:$0xf]
        %v518 = vld [vmem:[%s499 + $0x6c] sm:$0xff]
        %v519 = vld [vmem:[%s499 + $0x74] sm:$0xf]
        %v520 = vld [vmem:[%s499 + $0x78] sm:$0xff]
        %v521 = vld [vmem:[%s499 + $0x80] sm:$0xf]
        %v522 = vld [vmem:[%s499 + $0x84] sm:$0xff]
        %v523 = vld [vmem:[%s499 + $0x8c] sm:$0xf]
        %v524 = vld [vmem:[%s499 + $0x90] sm:$0xff]
        %v525 = vld [vmem:[%s499 + $0x98] sm:$0xf]
        %v526 = vld [vmem:[%s499 + $0x9c] sm:$0xff]
        %v527 = vld [vmem:[%s499 + $0xa4] sm:$0xf]
        %v528 = vld [vmem:[%s499 + $0xa8] sm:$0xff]
        %v529 = vld [vmem:[%s499 + $0xb0] sm:$0xf]
        %v530 = vld [vmem:[%s499 + $0xb4] sm:$0xff]
        %v531 = vld [vmem:[%s499 + $0xbc] sm:$0xf]
        %v540 = vunpack.c.l.b16 %v459
        %v541 = vunpack.c.l.b16 %v460
        %v542 = vunpack.c.l.b16 %v461
        %v543 = vunpack.c.l.b16 %v462
        %v544 = vunpack.c.l.b16 %v463
        %v545 = vunpack.c.l.b16 %v464
        %v546 = vunpack.c.l.b16 %v465
        %v547 = vunpack.c.l.b16 %v466
        %v548 = vpack.c.b16 %v541, %v540
        %v549 = vpack.c.b16 %v543, %v542
        %v550 = vpack.c.b16 %v545, %v544
        %v551 = vpack.c.b16 %v547, %v546
        %vm552 = vsmask.f32 7424
        %v554 = vshrl.u32 %v548, 16
        %v556 = vshll.u32 %v548, 16
        %v558 = vrot.slane %v556, 1
        %v559 = vor.u32 %v554, %v558
        %v561 = vshll.u32 %v549, 16
        %v563 = vrot.slane %v561, 1
        %v564 = vsel %vm552, %v559, %v563
        %v565 = vshrl.u32 %v549, 16
        %v567 = vor.u32 %v565, %v563
        %v569 = vshll.u32 %v550, 16
        %v571 = vrot.slane %v569, 1
        %v572 = vsel %vm552, %v567, %v571
        %v573 = vshrl.u32 %v550, 16
        %v575 = vor.u32 %v573, %v571
        %v577 = vshll.u32 %v551, 16
        %v579 = vrot.slane %v577, 1
        %v580 = vsel %vm552, %v575, %v579
        %v581 = vshrl.u32 %v551, 16
        %v583 = vor.u32 %v581, %v579
        %v620 = vunpack.c.l.b16 %v500
        %v621 = vunpack.c.h.b16 %v500
        %v622 = vunpack.c.l.b16 %v501
        %v623 = vunpack.c.l.b16 %v502
        %v624 = vunpack.c.h.b16 %v502
        %v625 = vunpack.c.l.b16 %v503
        %v626 = vunpack.c.l.b16 %v504
        %v627 = vunpack.c.h.b16 %v504
        %v628 = vunpack.c.l.b16 %v505
        %v629 = vunpack.c.l.b16 %v506
        %v630 = vunpack.c.h.b16 %v506
        %v631 = vunpack.c.l.b16 %v507
        %v632 = vunpack.c.l.b16 %v508
        %v633 = vunpack.c.h.b16 %v508
        %v634 = vunpack.c.l.b16 %v509
        %v635 = vunpack.c.l.b16 %v510
        %v636 = vunpack.c.h.b16 %v510
        %v637 = vunpack.c.l.b16 %v511
        %v638 = vunpack.c.l.b16 %v512
        %v639 = vunpack.c.h.b16 %v512
        %v640 = vunpack.c.l.b16 %v513
        %v641 = vunpack.c.l.b16 %v514
        %v642 = vunpack.c.h.b16 %v514
        %v643 = vunpack.c.l.b16 %v515
        %v644 = vunpack.c.l.b16 %v516
        %v645 = vunpack.c.h.b16 %v516
        %v646 = vunpack.c.l.b16 %v517
        %v647 = vunpack.c.l.b16 %v518
        %v648 = vunpack.c.h.b16 %v518
        %v649 = vunpack.c.l.b16 %v519
        %v650 = vunpack.c.l.b16 %v520
        %v651 = vunpack.c.h.b16 %v520
        %v652 = vunpack.c.l.b16 %v521
        %v653 = vunpack.c.l.b16 %v522
        %v654 = vunpack.c.h.b16 %v522
        %v655 = vunpack.c.l.b16 %v523
        %v656 = vunpack.c.l.b16 %v524
        %v657 = vunpack.c.h.b16 %v524
        %v658 = vunpack.c.l.b16 %v525
        %v659 = vunpack.c.l.b16 %v526
        %v660 = vunpack.c.h.b16 %v526
        %v661 = vunpack.c.l.b16 %v527
        %v662 = vunpack.c.l.b16 %v528
        %v663 = vunpack.c.h.b16 %v528
        %v664 = vunpack.c.l.b16 %v529
        %v665 = vunpack.c.l.b16 %v530
        %v666 = vunpack.c.h.b16 %v530
        %v667 = vunpack.c.l.b16 %v531
        %v668 = vpack.c.b16 %v623, %v620
        %v669 = vpack.c.b16 %v624, %v621
        %v670 = vpack.c.b16 %v625, %v622
        %v671 = vpack.c.b16 %v629, %v626
        %v672 = vpack.c.b16 %v630, %v627
        %v673 = vpack.c.b16 %v631, %v628
        %v674 = vpack.c.b16 %v635, %v632
        %v675 = vpack.c.b16 %v636, %v633
        %v676 = vpack.c.b16 %v637, %v634
        %v677 = vpack.c.b16 %v641, %v638
        %v678 = vpack.c.b16 %v642, %v639
        %v679 = vpack.c.b16 %v643, %v640
        %v680 = vpack.c.b16 %v647, %v644
        %v681 = vpack.c.b16 %v648, %v645
        %v682 = vpack.c.b16 %v649, %v646
        %v683 = vpack.c.b16 %v653, %v650
        %v684 = vpack.c.b16 %v654, %v651
        %v685 = vpack.c.b16 %v655, %v652
        %v686 = vpack.c.b16 %v659, %v656
        %v687 = vpack.c.b16 %v660, %v657
        %v688 = vpack.c.b16 %v661, %v658
        %v689 = vpack.c.b16 %v665, %v662
        %v690 = vpack.c.b16 %v666, %v663
        %v691 = vpack.c.b16 %v667, %v664
        %716 = vmatprep.subr.bf16.mxu0 %v669
        %717 = vmatpush1.bf16.msra.mxu0 %v668
        %718 = vmatprep.subr.bf16.mxu0 %v672
        %719 = vmatpush1.bf16.msra.mxu0 %v671
        %720 = vmatprep.subr.bf16.mxu0 %v675
        %721 = vmatpush1.bf16.msra.mxu0 %v674
        %722 = vmatprep.subr.bf16.mxu0 %v678
        %723 = vmatpush1.bf16.msra.mxu0 %v677
        %724 = vmatprep.subr.bf16.mxu0 %v681
        %725 = vmatpush1.bf16.msra.mxu0 %v680
        %726 = vmatprep.subr.bf16.mxu0 %v684
        %727 = vmatpush1.bf16.msra.mxu0 %v683
        %728 = vmatprep.subr.bf16.mxu0 %v687
        %729 = vmatpush1.bf16.msra.mxu0 %v686
        %730 = vmatprep.subr.bf16.mxu0 %v690
        %731 = vmatpush1.bf16.msra.mxu0 %v689
        %732 = vmatprep.subr.bf16.mxu0 0
        %733 = vmatpush1.bf16.msra.mxu0 0
        %734 = vmatprep.subr.bf16.mxu0 0
        %735 = vmatpush1.bf16.msra.mxu0 0
        %736 = vmatprep.subr.bf16.mxu0 0
        %737 = vmatpush1.bf16.msra.mxu0 0
        %738 = vmatprep.subr.bf16.mxu0 0
        %739 = vmatpush1.bf16.msra.mxu0 0
        %740 = vmatprep.subr.bf16.mxu0 0
        %741 = vmatpush1.bf16.msra.mxu0 0
        %742 = vmatprep.subr.bf16.mxu0 0
        %743 = vmatpush1.bf16.msra.mxu0 0
        %744 = vmatprep.subr.bf16.mxu0 0
        %745 = vmatpush1.bf16.msra.mxu0 0
        %746 = vmatprep.subr.bf16.mxu0 0
        %747 = vmatpush1.bf16.msra.mxu0 0
        %748 = vmatprep.mubr.bf16.mxu0 0
        %749 = vmatmul.mubr.bf16.gmra.mrb[0].mxu0 %v564
        %v750 = vpop.f32.mrb[0].mxu0
        %v751 = vadd.f32 0.0, %v750
        %v752 = vpop.f32.mrb[0].mxu0
        %v753 = vadd.f32 0.0, %v752
        %v754 = vpop.f32.mrb[0].mxu0
        %v755 = vadd.f32 0.0, %v754
        %v756 = vpop.f32.mrb[0].mxu0
        %v757 = vadd.f32 0.0, %v756
        %758 = vmatprep.mubr.bf16.mxu0 0
        %759 = vmatmul.mubr.bf16.gmra.mrb[0].mxu0 %v572
        %v760 = vpop.f32.mrb[0].mxu0
        %v761 = vadd.f32 0.0, %v760
        %v762 = vpop.f32.mrb[0].mxu0
        %v763 = vadd.f32 0.0, %v762
        %v764 = vpop.f32.mrb[0].mxu0
        %v765 = vadd.f32 0.0, %v764
        %v766 = vpop.f32.mrb[0].mxu0
        %v767 = vadd.f32 0.0, %v766
        %768 = vmatprep.mubr.bf16.mxu0 0
        %769 = vmatmul.mubr.bf16.gmra.mrb[0].mxu0 %v580
        %v770 = vpop.f32.mrb[0].mxu0
        %v771 = vadd.f32 0.0, %v770
        %v772 = vpop.f32.mrb[0].mxu0
        %v773 = vadd.f32 0.0, %v772
        %v774 = vpop.f32.mrb[0].mxu0
        %v775 = vadd.f32 0.0, %v774
        %v776 = vpop.f32.mrb[0].mxu0
        %v777 = vadd.f32 0.0, %v776
        %778 = vmatprep.mubr.bf16.mxu0 0
        %779 = vmatmul.mubr.bf16.gmra.mrb[0].mxu0 %v583
        %v780 = vpop.f32.mrb[0].mxu0
        %v781 = vadd.f32 0.0, %v780
        %v782 = vpop.f32.mrb[0].mxu0
        %v783 = vadd.f32 0.0, %v782
        %v784 = vpop.f32.mrb[0].mxu0
        %v785 = vadd.f32 0.0, %v784
        %v786 = vpop.f32.mrb[0].mxu0
        %v787 = vadd.f32 0.0, %v786
        %788 = vdwg.mxu0
        %789 = vmatprep.subr.bf16.mxu0 0
        %790 = vmatpush1.bf16.msra.mxu0 %v670
        %791 = vmatprep.subr.bf16.mxu0 0
        %792 = vmatpush1.bf16.msra.mxu0 %v673
        %793 = vmatprep.subr.bf16.mxu0 0
        %794 = vmatpush1.bf16.msra.mxu0 %v676
        %795 = vmatprep.subr.bf16.mxu0 0
        %796 = vmatpush1.bf16.msra.mxu0 %v679
        %797 = vmatprep.subr.bf16.mxu0 0
        %798 = vmatpush1.bf16.msra.mxu0 %v682
        %799 = vmatprep.subr.bf16.mxu0 0
        %800 = vmatpush1.bf16.msra.mxu0 %v685
        %801 = vmatprep.subr.bf16.mxu0 0
        %802 = vmatpush1.bf16.msra.mxu0 %v688
        %803 = vmatprep.subr.bf16.mxu0 0
        %804 = vmatpush1.bf16.msra.mxu0 %v691
        %805 = vmatprep.subr.bf16.mxu0 0
        %806 = vmatpush1.bf16.msra.mxu0 0
        %807 = vmatprep.subr.bf16.mxu0 0
        %808 = vmatpush1.bf16.msra.mxu0 0
        %809 = vmatprep.subr.bf16.mxu0 0
        %810 = vmatpush1.bf16.msra.mxu0 0
        %811 = vmatprep.subr.bf16.mxu0 0
        %812 = vmatpush1.bf16.msra.mxu0 0
        %813 = vmatprep.subr.bf16.mxu0 0
        %814 = vmatpush1.bf16.msra.mxu0 0
        %815 = vmatprep.subr.bf16.mxu0 0
        %816 = vmatpush1.bf16.msra.mxu0 0
        %817 = vmatprep.subr.bf16.mxu0 0
        %818 = vmatpush1.bf16.msra.mxu0 0
        %819 = vmatprep.subr.bf16.mxu0 0
        %820 = vmatpush1.bf16.msra.mxu0 0
        %821 = vmatprep.mubr.bf16.mxu0 0
        %822 = vmatmul.mubr.bf16.gmra.mrb[0].mxu0 %v564
        %v823 = vpop.f32.mrb[0].mxu0
        %v824 = vadd.f32 0.0, %v823
        %v825 = vpop.f32.mrb[0].mxu0
        %v826 = vpop.f32.mrb[0].mxu0
        %v827 = vadd.f32 0.0, %v826
        %v828 = vpop.f32.mrb[0].mxu0
        %829 = vmatprep.mubr.bf16.mxu0 0
        %830 = vmatmul.mubr.bf16.gmra.mrb[0].mxu0 %v572
        %v831 = vpop.f32.mrb[0].mxu0
        %v832 = vadd.f32 0.0, %v831
        %v833 = vpop.f32.mrb[0].mxu0
        %v834 = vpop.f32.mrb[0].mxu0
        %v835 = vadd.f32 0.0, %v834
        %v836 = vpop.f32.mrb[0].mxu0
        %837 = vmatprep.mubr.bf16.mxu0 0
        %838 = vmatmul.mubr.bf16.gmra.mrb[0].mxu0 %v580
        %v839 = vpop.f32.mrb[0].mxu0
        %v840 = vadd.f32 0.0, %v839
        %v841 = vpop.f32.mrb[0].mxu0
        %v842 = vpop.f32.mrb[0].mxu0
        %v843 = vadd.f32 0.0, %v842
        %v844 = vpop.f32.mrb[0].mxu0
        %845 = vmatprep.mubr.bf16.mxu0 0
        %846 = vmatmul.mubr.bf16.gmra.mrb[0].mxu0 %v583
        %v847 = vpop.f32.mrb[0].mxu0
        %v848 = vadd.f32 0.0, %v847
        %v849 = vpop.f32.mrb[0].mxu0
        %v850 = vpop.f32.mrb[0].mxu0
        %v851 = vadd.f32 0.0, %v850
        %v852 = vpop.f32.mrb[0].mxu0
        %853 = vdwg.mxu0
        %v890 = vunpack.c.l.b16 %v467
        %v891 = vunpack.c.h.b16 %v467
        %v892 = vunpack.c.l.b16 %v468
        %v893 = vunpack.c.l.b16 %v469
        %v894 = vunpack.c.h.b16 %v469
        %v895 = vunpack.c.l.b16 %v470
        %v896 = vunpack.c.l.b16 %v471
        %v897 = vunpack.c.h.b16 %v471
        %v898 = vunpack.c.l.b16 %v472
        %v899 = vunpack.c.l.b16 %v473
        %v900 = vunpack.c.h.b16 %v473
        %v901 = vunpack.c.l.b16 %v474
        %v902 = vunpack.c.l.b16 %v475
        %v903 = vunpack.c.h.b16 %v475
        %v904 = vunpack.c.l.b16 %v476
        %v905 = vunpack.c.l.b16 %v477
        %v906 = vunpack.c.h.b16 %v477
        %v907 = vunpack.c.l.b16 %v478
        %v908 = vunpack.c.l.b16 %v479
        %v909 = vunpack.c.h.b16 %v479
        %v910 = vunpack.c.l.b16 %v480
        %v911 = vunpack.c.l.b16 %v481
        %v912 = vunpack.c.h.b16 %v481
        %v913 = vunpack.c.l.b16 %v482
        %v914 = vunpack.c.l.b16 %v483
        %v915 = vunpack.c.h.b16 %v483
        %v916 = vunpack.c.l.b16 %v484
        %v917 = vunpack.c.l.b16 %v485
        %v918 = vunpack.c.h.b16 %v485
        %v919 = vunpack.c.l.b16 %v486
        %v920 = vunpack.c.l.b16 %v487
        %v921 = vunpack.c.h.b16 %v487
        %v922 = vunpack.c.l.b16 %v488
        %v923 = vunpack.c.l.b16 %v489
        %v924 = vunpack.c.h.b16 %v489
        %v925 = vunpack.c.l.b16 %v490
        %v926 = vunpack.c.l.b16 %v491
        %v927 = vunpack.c.h.b16 %v491
        %v928 = vunpack.c.l.b16 %v492
        %v929 = vunpack.c.l.b16 %v493
        %v930 = vunpack.c.h.b16 %v493
        %v931 = vunpack.c.l.b16 %v494
        %v932 = vunpack.c.l.b16 %v495
        %v933 = vunpack.c.h.b16 %v495
        %v934 = vunpack.c.l.b16 %v496
        %v935 = vunpack.c.l.b16 %v497
        %v936 = vunpack.c.h.b16 %v497
        %v937 = vunpack.c.l.b16 %v498
        %v938 = vpack.c.b16 %v893, %v890
        %v939 = vpack.c.b16 %v894, %v891
        %v940 = vpack.c.b16 %v895, %v892
        %v941 = vpack.c.b16 %v899, %v896
        %v942 = vpack.c.b16 %v900, %v897
        %v943 = vpack.c.b16 %v901, %v898
        %v944 = vpack.c.b16 %v905, %v902
        %v945 = vpack.c.b16 %v906, %v903
        %v946 = vpack.c.b16 %v907, %v904
        %v947 = vpack.c.b16 %v911, %v908
        %v948 = vpack.c.b16 %v912, %v909
        %v949 = vpack.c.b16 %v913, %v910
        %v950 = vpack.c.b16 %v917, %v914
        %v951 = vpack.c.b16 %v918, %v915
        %v952 = vpack.c.b16 %v919, %v916
        %v953 = vpack.c.b16 %v923, %v920
        %v954 = vpack.c.b16 %v924, %v921
        %v955 = vpack.c.b16 %v925, %v922
        %v956 = vpack.c.b16 %v929, %v926
        %v957 = vpack.c.b16 %v930, %v927
        %v958 = vpack.c.b16 %v931, %v928
        %v959 = vpack.c.b16 %v935, %v932
        %v960 = vpack.c.b16 %v936, %v933
        %v961 = vpack.c.b16 %v937, %v934
        %986 = vmatprep.subr.bf16.mxu0 %v939
        %987 = vmatpush1.bf16.msra.mxu0 %v938
        %988 = vmatprep.subr.bf16.mxu0 %v942
        %989 = vmatpush1.bf16.msra.mxu0 %v941
        %990 = vmatprep.subr.bf16.mxu0 %v945
        %991 = vmatpush1.bf16.msra.mxu0 %v944
        %992 = vmatprep.subr.bf16.mxu0 %v948
        %993 = vmatpush1.bf16.msra.mxu0 %v947
        %994 = vmatprep.subr.bf16.mxu0 %v951
        %995 = vmatpush1.bf16.msra.mxu0 %v950
        %996 = vmatprep.subr.bf16.mxu0 %v954
        %997 = vmatpush1.bf16.msra.mxu0 %v953
        %998 = vmatprep.subr.bf16.mxu0 %v957
        %999 = vmatpush1.bf16.msra.mxu0 %v956
        %1000 = vmatprep.subr.bf16.mxu0 %v960
        %1001 = vmatpush1.bf16.msra.mxu0 %v959
        %1002 = vmatprep.subr.bf16.mxu0 0
        %1003 = vmatpush1.bf16.msra.mxu0 0
        %1004 = vmatprep.subr.bf16.mxu0 0
        %1005 = vmatpush1.bf16.msra.mxu0 0
        %1006 = vmatprep.subr.bf16.mxu0 0
        %1007 = vmatpush1.bf16.msra.mxu0 0
        %1008 = vmatprep.subr.bf16.mxu0 0
        %1009 = vmatpush1.bf16.msra.mxu0 0
        %1010 = vmatprep.subr.bf16.mxu0 0
        %1011 = vmatpush1.bf16.msra.mxu0 0
        %1012 = vmatprep.subr.bf16.mxu0 0
        %1013 = vmatpush1.bf16.msra.mxu0 0
        %1014 = vmatprep.subr.bf16.mxu0 0
        %1015 = vmatpush1.bf16.msra.mxu0 0
        %1016 = vmatprep.subr.bf16.mxu0 0
        %1017 = vmatpush1.bf16.msra.mxu0 0
        %1018 = vmatprep.mubr.bf16.mxu0 0
        %1019 = vmatmul.mubr.bf16.gmra.mrb[0].mxu0 %v548
        %v1020 = vpop.f32.mrb[0].mxu0
        %v1021 = vadd.f32 %v751, %v1020
        %v1022 = vpop.f32.mrb[0].mxu0
        %v1023 = vadd.f32 %v753, %v1022
        %v1024 = vpop.f32.mrb[0].mxu0
        %v1025 = vadd.f32 %v755, %v1024
        %v1026 = vpop.f32.mrb[0].mxu0
        %v1027 = vadd.f32 %v757, %v1026
        %1028 = vmatprep.mubr.bf16.mxu0 0
        %1029 = vmatmul.mubr.bf16.gmra.mrb[0].mxu0 %v549
        %v1030 = vpop.f32.mrb[0].mxu0
        %v1031 = vadd.f32 %v761, %v1030
        %v1032 = vpop.f32.mrb[0].mxu0
        %v1033 = vadd.f32 %v763, %v1032
        %v1034 = vpop.f32.mrb[0].mxu0
        %v1035 = vadd.f32 %v765, %v1034
        %v1036 = vpop.f32.mrb[0].mxu0
        %v1037 = vadd.f32 %v767, %v1036
        %1038 = vmatprep.mubr.bf16.mxu0 0
        %1039 = vmatmul.mubr.bf16.gmra.mrb[0].mxu0 %v550
        %v1040 = vpop.f32.mrb[0].mxu0
        %v1041 = vadd.f32 %v771, %v1040
        %v1042 = vpop.f32.mrb[0].mxu0
        %v1043 = vadd.f32 %v773, %v1042
        %v1044 = vpop.f32.mrb[0].mxu0
        %v1045 = vadd.f32 %v775, %v1044
        %v1046 = vpop.f32.mrb[0].mxu0
        %v1047 = vadd.f32 %v777, %v1046
        %1048 = vmatprep.mubr.bf16.mxu0 0
        %1049 = vmatmul.mubr.bf16.gmra.mrb[0].mxu0 %v551
        %v1050 = vpop.f32.mrb[0].mxu0
        %v1051 = vadd.f32 %v781, %v1050
        %v1052 = vpop.f32.mrb[0].mxu0
        %v1053 = vadd.f32 %v783, %v1052
        %v1054 = vpop.f32.mrb[0].mxu0
        %v1055 = vadd.f32 %v785, %v1054
        %v1056 = vpop.f32.mrb[0].mxu0
        %v1057 = vadd.f32 %v787, %v1056
        %1058 = vdwg.mxu0
        %1059 = vmatprep.subr.bf16.mxu0 0
        %1060 = vmatpush1.bf16.msra.mxu0 %v940
        %1061 = vmatprep.subr.bf16.mxu0 0
        %1062 = vmatpush1.bf16.msra.mxu0 %v943
        %1063 = vmatprep.subr.bf16.mxu0 0
        %1064 = vmatpush1.bf16.msra.mxu0 %v946
        %1065 = vmatprep.subr.bf16.mxu0 0
        %1066 = vmatpush1.bf16.msra.mxu0 %v949
        %1067 = vmatprep.subr.bf16.mxu0 0
        %1068 = vmatpush1.bf16.msra.mxu0 %v952
        %1069 = vmatprep.subr.bf16.mxu0 0
        %1070 = vmatpush1.bf16.msra.mxu0 %v955
        %1071 = vmatprep.subr.bf16.mxu0 0
        %1072 = vmatpush1.bf16.msra.mxu0 %v958
        %1073 = vmatprep.subr.bf16.mxu0 0
        %1074 = vmatpush1.bf16.msra.mxu0 %v961
        %1075 = vmatprep.subr.bf16.mxu0 0
        %1076 = vmatpush1.bf16.msra.mxu0 0
        %1077 = vmatprep.subr.bf16.mxu0 0
        %1078 = vmatpush1.bf16.msra.mxu0 0
        %1079 = vmatprep.subr.bf16.mxu0 0
        %1080 = vmatpush1.bf16.msra.mxu0 0
        %1081 = vmatprep.subr.bf16.mxu0 0
        %1082 = vmatpush1.bf16.msra.mxu0 0
        %1083 = vmatprep.subr.bf16.mxu0 0
        %1084 = vmatpush1.bf16.msra.mxu0 0
        %1085 = vmatprep.subr.bf16.mxu0 0
        %1086 = vmatpush1.bf16.msra.mxu0 0
        %1087 = vmatprep.subr.bf16.mxu0 0
        %1088 = vmatpush1.bf16.msra.mxu0 0
        %1089 = vmatprep.subr.bf16.mxu0 0
        %1090 = vmatpush1.bf16.msra.mxu0 0
        %1091 = vmatprep.mubr.bf16.mxu0 0
        %1092 = vmatmul.mubr.bf16.gmra.mrb[0].mxu0 %v548
        %v1093 = vpop.f32.mrb[0].mxu0
        %v1094 = vadd.f32 %v824, %v1093
        %v1095 = vpop.f32.mrb[0].mxu0
        %v1096 = vpop.f32.mrb[0].mxu0
        %v1097 = vadd.f32 %v827, %v1096
        %v1098 = vpop.f32.mrb[0].mxu0
        %1099 = vmatprep.mubr.bf16.mxu0 0
        %1100 = vmatmul.mubr.bf16.gmra.mrb[0].mxu0 %v549
        %v1101 = vpop.f32.mrb[0].mxu0
        %v1102 = vadd.f32 %v832, %v1101
        %v1103 = vpop.f32.mrb[0].mxu0
        %v1104 = vpop.f32.mrb[0].mxu0
        %v1105 = vadd.f32 %v835, %v1104
        %v1106 = vpop.f32.mrb[0].mxu0
        %1107 = vmatprep.mubr.bf16.mxu0 0
        %1108 = vmatmul.mubr.bf16.gmra.mrb[0].mxu0 %v550
        %v1109 = vpop.f32.mrb[0].mxu0
        %v1110 = vadd.f32 %v840, %v1109
        %v1111 = vpop.f32.mrb[0].mxu0
        %v1112 = vpop.f32.mrb[0].mxu0
        %v1113 = vadd.f32 %v843, %v1112
        %v1114 = vpop.f32.mrb[0].mxu0
        %1115 = vmatprep.mubr.bf16.mxu0 0
        %1116 = vmatmul.mubr.bf16.gmra.mrb[0].mxu0 %v551
        %v1117 = vpop.f32.mrb[0].mxu0
        %v1118 = vadd.f32 %v848, %v1117
        %v1119 = vpop.f32.mrb[0].mxu0
        %v1120 = vpop.f32.mrb[0].mxu0
        %v1121 = vadd.f32 %v851, %v1120
        %v1122 = vpop.f32.mrb[0].mxu0
        %1123 = vdwg.mxu0
        %s1124 = scalar_lea.vmem [#allocation2], 384
        %v1125 = vld [vmem:[%s1124] sm:$0xff]
        %v1126 = vld [vmem:[%s1124 + $0x8] sm:$0xf]
        %v1127 = vld [vmem:[%s1124 + $0xc] sm:$0xff]
        %v1128 = vld [vmem:[%s1124 + $0x14] sm:$0xf]
        %v1129 = vld [vmem:[%s1124 + $0x18] sm:$0xff]
        %v1130 = vld [vmem:[%s1124 + $0x20] sm:$0xf]
        %v1131 = vld [vmem:[%s1124 + $0x24] sm:$0xff]
        %v1132 = vld [vmem:[%s1124 + $0x2c] sm:$0xf]
        %v1133 = vld [vmem:[%s1124 + $0x30] sm:$0xff]
        %v1134 = vld [vmem:[%s1124 + $0x38] sm:$0xf]
        %v1135 = vld [vmem:[%s1124 + $0x3c] sm:$0xff]
        %v1136 = vld [vmem:[%s1124 + $0x44] sm:$0xf]
        %v1137 = vld [vmem:[%s1124 + $0x48] sm:$0xff]
        %v1138 = vld [vmem:[%s1124 + $0x50] sm:$0xf]
        %v1139 = vld [vmem:[%s1124 + $0x54] sm:$0xff]
        %v1140 = vld [vmem:[%s1124 + $0x5c] sm:$0xf]
        %v1141 = vld [vmem:[%s1124 + $0x60] sm:$0xff]
        %v1142 = vld [vmem:[%s1124 + $0x68] sm:$0xf]
        %v1143 = vld [vmem:[%s1124 + $0x6c] sm:$0xff]
        %v1144 = vld [vmem:[%s1124 + $0x74] sm:$0xf]
        %v1145 = vld [vmem:[%s1124 + $0x78] sm:$0xff]
        %v1146 = vld [vmem:[%s1124 + $0x80] sm:$0xf]
        %v1147 = vld [vmem:[%s1124 + $0x84] sm:$0xff]
        %v1148 = vld [vmem:[%s1124 + $0x8c] sm:$0xf]
        %v1149 = vld [vmem:[%s1124 + $0x90] sm:$0xff]
        %v1150 = vld [vmem:[%s1124 + $0x98] sm:$0xf]
        %v1151 = vld [vmem:[%s1124 + $0x9c] sm:$0xff]
        %v1152 = vld [vmem:[%s1124 + $0xa4] sm:$0xf]
        %v1153 = vld [vmem:[%s1124 + $0xa8] sm:$0xff]
        %v1154 = vld [vmem:[%s1124 + $0xb0] sm:$0xf]
        %v1155 = vld [vmem:[%s1124 + $0xb4] sm:$0xff]
        %v1156 = vld [vmem:[%s1124 + $0xbc] sm:$0xf]
        %vm1157 = vcmask 1046528
        %v1158 = vrot.slane %v548, 1
        %v1159 = vrot.slane %v549, 1
        %v1160 = vsel %vm1157, %v1158, %v1159
        %v1161 = vrot.slane %v550, 1
        %v1162 = vsel %vm1157, %v1159, %v1161
        %v1163 = vrot.slane %v551, 1
        %v1164 = vsel %vm1157, %v1161, %v1163
        %v1201 = vunpack.c.l.b16 %v1125
        %v1202 = vunpack.c.h.b16 %v1125
        %v1203 = vunpack.c.l.b16 %v1126
        %v1204 = vunpack.c.l.b16 %v1127
        %v1205 = vunpack.c.h.b16 %v1127
        %v1206 = vunpack.c.l.b16 %v1128
        %v1207 = vunpack.c.l.b16 %v1129
        %v1208 = vunpack.c.h.b16 %v1129
        %v1209 = vunpack.c.l.b16 %v1130
        %v1210 = vunpack.c.l.b16 %v1131
        %v1211 = vunpack.c.h.b16 %v1131
        %v1212 = vunpack.c.l.b16 %v1132
        %v1213 = vunpack.c.l.b16 %v1133
        %v1214 = vunpack.c.h.b16 %v1133
        %v1215 = vunpack.c.l.b16 %v1134
        %v1216 = vunpack.c.l.b16 %v1135
        %v1217 = vunpack.c.h.b16 %v1135
        %v1218 = vunpack.c.l.b16 %v1136
        %v1219 = vunpack.c.l.b16 %v1137
        %v1220 = vunpack.c.h.b16 %v1137
        %v1221 = vunpack.c.l.b16 %v1138
        %v1222 = vunpack.c.l.b16 %v1139
        %v1223 = vunpack.c.h.b16 %v1139
        %v1224 = vunpack.c.l.b16 %v1140
        %v1225 = vunpack.c.l.b16 %v1141
        %v1226 = vunpack.c.h.b16 %v1141
        %v1227 = vunpack.c.l.b16 %v1142
        %v1228 = vunpack.c.l.b16 %v1143
        %v1229 = vunpack.c.h.b16 %v1143
        %v1230 = vunpack.c.l.b16 %v1144
        %v1231 = vunpack.c.l.b16 %v1145
        %v1232 = vunpack.c.h.b16 %v1145
        %v1233 = vunpack.c.l.b16 %v1146
        %v1234 = vunpack.c.l.b16 %v1147
        %v1235 = vunpack.c.h.b16 %v1147
        %v1236 = vunpack.c.l.b16 %v1148
        %v1237 = vunpack.c.l.b16 %v1149
        %v1238 = vunpack.c.h.b16 %v1149
        %v1239 = vunpack.c.l.b16 %v1150
        %v1240 = vunpack.c.l.b16 %v1151
        %v1241 = vunpack.c.h.b16 %v1151
        %v1242 = vunpack.c.l.b16 %v1152
        %v1243 = vunpack.c.l.b16 %v1153
        %v1244 = vunpack.c.h.b16 %v1153
        %v1245 = vunpack.c.l.b16 %v1154
        %v1246 = vunpack.c.l.b16 %v1155
        %v1247 = vunpack.c.h.b16 %v1155
        %v1248 = vunpack.c.l.b16 %v1156
        %v1249 = vpack.c.b16 %v1204, %v1201
        %v1250 = vpack.c.b16 %v1205, %v1202
        %v1251 = vpack.c.b16 %v1206, %v1203
        %v1252 = vpack.c.b16 %v1210, %v1207
        %v1253 = vpack.c.b16 %v1211, %v1208
        %v1254 = vpack.c.b16 %v1212, %v1209
        %v1255 = vpack.c.b16 %v1216, %v1213
        %v1256 = vpack.c.b16 %v1217, %v1214
        %v1257 = vpack.c.b16 %v1218, %v1215
        %v1258 = vpack.c.b16 %v1222, %v1219
        %v1259 = vpack.c.b16 %v1223, %v1220
        %v1260 = vpack.c.b16 %v1224, %v1221
        %v1261 = vpack.c.b16 %v1228, %v1225
        %v1262 = vpack.c.b16 %v1229, %v1226
        %v1263 = vpack.c.b16 %v1230, %v1227
        %v1264 = vpack.c.b16 %v1234, %v1231
        %v1265 = vpack.c.b16 %v1235, %v1232
        %v1266 = vpack.c.b16 %v1236, %v1233
        %v1267 = vpack.c.b16 %v1240, %v1237
        %v1268 = vpack.c.b16 %v1241, %v1238
        %v1269 = vpack.c.b16 %v1242, %v1239
        %v1270 = vpack.c.b16 %v1246, %v1243
        %v1271 = vpack.c.b16 %v1247, %v1244
        %v1272 = vpack.c.b16 %v1248, %v1245
        %1297 = vmatprep.subr.bf16.mxu0 %v1250
        %1298 = vmatpush1.bf16.msra.mxu0 %v1249
        %1299 = vmatprep.subr.bf16.mxu0 %v1253
        %1300 = vmatpush1.bf16.msra.mxu0 %v1252
        %1301 = vmatprep.subr.bf16.mxu0 %v1256
        %1302 = vmatpush1.bf16.msra.mxu0 %v1255
        %1303 = vmatprep.subr.bf16.mxu0 %v1259
        %1304 = vmatpush1.bf16.msra.mxu0 %v1258
        %1305 = vmatprep.subr.bf16.mxu0 %v1262
        %1306 = vmatpush1.bf16.msra.mxu0 %v1261
        %1307 = vmatprep.subr.bf16.mxu0 %v1265
        %1308 = vmatpush1.bf16.msra.mxu0 %v1264
        %1309 = vmatprep.subr.bf16.mxu0 %v1268
        %1310 = vmatpush1.bf16.msra.mxu0 %v1267
        %1311 = vmatprep.subr.bf16.mxu0 %v1271
        %1312 = vmatpush1.bf16.msra.mxu0 %v1270
        %1313 = vmatprep.subr.bf16.mxu0 0
        %1314 = vmatpush1.bf16.msra.mxu0 0
        %1315 = vmatprep.subr.bf16.mxu0 0
        %1316 = vmatpush1.bf16.msra.mxu0 0
        %1317 = vmatprep.subr.bf16.mxu0 0
        %1318 = vmatpush1.bf16.msra.mxu0 0
        %1319 = vmatprep.subr.bf16.mxu0 0
        %1320 = vmatpush1.bf16.msra.mxu0 0
        %1321 = vmatprep.subr.bf16.mxu0 0
        %1322 = vmatpush1.bf16.msra.mxu0 0
        %1323 = vmatprep.subr.bf16.mxu0 0
        %1324 = vmatpush1.bf16.msra.mxu0 0
        %1325 = vmatprep.subr.bf16.mxu0 0
        %1326 = vmatpush1.bf16.msra.mxu0 0
        %1327 = vmatprep.subr.bf16.mxu0 0
        %1328 = vmatpush1.bf16.msra.mxu0 0
        %1329 = vmatprep.mubr.bf16.mxu0 0
        %1330 = vmatmul.mubr.bf16.gmra.mrb[0].mxu0 %v1160
        %v1331 = vpop.f32.mrb[0].mxu0
        %v1332 = vadd.f32 0.0, %v1331
        %v1333 = vpop.f32.mrb[0].mxu0
        %v1334 = vadd.f32 0.0, %v1333
        %v1335 = vpop.f32.mrb[0].mxu0
        %v1336 = vadd.f32 0.0, %v1335
        %v1337 = vpop.f32.mrb[0].mxu0
        %v1338 = vadd.f32 0.0, %v1337
        %1339 = vmatprep.mubr.bf16.mxu0 0
        %1340 = vmatmul.mubr.bf16.gmra.mrb[0].mxu0 %v1162
        %v1341 = vpop.f32.mrb[0].mxu0
        %v1342 = vadd.f32 0.0, %v1341
        %v1343 = vpop.f32.mrb[0].mxu0
        %v1344 = vadd.f32 0.0, %v1343
        %v1345 = vpop.f32.mrb[0].mxu0
        %v1346 = vadd.f32 0.0, %v1345
        %v1347 = vpop.f32.mrb[0].mxu0
        %v1348 = vadd.f32 0.0, %v1347
        %1349 = vmatprep.mubr.bf16.mxu0 0
        %1350 = vmatmul.mubr.bf16.gmra.mrb[0].mxu0 %v1164
        %v1351 = vpop.f32.mrb[0].mxu0
        %v1352 = vadd.f32 0.0, %v1351
        %v1353 = vpop.f32.mrb[0].mxu0
        %v1354 = vadd.f32 0.0, %v1353
        %v1355 = vpop.f32.mrb[0].mxu0
        %v1356 = vadd.f32 0.0, %v1355
        %v1357 = vpop.f32.mrb[0].mxu0
        %v1358 = vadd.f32 0.0, %v1357
        %1359 = vmatprep.mubr.bf16.mxu0 0
        %1360 = vmatmul.mubr.bf16.gmra.mrb[0].mxu0 %v1163
        %v1361 = vpop.f32.mrb[0].mxu0
        %v1362 = vadd.f32 0.0, %v1361
        %v1363 = vpop.f32.mrb[0].mxu0
        %v1364 = vadd.f32 0.0, %v1363
        %v1365 = vpop.f32.mrb[0].mxu0
        %v1366 = vadd.f32 0.0, %v1365
        %v1367 = vpop.f32.mrb[0].mxu0
        %v1368 = vadd.f32 0.0, %v1367
        %1369 = vdwg.mxu0
        %1370 = vmatprep.subr.bf16.mxu0 0
        %1371 = vmatpush1.bf16.msra.mxu0 %v1251
        %1372 = vmatprep.subr.bf16.mxu0 0
        %1373 = vmatpush1.bf16.msra.mxu0 %v1254
        %1374 = vmatprep.subr.bf16.mxu0 0
        %1375 = vmatpush1.bf16.msra.mxu0 %v1257
        %1376 = vmatprep.subr.bf16.mxu0 0
        %1377 = vmatpush1.bf16.msra.mxu0 %v1260
        %1378 = vmatprep.subr.bf16.mxu0 0
        %1379 = vmatpush1.bf16.msra.mxu0 %v1263
        %1380 = vmatprep.subr.bf16.mxu0 0
        %1381 = vmatpush1.bf16.msra.mxu0 %v1266
        %1382 = vmatprep.subr.bf16.mxu0 0
        %1383 = vmatpush1.bf16.msra.mxu0 %v1269
        %1384 = vmatprep.subr.bf16.mxu0 0
        %1385 = vmatpush1.bf16.msra.mxu0 %v1272
        %1386 = vmatprep.subr.bf16.mxu0 0
        %1387 = vmatpush1.bf16.msra.mxu0 0
        %1388 = vmatprep.subr.bf16.mxu0 0
        %1389 = vmatpush1.bf16.msra.mxu0 0
        %1390 = vmatprep.subr.bf16.mxu0 0
        %1391 = vmatpush1.bf16.msra.mxu0 0
        %1392 = vmatprep.subr.bf16.mxu0 0
        %1393 = vmatpush1.bf16.msra.mxu0 0
        %1394 = vmatprep.subr.bf16.mxu0 0
        %1395 = vmatpush1.bf16.msra.mxu0 0
        %1396 = vmatprep.subr.bf16.mxu0 0
        %1397 = vmatpush1.bf16.msra.mxu0 0
        %1398 = vmatprep.subr.bf16.mxu0 0
        %1399 = vmatpush1.bf16.msra.mxu0 0
        %1400 = vmatprep.subr.bf16.mxu0 0
        %1401 = vmatpush1.bf16.msra.mxu0 0
        %1402 = vmatprep.mubr.bf16.mxu0 0
        %1403 = vmatmul.mubr.bf16.gmra.mrb[0].mxu0 %v1160
        %v1404 = vpop.f32.mrb[0].mxu0
        %v1405 = vadd.f32 0.0, %v1404
        %v1406 = vpop.f32.mrb[0].mxu0
        %v1407 = vpop.f32.mrb[0].mxu0
        %v1408 = vadd.f32 0.0, %v1407
        %v1409 = vpop.f32.mrb[0].mxu0
        %1410 = vmatprep.mubr.bf16.mxu0 0
        %1411 = vmatmul.mubr.bf16.gmra.mrb[0].mxu0 %v1162
        %v1412 = vpop.f32.mrb[0].mxu0
        %v1413 = vadd.f32 0.0, %v1412
        %v1414 = vpop.f32.mrb[0].mxu0
        %v1415 = vpop.f32.mrb[0].mxu0
        %v1416 = vadd.f32 0.0, %v1415
        %v1417 = vpop.f32.mrb[0].mxu0
        %1418 = vmatprep.mubr.bf16.mxu0 0
        %1419 = vmatmul.mubr.bf16.gmra.mrb[0].mxu0 %v1164
        %v1420 = vpop.f32.mrb[0].mxu0
        %v1421 = vadd.f32 0.0, %v1420
        %v1422 = vpop.f32.mrb[0].mxu0
        %v1423 = vpop.f32.mrb[0].mxu0
        %v1424 = vadd.f32 0.0, %v1423
        %v1425 = vpop.f32.mrb[0].mxu0
        %1426 = vmatprep.mubr.bf16.mxu0 0
        %1427 = vmatmul.mubr.bf16.gmra.mrb[0].mxu0 %v1163
        %v1428 = vpop.f32.mrb[0].mxu0
        %v1429 = vadd.f32 0.0, %v1428
        %v1430 = vpop.f32.mrb[0].mxu0
        %v1431 = vpop.f32.mrb[0].mxu0
        %v1432 = vadd.f32 0.0, %v1431
        %v1433 = vpop.f32.mrb[0].mxu0
        %1434 = vdwg.mxu0
        %v1435 = vadd.f32 %v1021, %v1332
        %v1436 = vadd.f32 %v1023, %v1334
        %v1437 = vadd.f32 %v1094, %v1405
        %v1438 = vadd.f32 %v1025, %v1336
        %v1439 = vadd.f32 %v1027, %v1338
        %v1440 = vadd.f32 %v1097, %v1408
        %v1441 = vadd.f32 %v1031, %v1342
        %v1442 = vadd.f32 %v1033, %v1344
        %v1443 = vadd.f32 %v1102, %v1413
        %v1444 = vadd.f32 %v1035, %v1346
        %v1445 = vadd.f32 %v1037, %v1348
        %v1446 = vadd.f32 %v1105, %v1416
        %v1447 = vadd.f32 %v1041, %v1352
        %v1448 = vadd.f32 %v1043, %v1354
        %v1449 = vadd.f32 %v1110, %v1421
        %v1450 = vadd.f32 %v1045, %v1356
        %v1451 = vadd.f32 %v1047, %v1358
        %v1452 = vadd.f32 %v1113, %v1424
        %v1453 = vadd.f32 %v1051, %v1362
        %v1454 = vadd.f32 %v1053, %v1364
        %v1455 = vadd.f32 %v1118, %v1429
        %v1456 = vadd.f32 %v1055, %v1366
        %v1457 = vadd.f32 %v1057, %v1368
        %v1458 = vadd.f32 %v1121, %v1432
        %v1459 = vld [vmem:[%s2] sm:$0x7]
        %v1461 = vlaneseq
        %v1462 = vshrl.u32 %v1461, 7
        %v1463 = vsub.s32 0, %v1462
        %v1464 = vrot.slane %v1459, %v1463
        %v1465 = vlaneseq
        %v1466 = vshrl.u32 %v1465, 7
        %v1467 = vsub.s32 1, %v1466
        %v1468 = vrot.slane %v1459, %v1467
        %v1469 = vlaneseq
        %v1470 = vshrl.u32 %v1469, 7
        %v1471 = vsub.s32 2, %v1470
        %v1472 = vrot.slane %v1459, %v1471
        %v1476 = vadd.f32 %v1435, %v1464
        %v1477 = vadd.f32 %v1436, %v1468
        %v1478 = vadd.f32 %v1437, %v1472
        %v1479 = vadd.f32 %v1438, %v1464
        %v1480 = vadd.f32 %v1439, %v1468
        %v1481 = vadd.f32 %v1440, %v1472
        %v1482 = vadd.f32 %v1441, %v1464
        %v1483 = vadd.f32 %v1442, %v1468
        %v1484 = vadd.f32 %v1443, %v1472
        %v1485 = vadd.f32 %v1444, %v1464
        %v1486 = vadd.f32 %v1445, %v1468
        %v1487 = vadd.f32 %v1446, %v1472
        %v1488 = vadd.f32 %v1447, %v1464
        %v1489 = vadd.f32 %v1448, %v1468
        %v1490 = vadd.f32 %v1449, %v1472
        %v1491 = vadd.f32 %v1450, %v1464
        %v1492 = vadd.f32 %v1451, %v1468
        %v1493 = vadd.f32 %v1452, %v1472
        %v1494 = vadd.f32 %v1453, %v1464
        %v1495 = vadd.f32 %v1454, %v1468
        %v1496 = vadd.f32 %v1455, %v1472
        %v1497 = vadd.f32 %v1456, %v1464
        %v1498 = vadd.f32 %v1457, %v1468
        %v1499 = vadd.f32 %v1458, %v1472
        %v1500 = vmax.f32 %v1476, 0.0
        %v1501 = vmax.f32 %v1477, 0.0
        %v1502 = vmax.f32 %v1478, 0.0
        %v1503 = vmax.f32 %v1479, 0.0
        %v1504 = vmax.f32 %v1480, 0.0
        %v1505 = vmax.f32 %v1481, 0.0
        %v1506 = vmax.f32 %v1482, 0.0
        %v1507 = vmax.f32 %v1483, 0.0
        %v1508 = vmax.f32 %v1484, 0.0
        %v1509 = vmax.f32 %v1485, 0.0
        %v1510 = vmax.f32 %v1486, 0.0
        %v1511 = vmax.f32 %v1487, 0.0
        %v1512 = vmax.f32 %v1488, 0.0
        %v1513 = vmax.f32 %v1489, 0.0
        %v1514 = vmax.f32 %v1490, 0.0
        %v1515 = vmax.f32 %v1491, 0.0
        %v1516 = vmax.f32 %v1492, 0.0
        %v1517 = vmax.f32 %v1493, 0.0
        %v1518 = vmax.f32 %v1494, 0.0
        %v1519 = vmax.f32 %v1495, 0.0
        %v1520 = vmax.f32 %v1496, 0.0
        %v1521 = vmax.f32 %v1497, 0.0
        %v1522 = vmax.f32 %v1498, 0.0
        %v1523 = vmax.f32 %v1499, 0.0
        %vm1524 = vcmask 1045504
        %v1525 = vsel %vm1524, %v1521, 0.0
        %v1526 = vlaneseq
        %v1527 = vshrl.u32 %v1526, 7
        %v1528 = vadd.s32 %v1527, 8
        %v1529 = vadd.s32 %v1527, 16
        %v1530 = vadd.s32 %v1527, 24
        %vm1531 = vcmp.lt.s32.totalorder %v1527, 30
        %vm1532 = vcmp.lt.s32.totalorder %v1528, 30
        %vm1533 = vcmp.lt.s32.totalorder %v1529, 30
        %vm1534 = vcmp.lt.s32.totalorder %v1530, 30
        %v1535 = vsel %vm1531, 1, 0
        %v1536 = vsel %vm1532, 1, 0
        %v1537 = vsel %vm1533, 1, 0
        %v1538 = vsel %vm1534, 1, 0
        %vm1539 = vcmp.eq.s32.totalorder %v1535, 1
        %vm1540 = vcmp.eq.s32.totalorder %v1536, 1
        %vm1541 = vcmp.eq.s32.totalorder %v1537, 1
        %vm1542 = vcmp.eq.s32.totalorder %v1538, 1
        %v1543 = vsel %vm1539, %v1500, 0.0
        %v1544 = vsel %vm1540, %v1503, 0.0
        %v1545 = vsel %vm1541, %v1506, 0.0
        %v1546 = vsel %vm1542, %v1509, 0.0
        %v1547 = vsel %vm1539, %v1512, 0.0
        %v1548 = vsel %vm1540, %v1515, 0.0
        %v1549 = vsel %vm1541, %v1518, 0.0
        %v1550 = vsel %vm1542, %v1525, 0.0
        %v1551 = vmax.f32 %v1543, %v1545
        %v1552 = vmax.f32 %v1544, %v1546
        %v1553 = vmax.f32 %v1551, %v1552
        %v1554 = vrot.slane %v1553, 4
        %v1555 = vmax.f32 %v1553, %v1554
        %v1556 = vrot.slane %v1555, 2
        %v1557 = vmax.f32 %v1555, %v1556
        %v1558 = vrot.slane %v1557, 1
        %v1559 = vmax.f32 %v1557, %v1558
        %v1560 = vmax.f32 %v1547, %v1549
        %v1561 = vmax.f32 %v1548, %v1550
        %v1562 = vmax.f32 %v1560, %v1561
        %v1563 = vrot.slane %v1562, 4
        %v1564 = vmax.f32 %v1562, %v1563
        %v1565 = vrot.slane %v1564, 2
        %v1566 = vmax.f32 %v1564, %v1565
        %v1567 = vrot.slane %v1566, 1
        %v1568 = vmax.f32 %v1566, %v1567
        %v1569 = vpack.c.bf16 %v1504, %v1501
        %v1570 = vpack.c.bf16 %v1510, %v1507
        %v1571 = vpack.c.bf16 %v1516, %v1513
        %v1572 = vpack.c.bf16 %v1522, %v1519
        %v1573 = vld [vmem:[#allocation4] sm:$0xf]
        %v1574 = vld [vmem:[#allocation4 + $0x4] sm:$0xf]
        %v1575 = vld [vmem:[#allocation4 + $0x8] sm:$0xf]
        %v1576 = vld [vmem:[#allocation4 + $0xc] sm:$0xf]
        %v1577 = vld [vmem:[#allocation4 + $0x10] sm:$0xf]
        %v1578 = vld [vmem:[#allocation4 + $0x14] sm:$0xf]
        %v1579 = vld [vmem:[#allocation4 + $0x18] sm:$0xf]
        %v1580 = vld [vmem:[#allocation4 + $0x1c] sm:$0xf]
        %v1581 = vld [vmem:[#allocation4 + $0x20] sm:$0xf]
        %v1582 = vld [vmem:[#allocation4 + $0x24] sm:$0xf]
        %v1583 = vld [vmem:[#allocation4 + $0x28] sm:$0xf]
        %v1584 = vld [vmem:[#allocation4 + $0x2c] sm:$0xf]
        %v1585 = vld [vmem:[#allocation4 + $0x30] sm:$0xf]
        %v1586 = vld [vmem:[#allocation4 + $0x34] sm:$0xf]
        %v1587 = vld [vmem:[#allocation4 + $0x38] sm:$0xf]
        %v1588 = vld [vmem:[#allocation4 + $0x3c] sm:$0xf]
        %s1589 = scalar_lea.vmem [#allocation4], 64
        %v1590 = vld [vmem:[%s1589] sm:$0xf]
        %v1591 = vld [vmem:[%s1589 + $0x4] sm:$0xf]
        %v1592 = vld [vmem:[%s1589 + $0x8] sm:$0xf]
        %v1593 = vld [vmem:[%s1589 + $0xc] sm:$0xf]
        %v1594 = vld [vmem:[%s1589 + $0x10] sm:$0xf]
        %v1595 = vld [vmem:[%s1589 + $0x14] sm:$0xf]
        %v1596 = vld [vmem:[%s1589 + $0x18] sm:$0xf]
        %v1597 = vld [vmem:[%s1589 + $0x1c] sm:$0xf]
        %v1598 = vld [vmem:[%s1589 + $0x20] sm:$0xf]
        %v1599 = vld [vmem:[%s1589 + $0x24] sm:$0xf]
        %v1600 = vld [vmem:[%s1589 + $0x28] sm:$0xf]
        %v1601 = vld [vmem:[%s1589 + $0x2c] sm:$0xf]
        %v1602 = vld [vmem:[%s1589 + $0x30] sm:$0xf]
        %v1603 = vld [vmem:[%s1589 + $0x34] sm:$0xf]
        %v1604 = vld [vmem:[%s1589 + $0x38] sm:$0xf]
        %v1605 = vld [vmem:[%s1589 + $0x3c] sm:$0xf]
        %v1607 = vshrl.u32 %v1569, 16
        %v1609 = vshll.u32 %v1569, 16
        %v1611 = vrot.slane %v1609, 1
        %v1612 = vor.u32 %v1607, %v1611
        %v1614 = vshll.u32 %v1570, 16
        %v1616 = vrot.slane %v1614, 1
        %v1617 = vsel %vm552, %v1612, %v1616
        %v1618 = vshrl.u32 %v1570, 16
        %v1620 = vor.u32 %v1618, %v1616
        %v1622 = vshll.u32 %v1571, 16
        %v1624 = vrot.slane %v1622, 1
        %v1625 = vsel %vm552, %v1620, %v1624
        %v1626 = vshrl.u32 %v1571, 16
        %v1628 = vor.u32 %v1626, %v1624
        %v1630 = vshll.u32 %v1572, 16
        %v1632 = vrot.slane %v1630, 1
        %v1633 = vsel %vm552, %v1628, %v1632
        %v1634 = vshrl.u32 %v1572, 16
        %v1636 = vor.u32 %v1634, %v1632
        %v1657 = vunpack.c.l.b16 %v1590
        %v1658 = vunpack.c.l.b16 %v1591
        %v1659 = vunpack.c.l.b16 %v1592
        %v1660 = vunpack.c.l.b16 %v1593
        %v1661 = vunpack.c.l.b16 %v1594
        %v1662 = vunpack.c.l.b16 %v1595
        %v1663 = vunpack.c.l.b16 %v1596
        %v1664 = vunpack.c.l.b16 %v1597
        %v1665 = vunpack.c.l.b16 %v1598
        %v1666 = vunpack.c.l.b16 %v1599
        %v1667 = vunpack.c.l.b16 %v1600
        %v1668 = vunpack.c.l.b16 %v1601
        %v1669 = vunpack.c.l.b16 %v1602
        %v1670 = vunpack.c.l.b16 %v1603
        %v1671 = vunpack.c.l.b16 %v1604
        %v1672 = vunpack.c.l.b16 %v1605
        %v1673 = vpack.c.b16 %v1658, %v1657
        %v1674 = vpack.c.b16 %v1660, %v1659
        %v1675 = vpack.c.b16 %v1662, %v1661
        %v1676 = vpack.c.b16 %v1664, %v1663
        %v1677 = vpack.c.b16 %v1666, %v1665
        %v1678 = vpack.c.b16 %v1668, %v1667
        %v1679 = vpack.c.b16 %v1670, %v1669
        %v1680 = vpack.c.b16 %v1672, %v1671
        %1689 = vmatprep.subr.bf16.mxu0 0
        %1690 = vmatpush1.bf16.msra.mxu0 %v1673
        %1691 = vmatprep.subr.bf16.mxu0 0
        %1692 = vmatpush1.bf16.msra.mxu0 %v1674
        %1693 = vmatprep.subr.bf16.mxu0 0
        %1694 = vmatpush1.bf16.msra.mxu0 %v1675
        %1695 = vmatprep.subr.bf16.mxu0 0
        %1696 = vmatpush1.bf16.msra.mxu0 %v1676
        %1697 = vmatprep.subr.bf16.mxu0 0
        %1698 = vmatpush1.bf16.msra.mxu0 %v1677
        %1699 = vmatprep.subr.bf16.mxu0 0
        %1700 = vmatpush1.bf16.msra.mxu0 %v1678
        %1701 = vmatprep.subr.bf16.mxu0 0
        %1702 = vmatpush1.bf16.msra.mxu0 %v1679
        %1703 = vmatprep.subr.bf16.mxu0 0
        %1704 = vmatpush1.bf16.msra.mxu0 %v1680
        %1705 = vmatprep.subr.bf16.mxu0 0
        %1706 = vmatpush1.bf16.msra.mxu0 0
        %1707 = vmatprep.subr.bf16.mxu0 0
        %1708 = vmatpush1.bf16.msra.mxu0 0
        %1709 = vmatprep.subr.bf16.mxu0 0
        %1710 = vmatpush1.bf16.msra.mxu0 0
        %1711 = vmatprep.subr.bf16.mxu0 0
        %1712 = vmatpush1.bf16.msra.mxu0 0
        %1713 = vmatprep.subr.bf16.mxu0 0
        %1714 = vmatpush1.bf16.msra.mxu0 0
        %1715 = vmatprep.subr.bf16.mxu0 0
        %1716 = vmatpush1.bf16.msra.mxu0 0
        %1717 = vmatprep.subr.bf16.mxu0 0
        %1718 = vmatpush1.bf16.msra.mxu0 0
        %1719 = vmatprep.subr.bf16.mxu0 0
        %1720 = vmatpush1.bf16.msra.mxu0 0
        %1721 = vmatprep.mubr.bf16.mxu0 0
        %1722 = vmatmul.mubr.bf16.gmra.mrb[0].mxu0 %v1617
        %v1723 = vpop.f32.mrb[0].mxu0
        %v1724 = vadd.f32 0.0, %v1723
        %v1725 = vpop.f32.mrb[0].mxu0
        %v1726 = vpop.f32.mrb[0].mxu0
        %v1727 = vadd.f32 0.0, %v1726
        %v1728 = vpop.f32.mrb[0].mxu0
        %1729 = vmatprep.mubr.bf16.mxu0 0
        %1730 = vmatmul.mubr.bf16.gmra.mrb[0].mxu0 %v1625
        %v1731 = vpop.f32.mrb[0].mxu0
        %v1732 = vadd.f32 0.0, %v1731
        %v1733 = vpop.f32.mrb[0].mxu0
        %v1734 = vpop.f32.mrb[0].mxu0
        %v1735 = vadd.f32 0.0, %v1734
        %v1736 = vpop.f32.mrb[0].mxu0
        %1737 = vmatprep.mubr.bf16.mxu0 0
        %1738 = vmatmul.mubr.bf16.gmra.mrb[0].mxu0 %v1633
        %v1739 = vpop.f32.mrb[0].mxu0
        %v1740 = vadd.f32 0.0, %v1739
        %v1741 = vpop.f32.mrb[0].mxu0
        %v1742 = vpop.f32.mrb[0].mxu0
        %v1743 = vadd.f32 0.0, %v1742
        %v1744 = vpop.f32.mrb[0].mxu0
        %1745 = vmatprep.mubr.bf16.mxu0 0
        %1746 = vmatmul.mubr.bf16.gmra.mrb[0].mxu0 %v1636
        %v1747 = vpop.f32.mrb[0].mxu0
        %v1748 = vadd.f32 0.0, %v1747
        %v1749 = vpop.f32.mrb[0].mxu0
        %v1750 = vpop.f32.mrb[0].mxu0
        %v1751 = vadd.f32 0.0, %v1750
        %v1752 = vpop.f32.mrb[0].mxu0
        %1753 = vdwg.mxu0
        %v1770 = vunpack.c.l.b16 %v1573
        %v1771 = vunpack.c.l.b16 %v1574
        %v1772 = vunpack.c.l.b16 %v1575
        %v1773 = vunpack.c.l.b16 %v1576
        %v1774 = vunpack.c.l.b16 %v1577
        %v1775 = vunpack.c.l.b16 %v1578
        %v1776 = vunpack.c.l.b16 %v1579
        %v1777 = vunpack.c.l.b16 %v1580
        %v1778 = vunpack.c.l.b16 %v1581
        %v1779 = vunpack.c.l.b16 %v1582
        %v1780 = vunpack.c.l.b16 %v1583
        %v1781 = vunpack.c.l.b16 %v1584
        %v1782 = vunpack.c.l.b16 %v1585
        %v1783 = vunpack.c.l.b16 %v1586
        %v1784 = vunpack.c.l.b16 %v1587
        %v1785 = vunpack.c.l.b16 %v1588
        %v1786 = vpack.c.b16 %v1771, %v1770
        %v1787 = vpack.c.b16 %v1773, %v1772
        %v1788 = vpack.c.b16 %v1775, %v1774
        %v1789 = vpack.c.b16 %v1777, %v1776
        %v1790 = vpack.c.b16 %v1779, %v1778
        %v1791 = vpack.c.b16 %v1781, %v1780
        %v1792 = vpack.c.b16 %v1783, %v1782
        %v1793 = vpack.c.b16 %v1785, %v1784
        %1802 = vmatprep.subr.bf16.mxu0 0
        %1803 = vmatpush1.bf16.msra.mxu0 %v1786
        %1804 = vmatprep.subr.bf16.mxu0 0
        %1805 = vmatpush1.bf16.msra.mxu0 %v1787
        %1806 = vmatprep.subr.bf16.mxu0 0
        %1807 = vmatpush1.bf16.msra.mxu0 %v1788
        %1808 = vmatprep.subr.bf16.mxu0 0
        %1809 = vmatpush1.bf16.msra.mxu0 %v1789
        %1810 = vmatprep.subr.bf16.mxu0 0
        %1811 = vmatpush1.bf16.msra.mxu0 %v1790
        %1812 = vmatprep.subr.bf16.mxu0 0
        %1813 = vmatpush1.bf16.msra.mxu0 %v1791
        %1814 = vmatprep.subr.bf16.mxu0 0
        %1815 = vmatpush1.bf16.msra.mxu0 %v1792
        %1816 = vmatprep.subr.bf16.mxu0 0
        %1817 = vmatpush1.bf16.msra.mxu0 %v1793
        %1818 = vmatprep.subr.bf16.mxu0 0
        %1819 = vmatpush1.bf16.msra.mxu0 0
        %1820 = vmatprep.subr.bf16.mxu0 0
        %1821 = vmatpush1.bf16.msra.mxu0 0
        %1822 = vmatprep.subr.bf16.mxu0 0
        %1823 = vmatpush1.bf16.msra.mxu0 0
        %1824 = vmatprep.subr.bf16.mxu0 0
        %1825 = vmatpush1.bf16.msra.mxu0 0
        %1826 = vmatprep.subr.bf16.mxu0 0
        %1827 = vmatpush1.bf16.msra.mxu0 0
        %1828 = vmatprep.subr.bf16.mxu0 0
        %1829 = vmatpush1.bf16.msra.mxu0 0
        %1830 = vmatprep.subr.bf16.mxu0 0
        %1831 = vmatpush1.bf16.msra.mxu0 0
        %1832 = vmatprep.subr.bf16.mxu0 0
        %1833 = vmatpush1.bf16.msra.mxu0 0
        %1834 = vmatprep.mubr.bf16.mxu0 0
        %1835 = vmatmul.mubr.bf16.gmra.mrb[0].mxu0 %v1569
        %v1836 = vpop.f32.mrb[0].mxu0
        %v1837 = vadd.f32 %v1724, %v1836
        %v1838 = vpop.f32.mrb[0].mxu0
        %v1839 = vpop.f32.mrb[0].mxu0
        %v1840 = vadd.f32 %v1727, %v1839
        %v1841 = vpop.f32.mrb[0].mxu0
        %1842 = vmatprep.mubr.bf16.mxu0 0
        %1843 = vmatmul.mubr.bf16.gmra.mrb[0].mxu0 %v1570
        %v1844 = vpop.f32.mrb[0].mxu0
        %v1845 = vadd.f32 %v1732, %v1844
        %v1846 = vpop.f32.mrb[0].mxu0
        %v1847 = vpop.f32.mrb[0].mxu0
        %v1848 = vadd.f32 %v1735, %v1847
        %v1849 = vpop.f32.mrb[0].mxu0
        %1850 = vmatprep.mubr.bf16.mxu0 0
        %1851 = vmatmul.mubr.bf16.gmra.mrb[0].mxu0 %v1571
        %v1852 = vpop.f32.mrb[0].mxu0
        %v1853 = vadd.f32 %v1740, %v1852
        %v1854 = vpop.f32.mrb[0].mxu0
        %v1855 = vpop.f32.mrb[0].mxu0
        %v1856 = vadd.f32 %v1743, %v1855
        %v1857 = vpop.f32.mrb[0].mxu0
        %1858 = vmatprep.mubr.bf16.mxu0 0
        %1859 = vmatmul.mubr.bf16.gmra.mrb[0].mxu0 %v1572
        %v1860 = vpop.f32.mrb[0].mxu0
        %v1861 = vadd.f32 %v1748, %v1860
        %v1862 = vpop.f32.mrb[0].mxu0
        %v1863 = vpop.f32.mrb[0].mxu0
        %v1864 = vadd.f32 %v1751, %v1863
        %v1865 = vpop.f32.mrb[0].mxu0
        %1866 = vdwg.mxu0
        %s1867 = scalar_lea.vmem [#allocation4], 128
        %v1868 = vld [vmem:[%s1867] sm:$0xf]
        %v1869 = vld [vmem:[%s1867 + $0x4] sm:$0xf]
        %v1870 = vld [vmem:[%s1867 + $0x8] sm:$0xf]
        %v1871 = vld [vmem:[%s1867 + $0xc] sm:$0xf]
        %v1872 = vld [vmem:[%s1867 + $0x10] sm:$0xf]
        %v1873 = vld [vmem:[%s1867 + $0x14] sm:$0xf]
        %v1874 = vld [vmem:[%s1867 + $0x18] sm:$0xf]
        %v1875 = vld [vmem:[%s1867 + $0x1c] sm:$0xf]
        %v1876 = vld [vmem:[%s1867 + $0x20] sm:$0xf]
        %v1877 = vld [vmem:[%s1867 + $0x24] sm:$0xf]
        %v1878 = vld [vmem:[%s1867 + $0x28] sm:$0xf]
        %v1879 = vld [vmem:[%s1867 + $0x2c] sm:$0xf]
        %v1880 = vld [vmem:[%s1867 + $0x30] sm:$0xf]
        %v1881 = vld [vmem:[%s1867 + $0x34] sm:$0xf]
        %v1882 = vld [vmem:[%s1867 + $0x38] sm:$0xf]
        %v1883 = vld [vmem:[%s1867 + $0x3c] sm:$0xf]
        %v1888 = vrot.slane %v1569, 1
        %v1889 = vrot.slane %v1570, 1
        %v1890 = vsel %vm1157, %v1888, %v1889
        %v1891 = vrot.slane %v1571, 1
        %v1892 = vsel %vm1157, %v1889, %v1891
        %v1893 = vrot.slane %v1572, 1
        %v1894 = vsel %vm1157, %v1891, %v1893
        %v1915 = vunpack.c.l.b16 %v1868
        %v1916 = vunpack.c.l.b16 %v1869
        %v1917 = vunpack.c.l.b16 %v1870
        %v1918 = vunpack.c.l.b16 %v1871
        %v1919 = vunpack.c.l.b16 %v1872
        %v1920 = vunpack.c.l.b16 %v1873
        %v1921 = vunpack.c.l.b16 %v1874
        %v1922 = vunpack.c.l.b16 %v1875
        %v1923 = vunpack.c.l.b16 %v1876
        %v1924 = vunpack.c.l.b16 %v1877
        %v1925 = vunpack.c.l.b16 %v1878
        %v1926 = vunpack.c.l.b16 %v1879
        %v1927 = vunpack.c.l.b16 %v1880
        %v1928 = vunpack.c.l.b16 %v1881
        %v1929 = vunpack.c.l.b16 %v1882
        %v1930 = vunpack.c.l.b16 %v1883
        %v1931 = vpack.c.b16 %v1916, %v1915
        %v1932 = vpack.c.b16 %v1918, %v1917
        %v1933 = vpack.c.b16 %v1920, %v1919
        %v1934 = vpack.c.b16 %v1922, %v1921
        %v1935 = vpack.c.b16 %v1924, %v1923
        %v1936 = vpack.c.b16 %v1926, %v1925
        %v1937 = vpack.c.b16 %v1928, %v1927
        %v1938 = vpack.c.b16 %v1930, %v1929
        %1947 = vmatprep.subr.bf16.mxu0 0
        %1948 = vmatpush1.bf16.msra.mxu0 %v1931
        %1949 = vmatprep.subr.bf16.mxu0 0
        %1950 = vmatpush1.bf16.msra.mxu0 %v1932
        %1951 = vmatprep.subr.bf16.mxu0 0
        %1952 = vmatpush1.bf16.msra.mxu0 %v1933
        %1953 = vmatprep.subr.bf16.mxu0 0
        %1954 = vmatpush1.bf16.msra.mxu0 %v1934
        %1955 = vmatprep.subr.bf16.mxu0 0
        %1956 = vmatpush1.bf16.msra.mxu0 %v1935
        %1957 = vmatprep.subr.bf16.mxu0 0
        %1958 = vmatpush1.bf16.msra.mxu0 %v1936
        %1959 = vmatprep.subr.bf16.mxu0 0
        %1960 = vmatpush1.bf16.msra.mxu0 %v1937
        %1961 = vmatprep.subr.bf16.mxu0 0
        %1962 = vmatpush1.bf16.msra.mxu0 %v1938
        %1963 = vmatprep.subr.bf16.mxu0 0
        %1964 = vmatpush1.bf16.msra.mxu0 0
        %1965 = vmatprep.subr.bf16.mxu0 0
        %1966 = vmatpush1.bf16.msra.mxu0 0
        %1967 = vmatprep.subr.bf16.mxu0 0
        %1968 = vmatpush1.bf16.msra.mxu0 0
        %1969 = vmatprep.subr.bf16.mxu0 0
        %1970 = vmatpush1.bf16.msra.mxu0 0
        %1971 = vmatprep.subr.bf16.mxu0 0
        %1972 = vmatpush1.bf16.msra.mxu0 0
        %1973 = vmatprep.subr.bf16.mxu0 0
        %1974 = vmatpush1.bf16.msra.mxu0 0
        %1975 = vmatprep.subr.bf16.mxu0 0
        %1976 = vmatpush1.bf16.msra.mxu0 0
        %1977 = vmatprep.subr.bf16.mxu0 0
        %1978 = vmatpush1.bf16.msra.mxu0 0
        %1979 = vmatprep.mubr.bf16.mxu0 0
        %1980 = vmatmul.mubr.bf16.gmra.mrb[0].mxu0 %v1890
        %v1981 = vpop.f32.mrb[0].mxu0
        %v1982 = vadd.f32 0.0, %v1981
        %v1983 = vpop.f32.mrb[0].mxu0
        %v1984 = vpop.f32.mrb[0].mxu0
        %v1985 = vadd.f32 0.0, %v1984
        %v1986 = vpop.f32.mrb[0].mxu0
        %1987 = vmatprep.mubr.bf16.mxu0 0
        %1988 = vmatmul.mubr.bf16.gmra.mrb[0].mxu0 %v1892
        %v1989 = vpop.f32.mrb[0].mxu0
        %v1990 = vadd.f32 0.0, %v1989
        %v1991 = vpop.f32.mrb[0].mxu0
        %v1992 = vpop.f32.mrb[0].mxu0
        %v1993 = vadd.f32 0.0, %v1992
        %v1994 = vpop.f32.mrb[0].mxu0
        %1995 = vmatprep.mubr.bf16.mxu0 0
        %1996 = vmatmul.mubr.bf16.gmra.mrb[0].mxu0 %v1894
        %v1997 = vpop.f32.mrb[0].mxu0
        %v1998 = vadd.f32 0.0, %v1997
        %v1999 = vpop.f32.mrb[0].mxu0
        %v2000 = vpop.f32.mrb[0].mxu0
        %v2001 = vadd.f32 0.0, %v2000
        %v2002 = vpop.f32.mrb[0].mxu0
        %2003 = vmatprep.mubr.bf16.mxu0 0
        %2004 = vmatmul.mubr.bf16.gmra.mrb[0].mxu0 %v1893
        %v2005 = vpop.f32.mrb[0].mxu0
        %v2006 = vadd.f32 0.0, %v2005
        %v2007 = vpop.f32.mrb[0].mxu0
        %v2008 = vpop.f32.mrb[0].mxu0
        %v2009 = vadd.f32 0.0, %v2008
        %v2010 = vpop.f32.mrb[0].mxu0
        %2011 = vdwg.mxu0
        %v2012 = vadd.f32 %v1837, %v1982
        %v2013 = vadd.f32 %v1840, %v1985
        %v2014 = vadd.f32 %v1845, %v1990
        %v2015 = vadd.f32 %v1848, %v1993
        %v2016 = vadd.f32 %v1853, %v1998
        %v2017 = vadd.f32 %v1856, %v2001
        %v2018 = vadd.f32 %v1861, %v2006
        %v2019 = vadd.f32 %v1864, %v2009
        %v2020 = vld [vmem:[%s4] sm:$0x1]
        %v2022 = vlaneseq
        %v2023 = vshrl.u32 %v2022, 7
        %v2024 = vsub.s32 0, %v2023
        %v2025 = vrot.slane %v2020, %v2024
        %v2027 = vadd.f32 %v2012, %v2025
        %v2028 = vadd.f32 %v2013, %v2025
        %v2029 = vadd.f32 %v2014, %v2025
        %v2030 = vadd.f32 %v2015, %v2025
        %v2031 = vadd.f32 %v2016, %v2025
        %v2032 = vadd.f32 %v2017, %v2025
        %v2033 = vadd.f32 %v2018, %v2025
        %v2034 = vadd.f32 %v2019, %v2025
        %v2035 = vmax.f32 %v2027, 0.0
        %v2036 = vmax.f32 %v2028, 0.0
        %v2037 = vmax.f32 %v2029, 0.0
        %v2038 = vmax.f32 %v2030, 0.0
        %v2039 = vmax.f32 %v2031, 0.0
        %v2040 = vmax.f32 %v2032, 0.0
        %v2041 = vmax.f32 %v2033, 0.0
        %v2042 = vmax.f32 %v2034, 0.0
        %vm2043 = vcmask 1043456
        %v2044 = vsel %vm2043, %v2042, 0.0
        %vm2045 = vcmp.lt.s32.totalorder %v1527, 28
        %vm2046 = vcmp.lt.s32.totalorder %v1528, 28
        %vm2047 = vcmp.lt.s32.totalorder %v1529, 28
        %vm2048 = vcmp.lt.s32.totalorder %v1530, 28
        %v2049 = vsel %vm2045, 1, 0
        %v2050 = vsel %vm2046, 1, 0
        %v2051 = vsel %vm2047, 1, 0
        %v2052 = vsel %vm2048, 1, 0
        %vm2053 = vcmp.eq.s32.totalorder %v2049, 1
        %vm2054 = vcmp.eq.s32.totalorder %v2050, 1
        %vm2055 = vcmp.eq.s32.totalorder %v2051, 1
        %vm2056 = vcmp.eq.s32.totalorder %v2052, 1
        %v2057 = vsel %vm2053, %v2035, 0.0
        %v2058 = vsel %vm2054, %v2036, 0.0
        %v2059 = vsel %vm2055, %v2037, 0.0
        %v2060 = vsel %vm2056, %v2038, 0.0
        %v2061 = vsel %vm2053, %v2039, 0.0
        %v2062 = vsel %vm2054, %v2040, 0.0
        %v2063 = vsel %vm2055, %v2041, 0.0
        %v2064 = vsel %vm2056, %v2044, 0.0
        %v2065 = vmax.f32 %v2057, %v2059
        %v2066 = vmax.f32 %v2058, %v2060
        %v2067 = vmax.f32 %v2065, %v2066
        %v2068 = vrot.slane %v2067, 4
        %v2069 = vmax.f32 %v2067, %v2068
        %v2070 = vrot.slane %v2069, 2
        %v2071 = vmax.f32 %v2069, %v2070
        %v2072 = vrot.slane %v2071, 1
        %v2073 = vmax.f32 %v2071, %v2072
        %v2074 = vmax.f32 %v2061, %v2063
        %v2075 = vmax.f32 %v2062, %v2064
        %v2076 = vmax.f32 %v2074, %v2075
        %v2077 = vrot.slane %v2076, 4
        %v2078 = vmax.f32 %v2076, %v2077
        %v2079 = vrot.slane %v2078, 2
        %v2080 = vmax.f32 %v2078, %v2079
        %v2081 = vrot.slane %v2080, 1
        %v2082 = vmax.f32 %v2080, %v2081
        %v2083 = vpack.c.bf16 %v1505, %v1502
        %v2084 = vpack.c.bf16 %v1511, %v1508
        %v2085 = vpack.c.bf16 %v1517, %v1514
        %v2086 = vpack.c.bf16 %v1523, %v1520
        %v2087 = vld [vmem:[#allocation6] sm:$0xf]
        %v2088 = vld [vmem:[#allocation6 + $0x4] sm:$0xf]
        %v2089 = vld [vmem:[#allocation6 + $0x8] sm:$0xf]
        %v2090 = vld [vmem:[#allocation6 + $0xc] sm:$0xf]
        %v2091 = vld [vmem:[#allocation6 + $0x10] sm:$0xf]
        %v2092 = vld [vmem:[#allocation6 + $0x14] sm:$0xf]
        %v2093 = vld [vmem:[#allocation6 + $0x18] sm:$0xf]
        %v2094 = vld [vmem:[#allocation6 + $0x1c] sm:$0xf]
        %v2095 = vld [vmem:[#allocation6 + $0x20] sm:$0xf]
        %v2096 = vld [vmem:[#allocation6 + $0x24] sm:$0xf]
        %v2097 = vld [vmem:[#allocation6 + $0x28] sm:$0xf]
        %v2098 = vld [vmem:[#allocation6 + $0x2c] sm:$0xf]
        %v2099 = vld [vmem:[#allocation6 + $0x30] sm:$0xf]
        %v2100 = vld [vmem:[#allocation6 + $0x34] sm:$0xf]
        %v2101 = vld [vmem:[#allocation6 + $0x38] sm:$0xf]
        %v2102 = vld [vmem:[#allocation6 + $0x3c] sm:$0xf]
        %s2103 = scalar_lea.vmem [#allocation6], 64
        %v2104 = vld [vmem:[%s2103] sm:$0xf]
        %v2105 = vld [vmem:[%s2103 + $0x4] sm:$0xf]
        %v2106 = vld [vmem:[%s2103 + $0x8] sm:$0xf]
        %v2107 = vld [vmem:[%s2103 + $0xc] sm:$0xf]
        %v2108 = vld [vmem:[%s2103 + $0x10] sm:$0xf]
        %v2109 = vld [vmem:[%s2103 + $0x14] sm:$0xf]
        %v2110 = vld [vmem:[%s2103 + $0x18] sm:$0xf]
        %v2111 = vld [vmem:[%s2103 + $0x1c] sm:$0xf]
        %v2112 = vld [vmem:[%s2103 + $0x20] sm:$0xf]
        %v2113 = vld [vmem:[%s2103 + $0x24] sm:$0xf]
        %v2114 = vld [vmem:[%s2103 + $0x28] sm:$0xf]
        %v2115 = vld [vmem:[%s2103 + $0x2c] sm:$0xf]
        %v2116 = vld [vmem:[%s2103 + $0x30] sm:$0xf]
        %v2117 = vld [vmem:[%s2103 + $0x34] sm:$0xf]
        %v2118 = vld [vmem:[%s2103 + $0x38] sm:$0xf]
        %v2119 = vld [vmem:[%s2103 + $0x3c] sm:$0xf]
        %v2121 = vshrl.u32 %v2083, 16
        %v2123 = vshll.u32 %v2083, 16
        %v2125 = vrot.slane %v2123, 1
        %v2126 = vor.u32 %v2121, %v2125
        %v2128 = vshll.u32 %v2084, 16
        %v2130 = vrot.slane %v2128, 1
        %v2131 = vsel %vm552, %v2126, %v2130
        %v2132 = vshrl.u32 %v2084, 16
        %v2134 = vor.u32 %v2132, %v2130
        %v2136 = vshll.u32 %v2085, 16
        %v2138 = vrot.slane %v2136, 1
        %v2139 = vsel %vm552, %v2134, %v2138
        %v2140 = vshrl.u32 %v2085, 16
        %v2142 = vor.u32 %v2140, %v2138
        %v2144 = vshll.u32 %v2086, 16
        %v2146 = vrot.slane %v2144, 1
        %v2147 = vsel %vm552, %v2142, %v2146
        %v2148 = vshrl.u32 %v2086, 16
        %v2150 = vor.u32 %v2148, %v2146
        %v2171 = vunpack.c.l.b16 %v2104
        %v2172 = vunpack.c.l.b16 %v2105
        %v2173 = vunpack.c.l.b16 %v2106
        %v2174 = vunpack.c.l.b16 %v2107
        %v2175 = vunpack.c.l.b16 %v2108
        %v2176 = vunpack.c.l.b16 %v2109
        %v2177 = vunpack.c.l.b16 %v2110
        %v2178 = vunpack.c.l.b16 %v2111
        %v2179 = vunpack.c.l.b16 %v2112
        %v2180 = vunpack.c.l.b16 %v2113
        %v2181 = vunpack.c.l.b16 %v2114
        %v2182 = vunpack.c.l.b16 %v2115
        %v2183 = vunpack.c.l.b16 %v2116
        %v2184 = vunpack.c.l.b16 %v2117
        %v2185 = vunpack.c.l.b16 %v2118
        %v2186 = vunpack.c.l.b16 %v2119
        %v2187 = vpack.c.b16 %v2172, %v2171
        %v2188 = vpack.c.b16 %v2174, %v2173
        %v2189 = vpack.c.b16 %v2176, %v2175
        %v2190 = vpack.c.b16 %v2178, %v2177
        %v2191 = vpack.c.b16 %v2180, %v2179
        %v2192 = vpack.c.b16 %v2182, %v2181
        %v2193 = vpack.c.b16 %v2184, %v2183
        %v2194 = vpack.c.b16 %v2186, %v2185
        %2203 = vmatprep.subr.bf16.mxu0 0
        %2204 = vmatpush1.bf16.msra.mxu0 %v2187
        %2205 = vmatprep.subr.bf16.mxu0 0
        %2206 = vmatpush1.bf16.msra.mxu0 %v2188
        %2207 = vmatprep.subr.bf16.mxu0 0
        %2208 = vmatpush1.bf16.msra.mxu0 %v2189
        %2209 = vmatprep.subr.bf16.mxu0 0
        %2210 = vmatpush1.bf16.msra.mxu0 %v2190
        %2211 = vmatprep.subr.bf16.mxu0 0
        %2212 = vmatpush1.bf16.msra.mxu0 %v2191
        %2213 = vmatprep.subr.bf16.mxu0 0
        %2214 = vmatpush1.bf16.msra.mxu0 %v2192
        %2215 = vmatprep.subr.bf16.mxu0 0
        %2216 = vmatpush1.bf16.msra.mxu0 %v2193
        %2217 = vmatprep.subr.bf16.mxu0 0
        %2218 = vmatpush1.bf16.msra.mxu0 %v2194
        %2219 = vmatprep.subr.bf16.mxu0 0
        %2220 = vmatpush1.bf16.msra.mxu0 0
        %2221 = vmatprep.subr.bf16.mxu0 0
        %2222 = vmatpush1.bf16.msra.mxu0 0
        %2223 = vmatprep.subr.bf16.mxu0 0
        %2224 = vmatpush1.bf16.msra.mxu0 0
        %2225 = vmatprep.subr.bf16.mxu0 0
        %2226 = vmatpush1.bf16.msra.mxu0 0
        %2227 = vmatprep.subr.bf16.mxu0 0
        %2228 = vmatpush1.bf16.msra.mxu0 0
        %2229 = vmatprep.subr.bf16.mxu0 0
        %2230 = vmatpush1.bf16.msra.mxu0 0
        %2231 = vmatprep.subr.bf16.mxu0 0
        %2232 = vmatpush1.bf16.msra.mxu0 0
        %2233 = vmatprep.subr.bf16.mxu0 0
        %2234 = vmatpush1.bf16.msra.mxu0 0
        %2235 = vmatprep.mubr.bf16.mxu0 0
        %2236 = vmatmul.mubr.bf16.gmra.mrb[0].mxu0 %v2131
        %v2237 = vpop.f32.mrb[0].mxu0
        %v2238 = vadd.f32 0.0, %v2237
        %v2239 = vpop.f32.mrb[0].mxu0
        %v2240 = vpop.f32.mrb[0].mxu0
        %v2241 = vadd.f32 0.0, %v2240
        %v2242 = vpop.f32.mrb[0].mxu0
        %2243 = vmatprep.mubr.bf16.mxu0 0
        %2244 = vmatmul.mubr.bf16.gmra.mrb[0].mxu0 %v2139
        %v2245 = vpop.f32.mrb[0].mxu0
        %v2246 = vadd.f32 0.0, %v2245
        %v2247 = vpop.f32.mrb[0].mxu0
        %v2248 = vpop.f32.mrb[0].mxu0
        %v2249 = vadd.f32 0.0, %v2248
        %v2250 = vpop.f32.mrb[0].mxu0
        %2251 = vmatprep.mubr.bf16.mxu0 0
        %2252 = vmatmul.mubr.bf16.gmra.mrb[0].mxu0 %v2147
        %v2253 = vpop.f32.mrb[0].mxu0
        %v2254 = vadd.f32 0.0, %v2253
        %v2255 = vpop.f32.mrb[0].mxu0
        %v2256 = vpop.f32.mrb[0].mxu0
        %v2257 = vadd.f32 0.0, %v2256
        %v2258 = vpop.f32.mrb[0].mxu0
        %2259 = vmatprep.mubr.bf16.mxu0 0
        %2260 = vmatmul.mubr.bf16.gmra.mrb[0].mxu0 %v2150
        %v2261 = vpop.f32.mrb[0].mxu0
        %v2262 = vadd.f32 0.0, %v2261
        %v2263 = vpop.f32.mrb[0].mxu0
        %v2264 = vpop.f32.mrb[0].mxu0
        %v2265 = vadd.f32 0.0, %v2264
        %v2266 = vpop.f32.mrb[0].mxu0
        %2267 = vdwg.mxu0
        %v2284 = vunpack.c.l.b16 %v2087
        %v2285 = vunpack.c.l.b16 %v2088
        %v2286 = vunpack.c.l.b16 %v2089
        %v2287 = vunpack.c.l.b16 %v2090
        %v2288 = vunpack.c.l.b16 %v2091
        %v2289 = vunpack.c.l.b16 %v2092
        %v2290 = vunpack.c.l.b16 %v2093
        %v2291 = vunpack.c.l.b16 %v2094
        %v2292 = vunpack.c.l.b16 %v2095
        %v2293 = vunpack.c.l.b16 %v2096
        %v2294 = vunpack.c.l.b16 %v2097
        %v2295 = vunpack.c.l.b16 %v2098
        %v2296 = vunpack.c.l.b16 %v2099
        %v2297 = vunpack.c.l.b16 %v2100
        %v2298 = vunpack.c.l.b16 %v2101
        %v2299 = vunpack.c.l.b16 %v2102
        %v2300 = vpack.c.b16 %v2285, %v2284
        %v2301 = vpack.c.b16 %v2287, %v2286
        %v2302 = vpack.c.b16 %v2289, %v2288
        %v2303 = vpack.c.b16 %v2291, %v2290
        %v2304 = vpack.c.b16 %v2293, %v2292
        %v2305 = vpack.c.b16 %v2295, %v2294
        %v2306 = vpack.c.b16 %v2297, %v2296
        %v2307 = vpack.c.b16 %v2299, %v2298
        %2316 = vmatprep.subr.bf16.mxu0 0
        %2317 = vmatpush1.bf16.msra.mxu0 %v2300
        %2318 = vmatprep.subr.bf16.mxu0 0
        %2319 = vmatpush1.bf16.msra.mxu0 %v2301
        %2320 = vmatprep.subr.bf16.mxu0 0
        %2321 = vmatpush1.bf16.msra.mxu0 %v2302
        %2322 = vmatprep.subr.bf16.mxu0 0
        %2323 = vmatpush1.bf16.msra.mxu0 %v2303
        %2324 = vmatprep.subr.bf16.mxu0 0
        %2325 = vmatpush1.bf16.msra.mxu0 %v2304
        %2326 = vmatprep.subr.bf16.mxu0 0
        %2327 = vmatpush1.bf16.msra.mxu0 %v2305
        %2328 = vmatprep.subr.bf16.mxu0 0
        %2329 = vmatpush1.bf16.msra.mxu0 %v2306
        %2330 = vmatprep.subr.bf16.mxu0 0
        %2331 = vmatpush1.bf16.msra.mxu0 %v2307
        %2332 = vmatprep.subr.bf16.mxu0 0
        %2333 = vmatpush1.bf16.msra.mxu0 0
        %2334 = vmatprep.subr.bf16.mxu0 0
        %2335 = vmatpush1.bf16.msra.mxu0 0
        %2336 = vmatprep.subr.bf16.mxu0 0
        %2337 = vmatpush1.bf16.msra.mxu0 0
        %2338 = vmatprep.subr.bf16.mxu0 0
        %2339 = vmatpush1.bf16.msra.mxu0 0
        %2340 = vmatprep.subr.bf16.mxu0 0
        %2341 = vmatpush1.bf16.msra.mxu0 0
        %2342 = vmatprep.subr.bf16.mxu0 0
        %2343 = vmatpush1.bf16.msra.mxu0 0
        %2344 = vmatprep.subr.bf16.mxu0 0
        %2345 = vmatpush1.bf16.msra.mxu0 0
        %2346 = vmatprep.subr.bf16.mxu0 0
        %2347 = vmatpush1.bf16.msra.mxu0 0
        %2348 = vmatprep.mubr.bf16.mxu0 0
        %2349 = vmatmul.mubr.bf16.gmra.mrb[0].mxu0 %v2083
        %v2350 = vpop.f32.mrb[0].mxu0
        %v2351 = vadd.f32 %v2238, %v2350
        %v2352 = vpop.f32.mrb[0].mxu0
        %v2353 = vpop.f32.mrb[0].mxu0
        %v2354 = vadd.f32 %v2241, %v2353
        %v2355 = vpop.f32.mrb[0].mxu0
        %2356 = vmatprep.mubr.bf16.mxu0 0
        %2357 = vmatmul.mubr.bf16.gmra.mrb[0].mxu0 %v2084
        %v2358 = vpop.f32.mrb[0].mxu0
        %v2359 = vadd.f32 %v2246, %v2358
        %v2360 = vpop.f32.mrb[0].mxu0
        %v2361 = vpop.f32.mrb[0].mxu0
        %v2362 = vadd.f32 %v2249, %v2361
        %v2363 = vpop.f32.mrb[0].mxu0
        %2364 = vmatprep.mubr.bf16.mxu0 0
        %2365 = vmatmul.mubr.bf16.gmra.mrb[0].mxu0 %v2085
        %v2366 = vpop.f32.mrb[0].mxu0
        %v2367 = vadd.f32 %v2254, %v2366
        %v2368 = vpop.f32.mrb[0].mxu0
        %v2369 = vpop.f32.mrb[0].mxu0
        %v2370 = vadd.f32 %v2257, %v2369
        %v2371 = vpop.f32.mrb[0].mxu0
        %2372 = vmatprep.mubr.bf16.mxu0 0
        %2373 = vmatmul.mubr.bf16.gmra.mrb[0].mxu0 %v2086
        %v2374 = vpop.f32.mrb[0].mxu0
        %v2375 = vadd.f32 %v2262, %v2374
        %v2376 = vpop.f32.mrb[0].mxu0
        %v2377 = vpop.f32.mrb[0].mxu0
        %v2378 = vadd.f32 %v2265, %v2377
        %v2379 = vpop.f32.mrb[0].mxu0
        %2380 = vdwg.mxu0
        %s2381 = scalar_lea.vmem [#allocation6], 128
        %v2382 = vld [vmem:[%s2381] sm:$0xf]
        %v2383 = vld [vmem:[%s2381 + $0x4] sm:$0xf]
        %v2384 = vld [vmem:[%s2381 + $0x8] sm:$0xf]
        %v2385 = vld [vmem:[%s2381 + $0xc] sm:$0xf]
        %v2386 = vld [vmem:[%s2381 + $0x10] sm:$0xf]
        %v2387 = vld [vmem:[%s2381 + $0x14] sm:$0xf]
        %v2388 = vld [vmem:[%s2381 + $0x18] sm:$0xf]
        %v2389 = vld [vmem:[%s2381 + $0x1c] sm:$0xf]
        %v2390 = vld [vmem:[%s2381 + $0x20] sm:$0xf]
        %v2391 = vld [vmem:[%s2381 + $0x24] sm:$0xf]
        %v2392 = vld [vmem:[%s2381 + $0x28] sm:$0xf]
        %v2393 = vld [vmem:[%s2381 + $0x2c] sm:$0xf]
        %v2394 = vld [vmem:[%s2381 + $0x30] sm:$0xf]
        %v2395 = vld [vmem:[%s2381 + $0x34] sm:$0xf]
        %v2396 = vld [vmem:[%s2381 + $0x38] sm:$0xf]
        %v2397 = vld [vmem:[%s2381 + $0x3c] sm:$0xf]
        %v2402 = vrot.slane %v2083, 1
        %v2403 = vrot.slane %v2084, 1
        %v2404 = vsel %vm1157, %v2402, %v2403
        %v2405 = vrot.slane %v2085, 1
        %v2406 = vsel %vm1157, %v2403, %v2405
        %v2407 = vrot.slane %v2086, 1
        %v2408 = vsel %vm1157, %v2405, %v2407
        %v2429 = vunpack.c.l.b16 %v2382
        %v2430 = vunpack.c.l.b16 %v2383
        %v2431 = vunpack.c.l.b16 %v2384
        %v2432 = vunpack.c.l.b16 %v2385
        %v2433 = vunpack.c.l.b16 %v2386
        %v2434 = vunpack.c.l.b16 %v2387
        %v2435 = vunpack.c.l.b16 %v2388
        %v2436 = vunpack.c.l.b16 %v2389
        %v2437 = vunpack.c.l.b16 %v2390
        %v2438 = vunpack.c.l.b16 %v2391
        %v2439 = vunpack.c.l.b16 %v2392
        %v2440 = vunpack.c.l.b16 %v2393
        %v2441 = vunpack.c.l.b16 %v2394
        %v2442 = vunpack.c.l.b16 %v2395
        %v2443 = vunpack.c.l.b16 %v2396
        %v2444 = vunpack.c.l.b16 %v2397
        %v2445 = vpack.c.b16 %v2430, %v2429
        %v2446 = vpack.c.b16 %v2432, %v2431
        %v2447 = vpack.c.b16 %v2434, %v2433
        %v2448 = vpack.c.b16 %v2436, %v2435
        %v2449 = vpack.c.b16 %v2438, %v2437
        %v2450 = vpack.c.b16 %v2440, %v2439
        %v2451 = vpack.c.b16 %v2442, %v2441
        %v2452 = vpack.c.b16 %v2444, %v2443
        %2461 = vmatprep.subr.bf16.mxu0 0
        %2462 = vmatpush1.bf16.msra.mxu0 %v2445
        %2463 = vmatprep.subr.bf16.mxu0 0
        %2464 = vmatpush1.bf16.msra.mxu0 %v2446
        %2465 = vmatprep.subr.bf16.mxu0 0
        %2466 = vmatpush1.bf16.msra.mxu0 %v2447
        %2467 = vmatprep.subr.bf16.mxu0 0
        %2468 = vmatpush1.bf16.msra.mxu0 %v2448
        %2469 = vmatprep.subr.bf16.mxu0 0
        %2470 = vmatpush1.bf16.msra.mxu0 %v2449
        %2471 = vmatprep.subr.bf16.mxu0 0
        %2472 = vmatpush1.bf16.msra.mxu0 %v2450
        %2473 = vmatprep.subr.bf16.mxu0 0
        %2474 = vmatpush1.bf16.msra.mxu0 %v2451
        %2475 = vmatprep.subr.bf16.mxu0 0
        %2476 = vmatpush1.bf16.msra.mxu0 %v2452
        %2477 = vmatprep.subr.bf16.mxu0 0
        %2478 = vmatpush1.bf16.msra.mxu0 0
        %2479 = vmatprep.subr.bf16.mxu0 0
        %2480 = vmatpush1.bf16.msra.mxu0 0
        %2481 = vmatprep.subr.bf16.mxu0 0
        %2482 = vmatpush1.bf16.msra.mxu0 0
        %2483 = vmatprep.subr.bf16.mxu0 0
        %2484 = vmatpush1.bf16.msra.mxu0 0
        %2485 = vmatprep.subr.bf16.mxu0 0
        %2486 = vmatpush1.bf16.msra.mxu0 0
        %2487 = vmatprep.subr.bf16.mxu0 0
        %2488 = vmatpush1.bf16.msra.mxu0 0
        %2489 = vmatprep.subr.bf16.mxu0 0
        %2490 = vmatpush1.bf16.msra.mxu0 0
        %2491 = vmatprep.subr.bf16.mxu0 0
        %2492 = vmatpush1.bf16.msra.mxu0 0
        %2493 = vmatprep.mubr.bf16.mxu0 0
        %2494 = vmatmul.mubr.bf16.gmra.mrb[0].mxu0 %v2404
        %v2495 = vpop.f32.mrb[0].mxu0
        %v2496 = vadd.f32 0.0, %v2495
        %v2497 = vpop.f32.mrb[0].mxu0
        %v2498 = vpop.f32.mrb[0].mxu0
        %v2499 = vadd.f32 0.0, %v2498
        %v2500 = vpop.f32.mrb[0].mxu0
        %2501 = vmatprep.mubr.bf16.mxu0 0
        %2502 = vmatmul.mubr.bf16.gmra.mrb[0].mxu0 %v2406
        %v2503 = vpop.f32.mrb[0].mxu0
        %v2504 = vadd.f32 0.0, %v2503
        %v2505 = vpop.f32.mrb[0].mxu0
        %v2506 = vpop.f32.mrb[0].mxu0
        %v2507 = vadd.f32 0.0, %v2506
        %v2508 = vpop.f32.mrb[0].mxu0
        %2509 = vmatprep.mubr.bf16.mxu0 0
        %2510 = vmatmul.mubr.bf16.gmra.mrb[0].mxu0 %v2408
        %v2511 = vpop.f32.mrb[0].mxu0
        %v2512 = vadd.f32 0.0, %v2511
        %v2513 = vpop.f32.mrb[0].mxu0
        %v2514 = vpop.f32.mrb[0].mxu0
        %v2515 = vadd.f32 0.0, %v2514
        %v2516 = vpop.f32.mrb[0].mxu0
        %2517 = vmatprep.mubr.bf16.mxu0 0
        %2518 = vmatmul.mubr.bf16.gmra.mrb[0].mxu0 %v2407
        %v2519 = vpop.f32.mrb[0].mxu0
        %v2520 = vadd.f32 0.0, %v2519
        %v2521 = vpop.f32.mrb[0].mxu0
        %v2522 = vpop.f32.mrb[0].mxu0
        %v2523 = vadd.f32 0.0, %v2522
        %v2524 = vpop.f32.mrb[0].mxu0
        %2525 = vdwg.mxu0
        %v2526 = vadd.f32 %v2351, %v2496
        %v2527 = vadd.f32 %v2354, %v2499
        %v2528 = vadd.f32 %v2359, %v2504
        %v2529 = vadd.f32 %v2362, %v2507
        %v2530 = vadd.f32 %v2367, %v2512
        %v2531 = vadd.f32 %v2370, %v2515
        %v2532 = vadd.f32 %v2375, %v2520
        %v2533 = vadd.f32 %v2378, %v2523
        %v2534 = vld [vmem:[%s6] sm:$0x1]
        %v2536 = vlaneseq
        %v2537 = vshrl.u32 %v2536, 7
        %v2538 = vsub.s32 0, %v2537
        %v2539 = vrot.slane %v2534, %v2538
        %v2541 = vadd.f32 %v2526, %v2539
        %v2542 = vadd.f32 %v2527, %v2539
        %v2543 = vadd.f32 %v2528, %v2539
        %v2544 = vadd.f32 %v2529, %v2539
        %v2545 = vadd.f32 %v2530, %v2539
        %v2546 = vadd.f32 %v2531, %v2539
        %v2547 = vadd.f32 %v2532, %v2539
        %v2548 = vadd.f32 %v2533, %v2539
        %v2549 = vmax.f32 %v2541, 0.0
        %v2550 = vmax.f32 %v2542, 0.0
        %v2551 = vmax.f32 %v2543, 0.0
        %v2552 = vmax.f32 %v2544, 0.0
        %v2553 = vmax.f32 %v2545, 0.0
        %v2554 = vmax.f32 %v2546, 0.0
        %v2555 = vmax.f32 %v2547, 0.0
        %v2556 = vmax.f32 %v2548, 0.0
        %v2557 = vpack.c.bf16 %v2550, %v2549
        %v2558 = vpack.c.bf16 %v2552, %v2551
        %v2559 = vpack.c.bf16 %v2554, %v2553
        %v2560 = vpack.c.bf16 %v2556, %v2555
        %v2561 = vld [vmem:[#allocation7] sm:$0xf]
        %v2562 = vld [vmem:[#allocation7 + $0x4] sm:$0xf]
        %v2563 = vld [vmem:[#allocation7 + $0x8] sm:$0xf]
        %v2564 = vld [vmem:[#allocation7 + $0xc] sm:$0xf]
        %v2565 = vld [vmem:[#allocation7 + $0x10] sm:$0xf]
        %v2566 = vld [vmem:[#allocation7 + $0x14] sm:$0xf]
        %v2567 = vld [vmem:[#allocation7 + $0x18] sm:$0xf]
        %v2568 = vld [vmem:[#allocation7 + $0x1c] sm:$0xf]
        %v2569 = vld [vmem:[#allocation7 + $0x20] sm:$0xf]
        %v2570 = vld [vmem:[#allocation7 + $0x24] sm:$0xf]
        %v2571 = vld [vmem:[#allocation7 + $0x28] sm:$0xf]
        %v2572 = vld [vmem:[#allocation7 + $0x2c] sm:$0xf]
        %v2573 = vld [vmem:[#allocation7 + $0x30] sm:$0xf]
        %v2574 = vld [vmem:[#allocation7 + $0x34] sm:$0xf]
        %v2575 = vld [vmem:[#allocation7 + $0x38] sm:$0xf]
        %v2576 = vld [vmem:[#allocation7 + $0x3c] sm:$0xf]
        %s2577 = scalar_lea.vmem [#allocation7], 64
        %v2578 = vld [vmem:[%s2577] sm:$0xf]
        %v2579 = vld [vmem:[%s2577 + $0x4] sm:$0xf]
        %v2580 = vld [vmem:[%s2577 + $0x8] sm:$0xf]
        %v2581 = vld [vmem:[%s2577 + $0xc] sm:$0xf]
        %v2582 = vld [vmem:[%s2577 + $0x10] sm:$0xf]
        %v2583 = vld [vmem:[%s2577 + $0x14] sm:$0xf]
        %v2584 = vld [vmem:[%s2577 + $0x18] sm:$0xf]
        %v2585 = vld [vmem:[%s2577 + $0x1c] sm:$0xf]
        %v2586 = vld [vmem:[%s2577 + $0x20] sm:$0xf]
        %v2587 = vld [vmem:[%s2577 + $0x24] sm:$0xf]
        %v2588 = vld [vmem:[%s2577 + $0x28] sm:$0xf]
        %v2589 = vld [vmem:[%s2577 + $0x2c] sm:$0xf]
        %v2590 = vld [vmem:[%s2577 + $0x30] sm:$0xf]
        %v2591 = vld [vmem:[%s2577 + $0x34] sm:$0xf]
        %v2592 = vld [vmem:[%s2577 + $0x38] sm:$0xf]
        %v2593 = vld [vmem:[%s2577 + $0x3c] sm:$0xf]
        %v2595 = vshrl.u32 %v2557, 16
        %v2597 = vshll.u32 %v2557, 16
        %v2599 = vrot.slane %v2597, 1
        %v2600 = vor.u32 %v2595, %v2599
        %v2602 = vshll.u32 %v2558, 16
        %v2604 = vrot.slane %v2602, 1
        %v2605 = vsel %vm552, %v2600, %v2604
        %v2606 = vshrl.u32 %v2558, 16
        %v2608 = vor.u32 %v2606, %v2604
        %v2610 = vshll.u32 %v2559, 16
        %v2612 = vrot.slane %v2610, 1
        %v2613 = vsel %vm552, %v2608, %v2612
        %v2614 = vshrl.u32 %v2559, 16
        %v2616 = vor.u32 %v2614, %v2612
        %v2618 = vshll.u32 %v2560, 16
        %v2620 = vrot.slane %v2618, 1
        %v2621 = vsel %vm552, %v2616, %v2620
        %v2622 = vshrl.u32 %v2560, 16
        %v2624 = vor.u32 %v2622, %v2620
        %v2645 = vunpack.c.l.b16 %v2578
        %v2646 = vunpack.c.l.b16 %v2579
        %v2647 = vunpack.c.l.b16 %v2580
        %v2648 = vunpack.c.l.b16 %v2581
        %v2649 = vunpack.c.l.b16 %v2582
        %v2650 = vunpack.c.l.b16 %v2583
        %v2651 = vunpack.c.l.b16 %v2584
        %v2652 = vunpack.c.l.b16 %v2585
        %v2653 = vunpack.c.l.b16 %v2586
        %v2654 = vunpack.c.l.b16 %v2587
        %v2655 = vunpack.c.l.b16 %v2588
        %v2656 = vunpack.c.l.b16 %v2589
        %v2657 = vunpack.c.l.b16 %v2590
        %v2658 = vunpack.c.l.b16 %v2591
        %v2659 = vunpack.c.l.b16 %v2592
        %v2660 = vunpack.c.l.b16 %v2593
        %v2661 = vpack.c.b16 %v2646, %v2645
        %v2662 = vpack.c.b16 %v2648, %v2647
        %v2663 = vpack.c.b16 %v2650, %v2649
        %v2664 = vpack.c.b16 %v2652, %v2651
        %v2665 = vpack.c.b16 %v2654, %v2653
        %v2666 = vpack.c.b16 %v2656, %v2655
        %v2667 = vpack.c.b16 %v2658, %v2657
        %v2668 = vpack.c.b16 %v2660, %v2659
        %2677 = vmatprep.subr.bf16.mxu0 0
        %2678 = vmatpush1.bf16.msra.mxu0 %v2661
        %2679 = vmatprep.subr.bf16.mxu0 0
        %2680 = vmatpush1.bf16.msra.mxu0 %v2662
        %2681 = vmatprep.subr.bf16.mxu0 0
        %2682 = vmatpush1.bf16.msra.mxu0 %v2663
        %2683 = vmatprep.subr.bf16.mxu0 0
        %2684 = vmatpush1.bf16.msra.mxu0 %v2664
        %2685 = vmatprep.subr.bf16.mxu0 0
        %2686 = vmatpush1.bf16.msra.mxu0 %v2665
        %2687 = vmatprep.subr.bf16.mxu0 0
        %2688 = vmatpush1.bf16.msra.mxu0 %v2666
        %2689 = vmatprep.subr.bf16.mxu0 0
        %2690 = vmatpush1.bf16.msra.mxu0 %v2667
        %2691 = vmatprep.subr.bf16.mxu0 0
        %2692 = vmatpush1.bf16.msra.mxu0 %v2668
        %2693 = vmatprep.subr.bf16.mxu0 0
        %2694 = vmatpush1.bf16.msra.mxu0 0
        %2695 = vmatprep.subr.bf16.mxu0 0
        %2696 = vmatpush1.bf16.msra.mxu0 0
        %2697 = vmatprep.subr.bf16.mxu0 0
        %2698 = vmatpush1.bf16.msra.mxu0 0
        %2699 = vmatprep.subr.bf16.mxu0 0
        %2700 = vmatpush1.bf16.msra.mxu0 0
        %2701 = vmatprep.subr.bf16.mxu0 0
        %2702 = vmatpush1.bf16.msra.mxu0 0
        %2703 = vmatprep.subr.bf16.mxu0 0
        %2704 = vmatpush1.bf16.msra.mxu0 0
        %2705 = vmatprep.subr.bf16.mxu0 0
        %2706 = vmatpush1.bf16.msra.mxu0 0
        %2707 = vmatprep.subr.bf16.mxu0 0
        %2708 = vmatpush1.bf16.msra.mxu0 0
        %2709 = vmatprep.mubr.bf16.mxu0 0
        %2710 = vmatmul.mubr.bf16.gmra.mrb[0].mxu0 %v2605
        %v2711 = vpop.f32.mrb[0].mxu0
        %v2712 = vadd.f32 0.0, %v2711
        %v2713 = vpop.f32.mrb[0].mxu0
        %v2714 = vpop.f32.mrb[0].mxu0
        %v2715 = vadd.f32 0.0, %v2714
        %v2716 = vpop.f32.mrb[0].mxu0
        %2717 = vmatprep.mubr.bf16.mxu0 0
        %2718 = vmatmul.mubr.bf16.gmra.mrb[0].mxu0 %v2613
        %v2719 = vpop.f32.mrb[0].mxu0
        %v2720 = vadd.f32 0.0, %v2719
        %v2721 = vpop.f32.mrb[0].mxu0
        %v2722 = vpop.f32.mrb[0].mxu0
        %v2723 = vadd.f32 0.0, %v2722
        %v2724 = vpop.f32.mrb[0].mxu0
        %2725 = vmatprep.mubr.bf16.mxu0 0
        %2726 = vmatmul.mubr.bf16.gmra.mrb[0].mxu0 %v2621
        %v2727 = vpop.f32.mrb[0].mxu0
        %v2728 = vadd.f32 0.0, %v2727
        %v2729 = vpop.f32.mrb[0].mxu0
        %v2730 = vpop.f32.mrb[0].mxu0
        %v2731 = vadd.f32 0.0, %v2730
        %v2732 = vpop.f32.mrb[0].mxu0
        %2733 = vmatprep.mubr.bf16.mxu0 0
        %2734 = vmatmul.mubr.bf16.gmra.mrb[0].mxu0 %v2624
        %v2735 = vpop.f32.mrb[0].mxu0
        %v2736 = vadd.f32 0.0, %v2735
        %v2737 = vpop.f32.mrb[0].mxu0
        %v2738 = vpop.f32.mrb[0].mxu0
        %v2739 = vadd.f32 0.0, %v2738
        %v2740 = vpop.f32.mrb[0].mxu0
        %2741 = vdwg.mxu0
        %v2758 = vunpack.c.l.b16 %v2561
        %v2759 = vunpack.c.l.b16 %v2562
        %v2760 = vunpack.c.l.b16 %v2563
        %v2761 = vunpack.c.l.b16 %v2564
        %v2762 = vunpack.c.l.b16 %v2565
        %v2763 = vunpack.c.l.b16 %v2566
        %v2764 = vunpack.c.l.b16 %v2567
        %v2765 = vunpack.c.l.b16 %v2568
        %v2766 = vunpack.c.l.b16 %v2569
        %v2767 = vunpack.c.l.b16 %v2570
        %v2768 = vunpack.c.l.b16 %v2571
        %v2769 = vunpack.c.l.b16 %v2572
        %v2770 = vunpack.c.l.b16 %v2573
        %v2771 = vunpack.c.l.b16 %v2574
        %v2772 = vunpack.c.l.b16 %v2575
        %v2773 = vunpack.c.l.b16 %v2576
        %v2774 = vpack.c.b16 %v2759, %v2758
        %v2775 = vpack.c.b16 %v2761, %v2760
        %v2776 = vpack.c.b16 %v2763, %v2762
        %v2777 = vpack.c.b16 %v2765, %v2764
        %v2778 = vpack.c.b16 %v2767, %v2766
        %v2779 = vpack.c.b16 %v2769, %v2768
        %v2780 = vpack.c.b16 %v2771, %v2770
        %v2781 = vpack.c.b16 %v2773, %v2772
        %2790 = vmatprep.subr.bf16.mxu0 0
        %2791 = vmatpush1.bf16.msra.mxu0 %v2774
        %2792 = vmatprep.subr.bf16.mxu0 0
        %2793 = vmatpush1.bf16.msra.mxu0 %v2775
        %2794 = vmatprep.subr.bf16.mxu0 0
        %2795 = vmatpush1.bf16.msra.mxu0 %v2776
        %2796 = vmatprep.subr.bf16.mxu0 0
        %2797 = vmatpush1.bf16.msra.mxu0 %v2777
        %2798 = vmatprep.subr.bf16.mxu0 0
        %2799 = vmatpush1.bf16.msra.mxu0 %v2778
        %2800 = vmatprep.subr.bf16.mxu0 0
        %2801 = vmatpush1.bf16.msra.mxu0 %v2779
        %2802 = vmatprep.subr.bf16.mxu0 0
        %2803 = vmatpush1.bf16.msra.mxu0 %v2780
        %2804 = vmatprep.subr.bf16.mxu0 0
        %2805 = vmatpush1.bf16.msra.mxu0 %v2781
        %2806 = vmatprep.subr.bf16.mxu0 0
        %2807 = vmatpush1.bf16.msra.mxu0 0
        %2808 = vmatprep.subr.bf16.mxu0 0
        %2809 = vmatpush1.bf16.msra.mxu0 0
        %2810 = vmatprep.subr.bf16.mxu0 0
        %2811 = vmatpush1.bf16.msra.mxu0 0
        %2812 = vmatprep.subr.bf16.mxu0 0
        %2813 = vmatpush1.bf16.msra.mxu0 0
        %2814 = vmatprep.subr.bf16.mxu0 0
        %2815 = vmatpush1.bf16.msra.mxu0 0
        %2816 = vmatprep.subr.bf16.mxu0 0
        %2817 = vmatpush1.bf16.msra.mxu0 0
        %2818 = vmatprep.subr.bf16.mxu0 0
        %2819 = vmatpush1.bf16.msra.mxu0 0
        %2820 = vmatprep.subr.bf16.mxu0 0
        %2821 = vmatpush1.bf16.msra.mxu0 0
        %2822 = vmatprep.mubr.bf16.mxu0 0
        %2823 = vmatmul.mubr.bf16.gmra.mrb[0].mxu0 %v2557
        %v2824 = vpop.f32.mrb[0].mxu0
        %v2825 = vadd.f32 %v2712, %v2824
        %v2826 = vpop.f32.mrb[0].mxu0
        %v2827 = vpop.f32.mrb[0].mxu0
        %v2828 = vadd.f32 %v2715, %v2827
        %v2829 = vpop.f32.mrb[0].mxu0
        %2830 = vmatprep.mubr.bf16.mxu0 0
        %2831 = vmatmul.mubr.bf16.gmra.mrb[0].mxu0 %v2558
        %v2832 = vpop.f32.mrb[0].mxu0
        %v2833 = vadd.f32 %v2720, %v2832
        %v2834 = vpop.f32.mrb[0].mxu0
        %v2835 = vpop.f32.mrb[0].mxu0
        %v2836 = vadd.f32 %v2723, %v2835
        %v2837 = vpop.f32.mrb[0].mxu0
        %2838 = vmatprep.mubr.bf16.mxu0 0
        %2839 = vmatmul.mubr.bf16.gmra.mrb[0].mxu0 %v2559
        %v2840 = vpop.f32.mrb[0].mxu0
        %v2841 = vadd.f32 %v2728, %v2840
        %v2842 = vpop.f32.mrb[0].mxu0
        %v2843 = vpop.f32.mrb[0].mxu0
        %v2844 = vadd.f32 %v2731, %v2843
        %v2845 = vpop.f32.mrb[0].mxu0
        %2846 = vmatprep.mubr.bf16.mxu0 0
        %2847 = vmatmul.mubr.bf16.gmra.mrb[0].mxu0 %v2560
        %v2848 = vpop.f32.mrb[0].mxu0
        %v2849 = vadd.f32 %v2736, %v2848
        %v2850 = vpop.f32.mrb[0].mxu0
        %v2851 = vpop.f32.mrb[0].mxu0
        %v2852 = vadd.f32 %v2739, %v2851
        %v2853 = vpop.f32.mrb[0].mxu0
        %2854 = vdwg.mxu0
        %s2855 = scalar_lea.vmem [#allocation7], 128
        %v2856 = vld [vmem:[%s2855] sm:$0xf]
        %v2857 = vld [vmem:[%s2855 + $0x4] sm:$0xf]
        %v2858 = vld [vmem:[%s2855 + $0x8] sm:$0xf]
        %v2859 = vld [vmem:[%s2855 + $0xc] sm:$0xf]
        %v2860 = vld [vmem:[%s2855 + $0x10] sm:$0xf]
        %v2861 = vld [vmem:[%s2855 + $0x14] sm:$0xf]
        %v2862 = vld [vmem:[%s2855 + $0x18] sm:$0xf]
        %v2863 = vld [vmem:[%s2855 + $0x1c] sm:$0xf]
        %v2864 = vld [vmem:[%s2855 + $0x20] sm:$0xf]
        %v2865 = vld [vmem:[%s2855 + $0x24] sm:$0xf]
        %v2866 = vld [vmem:[%s2855 + $0x28] sm:$0xf]
        %v2867 = vld [vmem:[%s2855 + $0x2c] sm:$0xf]
        %v2868 = vld [vmem:[%s2855 + $0x30] sm:$0xf]
        %v2869 = vld [vmem:[%s2855 + $0x34] sm:$0xf]
        %v2870 = vld [vmem:[%s2855 + $0x38] sm:$0xf]
        %v2871 = vld [vmem:[%s2855 + $0x3c] sm:$0xf]
        %v2876 = vrot.slane %v2557, 1
        %v2877 = vrot.slane %v2558, 1
        %v2878 = vsel %vm1157, %v2876, %v2877
        %v2879 = vrot.slane %v2559, 1
        %v2880 = vsel %vm1157, %v2877, %v2879
        %v2881 = vrot.slane %v2560, 1
        %v2882 = vsel %vm1157, %v2879, %v2881
        %v2903 = vunpack.c.l.b16 %v2856
        %v2904 = vunpack.c.l.b16 %v2857
        %v2905 = vunpack.c.l.b16 %v2858
        %v2906 = vunpack.c.l.b16 %v2859
        %v2907 = vunpack.c.l.b16 %v2860
        %v2908 = vunpack.c.l.b16 %v2861
        %v2909 = vunpack.c.l.b16 %v2862
        %v2910 = vunpack.c.l.b16 %v2863
        %v2911 = vunpack.c.l.b16 %v2864
        %v2912 = vunpack.c.l.b16 %v2865
        %v2913 = vunpack.c.l.b16 %v2866
        %v2914 = vunpack.c.l.b16 %v2867
        %v2915 = vunpack.c.l.b16 %v2868
        %v2916 = vunpack.c.l.b16 %v2869
        %v2917 = vunpack.c.l.b16 %v2870
        %v2918 = vunpack.c.l.b16 %v2871
        %v2919 = vpack.c.b16 %v2904, %v2903
        %v2920 = vpack.c.b16 %v2906, %v2905
        %v2921 = vpack.c.b16 %v2908, %v2907
        %v2922 = vpack.c.b16 %v2910, %v2909
        %v2923 = vpack.c.b16 %v2912, %v2911
        %v2924 = vpack.c.b16 %v2914, %v2913
        %v2925 = vpack.c.b16 %v2916, %v2915
        %v2926 = vpack.c.b16 %v2918, %v2917
        %2935 = vmatprep.subr.bf16.mxu0 0
        %2936 = vmatpush1.bf16.msra.mxu0 %v2919
        %2937 = vmatprep.subr.bf16.mxu0 0
        %2938 = vmatpush1.bf16.msra.mxu0 %v2920
        %2939 = vmatprep.subr.bf16.mxu0 0
        %2940 = vmatpush1.bf16.msra.mxu0 %v2921
        %2941 = vmatprep.subr.bf16.mxu0 0
        %2942 = vmatpush1.bf16.msra.mxu0 %v2922
        %2943 = vmatprep.subr.bf16.mxu0 0
        %2944 = vmatpush1.bf16.msra.mxu0 %v2923
        %2945 = vmatprep.subr.bf16.mxu0 0
        %2946 = vmatpush1.bf16.msra.mxu0 %v2924
        %2947 = vmatprep.subr.bf16.mxu0 0
        %2948 = vmatpush1.bf16.msra.mxu0 %v2925
        %2949 = vmatprep.subr.bf16.mxu0 0
        %2950 = vmatpush1.bf16.msra.mxu0 %v2926
        %2951 = vmatprep.subr.bf16.mxu0 0
        %2952 = vmatpush1.bf16.msra.mxu0 0
        %2953 = vmatprep.subr.bf16.mxu0 0
        %2954 = vmatpush1.bf16.msra.mxu0 0
        %2955 = vmatprep.subr.bf16.mxu0 0
        %2956 = vmatpush1.bf16.msra.mxu0 0
        %2957 = vmatprep.subr.bf16.mxu0 0
        %2958 = vmatpush1.bf16.msra.mxu0 0
        %2959 = vmatprep.subr.bf16.mxu0 0
        %2960 = vmatpush1.bf16.msra.mxu0 0
        %2961 = vmatprep.subr.bf16.mxu0 0
        %2962 = vmatpush1.bf16.msra.mxu0 0
        %2963 = vmatprep.subr.bf16.mxu0 0
        %2964 = vmatpush1.bf16.msra.mxu0 0
        %2965 = vmatprep.subr.bf16.mxu0 0
        %2966 = vmatpush1.bf16.msra.mxu0 0
        %2967 = vmatprep.mubr.bf16.mxu0 0
        %2968 = vmatmul.mubr.bf16.gmra.mrb[0].mxu0 %v2878
        %v2969 = vpop.f32.mrb[0].mxu0
        %v2970 = vadd.f32 0.0, %v2969
        %v2971 = vpop.f32.mrb[0].mxu0
        %v2972 = vpop.f32.mrb[0].mxu0
        %v2973 = vadd.f32 0.0, %v2972
        %v2974 = vpop.f32.mrb[0].mxu0
        %2975 = vmatprep.mubr.bf16.mxu0 0
        %2976 = vmatmul.mubr.bf16.gmra.mrb[0].mxu0 %v2880
        %v2977 = vpop.f32.mrb[0].mxu0
        %v2978 = vadd.f32 0.0, %v2977
        %v2979 = vpop.f32.mrb[0].mxu0
        %v2980 = vpop.f32.mrb[0].mxu0
        %v2981 = vadd.f32 0.0, %v2980
        %v2982 = vpop.f32.mrb[0].mxu0
        %2983 = vmatprep.mubr.bf16.mxu0 0
        %2984 = vmatmul.mubr.bf16.gmra.mrb[0].mxu0 %v2882
        %v2985 = vpop.f32.mrb[0].mxu0
        %v2986 = vadd.f32 0.0, %v2985
        %v2987 = vpop.f32.mrb[0].mxu0
        %v2988 = vpop.f32.mrb[0].mxu0
        %v2989 = vadd.f32 0.0, %v2988
        %v2990 = vpop.f32.mrb[0].mxu0
        %2991 = vmatprep.mubr.bf16.mxu0 0
        %2992 = vmatmul.mubr.bf16.gmra.mrb[0].mxu0 %v2881
        %v2993 = vpop.f32.mrb[0].mxu0
        %v2994 = vadd.f32 0.0, %v2993
        %v2995 = vpop.f32.mrb[0].mxu0
        %v2996 = vpop.f32.mrb[0].mxu0
        %v2997 = vadd.f32 0.0, %v2996
        %v2998 = vpop.f32.mrb[0].mxu0
        %2999 = vdwg.mxu0
        %v3000 = vadd.f32 %v2825, %v2970
        %v3001 = vadd.f32 %v2828, %v2973
        %v3002 = vadd.f32 %v2833, %v2978
        %v3003 = vadd.f32 %v2836, %v2981
        %v3004 = vadd.f32 %v2841, %v2986
        %v3005 = vadd.f32 %v2844, %v2989
        %v3006 = vadd.f32 %v2849, %v2994
        %v3007 = vadd.f32 %v2852, %v2997
        %v3008 = vld [vmem:[%s8] sm:$0x1]
        %v3010 = vlaneseq
        %v3011 = vshrl.u32 %v3010, 7
        %v3012 = vsub.s32 0, %v3011
        %v3013 = vrot.slane %v3008, %v3012
        %v3015 = vadd.f32 %v3000, %v3013
        %v3016 = vadd.f32 %v3001, %v3013
        %v3017 = vadd.f32 %v3002, %v3013
        %v3018 = vadd.f32 %v3003, %v3013
        %v3019 = vadd.f32 %v3004, %v3013
        %v3020 = vadd.f32 %v3005, %v3013
        %v3021 = vadd.f32 %v3006, %v3013
        %v3022 = vadd.f32 %v3007, %v3013
        %v3023 = vmax.f32 %v3015, 0.0
        %v3024 = vmax.f32 %v3016, 0.0
        %v3025 = vmax.f32 %v3017, 0.0
        %v3026 = vmax.f32 %v3018, 0.0
        %v3027 = vmax.f32 %v3019, 0.0
        %v3028 = vmax.f32 %v3020, 0.0
        %v3029 = vmax.f32 %v3021, 0.0
        %v3030 = vmax.f32 %v3022, 0.0
        %vm3031 = vcmask 1041408
        %v3032 = vsel %vm3031, %v3030, 0.0
        %vm3033 = vcmp.lt.s32.totalorder %v1527, 26
        %vm3034 = vcmp.lt.s32.totalorder %v1528, 26
        %vm3035 = vcmp.lt.s32.totalorder %v1529, 26
        %vm3036 = vcmp.lt.s32.totalorder %v1530, 26
        %v3037 = vsel %vm3033, 1, 0
        %v3038 = vsel %vm3034, 1, 0
        %v3039 = vsel %vm3035, 1, 0
        %v3040 = vsel %vm3036, 1, 0
        %vm3041 = vcmp.eq.s32.totalorder %v3037, 1
        %vm3042 = vcmp.eq.s32.totalorder %v3038, 1
        %vm3043 = vcmp.eq.s32.totalorder %v3039, 1
        %vm3044 = vcmp.eq.s32.totalorder %v3040, 1
        %v3045 = vsel %vm3041, %v3023, 0.0
        %v3046 = vsel %vm3042, %v3024, 0.0
        %v3047 = vsel %vm3043, %v3025, 0.0
        %v3048 = vsel %vm3044, %v3026, 0.0
        %v3049 = vsel %vm3041, %v3027, 0.0
        %v3050 = vsel %vm3042, %v3028, 0.0
        %v3051 = vsel %vm3043, %v3029, 0.0
        %v3052 = vsel %vm3044, %v3032, 0.0
        %v3053 = vmax.f32 %v3045, %v3047
        %v3054 = vmax.f32 %v3046, %v3048
        %v3055 = vmax.f32 %v3053, %v3054
        %v3056 = vrot.slane %v3055, 4
        %v3057 = vmax.f32 %v3055, %v3056
        %v3058 = vrot.slane %v3057, 2
        %v3059 = vmax.f32 %v3057, %v3058
        %v3060 = vrot.slane %v3059, 1
        %v3061 = vmax.f32 %v3059, %v3060
        %v3062 = vmax.f32 %v3049, %v3051
        %v3063 = vmax.f32 %v3050, %v3052
        %v3064 = vmax.f32 %v3062, %v3063
        %v3065 = vrot.slane %v3064, 4
        %v3066 = vmax.f32 %v3064, %v3065
        %v3067 = vrot.slane %v3066, 2
        %v3068 = vmax.f32 %v3066, %v3067
        %v3069 = vrot.slane %v3068, 1
        %v3070 = vmax.f32 %v3068, %v3069
        %vm3073 = vcmask 1041409
        %v3074 = vsel %vm3073, %v1568, %v1559
        %v3078 = vsel %vm3073, %v2082, %v2073
        %v3082 = vsel %vm3073, %v3070, %v3061
        %v3084 = vpack.c.bf16 %v3074, %v3074
        %v3085 = vpack.c.bf16 %v3078, %v3078
        %v3086 = vpack.c.bf16 %v3082, %v3082
        %v3087 = vld [vmem:[#allocation9] sm:$0xf]
        %v3088 = vld [vmem:[#allocation9 + $0x4] sm:$0xf]
        %v3089 = vld [vmem:[#allocation9 + $0x8] sm:$0xf]
        %v3090 = vld [vmem:[#allocation9 + $0xc] sm:$0xf]
        %v3091 = vld [vmem:[#allocation9 + $0x10] sm:$0xf]
        %v3092 = vld [vmem:[#allocation9 + $0x14] sm:$0xf]
        %v3093 = vld [vmem:[#allocation9 + $0x18] sm:$0xf]
        %v3094 = vld [vmem:[#allocation9 + $0x1c] sm:$0xf]
        %v3095 = vld [vmem:[#allocation9 + $0x20] sm:$0xf]
        %v3096 = vld [vmem:[#allocation9 + $0x24] sm:$0xf]
        %v3097 = vld [vmem:[#allocation9 + $0x28] sm:$0xf]
        %v3098 = vld [vmem:[#allocation9 + $0x2c] sm:$0xf]
        %v3099 = vld [vmem:[#allocation9 + $0x30] sm:$0xf]
        %v3100 = vld [vmem:[#allocation9 + $0x34] sm:$0xf]
        %v3101 = vld [vmem:[#allocation9 + $0x38] sm:$0xf]
        %v3102 = vld [vmem:[#allocation9 + $0x3c] sm:$0xf]
        %v3103 = vld [vmem:[#allocation9 + $0x40] sm:$0xf]
        %v3104 = vld [vmem:[#allocation9 + $0x44] sm:$0xf]
        %v3105 = vld [vmem:[#allocation9 + $0x48] sm:$0xf]
        %v3106 = vld [vmem:[#allocation9 + $0x4c] sm:$0xf]
        %v3107 = vld [vmem:[#allocation9 + $0x50] sm:$0xf]
        %v3108 = vld [vmem:[#allocation9 + $0x54] sm:$0xf]
        %v3109 = vld [vmem:[#allocation9 + $0x58] sm:$0xf]
        %v3110 = vld [vmem:[#allocation9 + $0x5c] sm:$0xf]
        %v3111 = vld [vmem:[#allocation9 + $0x60] sm:$0xf]
        %v3112 = vld [vmem:[#allocation9 + $0x64] sm:$0xf]
        %v3113 = vld [vmem:[#allocation9 + $0x68] sm:$0xf]
        %v3114 = vld [vmem:[#allocation9 + $0x6c] sm:$0xf]
        %v3115 = vld [vmem:[#allocation9 + $0x70] sm:$0xf]
        %v3116 = vld [vmem:[#allocation9 + $0x74] sm:$0xf]
        %v3117 = vld [vmem:[#allocation9 + $0x78] sm:$0xf]
        %v3118 = vld [vmem:[#allocation9 + $0x7c] sm:$0xf]
        %v3119 = vld [vmem:[#allocation9 + $0x80] sm:$0xf]
        %v3120 = vld [vmem:[#allocation9 + $0x84] sm:$0xf]
        %v3121 = vld [vmem:[#allocation9 + $0x88] sm:$0xf]
        %v3122 = vld [vmem:[#allocation9 + $0x8c] sm:$0xf]
        %v3123 = vld [vmem:[#allocation9 + $0x90] sm:$0xf]
        %v3124 = vld [vmem:[#allocation9 + $0x94] sm:$0xf]
        %v3125 = vld [vmem:[#allocation9 + $0x98] sm:$0xf]
        %v3126 = vld [vmem:[#allocation9 + $0x9c] sm:$0xf]
        %v3127 = vld [vmem:[#allocation9 + $0xa0] sm:$0xf]
        %v3128 = vld [vmem:[#allocation9 + $0xa4] sm:$0xf]
        %v3129 = vld [vmem:[#allocation9 + $0xa8] sm:$0xf]
        %v3130 = vld [vmem:[#allocation9 + $0xac] sm:$0xf]
        %v3131 = vld [vmem:[#allocation9 + $0xb0] sm:$0xf]
        %v3132 = vld [vmem:[#allocation9 + $0xb4] sm:$0xf]
        %v3133 = vld [vmem:[#allocation9 + $0xb8] sm:$0xf]
        %v3134 = vld [vmem:[#allocation9 + $0xbc] sm:$0xf]
        %v3135 = vld [vmem:[%s10] sm:$0x1]
        %v3137 = vlaneseq
        %v3138 = vshrl.u32 %v3137, 7
        %v3139 = vsub.s32 0, %v3138
        %v3140 = vrot.slane %v3135, %v3139
        %v3190 = vunpack.c.l.b16 %v3087
        %v3191 = vunpack.c.l.b16 %v3088
        %v3192 = vunpack.c.l.b16 %v3089
        %v3193 = vunpack.c.l.b16 %v3090
        %v3194 = vunpack.c.l.b16 %v3091
        %v3195 = vunpack.c.l.b16 %v3092
        %v3196 = vunpack.c.l.b16 %v3093
        %v3197 = vunpack.c.l.b16 %v3094
        %v3198 = vunpack.c.l.b16 %v3095
        %v3199 = vunpack.c.l.b16 %v3096
        %v3200 = vunpack.c.l.b16 %v3097
        %v3201 = vunpack.c.l.b16 %v3098
        %v3202 = vunpack.c.l.b16 %v3099
        %v3203 = vunpack.c.l.b16 %v3100
        %v3204 = vunpack.c.l.b16 %v3101
        %v3205 = vunpack.c.l.b16 %v3102
        %v3206 = vunpack.c.l.b16 %v3103
        %v3207 = vunpack.c.l.b16 %v3104
        %v3208 = vunpack.c.l.b16 %v3105
        %v3209 = vunpack.c.l.b16 %v3106
        %v3210 = vunpack.c.l.b16 %v3107
        %v3211 = vunpack.c.l.b16 %v3108
        %v3212 = vunpack.c.l.b16 %v3109
        %v3213 = vunpack.c.l.b16 %v3110
        %v3214 = vunpack.c.l.b16 %v3111
        %v3215 = vunpack.c.l.b16 %v3112
        %v3216 = vunpack.c.l.b16 %v3113
        %v3217 = vunpack.c.l.b16 %v3114
        %v3218 = vunpack.c.l.b16 %v3115
        %v3219 = vunpack.c.l.b16 %v3116
        %v3220 = vunpack.c.l.b16 %v3117
        %v3221 = vunpack.c.l.b16 %v3118
        %v3222 = vunpack.c.l.b16 %v3119
        %v3223 = vunpack.c.l.b16 %v3120
        %v3224 = vunpack.c.l.b16 %v3121
        %v3225 = vunpack.c.l.b16 %v3122
        %v3226 = vunpack.c.l.b16 %v3123
        %v3227 = vunpack.c.l.b16 %v3124
        %v3228 = vunpack.c.l.b16 %v3125
        %v3229 = vunpack.c.l.b16 %v3126
        %v3230 = vunpack.c.l.b16 %v3127
        %v3231 = vunpack.c.l.b16 %v3128
        %v3232 = vunpack.c.l.b16 %v3129
        %v3233 = vunpack.c.l.b16 %v3130
        %v3234 = vunpack.c.l.b16 %v3131
        %v3235 = vunpack.c.l.b16 %v3132
        %v3236 = vunpack.c.l.b16 %v3133
        %v3237 = vunpack.c.l.b16 %v3134
        %v3238 = vpack.c.b16 %v3191, %v3190
        %v3239 = vpack.c.b16 %v3193, %v3192
        %v3240 = vpack.c.b16 %v3195, %v3194
        %v3241 = vpack.c.b16 %v3197, %v3196
        %v3242 = vpack.c.b16 %v3199, %v3198
        %v3243 = vpack.c.b16 %v3201, %v3200
        %v3244 = vpack.c.b16 %v3203, %v3202
        %v3245 = vpack.c.b16 %v3205, %v3204
        %v3246 = vpack.c.b16 %v3207, %v3206
        %v3247 = vpack.c.b16 %v3209, %v3208
        %v3248 = vpack.c.b16 %v3211, %v3210
        %v3249 = vpack.c.b16 %v3213, %v3212
        %v3250 = vpack.c.b16 %v3215, %v3214
        %v3251 = vpack.c.b16 %v3217, %v3216
        %v3252 = vpack.c.b16 %v3219, %v3218
        %v3253 = vpack.c.b16 %v3221, %v3220
        %v3254 = vpack.c.b16 %v3223, %v3222
        %v3255 = vpack.c.b16 %v3225, %v3224
        %v3256 = vpack.c.b16 %v3227, %v3226
        %v3257 = vpack.c.b16 %v3229, %v3228
        %v3258 = vpack.c.b16 %v3231, %v3230
        %v3259 = vpack.c.b16 %v3233, %v3232
        %v3260 = vpack.c.b16 %v3235, %v3234
        %v3261 = vpack.c.b16 %v3237, %v3236
        %3286 = vmatprep.subr.bf16.mxu0 0
        %3287 = vmatpush1.bf16.msra.mxu0 %v3238
        %3288 = vmatprep.subr.bf16.mxu0 0
        %3289 = vmatpush1.bf16.msra.mxu0 %v3239
        %3290 = vmatprep.subr.bf16.mxu0 0
        %3291 = vmatpush1.bf16.msra.mxu0 %v3240
        %3292 = vmatprep.subr.bf16.mxu0 0
        %3293 = vmatpush1.bf16.msra.mxu0 %v3241
        %3294 = vmatprep.subr.bf16.mxu0 0
        %3295 = vmatpush1.bf16.msra.mxu0 %v3242
        %3296 = vmatprep.subr.bf16.mxu0 0
        %3297 = vmatpush1.bf16.msra.mxu0 %v3243
        %3298 = vmatprep.subr.bf16.mxu0 0
        %3299 = vmatpush1.bf16.msra.mxu0 %v3244
        %3300 = vmatprep.subr.bf16.mxu0 0
        %3301 = vmatpush1.bf16.msra.mxu0 %v3245
        %3302 = vmatprep.subr.bf16.mxu0 0
        %3303 = vmatpush1.bf16.msra.mxu0 %v3246
        %3304 = vmatprep.subr.bf16.mxu0 0
        %3305 = vmatpush1.bf16.msra.mxu0 %v3247
        %3306 = vmatprep.subr.bf16.mxu0 0
        %3307 = vmatpush1.bf16.msra.mxu0 %v3248
        %3308 = vmatprep.subr.bf16.mxu0 0
        %3309 = vmatpush1.bf16.msra.mxu0 %v3249
        %3310 = vmatprep.subr.bf16.mxu0 0
        %3311 = vmatpush1.bf16.msra.mxu0 %v3250
        %3312 = vmatprep.subr.bf16.mxu0 0
        %3313 = vmatpush1.bf16.msra.mxu0 %v3251
        %3314 = vmatprep.subr.bf16.mxu0 0
        %3315 = vmatpush1.bf16.msra.mxu0 %v3252
        %3316 = vmatprep.subr.bf16.mxu0 0
        %3317 = vmatpush1.bf16.msra.mxu0 %v3253
        %3318 = vmatprep.mubr.bf16.mxu0 %v3085
        %3319 = vmatmul.mubr.bf16.gmra.mrb[0].mxu0 %v3084
        %v3320 = vpop.f32.mrb[0].mxu0
        %v3321 = vadd.f32 %v3140, %v3320
        %v3322 = vpop.f32.mrb[0].mxu0
        %v3323 = vpop.f32.mrb[0].mxu0
        %v3324 = vpop.f32.mrb[0].mxu0
        %3325 = vdwg.mxu0
        %3326 = vmatprep.subr.bf16.mxu0 0
        %3327 = vmatpush1.bf16.msra.mxu0 %v3254
        %3328 = vmatprep.subr.bf16.mxu0 0
        %3329 = vmatpush1.bf16.msra.mxu0 %v3255
        %3330 = vmatprep.subr.bf16.mxu0 0
        %3331 = vmatpush1.bf16.msra.mxu0 %v3256
        %3332 = vmatprep.subr.bf16.mxu0 0
        %3333 = vmatpush1.bf16.msra.mxu0 %v3257
        %3334 = vmatprep.subr.bf16.mxu0 0
        %3335 = vmatpush1.bf16.msra.mxu0 %v3258
        %3336 = vmatprep.subr.bf16.mxu0 0
        %3337 = vmatpush1.bf16.msra.mxu0 %v3259
        %3338 = vmatprep.subr.bf16.mxu0 0
        %3339 = vmatpush1.bf16.msra.mxu0 %v3260
        %3340 = vmatprep.subr.bf16.mxu0 0
        %3341 = vmatpush1.bf16.msra.mxu0 %v3261
        %3342 = vmatprep.subr.bf16.mxu0 0
        %3343 = vmatpush1.bf16.msra.mxu0 0
        %3344 = vmatprep.subr.bf16.mxu0 0
        %3345 = vmatpush1.bf16.msra.mxu0 0
        %3346 = vmatprep.subr.bf16.mxu0 0
        %3347 = vmatpush1.bf16.msra.mxu0 0
        %3348 = vmatprep.subr.bf16.mxu0 0
        %3349 = vmatpush1.bf16.msra.mxu0 0
        %3350 = vmatprep.subr.bf16.mxu0 0
        %3351 = vmatpush1.bf16.msra.mxu0 0
        %3352 = vmatprep.subr.bf16.mxu0 0
        %3353 = vmatpush1.bf16.msra.mxu0 0
        %3354 = vmatprep.subr.bf16.mxu0 0
        %3355 = vmatpush1.bf16.msra.mxu0 0
        %3356 = vmatprep.subr.bf16.mxu0 0
        %3357 = vmatpush1.bf16.msra.mxu0 0
        %3358 = vmatprep.mubr.bf16.mxu0 0
        %3359 = vmatmul.mubr.bf16.gmra.mrb[0].mxu0 %v3086
        %v3360 = vpop.f32.mrb[0].mxu0
        %v3361 = vadd.f32 %v3321, %v3360
        %v3362 = vpop.f32.mrb[0].mxu0
        %v3363 = vpop.f32.mrb[0].mxu0
        %v3364 = vpop.f32.mrb[0].mxu0
        %3365 = vdwg.mxu0
        %3366 = vst [vmem:[%s457] sm:$0x3] %v3361
        %p3367 = scmp.lt.s32.totalorder %s25, 1
        %s3368 = scalar_select %p3367, %s25, 1
        %s3369 = smul.addr %s3368, 2
        %s3370 = scalar_lea.vmem %s11, %s3369
        // Predicated region
        $region85: #{tfusion_forward.4} parent=63 // pred_check
          %p3371 = pneg %p279
        $region86: #{tfusion_forward.4} parent=63 // pred_check_branch
          %3373 = sbr.rel (%p3371) target = $region88
        $region87: #{tfusion_forward.4} parent=63 // pred_region
          _
        $region88: #{tfusion_forward.4} parent=63 // pred_fallthru
          _
      $region64: #{tfusion_forward.4} parent=5 // pred_fallthru
        _
      %p3374 = scmp.le.s32.totalorder 2, %s20
      // Predicated region
      $region89: #{tfusion_forward.4} parent=5 // pred_check
        %p3375 = pneg %p3374
      $region90: #{tfusion_forward.4} parent=5 // pred_check_branch
        %3377 = sbr.rel (%p3375) target = $region92
      $region91: #{tfusion_forward.4} parent=5 // pred_region
        %s3378 = ssub.s32 %s20, 2
        // Predicated region
        $region93: #{tfusion_forward.4} parent=91 // pred_check
          %p3379 = pneg %p285
        $region94: #{tfusion_forward.4} parent=91 // pred_check_branch
          %3381 = sbr.rel (%p3379) target = $region96
        $region95: #{tfusion_forward.4} parent=91 // pred_region
          %p3382 = scmp.lt.s32.totalorder %s26, 1
          %s3383 = scalar_select %p3382, %s26, 1
          %s3384 = smul.addr %s3383, 2
          %s3385 = scalar_lea.vmem %s11, %s3384
        $region96: #{tfusion_forward.4} parent=91 // pred_fallthru
          _
      $region92: #{tfusion_forward.4} parent=5 // pred_fallthru
        _
    $region6: #{tfusion_forward.4} parent=1 // loop_footer
      %s24 = sadd.s32 1, %s20
    $region7: #{tfusion_forward.4} parent=1 // loop_footer_branch
      %19 = sbr.rel target = $region3
    $region8: #{tfusion_forward.4} parent=1 // loop_exit
      _
    %3386 = vsyncpa [#allocation3], 1
    %s3387 = scalar_lea.sflag [#allocation3], 1
    %3388 = vsyncpa %s3387, 1
    %3389 = vsyncpa [#allocation5], 1
    %3390 = vsyncpa [#allocation8], 1

// kernel: tfusion_forward.3
$region0: #{tfusion_forward.3}
  #allocation0 [shape = 'u32[]', space=smem, size = 0x4, offset = 0x4, fixed_abs, tag = 'smem constant byte address 0x4 - core index']
  #allocation1 [shape = 'u32[144,128]{1,0:T(1,128)}', space=vmem, size = 0x12000, scoped, tag = 'internal scratch']
  %s0 = inlined_call_operand.vmem [shape: bf16[2,48,128], index: 0, kind: input, shape index: {}]
  %s1 = inlined_call_operand.hbm [shape: bf16[3,128,384], index: 1, kind: input, shape index: {}]
  %s2 = inlined_call_operand.vmem [shape: f32[1,384], index: 2, kind: input, shape index: {}]
  %s3 = inlined_call_operand.vmem [shape: bf16[3,128,128], index: 3, kind: input, shape index: {}]
  %s4 = inlined_call_operand.vmem [shape: f32[1,128], index: 4, kind: input, shape index: {}]
  %s5 = inlined_call_operand.vmem [shape: bf16[3,128,128], index: 5, kind: input, shape index: {}]
  %s6 = inlined_call_operand.vmem [shape: f32[1,128], index: 6, kind: input, shape index: {}]
  %s7 = inlined_call_operand.hbm [shape: bf16[3,128,128], index: 7, kind: input, shape index: {}]
  %s8 = inlined_call_operand.vmem [shape: f32[1,128], index: 8, kind: input, shape index: {}]
  %s9 = inlined_call_operand.hbm [shape: bf16[384,128], index: 9, kind: input, shape index: {}]
  %s10 = inlined_call_operand.vmem [shape: f32[1,128], index: 10, kind: input, shape index: {}]
  %s11 = inlined_call_operand.vmem [shape: f32[2,2,128], index: 11, kind: output, shape index: {}]
  %s12 = sld [smem:[#allocation0]]
  $region89: #{tfusion_forward.3} parent=0
    _
  %s14 = ssub.s32 1, %s12
  %s15 = scalar_select 0, %s14, %s12
  $region1: #{tfusion_forward.3} parent=0
    #allocation2 [shape = 'u8[294912]{0}', space=vmem, size = 0x48000, scoped, tag = 'input window, operand 1, single buffered']
    #allocation3 [shape = 's32[2]{0}', space=sflag, size = 0x8, scoped, tag = 'scoped memory for tfusion_forward.3']
    #allocation4 [shape = 'u8[98304]{0}', space=vmem, size = 0x18000, scoped, tag = 'input window, operand 7, single buffered']
    #allocation5 [shape = 's32[1]{0}', space=sflag, size = 0x4, scoped, tag = 'scoped memory for tfusion_forward.3']
    #allocation6 [shape = 'u8[98304]{0}', space=vmem, size = 0x18000, scoped, tag = 'input window, operand 9, single buffered']
    %16 = vsyncpa [#allocation3], 0
    %17 = vsyncpa [#allocation5], 0
    loop: start=0, step=1, limit=4
    $region2: #{tfusion_forward.3} parent=1 // loop_pre_header
      _
    $region3: #{tfusion_forward.3} parent=1 // loop_header
      %s19 = sphi 0, %s23
      %p20 = scmp.ge.s32.totalorder %s19, 4
      %s29 = sphi 0, %s31
      %s32 = sphi 0, %s29
      %s33 = sphi 0, %s32
      %s49 = sphi 0, %s33
      %s53 = sphi 0, %s53
      %s55 = sphi 0, %s53
      %s56 = sphi 0, %s55
      %s70 = sphi 0, %s56
      %s74 = sphi 0, %s74
      %s76 = sphi 0, %s74
      %s77 = sphi 0, %s76
      %s91 = sphi 0, %s77
      %s95 = sphi 0, %s95
      %s97 = sphi 0, %s95
      %s98 = sphi 0, %s97
      %s112 = sphi 0, %s98
      %s116 = sphi 0, %s116
      %s118 = sphi 0, %s116
      %s119 = sphi 0, %s118
      %s133 = sphi 0, %s119
      %s137 = sphi 0, %s137
      %s139 = sphi 0, %s137
      %s140 = sphi 0, %s139
      %s154 = sphi 0, %s140
      %s158 = sphi 0, %s158
      %s160 = sphi 0, %s158
      %s161 = sphi 0, %s160
      %s175 = sphi 0, %s161
      %s179 = sphi 0, %s179
      %s181 = sphi 0, %s179
      %s182 = sphi 0, %s181
      %s196 = sphi 0, %s182
      %s200 = sphi 0, %s200
      %s202 = sphi 0, %s200
      %s203 = sphi 0, %s202
      %s217 = sphi 0, %s203
      %s221 = sphi 0, %s221
      %s223 = sphi 0, %s221
      %s224 = sphi 0, %s223
      %s238 = sphi 0, %s224
      %s242 = sphi 0, %s242
      %s244 = sphi 0, %s242
      %s245 = sphi 0, %s244
      %s259 = sphi 0, %s245
      %s265 = sphi 0, %s267
      %s268 = sphi 0, %s265
      %s269 = sphi 0, %s268
      %s285 = sphi 0, %s269
    $region4: #{tfusion_forward.3} parent=1 // loop_header_branch
      %22 = sbr.rel (%p20) target = $region8
    $region5: #{tfusion_forward.3} parent=1 // loop_body
      %s24 = ssub.s32 %s19, 1
      %s25 = ssub.s32 %s19, 2
      %s26 = sadd.s32 %s19, 1
      %s27 = ssub.s32 %s19, %s26
      %p28 = scmp.eq.s32.totalorder %s27, 0
      %s30 = sadd.s32 %s29, 1
      %s31 = scalar_select %p28, %s29, %s30
      %p34 = pneg %p28
      %p35 = scmp.eq.s32.totalorder %s19, 1
      %p36 = por %p34, %p35
      %p37 = scmp.ne.s32.totalorder %s29, %s32
      %p38 = scmp.eq.s32.totalorder %s19, 0
      %p39 = por %p37, %p38
      %p40 = scmp.ne.s32.totalorder %s29, %s32
      %p41 = scmp.eq.s32.totalorder %s24, 1
      %p42 = por %p40, %p41
      %p43 = scmp.ne.s32.totalorder %s32, %s33
      %p44 = scmp.eq.s32.totalorder %s24, 0
      %p45 = por %p43, %p44
      %p46 = scmp.ne.s32.totalorder %s32, %s33
      %p47 = scmp.eq.s32.totalorder %s25, 1
      %p48 = por %p46, %p47
      %p50 = scmp.ne.s32.totalorder %s33, %s49
      %p51 = scmp.eq.s32.totalorder %s25, 0
      %p52 = por %p50, %p51
      %s54 = sadd.s32 %s53, 1
      %p57 = scmp.eq.s32.totalorder %s19, 1
      %p58 = scmp.ne.s32.totalorder %s53, %s55
      %p59 = scmp.eq.s32.totalorder %s19, 0
      %p60 = por %p58, %p59
      %p61 = scmp.ne.s32.totalorder %s53, %s55
      %p62 = scmp.eq.s32.totalorder %s24, 1
      %p63 = por %p61, %p62
      %p64 = scmp.ne.s32.totalorder %s55, %s56
      %p65 = scmp.eq.s32.totalorder %s24, 0
      %p66 = por %p64, %p65
      %p67 = scmp.ne.s32.totalorder %s55, %s56
      %p68 = scmp.eq.s32.totalorder %s25, 1
      %p69 = por %p67, %p68
      %p71 = scmp.ne.s32.totalorder %s56, %s70
      %p72 = scmp.eq.s32.totalorder %s25, 0
      %p73 = por %p71, %p72
      %s75 = sadd.s32 %s74, 1
      %p78 = scmp.eq.s32.totalorder %s19, 1
      %p79 = scmp.ne.s32.totalorder %s74, %s76
      %p80 = scmp.eq.s32.totalorder %s19, 0
      %p81 = por %p79, %p80
      %p82 = scmp.ne.s32.totalorder %s74, %s76
      %p83 = scmp.eq.s32.totalorder %s24, 1
      %p84 = por %p82, %p83
      %p85 = scmp.ne.s32.totalorder %s76, %s77
      %p86 = scmp.eq.s32.totalorder %s24, 0
      %p87 = por %p85, %p86
      %p88 = scmp.ne.s32.totalorder %s76, %s77
      %p89 = scmp.eq.s32.totalorder %s25, 1
      %p90 = por %p88, %p89
      %p92 = scmp.ne.s32.totalorder %s77, %s91
      %p93 = scmp.eq.s32.totalorder %s25, 0
      %p94 = por %p92, %p93
      %s96 = sadd.s32 %s95, 1
      %p99 = scmp.eq.s32.totalorder %s19, 1
      %p100 = scmp.ne.s32.totalorder %s95, %s97
      %p101 = scmp.eq.s32.totalorder %s19, 0
      %p102 = por %p100, %p101
      %p103 = scmp.ne.s32.totalorder %s95, %s97
      %p104 = scmp.eq.s32.totalorder %s24, 1
      %p105 = por %p103, %p104
      %p106 = scmp.ne.s32.totalorder %s97, %s98
      %p107 = scmp.eq.s32.totalorder %s24, 0
      %p108 = por %p106, %p107
      %p109 = scmp.ne.s32.totalorder %s97, %s98
      %p110 = scmp.eq.s32.totalorder %s25, 1
      %p111 = por %p109, %p110
      %p113 = scmp.ne.s32.totalorder %s98, %s112
      %p114 = scmp.eq.s32.totalorder %s25, 0
      %p115 = por %p113, %p114
      %s117 = sadd.s32 %s116, 1
      %p120 = scmp.eq.s32.totalorder %s19, 1
      %p121 = scmp.ne.s32.totalorder %s116, %s118
      %p122 = scmp.eq.s32.totalorder %s19, 0
      %p123 = por %p121, %p122
      %p124 = scmp.ne.s32.totalorder %s116, %s118
      %p125 = scmp.eq.s32.totalorder %s24, 1
      %p126 = por %p124, %p125
      %p127 = scmp.ne.s32.totalorder %s118, %s119
      %p128 = scmp.eq.s32.totalorder %s24, 0
      %p129 = por %p127, %p128
      %p130 = scmp.ne.s32.totalorder %s118, %s119
      %p131 = scmp.eq.s32.totalorder %s25, 1
      %p132 = por %p130, %p131
      %p134 = scmp.ne.s32.totalorder %s119, %s133
      %p135 = scmp.eq.s32.totalorder %s25, 0
      %p136 = por %p134, %p135
      %s138 = sadd.s32 %s137, 1
      %p141 = scmp.eq.s32.totalorder %s19, 1
      %p142 = scmp.ne.s32.totalorder %s137, %s139
      %p143 = scmp.eq.s32.totalorder %s19, 0
      %p144 = por %p142, %p143
      %p145 = scmp.ne.s32.totalorder %s137, %s139
      %p146 = scmp.eq.s32.totalorder %s24, 1
      %p147 = por %p145, %p146
      %p148 = scmp.ne.s32.totalorder %s139, %s140
      %p149 = scmp.eq.s32.totalorder %s24, 0
      %p150 = por %p148, %p149
      %p151 = scmp.ne.s32.totalorder %s139, %s140
      %p152 = scmp.eq.s32.totalorder %s25, 1
      %p153 = por %p151, %p152
      %p155 = scmp.ne.s32.totalorder %s140, %s154
      %p156 = scmp.eq.s32.totalorder %s25, 0
      %p157 = por %p155, %p156
      %s159 = sadd.s32 %s158, 1
      %p162 = scmp.eq.s32.totalorder %s19, 1
      %p163 = scmp.ne.s32.totalorder %s158, %s160
      %p164 = scmp.eq.s32.totalorder %s19, 0
      %p165 = por %p163, %p164
      %p166 = scmp.ne.s32.totalorder %s158, %s160
      %p167 = scmp.eq.s32.totalorder %s24, 1
      %p168 = por %p166, %p167
      %p169 = scmp.ne.s32.totalorder %s160, %s161
      %p170 = scmp.eq.s32.totalorder %s24, 0
      %p171 = por %p169, %p170
      %p172 = scmp.ne.s32.totalorder %s160, %s161
      %p173 = scmp.eq.s32.totalorder %s25, 1
      %p174 = por %p172, %p173
      %p176 = scmp.ne.s32.totalorder %s161, %s175
      %p177 = scmp.eq.s32.totalorder %s25, 0
      %p178 = por %p176, %p177
      %s180 = sadd.s32 %s179, 1
      %p183 = scmp.eq.s32.totalorder %s19, 1
      %p184 = scmp.ne.s32.totalorder %s179, %s181
      %p185 = scmp.eq.s32.totalorder %s19, 0
      %p186 = por %p184, %p185
      %p187 = scmp.ne.s32.totalorder %s179, %s181
      %p188 = scmp.eq.s32.totalorder %s24, 1
      %p189 = por %p187, %p188
      %p190 = scmp.ne.s32.totalorder %s181, %s182
      %p191 = scmp.eq.s32.totalorder %s24, 0
      %p192 = por %p190, %p191
      %p193 = scmp.ne.s32.totalorder %s181, %s182
      %p194 = scmp.eq.s32.totalorder %s25, 1
      %p195 = por %p193, %p194
      %p197 = scmp.ne.s32.totalorder %s182, %s196
      %p198 = scmp.eq.s32.totalorder %s25, 0
      %p199 = por %p197, %p198
      %s201 = sadd.s32 %s200, 1
      %p204 = scmp.eq.s32.totalorder %s19, 1
      %p205 = scmp.ne.s32.totalorder %s200, %s202
      %p206 = scmp.eq.s32.totalorder %s19, 0
      %p207 = por %p205, %p206
      %p208 = scmp.ne.s32.totalorder %s200, %s202
      %p209 = scmp.eq.s32.totalorder %s24, 1
      %p210 = por %p208, %p209
      %p211 = scmp.ne.s32.totalorder %s202, %s203
      %p212 = scmp.eq.s32.totalorder %s24, 0
      %p213 = por %p211, %p212
      %p214 = scmp.ne.s32.totalorder %s202, %s203
      %p215 = scmp.eq.s32.totalorder %s25, 1
      %p216 = por %p214, %p215
      %p218 = scmp.ne.s32.totalorder %s203, %s217
      %p219 = scmp.eq.s32.totalorder %s25, 0
      %p220 = por %p218, %p219
      %s222 = sadd.s32 %s221, 1
      %p225 = scmp.eq.s32.totalorder %s19, 1
      %p226 = scmp.ne.s32.totalorder %s221, %s223
      %p227 = scmp.eq.s32.totalorder %s19, 0
      %p228 = por %p226, %p227
      %p229 = scmp.ne.s32.totalorder %s221, %s223
      %p230 = scmp.eq.s32.totalorder %s24, 1
      %p231 = por %p229, %p230
      %p232 = scmp.ne.s32.totalorder %s223, %s224
      %p233 = scmp.eq.s32.totalorder %s24, 0
      %p234 = por %p232, %p233
      %p235 = scmp.ne.s32.totalorder %s223, %s224
      %p236 = scmp.eq.s32.totalorder %s25, 1
      %p237 = por %p235, %p236
      %p239 = scmp.ne.s32.totalorder %s224, %s238
      %p240 = scmp.eq.s32.totalorder %s25, 0
      %p241 = por %p239, %p240
      %s243 = sadd.s32 %s242, 1
      %p246 = scmp.eq.s32.totalorder %s19, 1
      %p247 = scmp.ne.s32.totalorder %s242, %s244
      %p248 = scmp.eq.s32.totalorder %s19, 0
      %p249 = por %p247, %p248
      %p250 = scmp.ne.s32.totalorder %s242, %s244
      %p251 = scmp.eq.s32.totalorder %s24, 1
      %p252 = por %p250, %p251
      %p253 = scmp.ne.s32.totalorder %s244, %s245
      %p254 = scmp.eq.s32.totalorder %s24, 0
      %p255 = por %p253, %p254
      %p256 = scmp.ne.s32.totalorder %s244, %s245
      %p257 = scmp.eq.s32.totalorder %s25, 1
      %p258 = por %p256, %p257
      %p260 = scmp.ne.s32.totalorder %s245, %s259
      %p261 = scmp.eq.s32.totalorder %s25, 0
      %p262 = por %p260, %p261
      %s263 = ssub.s32 %s19, %s26
      %p264 = scmp.eq.s32.totalorder %s263, 0
      %s266 = sadd.s32 %s265, 1
      %s267 = scalar_select %p264, %s265, %s266
      %p270 = pneg %p264
      %p271 = scmp.eq.s32.totalorder %s19, 1
      %p272 = por %p270, %p271
      %p273 = scmp.ne.s32.totalorder %s265, %s268
      %p274 = scmp.eq.s32.totalorder %s19, 0
      %p275 = por %p273, %p274
      %p276 = scmp.ne.s32.totalorder %s265, %s268
      %p277 = scmp.eq.s32.totalorder %s24, 1
      %p278 = por %p276, %p277
      %p279 = scmp.ne.s32.totalorder %s268, %s269
      %p280 = scmp.eq.s32.totalorder %s24, 0
      %p281 = por %p279, %p280
      %p282 = scmp.ne.s32.totalorder %s268, %s269
      %p283 = scmp.eq.s32.totalorder %s25, 1
      %p284 = por %p282, %p283
      %p286 = scmp.ne.s32.totalorder %s269, %s285
      %p287 = scmp.eq.s32.totalorder %s25, 0
      %p288 = por %p286, %p287
      %p289 = scmp.le.s32.totalorder 1, %s19
      %p290 = scmp.lt.s32.totalorder %s19, 3
      %p291 = pnand %p289, %p290
      %p292 = pneg %p291
      // Predicated region
      $region9: #{tfusion_forward.3} parent=5 // pred_check
        _
      $region10: #{tfusion_forward.3} parent=5 // pred_check_branch
        %294 = sbr.rel (%p291) target = $region12
      $region11: #{tfusion_forward.3} parent=5 // pred_region
        %s295 = ssub.s32 %s19, 1
        // Predicated region
        $region13: #{tfusion_forward.3} parent=11 // pred_check
          %p296 = pneg %p66
        $region14: #{tfusion_forward.3} parent=11 // pred_check_branch
          %298 = sbr.rel (%p296) target = $region16
        $region15: #{tfusion_forward.3} parent=11 // pred_region
          %s300 = ssub.s32 9216, 9216
          %301 = vsyncadd [#allocation3], %s300
          %s302 = sshll.u32 [#allocation2], 4
          %s303 = int_to_ptr.vmem [resolvable:$true] %s302
          %308 = dma.hbm_to_vmem [thread:$0]  %s1, 9216, %s303, [#allocation3], 192, 192, 12
        $region16: #{tfusion_forward.3} parent=11 // pred_fallthru
          _
        // Predicated region
        $region17: #{tfusion_forward.3} parent=11 // pred_check
          %p309 = pneg %p87
        $region18: #{tfusion_forward.3} parent=11 // pred_check_branch
          %311 = sbr.rel (%p309) target = $region20
        $region19: #{tfusion_forward.3} parent=11 // pred_region
          _
        $region20: #{tfusion_forward.3} parent=11 // pred_fallthru
          _
        // Predicated region
        $region21: #{tfusion_forward.3} parent=11 // pred_check
          %p312 = pneg %p108
        $region22: #{tfusion_forward.3} parent=11 // pred_check_branch
          %314 = sbr.rel (%p312) target = $region24
        $region23: #{tfusion_forward.3} parent=11 // pred_region
          _
        $region24: #{tfusion_forward.3} parent=11 // pred_fallthru
          _
        // Predicated region
        $region25: #{tfusion_forward.3} parent=11 // pred_check
          %p315 = pneg %p129
        $region26: #{tfusion_forward.3} parent=11 // pred_check_branch
          %317 = sbr.rel (%p315) target = $region28
        $region27: #{tfusion_forward.3} parent=11 // pred_region
          _
        $region28: #{tfusion_forward.3} parent=11 // pred_fallthru
          _
        // Predicated region
        $region29: #{tfusion_forward.3} parent=11 // pred_check
          %p318 = pneg %p150
        $region30: #{tfusion_forward.3} parent=11 // pred_check_branch
          %320 = sbr.rel (%p318) target = $region32
        $region31: #{tfusion_forward.3} parent=11 // pred_region
          _
        $region32: #{tfusion_forward.3} parent=11 // pred_fallthru
          _
        // Predicated region
        $region33: #{tfusion_forward.3} parent=11 // pred_check
          %p321 = pneg %p171
        $region34: #{tfusion_forward.3} parent=11 // pred_check_branch
          %323 = sbr.rel (%p321) target = $region36
        $region35: #{tfusion_forward.3} parent=11 // pred_region
          _
        $region36: #{tfusion_forward.3} parent=11 // pred_fallthru
          _
        // Predicated region
        $region37: #{tfusion_forward.3} parent=11 // pred_check
          %p324 = pneg %p192
        $region38: #{tfusion_forward.3} parent=11 // pred_check_branch
          %326 = sbr.rel (%p324) target = $region40
        $region39: #{tfusion_forward.3} parent=11 // pred_region
          %s328 = ssub.s32 3072, 3072
          %329 = vsyncadd [#allocation5], %s328
          %s330 = sshll.u32 [#allocation4], 4
          %s331 = int_to_ptr.vmem [resolvable:$true] %s330
          %336 = dma.hbm_to_vmem [thread:$0]  %s7, 3072, %s331, [#allocation5], 64, 64, 4
        $region40: #{tfusion_forward.3} parent=11 // pred_fallthru
          _
        // Predicated region
        $region41: #{tfusion_forward.3} parent=11 // pred_check
          %p337 = pneg %p213
        $region42: #{tfusion_forward.3} parent=11 // pred_check_branch
          %339 = sbr.rel (%p337) target = $region44
        $region43: #{tfusion_forward.3} parent=11 // pred_region
          _
        $region44: #{tfusion_forward.3} parent=11 // pred_fallthru
          _
        // Predicated region
        $region45: #{tfusion_forward.3} parent=11 // pred_check
          %p340 = pneg %p234
        $region46: #{tfusion_forward.3} parent=11 // pred_check_branch
          %342 = sbr.rel (%p340) target = $region48
        $region47: #{tfusion_forward.3} parent=11 // pred_region
          %s344 = ssub.s32 3072, 3072
          %345 = vsyncadd [#allocation5], %s344
          %s346 = sshll.u32 [#allocation6], 4
          %s347 = int_to_ptr.vmem [resolvable:$true] %s346
          %352 = dma.hbm_to_vmem [thread:$0]  %s9, 3072, %s347, [#allocation5], 64, 64, 4
        $region48: #{tfusion_forward.3} parent=11 // pred_fallthru
          _
        // Predicated region
        $region49: #{tfusion_forward.3} parent=11 // pred_check
          %p353 = pneg %p255
        $region50: #{tfusion_forward.3} parent=11 // pred_check_branch
          %355 = sbr.rel (%p353) target = $region52
        $region51: #{tfusion_forward.3} parent=11 // pred_region
          _
        $region52: #{tfusion_forward.3} parent=11 // pred_fallthru
          _
      $region12: #{tfusion_forward.3} parent=5 // pred_fallthru
        _
      %p356 = scmp.lt.s32.totalorder %s19, 2
      // Predicated region
      $region53: #{tfusion_forward.3} parent=5 // pred_check
        %p357 = pneg %p356
      $region54: #{tfusion_forward.3} parent=5 // pred_check_branch
        %359 = sbr.rel (%p357) target = $region56
      $region55: #{tfusion_forward.3} parent=5 // pred_region
        // Predicated region
        $region57: #{tfusion_forward.3} parent=55 // pred_check
          %p360 = pneg %p39
        $region58: #{tfusion_forward.3} parent=55 // pred_check_branch
          %362 = sbr.rel (%p360) target = $region60
        $region59: #{tfusion_forward.3} parent=55 // pred_region
          %p363 = scmp.lt.s32.totalorder %s19, 1
          %s364 = scalar_select %p363, %s19, 1
          %s365 = smul.addr %s364, 6
          %s366 = smul.addr %s365, 4
          %s367 = scalar_lea.vmem %s0, %s366
        $region60: #{tfusion_forward.3} parent=55 // pred_fallthru
          _
      $region56: #{tfusion_forward.3} parent=5 // pred_fallthru
        _
      %p368 = scmp.le.s32.totalorder 1, %s19
      %p369 = scmp.lt.s32.totalorder %s19, 3
      %p370 = pnand %p368, %p369
      %p371 = pneg %p370
      // Predicated region
      $region61: #{tfusion_forward.3} parent=5 // pred_check
        _
      $region62: #{tfusion_forward.3} parent=5 // pred_check_branch
        %373 = sbr.rel (%p370) target = $region64
      $region63: #{tfusion_forward.3} parent=5 // pred_region
        %s374 = ssub.s32 %s19, 1
        // Predicated region
        $region65: #{tfusion_forward.3} parent=63 // pred_check
          %p375 = pneg %p66
        $region66: #{tfusion_forward.3} parent=63 // pred_check_branch
          %377 = sbr.rel (%p375) target = $region68
        $region67: #{tfusion_forward.3} parent=63 // pred_region
          %378 = dma.done [#allocation3], 9216
        $region68: #{tfusion_forward.3} parent=63 // pred_fallthru
          _
        // Predicated region
        $region69: #{tfusion_forward.3} parent=63 // pred_check
          %p379 = pneg %p192
        $region70: #{tfusion_forward.3} parent=63 // pred_check_branch
          %381 = sbr.rel (%p379) target = $region72
        $region71: #{tfusion_forward.3} parent=63 // pred_region
          %382 = dma.done [#allocation5], 3072
        $region72: #{tfusion_forward.3} parent=63 // pred_fallthru
          _
        // Predicated region
        $region73: #{tfusion_forward.3} parent=63 // pred_check
          %p383 = pneg %p234
        $region74: #{tfusion_forward.3} parent=63 // pred_check_branch
          %385 = sbr.rel (%p383) target = $region76
        $region75: #{tfusion_forward.3} parent=63 // pred_region
          %386 = dma.done [#allocation5], 3072
        $region76: #{tfusion_forward.3} parent=63 // pred_fallthru
          _
        %p387 = scmp.lt.s32.totalorder %s24, 1
        %s388 = scalar_select %p387, %s24, 1
        %s389 = smul.addr %s388, 6
        %s390 = smul.addr %s389, 4
        %s391 = scalar_lea.vmem %s0, %s390
        %p392 = pneg %p45
        %p393 = pneg %p42
        %p394 = pneg %p66
        %p395 = pneg %p63
        %p396 = pneg %p87
        %p397 = pneg %p84
        %p398 = pneg %p108
        %p399 = pneg %p105
        %p400 = pneg %p129
        %p401 = pneg %p126
        %p402 = pneg %p150
        %p403 = pneg %p147
        %p404 = pneg %p171
        %p405 = pneg %p168
        %p406 = pneg %p192
        %p407 = pneg %p189
        %p408 = pneg %p213
        %p409 = pneg %p210
        %p410 = pneg %p234
        %p411 = pneg %p231
        %p412 = pneg %p255
        %p413 = pneg %p252
        %p414 = pneg %p281
        %p415 = pneg %p278
        %p416 = scmp.lt.s32.totalorder %s24, 1
        %s417 = scalar_select %p416, %s24, 1
        %s418 = smul.addr %s417, 2
        %s419 = scalar_lea.vmem %s11, %s418
        %p420 = scmp.lt.s32.totalorder %s24, 1
        %s421 = scalar_select %p420, %s24, 1
        %s422 = smul.addr %s421, 6
        %s423 = smul.addr %s422, 4
        %s424 = scalar_lea.vmem %s0, %s423
        %p425 = scmp.lt.s32.totalorder %s24, 1
        %s426 = scalar_select %p425, %s24, 1
        %s427 = smul.addr %s426, 2
        %s428 = scalar_lea.vmem %s11, %s427
        %v430 = vld [vmem:[%s424] sm:$0xf]
        %v431 = vld [vmem:[%s424 + $0x4] sm:$0xf]
        %v432 = vld [vmem:[%s424 + $0x8] sm:$0xf]
        %v433 = vld [vmem:[%s424 + $0xc] sm:$0xf]
        %v434 = vld [vmem:[%s424 + $0x10] sm:$0xf]
        %v435 = vld [vmem:[%s424 + $0x14] sm:$0xf]
        %v436 = vld [vmem:[#allocation2] sm:$0xff]
        %v437 = vld [vmem:[#allocation2 + $0x8] sm:$0xf]
        %v438 = vld [vmem:[#allocation2 + $0xc] sm:$0xff]
        %v439 = vld [vmem:[#allocation2 + $0x14] sm:$0xf]
        %v440 = vld [vmem:[#allocation2 + $0x18] sm:$0xff]
        %v441 = vld [vmem:[#allocation2 + $0x20] sm:$0xf]
        %v442 = vld [vmem:[#allocation2 + $0x24] sm:$0xff]
        %v443 = vld [vmem:[#allocation2 + $0x2c] sm:$0xf]
        %v444 = vld [vmem:[#allocation2 + $0x30] sm:$0xff]
        %v445 = vld [vmem:[#allocation2 + $0x38] sm:$0xf]
        %v446 = vld [vmem:[#allocation2 + $0x3c] sm:$0xff]
        %v447 = vld [vmem:[#allocation2 + $0x44] sm:$0xf]
        %v448 = vld [vmem:[#allocation2 + $0x48] sm:$0xff]
        %v449 = vld [vmem:[#allocation2 + $0x50] sm:$0xf]
        %v450 = vld [vmem:[#allocation2 + $0x54] sm:$0xff]
        %v451 = vld [vmem:[#allocation2 + $0x5c] sm:$0xf]
        %v452 = vld [vmem:[#allocation2 + $0x60] sm:$0xff]
        %v453 = vld [vmem:[#allocation2 + $0x68] sm:$0xf]
        %v454 = vld [vmem:[#allocation2 + $0x6c] sm:$0xff]
        %v455 = vld [vmem:[#allocation2 + $0x74] sm:$0xf]
        %v456 = vld [vmem:[#allocation2 + $0x78] sm:$0xff]
        %v457 = vld [vmem:[#allocation2 + $0x80] sm:$0xf]
        %v458 = vld [vmem:[#allocation2 + $0x84] sm:$0xff]
        %v459 = vld [vmem:[#allocation2 + $0x8c] sm:$0xf]
        %v460 = vld [vmem:[#allocation2 + $0x90] sm:$0xff]
        %v461 = vld [vmem:[#allocation2 + $0x98] sm:$0xf]
        %v462 = vld [vmem:[#allocation2 + $0x9c] sm:$0xff]
        %v463 = vld [vmem:[#allocation2 + $0xa4] sm:$0xf]
        %v464 = vld [vmem:[#allocation2 + $0xa8] sm:$0xff]
        %v465 = vld [vmem:[#allocation2 + $0xb0] sm:$0xf]
        %v466 = vld [vmem:[#allocation2 + $0xb4] sm:$0xff]
        %v467 = vld [vmem:[#allocation2 + $0xbc] sm:$0xf]
        %s468 = scalar_lea.vmem [#allocation2], 192
        %v469 = vld [vmem:[%s468] sm:$0xff]
        %v470 = vld [vmem:[%s468 + $0x8] sm:$0xf]
        %v471 = vld [vmem:[%s468 + $0xc] sm:$0xff]
        %v472 = vld [vmem:[%s468 + $0x14] sm:$0xf]
        %v473 = vld [vmem:[%s468 + $0x18] sm:$0xff]
        %v474 = vld [vmem:[%s468 + $0x20] sm:$0xf]
        %v475 = vld [vmem:[%s468 + $0x24] sm:$0xff]
        %v476 = vld [vmem:[%s468 + $0x2c] sm:$0xf]
        %v477 = vld [vmem:[%s468 + $0x30] sm:$0xff]
        %v478 = vld [vmem:[%s468 + $0x38] sm:$0xf]
        %v479 = vld [vmem:[%s468 + $0x3c] sm:$0xff]
        %v480 = vld [vmem:[%s468 + $0x44] sm:$0xf]
        %v481 = vld [vmem:[%s468 + $0x48] sm:$0xff]
        %v482 = vld [vmem:[%s468 + $0x50] sm:$0xf]
        %v483 = vld [vmem:[%s468 + $0x54] sm:$0xff]
        %v484 = vld [vmem:[%s468 + $0x5c] sm:$0xf]
        %v485 = vld [vmem:[%s468 + $0x60] sm:$0xff]
        %v486 = vld [vmem:[%s468 + $0x68] sm:$0xf]
        %v487 = vld [vmem:[%s468 + $0x6c] sm:$0xff]
        %v488 = vld [vmem:[%s468 + $0x74] sm:$0xf]
        %v489 = vld [vmem:[%s468 + $0x78] sm:$0xff]
        %v490 = vld [vmem:[%s468 + $0x80] sm:$0xf]
        %v491 = vld [vmem:[%s468 + $0x84] sm:$0xff]
        %v492 = vld [vmem:[%s468 + $0x8c] sm:$0xf]
        %v493 = vld [vmem:[%s468 + $0x90] sm:$0xff]
        %v494 = vld [vmem:[%s468 + $0x98] sm:$0xf]
        %v495 = vld [vmem:[%s468 + $0x9c] sm:$0xff]
        %v496 = vld [vmem:[%s468 + $0xa4] sm:$0xf]
        %v497 = vld [vmem:[%s468 + $0xa8] sm:$0xff]
        %v498 = vld [vmem:[%s468 + $0xb0] sm:$0xf]
        %v499 = vld [vmem:[%s468 + $0xb4] sm:$0xff]
        %v500 = vld [vmem:[%s468 + $0xbc] sm:$0xf]
        %v507 = vunpack.c.l.b16 %v430
        %v508 = vunpack.c.l.b16 %v431
        %v509 = vunpack.c.l.b16 %v432
        %v510 = vunpack.c.l.b16 %v433
        %v511 = vunpack.c.l.b16 %v434
        %v512 = vunpack.c.l.b16 %v435
        %v513 = vpack.c.b16 %v508, %v507
        %v514 = vpack.c.b16 %v510, %v509
        %v515 = vpack.c.b16 %v512, %v511
        %vm516 = vsmask.f32 7424
        %v518 = vshrl.u32 %v513, 16
        %v520 = vshll.u32 %v513, 16
        %v522 = vrot.slane %v520, 1
        %v523 = vor.u32 %v518, %v522
        %v525 = vshll.u32 %v514, 16
        %v527 = vrot.slane %v525, 1
        %v528 = vsel %vm516, %v523, %v527
        %v529 = vshrl.u32 %v514, 16
        %v531 = vor.u32 %v529, %v527
        %v533 = vshll.u32 %v515, 16
        %v535 = vrot.slane %v533, 1
        %v536 = vsel %vm516, %v531, %v535
        %v537 = vshrl.u32 %v515, 16
        %v539 = vor.u32 %v537, %v535
        %v575 = vunpack.c.l.b16 %v469
        %v576 = vunpack.c.h.b16 %v469
        %v577 = vunpack.c.l.b16 %v470
        %v578 = vunpack.c.l.b16 %v471
        %v579 = vunpack.c.h.b16 %v471
        %v580 = vunpack.c.l.b16 %v472
        %v581 = vunpack.c.l.b16 %v473
        %v582 = vunpack.c.h.b16 %v473
        %v583 = vunpack.c.l.b16 %v474
        %v584 = vunpack.c.l.b16 %v475
        %v585 = vunpack.c.h.b16 %v475
        %v586 = vunpack.c.l.b16 %v476
        %v587 = vunpack.c.l.b16 %v477
        %v588 = vunpack.c.h.b16 %v477
        %v589 = vunpack.c.l.b16 %v478
        %v590 = vunpack.c.l.b16 %v479
        %v591 = vunpack.c.h.b16 %v479
        %v592 = vunpack.c.l.b16 %v480
        %v593 = vunpack.c.l.b16 %v481
        %v594 = vunpack.c.h.b16 %v481
        %v595 = vunpack.c.l.b16 %v482
        %v596 = vunpack.c.l.b16 %v483
        %v597 = vunpack.c.h.b16 %v483
        %v598 = vunpack.c.l.b16 %v484
        %v599 = vunpack.c.l.b16 %v485
        %v600 = vunpack.c.h.b16 %v485
        %v601 = vunpack.c.l.b16 %v486
        %v602 = vunpack.c.l.b16 %v487
        %v603 = vunpack.c.h.b16 %v487
        %v604 = vunpack.c.l.b16 %v488
        %v605 = vunpack.c.l.b16 %v489
        %v606 = vunpack.c.h.b16 %v489
        %v607 = vunpack.c.l.b16 %v490
        %v608 = vunpack.c.l.b16 %v491
        %v609 = vunpack.c.h.b16 %v491
        %v610 = vunpack.c.l.b16 %v492
        %v611 = vunpack.c.l.b16 %v493
        %v612 = vunpack.c.h.b16 %v493
        %v613 = vunpack.c.l.b16 %v494
        %v614 = vunpack.c.l.b16 %v495
        %v615 = vunpack.c.h.b16 %v495
        %v616 = vunpack.c.l.b16 %v496
        %v617 = vunpack.c.l.b16 %v497
        %v618 = vunpack.c.h.b16 %v497
        %v619 = vunpack.c.l.b16 %v498
        %v620 = vunpack.c.l.b16 %v499
        %v621 = vunpack.c.h.b16 %v499
        %v622 = vunpack.c.l.b16 %v500
        %v623 = vpack.c.b16 %v578, %v575
        %v624 = vpack.c.b16 %v579, %v576
        %v625 = vpack.c.b16 %v580, %v577
        %v626 = vpack.c.b16 %v584, %v581
        %v627 = vpack.c.b16 %v585, %v582
        %v628 = vpack.c.b16 %v586, %v583
        %v629 = vpack.c.b16 %v590, %v587
        %v630 = vpack.c.b16 %v591, %v588
        %v631 = vpack.c.b16 %v592, %v589
        %v632 = vpack.c.b16 %v596, %v593
        %v633 = vpack.c.b16 %v597, %v594
        %v634 = vpack.c.b16 %v598, %v595
        %v635 = vpack.c.b16 %v602, %v599
        %v636 = vpack.c.b16 %v603, %v600
        %v637 = vpack.c.b16 %v604, %v601
        %v638 = vpack.c.b16 %v608, %v605
        %v639 = vpack.c.b16 %v609, %v606
        %v640 = vpack.c.b16 %v610, %v607
        %v641 = vpack.c.b16 %v614, %v611
        %v642 = vpack.c.b16 %v615, %v612
        %v643 = vpack.c.b16 %v616, %v613
        %v644 = vpack.c.b16 %v620, %v617
        %v645 = vpack.c.b16 %v621, %v618
        %v646 = vpack.c.b16 %v622, %v619
        %671 = vmatprep.subr.bf16.mxu0 %v624
        %672 = vmatpush1.bf16.msra.mxu0 %v623
        %673 = vmatprep.subr.bf16.mxu0 %v627
        %674 = vmatpush1.bf16.msra.mxu0 %v626
        %675 = vmatprep.subr.bf16.mxu0 %v630
        %676 = vmatpush1.bf16.msra.mxu0 %v629
        %677 = vmatprep.subr.bf16.mxu0 %v633
        %678 = vmatpush1.bf16.msra.mxu0 %v632
        %679 = vmatprep.subr.bf16.mxu0 %v636
        %680 = vmatpush1.bf16.msra.mxu0 %v635
        %681 = vmatprep.subr.bf16.mxu0 %v639
        %682 = vmatpush1.bf16.msra.mxu0 %v638
        %683 = vmatprep.subr.bf16.mxu0 %v642
        %684 = vmatpush1.bf16.msra.mxu0 %v641
        %685 = vmatprep.subr.bf16.mxu0 %v645
        %686 = vmatpush1.bf16.msra.mxu0 %v644
        %687 = vmatprep.subr.bf16.mxu0 0
        %688 = vmatpush1.bf16.msra.mxu0 0
        %689 = vmatprep.subr.bf16.mxu0 0
        %690 = vmatpush1.bf16.msra.mxu0 0
        %691 = vmatprep.subr.bf16.mxu0 0
        %692 = vmatpush1.bf16.msra.mxu0 0
        %693 = vmatprep.subr.bf16.mxu0 0
        %694 = vmatpush1.bf16.msra.mxu0 0
        %695 = vmatprep.subr.bf16.mxu0 0
        %696 = vmatpush1.bf16.msra.mxu0 0
        %697 = vmatprep.subr.bf16.mxu0 0
        %698 = vmatpush1.bf16.msra.mxu0 0
        %699 = vmatprep.subr.bf16.mxu0 0
        %700 = vmatpush1.bf16.msra.mxu0 0
        %701 = vmatprep.subr.bf16.mxu0 0
        %702 = vmatpush1.bf16.msra.mxu0 0
        %703 = vmatprep.mubr.bf16.mxu0 0
        %704 = vmatmul.mubr.bf16.gmra.mrb[0].mxu0 %v528
        %v705 = vpop.f32.mrb[0].mxu0
        %v706 = vadd.f32 0.0, %v705
        %v707 = vpop.f32.mrb[0].mxu0
        %v708 = vadd.f32 0.0, %v707
        %v709 = vpop.f32.mrb[0].mxu0
        %v710 = vadd.f32 0.0, %v709
        %v711 = vpop.f32.mrb[0].mxu0
        %v712 = vadd.f32 0.0, %v711
        %713 = vmatprep.mubr.bf16.mxu0 0
        %714 = vmatmul.mubr.bf16.gmra.mrb[0].mxu0 %v536
        %v715 = vpop.f32.mrb[0].mxu0
        %v716 = vadd.f32 0.0, %v715
        %v717 = vpop.f32.mrb[0].mxu0
        %v718 = vadd.f32 0.0, %v717
        %v719 = vpop.f32.mrb[0].mxu0
        %v720 = vadd.f32 0.0, %v719
        %v721 = vpop.f32.mrb[0].mxu0
        %v722 = vadd.f32 0.0, %v721
        %723 = vmatprep.mubr.bf16.mxu0 0
        %724 = vmatmul.mubr.bf16.gmra.mrb[0].mxu0 %v539
        %v725 = vpop.f32.mrb[0].mxu0
        %v726 = vadd.f32 0.0, %v725
        %v727 = vpop.f32.mrb[0].mxu0
        %v728 = vadd.f32 0.0, %v727
        %v729 = vpop.f32.mrb[0].mxu0
        %v730 = vadd.f32 0.0, %v729
        %v731 = vpop.f32.mrb[0].mxu0
        %v732 = vadd.f32 0.0, %v731
        %733 = vdwg.mxu0
        %734 = vmatprep.subr.bf16.mxu0 0
        %735 = vmatpush1.bf16.msra.mxu0 %v625
        %736 = vmatprep.subr.bf16.mxu0 0
        %737 = vmatpush1.bf16.msra.mxu0 %v628
        %738 = vmatprep.subr.bf16.mxu0 0
        %739 = vmatpush1.bf16.msra.mxu0 %v631
        %740 = vmatprep.subr.bf16.mxu0 0
        %741 = vmatpush1.bf16.msra.mxu0 %v634
        %742 = vmatprep.subr.bf16.mxu0 0
        %743 = vmatpush1.bf16.msra.mxu0 %v637
        %744 = vmatprep.subr.bf16.mxu0 0
        %745 = vmatpush1.bf16.msra.mxu0 %v640
        %746 = vmatprep.subr.bf16.mxu0 0
        %747 = vmatpush1.bf16.msra.mxu0 %v643
        %748 = vmatprep.subr.bf16.mxu0 0
        %749 = vmatpush1.bf16.msra.mxu0 %v646
        %750 = vmatprep.subr.bf16.mxu0 0
        %751 = vmatpush1.bf16.msra.mxu0 0
        %752 = vmatprep.subr.bf16.mxu0 0
        %753 = vmatpush1.bf16.msra.mxu0 0
        %754 = vmatprep.subr.bf16.mxu0 0
        %755 = vmatpush1.bf16.msra.mxu0 0
        %756 = vmatprep.subr.bf16.mxu0 0
        %757 = vmatpush1.bf16.msra.mxu0 0
        %758 = vmatprep.subr.bf16.mxu0 0
        %759 = vmatpush1.bf16.msra.mxu0 0
        %760 = vmatprep.subr.bf16.mxu0 0
        %761 = vmatpush1.bf16.msra.mxu0 0
        %762 = vmatprep.subr.bf16.mxu0 0
        %763 = vmatpush1.bf16.msra.mxu0 0
        %764 = vmatprep.subr.bf16.mxu0 0
        %765 = vmatpush1.bf16.msra.mxu0 0
        %766 = vmatprep.mubr.bf16.mxu0 0
        %767 = vmatmul.mubr.bf16.gmra.mrb[0].mxu0 %v528
        %v768 = vpop.f32.mrb[0].mxu0
        %v769 = vadd.f32 0.0, %v768
        %v770 = vpop.f32.mrb[0].mxu0
        %v771 = vpop.f32.mrb[0].mxu0
        %v772 = vadd.f32 0.0, %v771
        %v773 = vpop.f32.mrb[0].mxu0
        %774 = vmatprep.mubr.bf16.mxu0 0
        %775 = vmatmul.mubr.bf16.gmra.mrb[0].mxu0 %v536
        %v776 = vpop.f32.mrb[0].mxu0
        %v777 = vadd.f32 0.0, %v776
        %v778 = vpop.f32.mrb[0].mxu0
        %v779 = vpop.f32.mrb[0].mxu0
        %v780 = vadd.f32 0.0, %v779
        %v781 = vpop.f32.mrb[0].mxu0
        %782 = vmatprep.mubr.bf16.mxu0 0
        %783 = vmatmul.mubr.bf16.gmra.mrb[0].mxu0 %v539
        %v784 = vpop.f32.mrb[0].mxu0
        %v785 = vadd.f32 0.0, %v784
        %v786 = vpop.f32.mrb[0].mxu0
        %v787 = vpop.f32.mrb[0].mxu0
        %v788 = vadd.f32 0.0, %v787
        %v789 = vpop.f32.mrb[0].mxu0
        %790 = vdwg.mxu0
        %v826 = vunpack.c.l.b16 %v436
        %v827 = vunpack.c.h.b16 %v436
        %v828 = vunpack.c.l.b16 %v437
        %v829 = vunpack.c.l.b16 %v438
        %v830 = vunpack.c.h.b16 %v438
        %v831 = vunpack.c.l.b16 %v439
        %v832 = vunpack.c.l.b16 %v440
        %v833 = vunpack.c.h.b16 %v440
        %v834 = vunpack.c.l.b16 %v441
        %v835 = vunpack.c.l.b16 %v442
        %v836 = vunpack.c.h.b16 %v442
        %v837 = vunpack.c.l.b16 %v443
        %v838 = vunpack.c.l.b16 %v444
        %v839 = vunpack.c.h.b16 %v444
        %v840 = vunpack.c.l.b16 %v445
        %v841 = vunpack.c.l.b16 %v446
        %v842 = vunpack.c.h.b16 %v446
        %v843 = vunpack.c.l.b16 %v447
        %v844 = vunpack.c.l.b16 %v448
        %v845 = vunpack.c.h.b16 %v448
        %v846 = vunpack.c.l.b16 %v449
        %v847 = vunpack.c.l.b16 %v450
        %v848 = vunpack.c.h.b16 %v450
        %v849 = vunpack.c.l.b16 %v451
        %v850 = vunpack.c.l.b16 %v452
        %v851 = vunpack.c.h.b16 %v452
        %v852 = vunpack.c.l.b16 %v453
        %v853 = vunpack.c.l.b16 %v454
        %v854 = vunpack.c.h.b16 %v454
        %v855 = vunpack.c.l.b16 %v455
        %v856 = vunpack.c.l.b16 %v456
        %v857 = vunpack.c.h.b16 %v456
        %v858 = vunpack.c.l.b16 %v457
        %v859 = vunpack.c.l.b16 %v458
        %v860 = vunpack.c.h.b16 %v458
        %v861 = vunpack.c.l.b16 %v459
        %v862 = vunpack.c.l.b16 %v460
        %v863 = vunpack.c.h.b16 %v460
        %v864 = vunpack.c.l.b16 %v461
        %v865 = vunpack.c.l.b16 %v462
        %v866 = vunpack.c.h.b16 %v462
        %v867 = vunpack.c.l.b16 %v463
        %v868 = vunpack.c.l.b16 %v464
        %v869 = vunpack.c.h.b16 %v464
        %v870 = vunpack.c.l.b16 %v465
        %v871 = vunpack.c.l.b16 %v466
        %v872 = vunpack.c.h.b16 %v466
        %v873 = vunpack.c.l.b16 %v467
        %v874 = vpack.c.b16 %v829, %v826
        %v875 = vpack.c.b16 %v830, %v827
        %v876 = vpack.c.b16 %v831, %v828
        %v877 = vpack.c.b16 %v835, %v832
        %v878 = vpack.c.b16 %v836, %v833
        %v879 = vpack.c.b16 %v837, %v834
        %v880 = vpack.c.b16 %v841, %v838
        %v881 = vpack.c.b16 %v842, %v839
        %v882 = vpack.c.b16 %v843, %v840
        %v883 = vpack.c.b16 %v847, %v844
        %v884 = vpack.c.b16 %v848, %v845
        %v885 = vpack.c.b16 %v849, %v846
        %v886 = vpack.c.b16 %v853, %v850
        %v887 = vpack.c.b16 %v854, %v851
        %v888 = vpack.c.b16 %v855, %v852
        %v889 = vpack.c.b16 %v859, %v856
        %v890 = vpack.c.b16 %v860, %v857
        %v891 = vpack.c.b16 %v861, %v858
        %v892 = vpack.c.b16 %v865, %v862
        %v893 = vpack.c.b16 %v866, %v863
        %v894 = vpack.c.b16 %v867, %v864
        %v895 = vpack.c.b16 %v871, %v868
        %v896 = vpack.c.b16 %v872, %v869
        %v897 = vpack.c.b16 %v873, %v870
        %922 = vmatprep.subr.bf16.mxu0 %v875
        %923 = vmatpush1.bf16.msra.mxu0 %v874
        %924 = vmatprep.subr.bf16.mxu0 %v878
        %925 = vmatpush1.bf16.msra.mxu0 %v877
        %926 = vmatprep.subr.bf16.mxu0 %v881
        %927 = vmatpush1.bf16.msra.mxu0 %v880
        %928 = vmatprep.subr.bf16.mxu0 %v884
        %929 = vmatpush1.bf16.msra.mxu0 %v883
        %930 = vmatprep.subr.bf16.mxu0 %v887
        %931 = vmatpush1.bf16.msra.mxu0 %v886
        %932 = vmatprep.subr.bf16.mxu0 %v890
        %933 = vmatpush1.bf16.msra.mxu0 %v889
        %934 = vmatprep.subr.bf16.mxu0 %v893
        %935 = vmatpush1.bf16.msra.mxu0 %v892
        %936 = vmatprep.subr.bf16.mxu0 %v896
        %937 = vmatpush1.bf16.msra.mxu0 %v895
        %938 = vmatprep.subr.bf16.mxu0 0
        %939 = vmatpush1.bf16.msra.mxu0 0
        %940 = vmatprep.subr.bf16.mxu0 0
        %941 = vmatpush1.bf16.msra.mxu0 0
        %942 = vmatprep.subr.bf16.mxu0 0
        %943 = vmatpush1.bf16.msra.mxu0 0
        %944 = vmatprep.subr.bf16.mxu0 0
        %945 = vmatpush1.bf16.msra.mxu0 0
        %946 = vmatprep.subr.bf16.mxu0 0
        %947 = vmatpush1.bf16.msra.mxu0 0
        %948 = vmatprep.subr.bf16.mxu0 0
        %949 = vmatpush1.bf16.msra.mxu0 0
        %950 = vmatprep.subr.bf16.mxu0 0
        %951 = vmatpush1.bf16.msra.mxu0 0
        %952 = vmatprep.subr.bf16.mxu0 0
        %953 = vmatpush1.bf16.msra.mxu0 0
        %954 = vmatprep.mubr.bf16.mxu0 0
        %955 = vmatmul.mubr.bf16.gmra.mrb[0].mxu0 %v513
        %v956 = vpop.f32.mrb[0].mxu0
        %v957 = vadd.f32 %v706, %v956
        %v958 = vpop.f32.mrb[0].mxu0
        %v959 = vadd.f32 %v708, %v958
        %v960 = vpop.f32.mrb[0].mxu0
        %v961 = vadd.f32 %v710, %v960
        %v962 = vpop.f32.mrb[0].mxu0
        %v963 = vadd.f32 %v712, %v962
        %964 = vmatprep.mubr.bf16.mxu0 0
        %965 = vmatmul.mubr.bf16.gmra.mrb[0].mxu0 %v514
        %v966 = vpop.f32.mrb[0].mxu0
        %v967 = vadd.f32 %v716, %v966
        %v968 = vpop.f32.mrb[0].mxu0
        %v969 = vadd.f32 %v718, %v968
        %v970 = vpop.f32.mrb[0].mxu0
        %v971 = vadd.f32 %v720, %v970
        %v972 = vpop.f32.mrb[0].mxu0
        %v973 = vadd.f32 %v722, %v972
        %974 = vmatprep.mubr.bf16.mxu0 0
        %975 = vmatmul.mubr.bf16.gmra.mrb[0].mxu0 %v515
        %v976 = vpop.f32.mrb[0].mxu0
        %v977 = vadd.f32 %v726, %v976
        %v978 = vpop.f32.mrb[0].mxu0
        %v979 = vadd.f32 %v728, %v978
        %v980 = vpop.f32.mrb[0].mxu0
        %v981 = vadd.f32 %v730, %v980
        %v982 = vpop.f32.mrb[0].mxu0
        %v983 = vadd.f32 %v732, %v982
        %984 = vdwg.mxu0
        %985 = vmatprep.subr.bf16.mxu0 0
        %986 = vmatpush1.bf16.msra.mxu0 %v876
        %987 = vmatprep.subr.bf16.mxu0 0
        %988 = vmatpush1.bf16.msra.mxu0 %v879
        %989 = vmatprep.subr.bf16.mxu0 0
        %990 = vmatpush1.bf16.msra.mxu0 %v882
        %991 = vmatprep.subr.bf16.mxu0 0
        %992 = vmatpush1.bf16.msra.mxu0 %v885
        %993 = vmatprep.subr.bf16.mxu0 0
        %994 = vmatpush1.bf16.msra.mxu0 %v888
        %995 = vmatprep.subr.bf16.mxu0 0
        %996 = vmatpush1.bf16.msra.mxu0 %v891
        %997 = vmatprep.subr.bf16.mxu0 0
        %998 = vmatpush1.bf16.msra.mxu0 %v894
        %999 = vmatprep.subr.bf16.mxu0 0
        %1000 = vmatpush1.bf16.msra.mxu0 %v897
        %1001 = vmatprep.subr.bf16.mxu0 0
        %1002 = vmatpush1.bf16.msra.mxu0 0
        %1003 = vmatprep.subr.bf16.mxu0 0
        %1004 = vmatpush1.bf16.msra.mxu0 0
        %1005 = vmatprep.subr.bf16.mxu0 0
        %1006 = vmatpush1.bf16.msra.mxu0 0
        %1007 = vmatprep.subr.bf16.mxu0 0
        %1008 = vmatpush1.bf16.msra.mxu0 0
        %1009 = vmatprep.subr.bf16.mxu0 0
        %1010 = vmatpush1.bf16.msra.mxu0 0
        %1011 = vmatprep.subr.bf16.mxu0 0
        %1012 = vmatpush1.bf16.msra.mxu0 0
        %1013 = vmatprep.subr.bf16.mxu0 0
        %1014 = vmatpush1.bf16.msra.mxu0 0
        %1015 = vmatprep.subr.bf16.mxu0 0
        %1016 = vmatpush1.bf16.msra.mxu0 0
        %1017 = vmatprep.mubr.bf16.mxu0 0
        %1018 = vmatmul.mubr.bf16.gmra.mrb[0].mxu0 %v513
        %v1019 = vpop.f32.mrb[0].mxu0
        %v1020 = vadd.f32 %v769, %v1019
        %v1021 = vpop.f32.mrb[0].mxu0
        %v1022 = vpop.f32.mrb[0].mxu0
        %v1023 = vadd.f32 %v772, %v1022
        %v1024 = vpop.f32.mrb[0].mxu0
        %1025 = vmatprep.mubr.bf16.mxu0 0
        %1026 = vmatmul.mubr.bf16.gmra.mrb[0].mxu0 %v514
        %v1027 = vpop.f32.mrb[0].mxu0
        %v1028 = vadd.f32 %v777, %v1027
        %v1029 = vpop.f32.mrb[0].mxu0
        %v1030 = vpop.f32.mrb[0].mxu0
        %v1031 = vadd.f32 %v780, %v1030
        %v1032 = vpop.f32.mrb[0].mxu0
        %1033 = vmatprep.mubr.bf16.mxu0 0
        %1034 = vmatmul.mubr.bf16.gmra.mrb[0].mxu0 %v515
        %v1035 = vpop.f32.mrb[0].mxu0
        %v1036 = vadd.f32 %v785, %v1035
        %v1037 = vpop.f32.mrb[0].mxu0
        %v1038 = vpop.f32.mrb[0].mxu0
        %v1039 = vadd.f32 %v788, %v1038
        %v1040 = vpop.f32.mrb[0].mxu0
        %1041 = vdwg.mxu0
        %s1042 = scalar_lea.vmem [#allocation2], 384
        %v1043 = vld [vmem:[%s1042] sm:$0xff]
        %v1044 = vld [vmem:[%s1042 + $0x8] sm:$0xf]
        %v1045 = vld [vmem:[%s1042 + $0xc] sm:$0xff]
        %v1046 = vld [vmem:[%s1042 + $0x14] sm:$0xf]
        %v1047 = vld [vmem:[%s1042 + $0x18] sm:$0xff]
        %v1048 = vld [vmem:[%s1042 + $0x20] sm:$0xf]
        %v1049 = vld [vmem:[%s1042 + $0x24] sm:$0xff]
        %v1050 = vld [vmem:[%s1042 + $0x2c] sm:$0xf]
        %v1051 = vld [vmem:[%s1042 + $0x30] sm:$0xff]
        %v1052 = vld [vmem:[%s1042 + $0x38] sm:$0xf]
        %v1053 = vld [vmem:[%s1042 + $0x3c] sm:$0xff]
        %v1054 = vld [vmem:[%s1042 + $0x44] sm:$0xf]
        %v1055 = vld [vmem:[%s1042 + $0x48] sm:$0xff]
        %v1056 = vld [vmem:[%s1042 + $0x50] sm:$0xf]
        %v1057 = vld [vmem:[%s1042 + $0x54] sm:$0xff]
        %v1058 = vld [vmem:[%s1042 + $0x5c] sm:$0xf]
        %v1059 = vld [vmem:[%s1042 + $0x60] sm:$0xff]
        %v1060 = vld [vmem:[%s1042 + $0x68] sm:$0xf]
        %v1061 = vld [vmem:[%s1042 + $0x6c] sm:$0xff]
        %v1062 = vld [vmem:[%s1042 + $0x74] sm:$0xf]
        %v1063 = vld [vmem:[%s1042 + $0x78] sm:$0xff]
        %v1064 = vld [vmem:[%s1042 + $0x80] sm:$0xf]
        %v1065 = vld [vmem:[%s1042 + $0x84] sm:$0xff]
        %v1066 = vld [vmem:[%s1042 + $0x8c] sm:$0xf]
        %v1067 = vld [vmem:[%s1042 + $0x90] sm:$0xff]
        %v1068 = vld [vmem:[%s1042 + $0x98] sm:$0xf]
        %v1069 = vld [vmem:[%s1042 + $0x9c] sm:$0xff]
        %v1070 = vld [vmem:[%s1042 + $0xa4] sm:$0xf]
        %v1071 = vld [vmem:[%s1042 + $0xa8] sm:$0xff]
        %v1072 = vld [vmem:[%s1042 + $0xb0] sm:$0xf]
        %v1073 = vld [vmem:[%s1042 + $0xb4] sm:$0xff]
        %v1074 = vld [vmem:[%s1042 + $0xbc] sm:$0xf]
        %vm1075 = vcmask 1046528
        %v1076 = vrot.slane %v513, 1
        %v1077 = vrot.slane %v514, 1
        %v1078 = vsel %vm1075, %v1076, %v1077
        %v1079 = vrot.slane %v515, 1
        %v1080 = vsel %vm1075, %v1077, %v1079
        %v1116 = vunpack.c.l.b16 %v1043
        %v1117 = vunpack.c.h.b16 %v1043
        %v1118 = vunpack.c.l.b16 %v1044
        %v1119 = vunpack.c.l.b16 %v1045
        %v1120 = vunpack.c.h.b16 %v1045
        %v1121 = vunpack.c.l.b16 %v1046
        %v1122 = vunpack.c.l.b16 %v1047
        %v1123 = vunpack.c.h.b16 %v1047
        %v1124 = vunpack.c.l.b16 %v1048
        %v1125 = vunpack.c.l.b16 %v1049
        %v1126 = vunpack.c.h.b16 %v1049
        %v1127 = vunpack.c.l.b16 %v1050
        %v1128 = vunpack.c.l.b16 %v1051
        %v1129 = vunpack.c.h.b16 %v1051
        %v1130 = vunpack.c.l.b16 %v1052
        %v1131 = vunpack.c.l.b16 %v1053
        %v1132 = vunpack.c.h.b16 %v1053
        %v1133 = vunpack.c.l.b16 %v1054
        %v1134 = vunpack.c.l.b16 %v1055
        %v1135 = vunpack.c.h.b16 %v1055
        %v1136 = vunpack.c.l.b16 %v1056
        %v1137 = vunpack.c.l.b16 %v1057
        %v1138 = vunpack.c.h.b16 %v1057
        %v1139 = vunpack.c.l.b16 %v1058
        %v1140 = vunpack.c.l.b16 %v1059
        %v1141 = vunpack.c.h.b16 %v1059
        %v1142 = vunpack.c.l.b16 %v1060
        %v1143 = vunpack.c.l.b16 %v1061
        %v1144 = vunpack.c.h.b16 %v1061
        %v1145 = vunpack.c.l.b16 %v1062
        %v1146 = vunpack.c.l.b16 %v1063
        %v1147 = vunpack.c.h.b16 %v1063
        %v1148 = vunpack.c.l.b16 %v1064
        %v1149 = vunpack.c.l.b16 %v1065
        %v1150 = vunpack.c.h.b16 %v1065
        %v1151 = vunpack.c.l.b16 %v1066
        %v1152 = vunpack.c.l.b16 %v1067
        %v1153 = vunpack.c.h.b16 %v1067
        %v1154 = vunpack.c.l.b16 %v1068
        %v1155 = vunpack.c.l.b16 %v1069
        %v1156 = vunpack.c.h.b16 %v1069
        %v1157 = vunpack.c.l.b16 %v1070
        %v1158 = vunpack.c.l.b16 %v1071
        %v1159 = vunpack.c.h.b16 %v1071
        %v1160 = vunpack.c.l.b16 %v1072
        %v1161 = vunpack.c.l.b16 %v1073
        %v1162 = vunpack.c.h.b16 %v1073
        %v1163 = vunpack.c.l.b16 %v1074
        %v1164 = vpack.c.b16 %v1119, %v1116
        %v1165 = vpack.c.b16 %v1120, %v1117
        %v1166 = vpack.c.b16 %v1121, %v1118
        %v1167 = vpack.c.b16 %v1125, %v1122
        %v1168 = vpack.c.b16 %v1126, %v1123
        %v1169 = vpack.c.b16 %v1127, %v1124
        %v1170 = vpack.c.b16 %v1131, %v1128
        %v1171 = vpack.c.b16 %v1132, %v1129
        %v1172 = vpack.c.b16 %v1133, %v1130
        %v1173 = vpack.c.b16 %v1137, %v1134
        %v1174 = vpack.c.b16 %v1138, %v1135
        %v1175 = vpack.c.b16 %v1139, %v1136
        %v1176 = vpack.c.b16 %v1143, %v1140
        %v1177 = vpack.c.b16 %v1144, %v1141
        %v1178 = vpack.c.b16 %v1145, %v1142
        %v1179 = vpack.c.b16 %v1149, %v1146
        %v1180 = vpack.c.b16 %v1150, %v1147
        %v1181 = vpack.c.b16 %v1151, %v1148
        %v1182 = vpack.c.b16 %v1155, %v1152
        %v1183 = vpack.c.b16 %v1156, %v1153
        %v1184 = vpack.c.b16 %v1157, %v1154
        %v1185 = vpack.c.b16 %v1161, %v1158
        %v1186 = vpack.c.b16 %v1162, %v1159
        %v1187 = vpack.c.b16 %v1163, %v1160
        %1212 = vmatprep.subr.bf16.mxu0 %v1165
        %1213 = vmatpush1.bf16.msra.mxu0 %v1164
        %1214 = vmatprep.subr.bf16.mxu0 %v1168
        %1215 = vmatpush1.bf16.msra.mxu0 %v1167
        %1216 = vmatprep.subr.bf16.mxu0 %v1171
        %1217 = vmatpush1.bf16.msra.mxu0 %v1170
        %1218 = vmatprep.subr.bf16.mxu0 %v1174
        %1219 = vmatpush1.bf16.msra.mxu0 %v1173
        %1220 = vmatprep.subr.bf16.mxu0 %v1177
        %1221 = vmatpush1.bf16.msra.mxu0 %v1176
        %1222 = vmatprep.subr.bf16.mxu0 %v1180
        %1223 = vmatpush1.bf16.msra.mxu0 %v1179
        %1224 = vmatprep.subr.bf16.mxu0 %v1183
        %1225 = vmatpush1.bf16.msra.mxu0 %v1182
        %1226 = vmatprep.subr.bf16.mxu0 %v1186
        %1227 = vmatpush1.bf16.msra.mxu0 %v1185
        %1228 = vmatprep.subr.bf16.mxu0 0
        %1229 = vmatpush1.bf16.msra.mxu0 0
        %1230 = vmatprep.subr.bf16.mxu0 0
        %1231 = vmatpush1.bf16.msra.mxu0 0
        %1232 = vmatprep.subr.bf16.mxu0 0
        %1233 = vmatpush1.bf16.msra.mxu0 0
        %1234 = vmatprep.subr.bf16.mxu0 0
        %1235 = vmatpush1.bf16.msra.mxu0 0
        %1236 = vmatprep.subr.bf16.mxu0 0
        %1237 = vmatpush1.bf16.msra.mxu0 0
        %1238 = vmatprep.subr.bf16.mxu0 0
        %1239 = vmatpush1.bf16.msra.mxu0 0
        %1240 = vmatprep.subr.bf16.mxu0 0
        %1241 = vmatpush1.bf16.msra.mxu0 0
        %1242 = vmatprep.subr.bf16.mxu0 0
        %1243 = vmatpush1.bf16.msra.mxu0 0
        %1244 = vmatprep.mubr.bf16.mxu0 0
        %1245 = vmatmul.mubr.bf16.gmra.mrb[0].mxu0 %v1078
        %v1246 = vpop.f32.mrb[0].mxu0
        %v1247 = vadd.f32 0.0, %v1246
        %v1248 = vpop.f32.mrb[0].mxu0
        %v1249 = vadd.f32 0.0, %v1248
        %v1250 = vpop.f32.mrb[0].mxu0
        %v1251 = vadd.f32 0.0, %v1250
        %v1252 = vpop.f32.mrb[0].mxu0
        %v1253 = vadd.f32 0.0, %v1252
        %1254 = vmatprep.mubr.bf16.mxu0 0
        %1255 = vmatmul.mubr.bf16.gmra.mrb[0].mxu0 %v1080
        %v1256 = vpop.f32.mrb[0].mxu0
        %v1257 = vadd.f32 0.0, %v1256
        %v1258 = vpop.f32.mrb[0].mxu0
        %v1259 = vadd.f32 0.0, %v1258
        %v1260 = vpop.f32.mrb[0].mxu0
        %v1261 = vadd.f32 0.0, %v1260
        %v1262 = vpop.f32.mrb[0].mxu0
        %v1263 = vadd.f32 0.0, %v1262
        %1264 = vmatprep.mubr.bf16.mxu0 0
        %1265 = vmatmul.mubr.bf16.gmra.mrb[0].mxu0 %v1079
        %v1266 = vpop.f32.mrb[0].mxu0
        %v1267 = vadd.f32 0.0, %v1266
        %v1268 = vpop.f32.mrb[0].mxu0
        %v1269 = vadd.f32 0.0, %v1268
        %v1270 = vpop.f32.mrb[0].mxu0
        %v1271 = vadd.f32 0.0, %v1270
        %v1272 = vpop.f32.mrb[0].mxu0
        %v1273 = vadd.f32 0.0, %v1272
        %1274 = vdwg.mxu0
        %1275 = vmatprep.subr.bf16.mxu0 0
        %1276 = vmatpush1.bf16.msra.mxu0 %v1166
        %1277 = vmatprep.subr.bf16.mxu0 0
        %1278 = vmatpush1.bf16.msra.mxu0 %v1169
        %1279 = vmatprep.subr.bf16.mxu0 0
        %1280 = vmatpush1.bf16.msra.mxu0 %v1172
        %1281 = vmatprep.subr.bf16.mxu0 0
        %1282 = vmatpush1.bf16.msra.mxu0 %v1175
        %1283 = vmatprep.subr.bf16.mxu0 0
        %1284 = vmatpush1.bf16.msra.mxu0 %v1178
        %1285 = vmatprep.subr.bf16.mxu0 0
        %1286 = vmatpush1.bf16.msra.mxu0 %v1181
        %1287 = vmatprep.subr.bf16.mxu0 0
        %1288 = vmatpush1.bf16.msra.mxu0 %v1184
        %1289 = vmatprep.subr.bf16.mxu0 0
        %1290 = vmatpush1.bf16.msra.mxu0 %v1187
        %1291 = vmatprep.subr.bf16.mxu0 0
        %1292 = vmatpush1.bf16.msra.mxu0 0
        %1293 = vmatprep.subr.bf16.mxu0 0
        %1294 = vmatpush1.bf16.msra.mxu0 0
        %1295 = vmatprep.subr.bf16.mxu0 0
        %1296 = vmatpush1.bf16.msra.mxu0 0
        %1297 = vmatprep.subr.bf16.mxu0 0
        %1298 = vmatpush1.bf16.msra.mxu0 0
        %1299 = vmatprep.subr.bf16.mxu0 0
        %1300 = vmatpush1.bf16.msra.mxu0 0
        %1301 = vmatprep.subr.bf16.mxu0 0
        %1302 = vmatpush1.bf16.msra.mxu0 0
        %1303 = vmatprep.subr.bf16.mxu0 0
        %1304 = vmatpush1.bf16.msra.mxu0 0
        %1305 = vmatprep.subr.bf16.mxu0 0
        %1306 = vmatpush1.bf16.msra.mxu0 0
        %1307 = vmatprep.mubr.bf16.mxu0 0
        %1308 = vmatmul.mubr.bf16.gmra.mrb[0].mxu0 %v1078
        %v1309 = vpop.f32.mrb[0].mxu0
        %v1310 = vadd.f32 0.0, %v1309
        %v1311 = vpop.f32.mrb[0].mxu0
        %v1312 = vpop.f32.mrb[0].mxu0
        %v1313 = vadd.f32 0.0, %v1312
        %v1314 = vpop.f32.mrb[0].mxu0
        %1315 = vmatprep.mubr.bf16.mxu0 0
        %1316 = vmatmul.mubr.bf16.gmra.mrb[0].mxu0 %v1080
        %v1317 = vpop.f32.mrb[0].mxu0
        %v1318 = vadd.f32 0.0, %v1317
        %v1319 = vpop.f32.mrb[0].mxu0
        %v1320 = vpop.f32.mrb[0].mxu0
        %v1321 = vadd.f32 0.0, %v1320
        %v1322 = vpop.f32.mrb[0].mxu0
        %1323 = vmatprep.mubr.bf16.mxu0 0
        %1324 = vmatmul.mubr.bf16.gmra.mrb[0].mxu0 %v1079
        %v1325 = vpop.f32.mrb[0].mxu0
        %v1326 = vadd.f32 0.0, %v1325
        %v1327 = vpop.f32.mrb[0].mxu0
        %v1328 = vpop.f32.mrb[0].mxu0
        %v1329 = vadd.f32 0.0, %v1328
        %v1330 = vpop.f32.mrb[0].mxu0
        %1331 = vdwg.mxu0
        %v1332 = vadd.f32 %v957, %v1247
        %v1333 = vadd.f32 %v959, %v1249
        %v1334 = vadd.f32 %v1020, %v1310
        %v1335 = vadd.f32 %v961, %v1251
        %v1336 = vadd.f32 %v963, %v1253
        %v1337 = vadd.f32 %v1023, %v1313
        %v1338 = vadd.f32 %v967, %v1257
        %v1339 = vadd.f32 %v969, %v1259
        %v1340 = vadd.f32 %v1028, %v1318
        %v1341 = vadd.f32 %v971, %v1261
        %v1342 = vadd.f32 %v973, %v1263
        %v1343 = vadd.f32 %v1031, %v1321
        %v1344 = vadd.f32 %v977, %v1267
        %v1345 = vadd.f32 %v979, %v1269
        %v1346 = vadd.f32 %v1036, %v1326
        %v1347 = vadd.f32 %v981, %v1271
        %v1348 = vadd.f32 %v983, %v1273
        %v1349 = vadd.f32 %v1039, %v1329
        %v1350 = vld [vmem:[%s2] sm:$0x7]
        %v1352 = vlaneseq
        %v1353 = vshrl.u32 %v1352, 7
        %v1354 = vsub.s32 0, %v1353
        %v1355 = vrot.slane %v1350, %v1354
        %v1356 = vlaneseq
        %v1357 = vshrl.u32 %v1356, 7
        %v1358 = vsub.s32 1, %v1357
        %v1359 = vrot.slane %v1350, %v1358
        %v1360 = vlaneseq
        %v1361 = vshrl.u32 %v1360, 7
        %v1362 = vsub.s32 2, %v1361
        %v1363 = vrot.slane %v1350, %v1362
        %v1367 = vadd.f32 %v1332, %v1355
        %v1368 = vadd.f32 %v1333, %v1359
        %v1369 = vadd.f32 %v1334, %v1363
        %v1370 = vadd.f32 %v1335, %v1355
        %v1371 = vadd.f32 %v1336, %v1359
        %v1372 = vadd.f32 %v1337, %v1363
        %v1373 = vadd.f32 %v1338, %v1355
        %v1374 = vadd.f32 %v1339, %v1359
        %v1375 = vadd.f32 %v1340, %v1363
        %v1376 = vadd.f32 %v1341, %v1355
        %v1377 = vadd.f32 %v1342, %v1359
        %v1378 = vadd.f32 %v1343, %v1363
        %v1379 = vadd.f32 %v1344, %v1355
        %v1380 = vadd.f32 %v1345, %v1359
        %v1381 = vadd.f32 %v1346, %v1363
        %v1382 = vadd.f32 %v1347, %v1355
        %v1383 = vadd.f32 %v1348, %v1359
        %v1384 = vadd.f32 %v1349, %v1363
        %v1385 = vmax.f32 %v1367, 0.0
        %v1386 = vmax.f32 %v1368, 0.0
        %v1387 = vmax.f32 %v1369, 0.0
        %v1388 = vmax.f32 %v1370, 0.0
        %v1389 = vmax.f32 %v1371, 0.0
        %v1390 = vmax.f32 %v1372, 0.0
        %v1391 = vmax.f32 %v1373, 0.0
        %v1392 = vmax.f32 %v1374, 0.0
        %v1393 = vmax.f32 %v1375, 0.0
        %v1394 = vmax.f32 %v1376, 0.0
        %v1395 = vmax.f32 %v1377, 0.0
        %v1396 = vmax.f32 %v1378, 0.0
        %v1397 = vmax.f32 %v1379, 0.0
        %v1398 = vmax.f32 %v1380, 0.0
        %v1399 = vmax.f32 %v1381, 0.0
        %v1400 = vmax.f32 %v1382, 0.0
        %v1401 = vmax.f32 %v1383, 0.0
        %v1402 = vmax.f32 %v1384, 0.0
        %vm1403 = vcmask 1045504
        %v1404 = vsel %vm1403, %v1400, 0.0
        %v1405 = vlaneseq
        %v1406 = vshrl.u32 %v1405, 7
        %v1407 = vadd.s32 %v1406, 8
        %v1408 = vadd.s32 %v1406, 16
        %vm1409 = vcmp.lt.s32.totalorder %v1406, 22
        %vm1410 = vcmp.lt.s32.totalorder %v1407, 22
        %vm1411 = vcmp.lt.s32.totalorder %v1408, 22
        %v1412 = vsel %vm1409, 1, 0
        %v1413 = vsel %vm1410, 1, 0
        %v1414 = vsel %vm1411, 1, 0
        %vm1415 = vcmp.eq.s32.totalorder %v1412, 1
        %vm1416 = vcmp.eq.s32.totalorder %v1413, 1
        %vm1417 = vcmp.eq.s32.totalorder %v1414, 1
        %v1418 = vsel %vm1415, %v1385, 0.0
        %v1419 = vsel %vm1416, %v1388, 0.0
        %v1420 = vsel %vm1417, %v1391, 0.0
        %v1421 = vsel %vm1415, %v1394, 0.0
        %v1422 = vsel %vm1416, %v1397, 0.0
        %v1423 = vsel %vm1417, %v1404, 0.0
        %v1424 = vmax.f32 %v1418, %v1420
        %v1425 = vmax.f32 %v1424, %v1419
        %v1426 = vrot.slane %v1425, 4
        %v1427 = vmax.f32 %v1425, %v1426
        %v1428 = vrot.slane %v1427, 2
        %v1429 = vmax.f32 %v1427, %v1428
        %v1430 = vrot.slane %v1429, 1
        %v1431 = vmax.f32 %v1429, %v1430
        %v1432 = vmax.f32 %v1421, %v1423
        %v1433 = vmax.f32 %v1432, %v1422
        %v1434 = vrot.slane %v1433, 4
        %v1435 = vmax.f32 %v1433, %v1434
        %v1436 = vrot.slane %v1435, 2
        %v1437 = vmax.f32 %v1435, %v1436
        %v1438 = vrot.slane %v1437, 1
        %v1439 = vmax.f32 %v1437, %v1438
        %v1440 = vpack.c.bf16 %v1389, %v1386
        %v1441 = vpack.c.bf16 %v1395, %v1392
        %v1442 = vpack.c.bf16 %v1401, %v1398
        %v1443 = vld [vmem:[%s3] sm:$0xf]
        %v1444 = vld [vmem:[%s3 + $0x4] sm:$0xf]
        %v1445 = vld [vmem:[%s3 + $0x8] sm:$0xf]
        %v1446 = vld [vmem:[%s3 + $0xc] sm:$0xf]
        %v1447 = vld [vmem:[%s3 + $0x10] sm:$0xf]
        %v1448 = vld [vmem:[%s3 + $0x14] sm:$0xf]
        %v1449 = vld [vmem:[%s3 + $0x18] sm:$0xf]
        %v1450 = vld [vmem:[%s3 + $0x1c] sm:$0xf]
        %v1451 = vld [vmem:[%s3 + $0x20] sm:$0xf]
        %v1452 = vld [vmem:[%s3 + $0x24] sm:$0xf]
        %v1453 = vld [vmem:[%s3 + $0x28] sm:$0xf]
        %v1454 = vld [vmem:[%s3 + $0x2c] sm:$0xf]
        %v1455 = vld [vmem:[%s3 + $0x30] sm:$0xf]
        %v1456 = vld [vmem:[%s3 + $0x34] sm:$0xf]
        %v1457 = vld [vmem:[%s3 + $0x38] sm:$0xf]
        %v1458 = vld [vmem:[%s3 + $0x3c] sm:$0xf]
        %s1459 = scalar_lea.vmem %s3, 64
        %v1460 = vld [vmem:[%s1459] sm:$0xf]
        %v1461 = vld [vmem:[%s1459 + $0x4] sm:$0xf]
        %v1462 = vld [vmem:[%s1459 + $0x8] sm:$0xf]
        %v1463 = vld [vmem:[%s1459 + $0xc] sm:$0xf]
        %v1464 = vld [vmem:[%s1459 + $0x10] sm:$0xf]
        %v1465 = vld [vmem:[%s1459 + $0x14] sm:$0xf]
        %v1466 = vld [vmem:[%s1459 + $0x18] sm:$0xf]
        %v1467 = vld [vmem:[%s1459 + $0x1c] sm:$0xf]
        %v1468 = vld [vmem:[%s1459 + $0x20] sm:$0xf]
        %v1469 = vld [vmem:[%s1459 + $0x24] sm:$0xf]
        %v1470 = vld [vmem:[%s1459 + $0x28] sm:$0xf]
        %v1471 = vld [vmem:[%s1459 + $0x2c] sm:$0xf]
        %v1472 = vld [vmem:[%s1459 + $0x30] sm:$0xf]
        %v1473 = vld [vmem:[%s1459 + $0x34] sm:$0xf]
        %v1474 = vld [vmem:[%s1459 + $0x38] sm:$0xf]
        %v1475 = vld [vmem:[%s1459 + $0x3c] sm:$0xf]
        %v1477 = vshrl.u32 %v1440, 16
        %v1479 = vshll.u32 %v1440, 16
        %v1481 = vrot.slane %v1479, 1
        %v1482 = vor.u32 %v1477, %v1481
        %v1484 = vshll.u32 %v1441, 16
        %v1486 = vrot.slane %v1484, 1
        %v1487 = vsel %vm516, %v1482, %v1486
        %v1488 = vshrl.u32 %v1441, 16
        %v1490 = vor.u32 %v1488, %v1486
        %v1492 = vshll.u32 %v1442, 16
        %v1494 = vrot.slane %v1492, 1
        %v1495 = vsel %vm516, %v1490, %v1494
        %v1496 = vshrl.u32 %v1442, 16
        %v1498 = vor.u32 %v1496, %v1494
        %v1518 = vunpack.c.l.b16 %v1460
        %v1519 = vunpack.c.l.b16 %v1461
        %v1520 = vunpack.c.l.b16 %v1462
        %v1521 = vunpack.c.l.b16 %v1463
        %v1522 = vunpack.c.l.b16 %v1464
        %v1523 = vunpack.c.l.b16 %v1465
        %v1524 = vunpack.c.l.b16 %v1466
        %v1525 = vunpack.c.l.b16 %v1467
        %v1526 = vunpack.c.l.b16 %v1468
        %v1527 = vunpack.c.l.b16 %v1469
        %v1528 = vunpack.c.l.b16 %v1470
        %v1529 = vunpack.c.l.b16 %v1471
        %v1530 = vunpack.c.l.b16 %v1472
        %v1531 = vunpack.c.l.b16 %v1473
        %v1532 = vunpack.c.l.b16 %v1474
        %v1533 = vunpack.c.l.b16 %v1475
        %v1534 = vpack.c.b16 %v1519, %v1518
        %v1535 = vpack.c.b16 %v1521, %v1520
        %v1536 = vpack.c.b16 %v1523, %v1522
        %v1537 = vpack.c.b16 %v1525, %v1524
        %v1538 = vpack.c.b16 %v1527, %v1526
        %v1539 = vpack.c.b16 %v1529, %v1528
        %v1540 = vpack.c.b16 %v1531, %v1530
        %v1541 = vpack.c.b16 %v1533, %v1532
        %1550 = vmatprep.subr.bf16.mxu0 0
        %1551 = vmatpush1.bf16.msra.mxu0 %v1534
        %1552 = vmatprep.subr.bf16.mxu0 0
        %1553 = vmatpush1.bf16.msra.mxu0 %v1535
        %1554 = vmatprep.subr.bf16.mxu0 0
        %1555 = vmatpush1.bf16.msra.mxu0 %v1536
        %1556 = vmatprep.subr.bf16.mxu0 0
        %1557 = vmatpush1.bf16.msra.mxu0 %v1537
        %1558 = vmatprep.subr.bf16.mxu0 0
        %1559 = vmatpush1.bf16.msra.mxu0 %v1538
        %1560 = vmatprep.subr.bf16.mxu0 0
        %1561 = vmatpush1.bf16.msra.mxu0 %v1539
        %1562 = vmatprep.subr.bf16.mxu0 0
        %1563 = vmatpush1.bf16.msra.mxu0 %v1540
        %1564 = vmatprep.subr.bf16.mxu0 0
        %1565 = vmatpush1.bf16.msra.mxu0 %v1541
        %1566 = vmatprep.subr.bf16.mxu0 0
        %1567 = vmatpush1.bf16.msra.mxu0 0
        %1568 = vmatprep.subr.bf16.mxu0 0
        %1569 = vmatpush1.bf16.msra.mxu0 0
        %1570 = vmatprep.subr.bf16.mxu0 0
        %1571 = vmatpush1.bf16.msra.mxu0 0
        %1572 = vmatprep.subr.bf16.mxu0 0
        %1573 = vmatpush1.bf16.msra.mxu0 0
        %1574 = vmatprep.subr.bf16.mxu0 0
        %1575 = vmatpush1.bf16.msra.mxu0 0
        %1576 = vmatprep.subr.bf16.mxu0 0
        %1577 = vmatpush1.bf16.msra.mxu0 0
        %1578 = vmatprep.subr.bf16.mxu0 0
        %1579 = vmatpush1.bf16.msra.mxu0 0
        %1580 = vmatprep.subr.bf16.mxu0 0
        %1581 = vmatpush1.bf16.msra.mxu0 0
        %1582 = vmatprep.mubr.bf16.mxu0 0
        %1583 = vmatmul.mubr.bf16.gmra.mrb[0].mxu0 %v1487
        %v1584 = vpop.f32.mrb[0].mxu0
        %v1585 = vadd.f32 0.0, %v1584
        %v1586 = vpop.f32.mrb[0].mxu0
        %v1587 = vpop.f32.mrb[0].mxu0
        %v1588 = vadd.f32 0.0, %v1587
        %v1589 = vpop.f32.mrb[0].mxu0
        %1590 = vmatprep.mubr.bf16.mxu0 0
        %1591 = vmatmul.mubr.bf16.gmra.mrb[0].mxu0 %v1495
        %v1592 = vpop.f32.mrb[0].mxu0
        %v1593 = vadd.f32 0.0, %v1592
        %v1594 = vpop.f32.mrb[0].mxu0
        %v1595 = vpop.f32.mrb[0].mxu0
        %v1596 = vadd.f32 0.0, %v1595
        %v1597 = vpop.f32.mrb[0].mxu0
        %1598 = vmatprep.mubr.bf16.mxu0 0
        %1599 = vmatmul.mubr.bf16.gmra.mrb[0].mxu0 %v1498
        %v1600 = vpop.f32.mrb[0].mxu0
        %v1601 = vadd.f32 0.0, %v1600
        %v1602 = vpop.f32.mrb[0].mxu0
        %v1603 = vpop.f32.mrb[0].mxu0
        %v1604 = vadd.f32 0.0, %v1603
        %v1605 = vpop.f32.mrb[0].mxu0
        %1606 = vdwg.mxu0
        %v1623 = vunpack.c.l.b16 %v1443
        %v1624 = vunpack.c.l.b16 %v1444
        %v1625 = vunpack.c.l.b16 %v1445
        %v1626 = vunpack.c.l.b16 %v1446
        %v1627 = vunpack.c.l.b16 %v1447
        %v1628 = vunpack.c.l.b16 %v1448
        %v1629 = vunpack.c.l.b16 %v1449
        %v1630 = vunpack.c.l.b16 %v1450
        %v1631 = vunpack.c.l.b16 %v1451
        %v1632 = vunpack.c.l.b16 %v1452
        %v1633 = vunpack.c.l.b16 %v1453
        %v1634 = vunpack.c.l.b16 %v1454
        %v1635 = vunpack.c.l.b16 %v1455
        %v1636 = vunpack.c.l.b16 %v1456
        %v1637 = vunpack.c.l.b16 %v1457
        %v1638 = vunpack.c.l.b16 %v1458
        %v1639 = vpack.c.b16 %v1624, %v1623
        %v1640 = vpack.c.b16 %v1626, %v1625
        %v1641 = vpack.c.b16 %v1628, %v1627
        %v1642 = vpack.c.b16 %v1630, %v1629
        %v1643 = vpack.c.b16 %v1632, %v1631
        %v1644 = vpack.c.b16 %v1634, %v1633
        %v1645 = vpack.c.b16 %v1636, %v1635
        %v1646 = vpack.c.b16 %v1638, %v1637
        %1655 = vmatprep.subr.bf16.mxu0 0
        %1656 = vmatpush1.bf16.msra.mxu0 %v1639
        %1657 = vmatprep.subr.bf16.mxu0 0
        %1658 = vmatpush1.bf16.msra.mxu0 %v1640
        %1659 = vmatprep.subr.bf16.mxu0 0
        %1660 = vmatpush1.bf16.msra.mxu0 %v1641
        %1661 = vmatprep.subr.bf16.mxu0 0
        %1662 = vmatpush1.bf16.msra.mxu0 %v1642
        %1663 = vmatprep.subr.bf16.mxu0 0
        %1664 = vmatpush1.bf16.msra.mxu0 %v1643
        %1665 = vmatprep.subr.bf16.mxu0 0
        %1666 = vmatpush1.bf16.msra.mxu0 %v1644
        %1667 = vmatprep.subr.bf16.mxu0 0
        %1668 = vmatpush1.bf16.msra.mxu0 %v1645
        %1669 = vmatprep.subr.bf16.mxu0 0
        %1670 = vmatpush1.bf16.msra.mxu0 %v1646
        %1671 = vmatprep.subr.bf16.mxu0 0
        %1672 = vmatpush1.bf16.msra.mxu0 0
        %1673 = vmatprep.subr.bf16.mxu0 0
        %1674 = vmatpush1.bf16.msra.mxu0 0
        %1675 = vmatprep.subr.bf16.mxu0 0
        %1676 = vmatpush1.bf16.msra.mxu0 0
        %1677 = vmatprep.subr.bf16.mxu0 0
        %1678 = vmatpush1.bf16.msra.mxu0 0
        %1679 = vmatprep.subr.bf16.mxu0 0
        %1680 = vmatpush1.bf16.msra.mxu0 0
        %1681 = vmatprep.subr.bf16.mxu0 0
        %1682 = vmatpush1.bf16.msra.mxu0 0
        %1683 = vmatprep.subr.bf16.mxu0 0
        %1684 = vmatpush1.bf16.msra.mxu0 0
        %1685 = vmatprep.subr.bf16.mxu0 0
        %1686 = vmatpush1.bf16.msra.mxu0 0
        %1687 = vmatprep.mubr.bf16.mxu0 0
        %1688 = vmatmul.mubr.bf16.gmra.mrb[0].mxu0 %v1440
        %v1689 = vpop.f32.mrb[0].mxu0
        %v1690 = vadd.f32 %v1585, %v1689
        %v1691 = vpop.f32.mrb[0].mxu0
        %v1692 = vpop.f32.mrb[0].mxu0
        %v1693 = vadd.f32 %v1588, %v1692
        %v1694 = vpop.f32.mrb[0].mxu0
        %1695 = vmatprep.mubr.bf16.mxu0 0
        %1696 = vmatmul.mubr.bf16.gmra.mrb[0].mxu0 %v1441
        %v1697 = vpop.f32.mrb[0].mxu0
        %v1698 = vadd.f32 %v1593, %v1697
        %v1699 = vpop.f32.mrb[0].mxu0
        %v1700 = vpop.f32.mrb[0].mxu0
        %v1701 = vadd.f32 %v1596, %v1700
        %v1702 = vpop.f32.mrb[0].mxu0
        %1703 = vmatprep.mubr.bf16.mxu0 0
        %1704 = vmatmul.mubr.bf16.gmra.mrb[0].mxu0 %v1442
        %v1705 = vpop.f32.mrb[0].mxu0
        %v1706 = vadd.f32 %v1601, %v1705
        %v1707 = vpop.f32.mrb[0].mxu0
        %v1708 = vpop.f32.mrb[0].mxu0
        %v1709 = vadd.f32 %v1604, %v1708
        %v1710 = vpop.f32.mrb[0].mxu0
        %1711 = vdwg.mxu0
        %s1712 = scalar_lea.vmem %s3, 128
        %v1713 = vld [vmem:[%s1712] sm:$0xf]
        %v1714 = vld [vmem:[%s1712 + $0x4] sm:$0xf]
        %v1715 = vld [vmem:[%s1712 + $0x8] sm:$0xf]
        %v1716 = vld [vmem:[%s1712 + $0xc] sm:$0xf]
        %v1717 = vld [vmem:[%s1712 + $0x10] sm:$0xf]
        %v1718 = vld [vmem:[%s1712 + $0x14] sm:$0xf]
        %v1719 = vld [vmem:[%s1712 + $0x18] sm:$0xf]
        %v1720 = vld [vmem:[%s1712 + $0x1c] sm:$0xf]
        %v1721 = vld [vmem:[%s1712 + $0x20] sm:$0xf]
        %v1722 = vld [vmem:[%s1712 + $0x24] sm:$0xf]
        %v1723 = vld [vmem:[%s1712 + $0x28] sm:$0xf]
        %v1724 = vld [vmem:[%s1712 + $0x2c] sm:$0xf]
        %v1725 = vld [vmem:[%s1712 + $0x30] sm:$0xf]
        %v1726 = vld [vmem:[%s1712 + $0x34] sm:$0xf]
        %v1727 = vld [vmem:[%s1712 + $0x38] sm:$0xf]
        %v1728 = vld [vmem:[%s1712 + $0x3c] sm:$0xf]
        %v1732 = vrot.slane %v1440, 1
        %v1733 = vrot.slane %v1441, 1
        %v1734 = vsel %vm1075, %v1732, %v1733
        %v1735 = vrot.slane %v1442, 1
        %v1736 = vsel %vm1075, %v1733, %v1735
        %v1756 = vunpack.c.l.b16 %v1713
        %v1757 = vunpack.c.l.b16 %v1714
        %v1758 = vunpack.c.l.b16 %v1715
        %v1759 = vunpack.c.l.b16 %v1716
        %v1760 = vunpack.c.l.b16 %v1717
        %v1761 = vunpack.c.l.b16 %v1718
        %v1762 = vunpack.c.l.b16 %v1719
        %v1763 = vunpack.c.l.b16 %v1720
        %v1764 = vunpack.c.l.b16 %v1721
        %v1765 = vunpack.c.l.b16 %v1722
        %v1766 = vunpack.c.l.b16 %v1723
        %v1767 = vunpack.c.l.b16 %v1724
        %v1768 = vunpack.c.l.b16 %v1725
        %v1769 = vunpack.c.l.b16 %v1726
        %v1770 = vunpack.c.l.b16 %v1727
        %v1771 = vunpack.c.l.b16 %v1728
        %v1772 = vpack.c.b16 %v1757, %v1756
        %v1773 = vpack.c.b16 %v1759, %v1758
        %v1774 = vpack.c.b16 %v1761, %v1760
        %v1775 = vpack.c.b16 %v1763, %v1762
        %v1776 = vpack.c.b16 %v1765, %v1764
        %v1777 = vpack.c.b16 %v1767, %v1766
        %v1778 = vpack.c.b16 %v1769, %v1768
        %v1779 = vpack.c.b16 %v1771, %v1770
        %1788 = vmatprep.subr.bf16.mxu0 0
        %1789 = vmatpush1.bf16.msra.mxu0 %v1772
        %1790 = vmatprep.subr.bf16.mxu0 0
        %1791 = vmatpush1.bf16.msra.mxu0 %v1773
        %1792 = vmatprep.subr.bf16.mxu0 0
        %1793 = vmatpush1.bf16.msra.mxu0 %v1774
        %1794 = vmatprep.subr.bf16.mxu0 0
        %1795 = vmatpush1.bf16.msra.mxu0 %v1775
        %1796 = vmatprep.subr.bf16.mxu0 0
        %1797 = vmatpush1.bf16.msra.mxu0 %v1776
        %1798 = vmatprep.subr.bf16.mxu0 0
        %1799 = vmatpush1.bf16.msra.mxu0 %v1777
        %1800 = vmatprep.subr.bf16.mxu0 0
        %1801 = vmatpush1.bf16.msra.mxu0 %v1778
        %1802 = vmatprep.subr.bf16.mxu0 0
        %1803 = vmatpush1.bf16.msra.mxu0 %v1779
        %1804 = vmatprep.subr.bf16.mxu0 0
        %1805 = vmatpush1.bf16.msra.mxu0 0
        %1806 = vmatprep.subr.bf16.mxu0 0
        %1807 = vmatpush1.bf16.msra.mxu0 0
        %1808 = vmatprep.subr.bf16.mxu0 0
        %1809 = vmatpush1.bf16.msra.mxu0 0
        %1810 = vmatprep.subr.bf16.mxu0 0
        %1811 = vmatpush1.bf16.msra.mxu0 0
        %1812 = vmatprep.subr.bf16.mxu0 0
        %1813 = vmatpush1.bf16.msra.mxu0 0
        %1814 = vmatprep.subr.bf16.mxu0 0
        %1815 = vmatpush1.bf16.msra.mxu0 0
        %1816 = vmatprep.subr.bf16.mxu0 0
        %1817 = vmatpush1.bf16.msra.mxu0 0
        %1818 = vmatprep.subr.bf16.mxu0 0
        %1819 = vmatpush1.bf16.msra.mxu0 0
        %1820 = vmatprep.mubr.bf16.mxu0 0
        %1821 = vmatmul.mubr.bf16.gmra.mrb[0].mxu0 %v1734
        %v1822 = vpop.f32.mrb[0].mxu0
        %v1823 = vadd.f32 0.0, %v1822
        %v1824 = vpop.f32.mrb[0].mxu0
        %v1825 = vpop.f32.mrb[0].mxu0
        %v1826 = vadd.f32 0.0, %v1825
        %v1827 = vpop.f32.mrb[0].mxu0
        %1828 = vmatprep.mubr.bf16.mxu0 0
        %1829 = vmatmul.mubr.bf16.gmra.mrb[0].mxu0 %v1736
        %v1830 = vpop.f32.mrb[0].mxu0
        %v1831 = vadd.f32 0.0, %v1830
        %v1832 = vpop.f32.mrb[0].mxu0
        %v1833 = vpop.f32.mrb[0].mxu0
        %v1834 = vadd.f32 0.0, %v1833
        %v1835 = vpop.f32.mrb[0].mxu0
        %1836 = vmatprep.mubr.bf16.mxu0 0
        %1837 = vmatmul.mubr.bf16.gmra.mrb[0].mxu0 %v1735
        %v1838 = vpop.f32.mrb[0].mxu0
        %v1839 = vadd.f32 0.0, %v1838
        %v1840 = vpop.f32.mrb[0].mxu0
        %v1841 = vpop.f32.mrb[0].mxu0
        %v1842 = vadd.f32 0.0, %v1841
        %v1843 = vpop.f32.mrb[0].mxu0
        %1844 = vdwg.mxu0
        %v1845 = vadd.f32 %v1690, %v1823
        %v1846 = vadd.f32 %v1693, %v1826
        %v1847 = vadd.f32 %v1698, %v1831
        %v1848 = vadd.f32 %v1701, %v1834
        %v1849 = vadd.f32 %v1706, %v1839
        %v1850 = vadd.f32 %v1709, %v1842
        %v1851 = vld [vmem:[%s4] sm:$0x1]
        %v1853 = vlaneseq
        %v1854 = vshrl.u32 %v1853, 7
        %v1855 = vsub.s32 0, %v1854
        %v1856 = vrot.slane %v1851, %v1855
        %v1858 = vadd.f32 %v1845, %v1856
        %v1859 = vadd.f32 %v1846, %v1856
        %v1860 = vadd.f32 %v1847, %v1856
        %v1861 = vadd.f32 %v1848, %v1856
        %v1862 = vadd.f32 %v1849, %v1856
        %v1863 = vadd.f32 %v1850, %v1856
        %v1864 = vmax.f32 %v1858, 0.0
        %v1865 = vmax.f32 %v1859, 0.0
        %v1866 = vmax.f32 %v1860, 0.0
        %v1867 = vmax.f32 %v1861, 0.0
        %v1868 = vmax.f32 %v1862, 0.0
        %v1869 = vmax.f32 %v1863, 0.0
        %vm1870 = vcmask 1043456
        %v1871 = vsel %vm1870, %v1869, 0.0
        %vm1872 = vcmp.lt.s32.totalorder %v1406, 20
        %vm1873 = vcmp.lt.s32.totalorder %v1407, 20
        %vm1874 = vcmp.lt.s32.totalorder %v1408, 20
        %v1875 = vsel %vm1872, 1, 0
        %v1876 = vsel %vm1873, 1, 0
        %v1877 = vsel %vm1874, 1, 0
        %vm1878 = vcmp.eq.s32.totalorder %v1875, 1
        %vm1879 = vcmp.eq.s32.totalorder %v1876, 1
        %vm1880 = vcmp.eq.s32.totalorder %v1877, 1
        %v1881 = vsel %vm1878, %v1864, 0.0
        %v1882 = vsel %vm1879, %v1865, 0.0
        %v1883 = vsel %vm1880, %v1866, 0.0
        %v1884 = vsel %vm1878, %v1867, 0.0
        %v1885 = vsel %vm1879, %v1868, 0.0
        %v1886 = vsel %vm1880, %v1871, 0.0
        %v1887 = vmax.f32 %v1881, %v1883
        %v1888 = vmax.f32 %v1887, %v1882
        %v1889 = vrot.slane %v1888, 4
        %v1890 = vmax.f32 %v1888, %v1889
        %v1891 = vrot.slane %v1890, 2
        %v1892 = vmax.f32 %v1890, %v1891
        %v1893 = vrot.slane %v1892, 1
        %v1894 = vmax.f32 %v1892, %v1893
        %v1895 = vmax.f32 %v1884, %v1886
        %v1896 = vmax.f32 %v1895, %v1885
        %v1897 = vrot.slane %v1896, 4
        %v1898 = vmax.f32 %v1896, %v1897
        %v1899 = vrot.slane %v1898, 2
        %v1900 = vmax.f32 %v1898, %v1899
        %v1901 = vrot.slane %v1900, 1
        %v1902 = vmax.f32 %v1900, %v1901
        %v1903 = vpack.c.bf16 %v1390, %v1387
        %v1904 = vpack.c.bf16 %v1396, %v1393
        %v1905 = vpack.c.bf16 %v1402, %v1399
        %v1906 = vld [vmem:[%s5] sm:$0xf]
        %v1907 = vld [vmem:[%s5 + $0x4] sm:$0xf]
        %v1908 = vld [vmem:[%s5 + $0x8] sm:$0xf]
        %v1909 = vld [vmem:[%s5 + $0xc] sm:$0xf]
        %v1910 = vld [vmem:[%s5 + $0x10] sm:$0xf]
        %v1911 = vld [vmem:[%s5 + $0x14] sm:$0xf]
        %v1912 = vld [vmem:[%s5 + $0x18] sm:$0xf]
        %v1913 = vld [vmem:[%s5 + $0x1c] sm:$0xf]
        %v1914 = vld [vmem:[%s5 + $0x20] sm:$0xf]
        %v1915 = vld [vmem:[%s5 + $0x24] sm:$0xf]
        %v1916 = vld [vmem:[%s5 + $0x28] sm:$0xf]
        %v1917 = vld [vmem:[%s5 + $0x2c] sm:$0xf]
        %v1918 = vld [vmem:[%s5 + $0x30] sm:$0xf]
        %v1919 = vld [vmem:[%s5 + $0x34] sm:$0xf]
        %v1920 = vld [vmem:[%s5 + $0x38] sm:$0xf]
        %v1921 = vld [vmem:[%s5 + $0x3c] sm:$0xf]
        %s1922 = scalar_lea.vmem %s5, 64
        %v1923 = vld [vmem:[%s1922] sm:$0xf]
        %v1924 = vld [vmem:[%s1922 + $0x4] sm:$0xf]
        %v1925 = vld [vmem:[%s1922 + $0x8] sm:$0xf]
        %v1926 = vld [vmem:[%s1922 + $0xc] sm:$0xf]
        %v1927 = vld [vmem:[%s1922 + $0x10] sm:$0xf]
        %v1928 = vld [vmem:[%s1922 + $0x14] sm:$0xf]
        %v1929 = vld [vmem:[%s1922 + $0x18] sm:$0xf]
        %v1930 = vld [vmem:[%s1922 + $0x1c] sm:$0xf]
        %v1931 = vld [vmem:[%s1922 + $0x20] sm:$0xf]
        %v1932 = vld [vmem:[%s1922 + $0x24] sm:$0xf]
        %v1933 = vld [vmem:[%s1922 + $0x28] sm:$0xf]
        %v1934 = vld [vmem:[%s1922 + $0x2c] sm:$0xf]
        %v1935 = vld [vmem:[%s1922 + $0x30] sm:$0xf]
        %v1936 = vld [vmem:[%s1922 + $0x34] sm:$0xf]
        %v1937 = vld [vmem:[%s1922 + $0x38] sm:$0xf]
        %v1938 = vld [vmem:[%s1922 + $0x3c] sm:$0xf]
        %v1940 = vshrl.u32 %v1903, 16
        %v1942 = vshll.u32 %v1903, 16
        %v1944 = vrot.slane %v1942, 1
        %v1945 = vor.u32 %v1940, %v1944
        %v1947 = vshll.u32 %v1904, 16
        %v1949 = vrot.slane %v1947, 1
        %v1950 = vsel %vm516, %v1945, %v1949
        %v1951 = vshrl.u32 %v1904, 16
        %v1953 = vor.u32 %v1951, %v1949
        %v1955 = vshll.u32 %v1905, 16
        %v1957 = vrot.slane %v1955, 1
        %v1958 = vsel %vm516, %v1953, %v1957
        %v1959 = vshrl.u32 %v1905, 16
        %v1961 = vor.u32 %v1959, %v1957
        %v1981 = vunpack.c.l.b16 %v1923
        %v1982 = vunpack.c.l.b16 %v1924
        %v1983 = vunpack.c.l.b16 %v1925
        %v1984 = vunpack.c.l.b16 %v1926
        %v1985 = vunpack.c.l.b16 %v1927
        %v1986 = vunpack.c.l.b16 %v1928
        %v1987 = vunpack.c.l.b16 %v1929
        %v1988 = vunpack.c.l.b16 %v1930
        %v1989 = vunpack.c.l.b16 %v1931
        %v1990 = vunpack.c.l.b16 %v1932
        %v1991 = vunpack.c.l.b16 %v1933
        %v1992 = vunpack.c.l.b16 %v1934
        %v1993 = vunpack.c.l.b16 %v1935
        %v1994 = vunpack.c.l.b16 %v1936
        %v1995 = vunpack.c.l.b16 %v1937
        %v1996 = vunpack.c.l.b16 %v1938
        %v1997 = vpack.c.b16 %v1982, %v1981
        %v1998 = vpack.c.b16 %v1984, %v1983
        %v1999 = vpack.c.b16 %v1986, %v1985
        %v2000 = vpack.c.b16 %v1988, %v1987
        %v2001 = vpack.c.b16 %v1990, %v1989
        %v2002 = vpack.c.b16 %v1992, %v1991
        %v2003 = vpack.c.b16 %v1994, %v1993
        %v2004 = vpack.c.b16 %v1996, %v1995
        %2013 = vmatprep.subr.bf16.mxu0 0
        %2014 = vmatpush1.bf16.msra.mxu0 %v1997
        %2015 = vmatprep.subr.bf16.mxu0 0
        %2016 = vmatpush1.bf16.msra.mxu0 %v1998
        %2017 = vmatprep.subr.bf16.mxu0 0
        %2018 = vmatpush1.bf16.msra.mxu0 %v1999
        %2019 = vmatprep.subr.bf16.mxu0 0
        %2020 = vmatpush1.bf16.msra.mxu0 %v2000
        %2021 = vmatprep.subr.bf16.mxu0 0
        %2022 = vmatpush1.bf16.msra.mxu0 %v2001
        %2023 = vmatprep.subr.bf16.mxu0 0
        %2024 = vmatpush1.bf16.msra.mxu0 %v2002
        %2025 = vmatprep.subr.bf16.mxu0 0
        %2026 = vmatpush1.bf16.msra.mxu0 %v2003
        %2027 = vmatprep.subr.bf16.mxu0 0
        %2028 = vmatpush1.bf16.msra.mxu0 %v2004
        %2029 = vmatprep.subr.bf16.mxu0 0
        %2030 = vmatpush1.bf16.msra.mxu0 0
        %2031 = vmatprep.subr.bf16.mxu0 0
        %2032 = vmatpush1.bf16.msra.mxu0 0
        %2033 = vmatprep.subr.bf16.mxu0 0
        %2034 = vmatpush1.bf16.msra.mxu0 0
        %2035 = vmatprep.subr.bf16.mxu0 0
        %2036 = vmatpush1.bf16.msra.mxu0 0
        %2037 = vmatprep.subr.bf16.mxu0 0
        %2038 = vmatpush1.bf16.msra.mxu0 0
        %2039 = vmatprep.subr.bf16.mxu0 0
        %2040 = vmatpush1.bf16.msra.mxu0 0
        %2041 = vmatprep.subr.bf16.mxu0 0
        %2042 = vmatpush1.bf16.msra.mxu0 0
        %2043 = vmatprep.subr.bf16.mxu0 0
        %2044 = vmatpush1.bf16.msra.mxu0 0
        %2045 = vmatprep.mubr.bf16.mxu0 0
        %2046 = vmatmul.mubr.bf16.gmra.mrb[0].mxu0 %v1950
        %v2047 = vpop.f32.mrb[0].mxu0
        %v2048 = vadd.f32 0.0, %v2047
        %v2049 = vpop.f32.mrb[0].mxu0
        %v2050 = vpop.f32.mrb[0].mxu0
        %v2051 = vadd.f32 0.0, %v2050
        %v2052 = vpop.f32.mrb[0].mxu0
        %2053 = vmatprep.mubr.bf16.mxu0 0
        %2054 = vmatmul.mubr.bf16.gmra.mrb[0].mxu0 %v1958
        %v2055 = vpop.f32.mrb[0].mxu0
        %v2056 = vadd.f32 0.0, %v2055
        %v2057 = vpop.f32.mrb[0].mxu0
        %v2058 = vpop.f32.mrb[0].mxu0
        %v2059 = vadd.f32 0.0, %v2058
        %v2060 = vpop.f32.mrb[0].mxu0
        %2061 = vmatprep.mubr.bf16.mxu0 0
        %2062 = vmatmul.mubr.bf16.gmra.mrb[0].mxu0 %v1961
        %v2063 = vpop.f32.mrb[0].mxu0
        %v2064 = vadd.f32 0.0, %v2063
        %v2065 = vpop.f32.mrb[0].mxu0
        %v2066 = vpop.f32.mrb[0].mxu0
        %v2067 = vadd.f32 0.0, %v2066
        %v2068 = vpop.f32.mrb[0].mxu0
        %2069 = vdwg.mxu0
        %v2086 = vunpack.c.l.b16 %v1906
        %v2087 = vunpack.c.l.b16 %v1907
        %v2088 = vunpack.c.l.b16 %v1908
        %v2089 = vunpack.c.l.b16 %v1909
        %v2090 = vunpack.c.l.b16 %v1910
        %v2091 = vunpack.c.l.b16 %v1911
        %v2092 = vunpack.c.l.b16 %v1912
        %v2093 = vunpack.c.l.b16 %v1913
        %v2094 = vunpack.c.l.b16 %v1914
        %v2095 = vunpack.c.l.b16 %v1915
        %v2096 = vunpack.c.l.b16 %v1916
        %v2097 = vunpack.c.l.b16 %v1917
        %v2098 = vunpack.c.l.b16 %v1918
        %v2099 = vunpack.c.l.b16 %v1919
        %v2100 = vunpack.c.l.b16 %v1920
        %v2101 = vunpack.c.l.b16 %v1921
        %v2102 = vpack.c.b16 %v2087, %v2086
        %v2103 = vpack.c.b16 %v2089, %v2088
        %v2104 = vpack.c.b16 %v2091, %v2090
        %v2105 = vpack.c.b16 %v2093, %v2092
        %v2106 = vpack.c.b16 %v2095, %v2094
        %v2107 = vpack.c.b16 %v2097, %v2096
        %v2108 = vpack.c.b16 %v2099, %v2098
        %v2109 = vpack.c.b16 %v2101, %v2100
        %2118 = vmatprep.subr.bf16.mxu0 0
        %2119 = vmatpush1.bf16.msra.mxu0 %v2102
        %2120 = vmatprep.subr.bf16.mxu0 0
        %2121 = vmatpush1.bf16.msra.mxu0 %v2103
        %2122 = vmatprep.subr.bf16.mxu0 0
        %2123 = vmatpush1.bf16.msra.mxu0 %v2104
        %2124 = vmatprep.subr.bf16.mxu0 0
        %2125 = vmatpush1.bf16.msra.mxu0 %v2105
        %2126 = vmatprep.subr.bf16.mxu0 0
        %2127 = vmatpush1.bf16.msra.mxu0 %v2106
        %2128 = vmatprep.subr.bf16.mxu0 0
        %2129 = vmatpush1.bf16.msra.mxu0 %v2107
        %2130 = vmatprep.subr.bf16.mxu0 0
        %2131 = vmatpush1.bf16.msra.mxu0 %v2108
        %2132 = vmatprep.subr.bf16.mxu0 0
        %2133 = vmatpush1.bf16.msra.mxu0 %v2109
        %2134 = vmatprep.subr.bf16.mxu0 0
        %2135 = vmatpush1.bf16.msra.mxu0 0
        %2136 = vmatprep.subr.bf16.mxu0 0
        %2137 = vmatpush1.bf16.msra.mxu0 0
        %2138 = vmatprep.subr.bf16.mxu0 0
        %2139 = vmatpush1.bf16.msra.mxu0 0
        %2140 = vmatprep.subr.bf16.mxu0 0
        %2141 = vmatpush1.bf16.msra.mxu0 0
        %2142 = vmatprep.subr.bf16.mxu0 0
        %2143 = vmatpush1.bf16.msra.mxu0 0
        %2144 = vmatprep.subr.bf16.mxu0 0
        %2145 = vmatpush1.bf16.msra.mxu0 0
        %2146 = vmatprep.subr.bf16.mxu0 0
        %2147 = vmatpush1.bf16.msra.mxu0 0
        %2148 = vmatprep.subr.bf16.mxu0 0
        %2149 = vmatpush1.bf16.msra.mxu0 0
        %2150 = vmatprep.mubr.bf16.mxu0 0
        %2151 = vmatmul.mubr.bf16.gmra.mrb[0].mxu0 %v1903
        %v2152 = vpop.f32.mrb[0].mxu0
        %v2153 = vadd.f32 %v2048, %v2152
        %v2154 = vpop.f32.mrb[0].mxu0
        %v2155 = vpop.f32.mrb[0].mxu0
        %v2156 = vadd.f32 %v2051, %v2155
        %v2157 = vpop.f32.mrb[0].mxu0
        %2158 = vmatprep.mubr.bf16.mxu0 0
        %2159 = vmatmul.mubr.bf16.gmra.mrb[0].mxu0 %v1904
        %v2160 = vpop.f32.mrb[0].mxu0
        %v2161 = vadd.f32 %v2056, %v2160
        %v2162 = vpop.f32.mrb[0].mxu0
        %v2163 = vpop.f32.mrb[0].mxu0
        %v2164 = vadd.f32 %v2059, %v2163
        %v2165 = vpop.f32.mrb[0].mxu0
        %2166 = vmatprep.mubr.bf16.mxu0 0
        %2167 = vmatmul.mubr.bf16.gmra.mrb[0].mxu0 %v1905
        %v2168 = vpop.f32.mrb[0].mxu0
        %v2169 = vadd.f32 %v2064, %v2168
        %v2170 = vpop.f32.mrb[0].mxu0
        %v2171 = vpop.f32.mrb[0].mxu0
        %v2172 = vadd.f32 %v2067, %v2171
        %v2173 = vpop.f32.mrb[0].mxu0
        %2174 = vdwg.mxu0
        %s2175 = scalar_lea.vmem %s5, 128
        %v2176 = vld [vmem:[%s2175] sm:$0xf]
        %v2177 = vld [vmem:[%s2175 + $0x4] sm:$0xf]
        %v2178 = vld [vmem:[%s2175 + $0x8] sm:$0xf]
        %v2179 = vld [vmem:[%s2175 + $0xc] sm:$0xf]
        %v2180 = vld [vmem:[%s2175 + $0x10] sm:$0xf]
        %v2181 = vld [vmem:[%s2175 + $0x14] sm:$0xf]
        %v2182 = vld [vmem:[%s2175 + $0x18] sm:$0xf]
        %v2183 = vld [vmem:[%s2175 + $0x1c] sm:$0xf]
        %v2184 = vld [vmem:[%s2175 + $0x20] sm:$0xf]
        %v2185 = vld [vmem:[%s2175 + $0x24] sm:$0xf]
        %v2186 = vld [vmem:[%s2175 + $0x28] sm:$0xf]
        %v2187 = vld [vmem:[%s2175 + $0x2c] sm:$0xf]
        %v2188 = vld [vmem:[%s2175 + $0x30] sm:$0xf]
        %v2189 = vld [vmem:[%s2175 + $0x34] sm:$0xf]
        %v2190 = vld [vmem:[%s2175 + $0x38] sm:$0xf]
        %v2191 = vld [vmem:[%s2175 + $0x3c] sm:$0xf]
        %v2195 = vrot.slane %v1903, 1
        %v2196 = vrot.slane %v1904, 1
        %v2197 = vsel %vm1075, %v2195, %v2196
        %v2198 = vrot.slane %v1905, 1
        %v2199 = vsel %vm1075, %v2196, %v2198
        %v2219 = vunpack.c.l.b16 %v2176
        %v2220 = vunpack.c.l.b16 %v2177
        %v2221 = vunpack.c.l.b16 %v2178
        %v2222 = vunpack.c.l.b16 %v2179
        %v2223 = vunpack.c.l.b16 %v2180
        %v2224 = vunpack.c.l.b16 %v2181
        %v2225 = vunpack.c.l.b16 %v2182
        %v2226 = vunpack.c.l.b16 %v2183
        %v2227 = vunpack.c.l.b16 %v2184
        %v2228 = vunpack.c.l.b16 %v2185
        %v2229 = vunpack.c.l.b16 %v2186
        %v2230 = vunpack.c.l.b16 %v2187
        %v2231 = vunpack.c.l.b16 %v2188
        %v2232 = vunpack.c.l.b16 %v2189
        %v2233 = vunpack.c.l.b16 %v2190
        %v2234 = vunpack.c.l.b16 %v2191
        %v2235 = vpack.c.b16 %v2220, %v2219
        %v2236 = vpack.c.b16 %v2222, %v2221
        %v2237 = vpack.c.b16 %v2224, %v2223
        %v2238 = vpack.c.b16 %v2226, %v2225
        %v2239 = vpack.c.b16 %v2228, %v2227
        %v2240 = vpack.c.b16 %v2230, %v2229
        %v2241 = vpack.c.b16 %v2232, %v2231
        %v2242 = vpack.c.b16 %v2234, %v2233
        %2251 = vmatprep.subr.bf16.mxu0 0
        %2252 = vmatpush1.bf16.msra.mxu0 %v2235
        %2253 = vmatprep.subr.bf16.mxu0 0
        %2254 = vmatpush1.bf16.msra.mxu0 %v2236
        %2255 = vmatprep.subr.bf16.mxu0 0
        %2256 = vmatpush1.bf16.msra.mxu0 %v2237
        %2257 = vmatprep.subr.bf16.mxu0 0
        %2258 = vmatpush1.bf16.msra.mxu0 %v2238
        %2259 = vmatprep.subr.bf16.mxu0 0
        %2260 = vmatpush1.bf16.msra.mxu0 %v2239
        %2261 = vmatprep.subr.bf16.mxu0 0
        %2262 = vmatpush1.bf16.msra.mxu0 %v2240
        %2263 = vmatprep.subr.bf16.mxu0 0
        %2264 = vmatpush1.bf16.msra.mxu0 %v2241
        %2265 = vmatprep.subr.bf16.mxu0 0
        %2266 = vmatpush1.bf16.msra.mxu0 %v2242
        %2267 = vmatprep.subr.bf16.mxu0 0
        %2268 = vmatpush1.bf16.msra.mxu0 0
        %2269 = vmatprep.subr.bf16.mxu0 0
        %2270 = vmatpush1.bf16.msra.mxu0 0
        %2271 = vmatprep.subr.bf16.mxu0 0
        %2272 = vmatpush1.bf16.msra.mxu0 0
        %2273 = vmatprep.subr.bf16.mxu0 0
        %2274 = vmatpush1.bf16.msra.mxu0 0
        %2275 = vmatprep.subr.bf16.mxu0 0
        %2276 = vmatpush1.bf16.msra.mxu0 0
        %2277 = vmatprep.subr.bf16.mxu0 0
        %2278 = vmatpush1.bf16.msra.mxu0 0
        %2279 = vmatprep.subr.bf16.mxu0 0
        %2280 = vmatpush1.bf16.msra.mxu0 0
        %2281 = vmatprep.subr.bf16.mxu0 0
        %2282 = vmatpush1.bf16.msra.mxu0 0
        %2283 = vmatprep.mubr.bf16.mxu0 0
        %2284 = vmatmul.mubr.bf16.gmra.mrb[0].mxu0 %v2197
        %v2285 = vpop.f32.mrb[0].mxu0
        %v2286 = vadd.f32 0.0, %v2285
        %v2287 = vpop.f32.mrb[0].mxu0
        %v2288 = vpop.f32.mrb[0].mxu0
        %v2289 = vadd.f32 0.0, %v2288
        %v2290 = vpop.f32.mrb[0].mxu0
        %2291 = vmatprep.mubr.bf16.mxu0 0
        %2292 = vmatmul.mubr.bf16.gmra.mrb[0].mxu0 %v2199
        %v2293 = vpop.f32.mrb[0].mxu0
        %v2294 = vadd.f32 0.0, %v2293
        %v2295 = vpop.f32.mrb[0].mxu0
        %v2296 = vpop.f32.mrb[0].mxu0
        %v2297 = vadd.f32 0.0, %v2296
        %v2298 = vpop.f32.mrb[0].mxu0
        %2299 = vmatprep.mubr.bf16.mxu0 0
        %2300 = vmatmul.mubr.bf16.gmra.mrb[0].mxu0 %v2198
        %v2301 = vpop.f32.mrb[0].mxu0
        %v2302 = vadd.f32 0.0, %v2301
        %v2303 = vpop.f32.mrb[0].mxu0
        %v2304 = vpop.f32.mrb[0].mxu0
        %v2305 = vadd.f32 0.0, %v2304
        %v2306 = vpop.f32.mrb[0].mxu0
        %2307 = vdwg.mxu0
        %v2308 = vadd.f32 %v2153, %v2286
        %v2309 = vadd.f32 %v2156, %v2289
        %v2310 = vadd.f32 %v2161, %v2294
        %v2311 = vadd.f32 %v2164, %v2297
        %v2312 = vadd.f32 %v2169, %v2302
        %v2313 = vadd.f32 %v2172, %v2305
        %v2314 = vld [vmem:[%s6] sm:$0x1]
        %v2316 = vlaneseq
        %v2317 = vshrl.u32 %v2316, 7
        %v2318 = vsub.s32 0, %v2317
        %v2319 = vrot.slane %v2314, %v2318
        %v2321 = vadd.f32 %v2308, %v2319
        %v2322 = vadd.f32 %v2309, %v2319
        %v2323 = vadd.f32 %v2310, %v2319
        %v2324 = vadd.f32 %v2311, %v2319
        %v2325 = vadd.f32 %v2312, %v2319
        %v2326 = vadd.f32 %v2313, %v2319
        %v2327 = vmax.f32 %v2321, 0.0
        %v2328 = vmax.f32 %v2322, 0.0
        %v2329 = vmax.f32 %v2323, 0.0
        %v2330 = vmax.f32 %v2324, 0.0
        %v2331 = vmax.f32 %v2325, 0.0
        %v2332 = vmax.f32 %v2326, 0.0
        %v2333 = vpack.c.bf16 %v2328, %v2327
        %v2334 = vpack.c.bf16 %v2330, %v2329
        %v2335 = vpack.c.bf16 %v2332, %v2331
        %v2336 = vld [vmem:[#allocation4] sm:$0xf]
        %v2337 = vld [vmem:[#allocation4 + $0x4] sm:$0xf]
        %v2338 = vld [vmem:[#allocation4 + $0x8] sm:$0xf]
        %v2339 = vld [vmem:[#allocation4 + $0xc] sm:$0xf]
        %v2340 = vld [vmem:[#allocation4 + $0x10] sm:$0xf]
        %v2341 = vld [vmem:[#allocation4 + $0x14] sm:$0xf]
        %v2342 = vld [vmem:[#allocation4 + $0x18] sm:$0xf]
        %v2343 = vld [vmem:[#allocation4 + $0x1c] sm:$0xf]
        %v2344 = vld [vmem:[#allocation4 + $0x20] sm:$0xf]
        %v2345 = vld [vmem:[#allocation4 + $0x24] sm:$0xf]
        %v2346 = vld [vmem:[#allocation4 + $0x28] sm:$0xf]
        %v2347 = vld [vmem:[#allocation4 + $0x2c] sm:$0xf]
        %v2348 = vld [vmem:[#allocation4 + $0x30] sm:$0xf]
        %v2349 = vld [vmem:[#allocation4 + $0x34] sm:$0xf]
        %v2350 = vld [vmem:[#allocation4 + $0x38] sm:$0xf]
        %v2351 = vld [vmem:[#allocation4 + $0x3c] sm:$0xf]
        %s2352 = scalar_lea.vmem [#allocation4], 64
        %v2353 = vld [vmem:[%s2352] sm:$0xf]
        %v2354 = vld [vmem:[%s2352 + $0x4] sm:$0xf]
        %v2355 = vld [vmem:[%s2352 + $0x8] sm:$0xf]
        %v2356 = vld [vmem:[%s2352 + $0xc] sm:$0xf]
        %v2357 = vld [vmem:[%s2352 + $0x10] sm:$0xf]
        %v2358 = vld [vmem:[%s2352 + $0x14] sm:$0xf]
        %v2359 = vld [vmem:[%s2352 + $0x18] sm:$0xf]
        %v2360 = vld [vmem:[%s2352 + $0x1c] sm:$0xf]
        %v2361 = vld [vmem:[%s2352 + $0x20] sm:$0xf]
        %v2362 = vld [vmem:[%s2352 + $0x24] sm:$0xf]
        %v2363 = vld [vmem:[%s2352 + $0x28] sm:$0xf]
        %v2364 = vld [vmem:[%s2352 + $0x2c] sm:$0xf]
        %v2365 = vld [vmem:[%s2352 + $0x30] sm:$0xf]
        %v2366 = vld [vmem:[%s2352 + $0x34] sm:$0xf]
        %v2367 = vld [vmem:[%s2352 + $0x38] sm:$0xf]
        %v2368 = vld [vmem:[%s2352 + $0x3c] sm:$0xf]
        %v2370 = vshrl.u32 %v2333, 16
        %v2372 = vshll.u32 %v2333, 16
        %v2374 = vrot.slane %v2372, 1
        %v2375 = vor.u32 %v2370, %v2374
        %v2377 = vshll.u32 %v2334, 16
        %v2379 = vrot.slane %v2377, 1
        %v2380 = vsel %vm516, %v2375, %v2379
        %v2381 = vshrl.u32 %v2334, 16
        %v2383 = vor.u32 %v2381, %v2379
        %v2385 = vshll.u32 %v2335, 16
        %v2387 = vrot.slane %v2385, 1
        %v2388 = vsel %vm516, %v2383, %v2387
        %v2389 = vshrl.u32 %v2335, 16
        %v2391 = vor.u32 %v2389, %v2387
        %v2411 = vunpack.c.l.b16 %v2353
        %v2412 = vunpack.c.l.b16 %v2354
        %v2413 = vunpack.c.l.b16 %v2355
        %v2414 = vunpack.c.l.b16 %v2356
        %v2415 = vunpack.c.l.b16 %v2357
        %v2416 = vunpack.c.l.b16 %v2358
        %v2417 = vunpack.c.l.b16 %v2359
        %v2418 = vunpack.c.l.b16 %v2360
        %v2419 = vunpack.c.l.b16 %v2361
        %v2420 = vunpack.c.l.b16 %v2362
        %v2421 = vunpack.c.l.b16 %v2363
        %v2422 = vunpack.c.l.b16 %v2364
        %v2423 = vunpack.c.l.b16 %v2365
        %v2424 = vunpack.c.l.b16 %v2366
        %v2425 = vunpack.c.l.b16 %v2367
        %v2426 = vunpack.c.l.b16 %v2368
        %v2427 = vpack.c.b16 %v2412, %v2411
        %v2428 = vpack.c.b16 %v2414, %v2413
        %v2429 = vpack.c.b16 %v2416, %v2415
        %v2430 = vpack.c.b16 %v2418, %v2417
        %v2431 = vpack.c.b16 %v2420, %v2419
        %v2432 = vpack.c.b16 %v2422, %v2421
        %v2433 = vpack.c.b16 %v2424, %v2423
        %v2434 = vpack.c.b16 %v2426, %v2425
        %2443 = vmatprep.subr.bf16.mxu0 0
        %2444 = vmatpush1.bf16.msra.mxu0 %v2427
        %2445 = vmatprep.subr.bf16.mxu0 0
        %2446 = vmatpush1.bf16.msra.mxu0 %v2428
        %2447 = vmatprep.subr.bf16.mxu0 0
        %2448 = vmatpush1.bf16.msra.mxu0 %v2429
        %2449 = vmatprep.subr.bf16.mxu0 0
        %2450 = vmatpush1.bf16.msra.mxu0 %v2430
        %2451 = vmatprep.subr.bf16.mxu0 0
        %2452 = vmatpush1.bf16.msra.mxu0 %v2431
        %2453 = vmatprep.subr.bf16.mxu0 0
        %2454 = vmatpush1.bf16.msra.mxu0 %v2432
        %2455 = vmatprep.subr.bf16.mxu0 0
        %2456 = vmatpush1.bf16.msra.mxu0 %v2433
        %2457 = vmatprep.subr.bf16.mxu0 0
        %2458 = vmatpush1.bf16.msra.mxu0 %v2434
        %2459 = vmatprep.subr.bf16.mxu0 0
        %2460 = vmatpush1.bf16.msra.mxu0 0
        %2461 = vmatprep.subr.bf16.mxu0 0
        %2462 = vmatpush1.bf16.msra.mxu0 0
        %2463 = vmatprep.subr.bf16.mxu0 0
        %2464 = vmatpush1.bf16.msra.mxu0 0
        %2465 = vmatprep.subr.bf16.mxu0 0
        %2466 = vmatpush1.bf16.msra.mxu0 0
        %2467 = vmatprep.subr.bf16.mxu0 0
        %2468 = vmatpush1.bf16.msra.mxu0 0
        %2469 = vmatprep.subr.bf16.mxu0 0
        %2470 = vmatpush1.bf16.msra.mxu0 0
        %2471 = vmatprep.subr.bf16.mxu0 0
        %2472 = vmatpush1.bf16.msra.mxu0 0
        %2473 = vmatprep.subr.bf16.mxu0 0
        %2474 = vmatpush1.bf16.msra.mxu0 0
        %2475 = vmatprep.mubr.bf16.mxu0 0
        %2476 = vmatmul.mubr.bf16.gmra.mrb[0].mxu0 %v2380
        %v2477 = vpop.f32.mrb[0].mxu0
        %v2478 = vadd.f32 0.0, %v2477
        %v2479 = vpop.f32.mrb[0].mxu0
        %v2480 = vpop.f32.mrb[0].mxu0
        %v2481 = vadd.f32 0.0, %v2480
        %v2482 = vpop.f32.mrb[0].mxu0
        %2483 = vmatprep.mubr.bf16.mxu0 0
        %2484 = vmatmul.mubr.bf16.gmra.mrb[0].mxu0 %v2388
        %v2485 = vpop.f32.mrb[0].mxu0
        %v2486 = vadd.f32 0.0, %v2485
        %v2487 = vpop.f32.mrb[0].mxu0
        %v2488 = vpop.f32.mrb[0].mxu0
        %v2489 = vadd.f32 0.0, %v2488
        %v2490 = vpop.f32.mrb[0].mxu0
        %2491 = vmatprep.mubr.bf16.mxu0 0
        %2492 = vmatmul.mubr.bf16.gmra.mrb[0].mxu0 %v2391
        %v2493 = vpop.f32.mrb[0].mxu0
        %v2494 = vadd.f32 0.0, %v2493
        %v2495 = vpop.f32.mrb[0].mxu0
        %v2496 = vpop.f32.mrb[0].mxu0
        %v2497 = vadd.f32 0.0, %v2496
        %v2498 = vpop.f32.mrb[0].mxu0
        %2499 = vdwg.mxu0
        %v2516 = vunpack.c.l.b16 %v2336
        %v2517 = vunpack.c.l.b16 %v2337
        %v2518 = vunpack.c.l.b16 %v2338
        %v2519 = vunpack.c.l.b16 %v2339
        %v2520 = vunpack.c.l.b16 %v2340
        %v2521 = vunpack.c.l.b16 %v2341
        %v2522 = vunpack.c.l.b16 %v2342
        %v2523 = vunpack.c.l.b16 %v2343
        %v2524 = vunpack.c.l.b16 %v2344
        %v2525 = vunpack.c.l.b16 %v2345
        %v2526 = vunpack.c.l.b16 %v2346
        %v2527 = vunpack.c.l.b16 %v2347
        %v2528 = vunpack.c.l.b16 %v2348
        %v2529 = vunpack.c.l.b16 %v2349
        %v2530 = vunpack.c.l.b16 %v2350
        %v2531 = vunpack.c.l.b16 %v2351
        %v2532 = vpack.c.b16 %v2517, %v2516
        %v2533 = vpack.c.b16 %v2519, %v2518
        %v2534 = vpack.c.b16 %v2521, %v2520
        %v2535 = vpack.c.b16 %v2523, %v2522
        %v2536 = vpack.c.b16 %v2525, %v2524
        %v2537 = vpack.c.b16 %v2527, %v2526
        %v2538 = vpack.c.b16 %v2529, %v2528
        %v2539 = vpack.c.b16 %v2531, %v2530
        %2548 = vmatprep.subr.bf16.mxu0 0
        %2549 = vmatpush1.bf16.msra.mxu0 %v2532
        %2550 = vmatprep.subr.bf16.mxu0 0
        %2551 = vmatpush1.bf16.msra.mxu0 %v2533
        %2552 = vmatprep.subr.bf16.mxu0 0
        %2553 = vmatpush1.bf16.msra.mxu0 %v2534
        %2554 = vmatprep.subr.bf16.mxu0 0
        %2555 = vmatpush1.bf16.msra.mxu0 %v2535
        %2556 = vmatprep.subr.bf16.mxu0 0
        %2557 = vmatpush1.bf16.msra.mxu0 %v2536
        %2558 = vmatprep.subr.bf16.mxu0 0
        %2559 = vmatpush1.bf16.msra.mxu0 %v2537
        %2560 = vmatprep.subr.bf16.mxu0 0
        %2561 = vmatpush1.bf16.msra.mxu0 %v2538
        %2562 = vmatprep.subr.bf16.mxu0 0
        %2563 = vmatpush1.bf16.msra.mxu0 %v2539
        %2564 = vmatprep.subr.bf16.mxu0 0
        %2565 = vmatpush1.bf16.msra.mxu0 0
        %2566 = vmatprep.subr.bf16.mxu0 0
        %2567 = vmatpush1.bf16.msra.mxu0 0
        %2568 = vmatprep.subr.bf16.mxu0 0
        %2569 = vmatpush1.bf16.msra.mxu0 0
        %2570 = vmatprep.subr.bf16.mxu0 0
        %2571 = vmatpush1.bf16.msra.mxu0 0
        %2572 = vmatprep.subr.bf16.mxu0 0
        %2573 = vmatpush1.bf16.msra.mxu0 0
        %2574 = vmatprep.subr.bf16.mxu0 0
        %2575 = vmatpush1.bf16.msra.mxu0 0
        %2576 = vmatprep.subr.bf16.mxu0 0
        %2577 = vmatpush1.bf16.msra.mxu0 0
        %2578 = vmatprep.subr.bf16.mxu0 0
        %2579 = vmatpush1.bf16.msra.mxu0 0
        %2580 = vmatprep.mubr.bf16.mxu0 0
        %2581 = vmatmul.mubr.bf16.gmra.mrb[0].mxu0 %v2333
        %v2582 = vpop.f32.mrb[0].mxu0
        %v2583 = vadd.f32 %v2478, %v2582
        %v2584 = vpop.f32.mrb[0].mxu0
        %v2585 = vpop.f32.mrb[0].mxu0
        %v2586 = vadd.f32 %v2481, %v2585
        %v2587 = vpop.f32.mrb[0].mxu0
        %2588 = vmatprep.mubr.bf16.mxu0 0
        %2589 = vmatmul.mubr.bf16.gmra.mrb[0].mxu0 %v2334
        %v2590 = vpop.f32.mrb[0].mxu0
        %v2591 = vadd.f32 %v2486, %v2590
        %v2592 = vpop.f32.mrb[0].mxu0
        %v2593 = vpop.f32.mrb[0].mxu0
        %v2594 = vadd.f32 %v2489, %v2593
        %v2595 = vpop.f32.mrb[0].mxu0
        %2596 = vmatprep.mubr.bf16.mxu0 0
        %2597 = vmatmul.mubr.bf16.gmra.mrb[0].mxu0 %v2335
        %v2598 = vpop.f32.mrb[0].mxu0
        %v2599 = vadd.f32 %v2494, %v2598
        %v2600 = vpop.f32.mrb[0].mxu0
        %v2601 = vpop.f32.mrb[0].mxu0
        %v2602 = vadd.f32 %v2497, %v2601
        %v2603 = vpop.f32.mrb[0].mxu0
        %2604 = vdwg.mxu0
        %s2605 = scalar_lea.vmem [#allocation4], 128
        %v2606 = vld [vmem:[%s2605] sm:$0xf]
        %v2607 = vld [vmem:[%s2605 + $0x4] sm:$0xf]
        %v2608 = vld [vmem:[%s2605 + $0x8] sm:$0xf]
        %v2609 = vld [vmem:[%s2605 + $0xc] sm:$0xf]
        %v2610 = vld [vmem:[%s2605 + $0x10] sm:$0xf]
        %v2611 = vld [vmem:[%s2605 + $0x14] sm:$0xf]
        %v2612 = vld [vmem:[%s2605 + $0x18] sm:$0xf]
        %v2613 = vld [vmem:[%s2605 + $0x1c] sm:$0xf]
        %v2614 = vld [vmem:[%s2605 + $0x20] sm:$0xf]
        %v2615 = vld [vmem:[%s2605 + $0x24] sm:$0xf]
        %v2616 = vld [vmem:[%s2605 + $0x28] sm:$0xf]
        %v2617 = vld [vmem:[%s2605 + $0x2c] sm:$0xf]
        %v2618 = vld [vmem:[%s2605 + $0x30] sm:$0xf]
        %v2619 = vld [vmem:[%s2605 + $0x34] sm:$0xf]
        %v2620 = vld [vmem:[%s2605 + $0x38] sm:$0xf]
        %v2621 = vld [vmem:[%s2605 + $0x3c] sm:$0xf]
        %v2625 = vrot.slane %v2333, 1
        %v2626 = vrot.slane %v2334, 1
        %v2627 = vsel %vm1075, %v2625, %v2626
        %v2628 = vrot.slane %v2335, 1
        %v2629 = vsel %vm1075, %v2626, %v2628
        %v2649 = vunpack.c.l.b16 %v2606
        %v2650 = vunpack.c.l.b16 %v2607
        %v2651 = vunpack.c.l.b16 %v2608
        %v2652 = vunpack.c.l.b16 %v2609
        %v2653 = vunpack.c.l.b16 %v2610
        %v2654 = vunpack.c.l.b16 %v2611
        %v2655 = vunpack.c.l.b16 %v2612
        %v2656 = vunpack.c.l.b16 %v2613
        %v2657 = vunpack.c.l.b16 %v2614
        %v2658 = vunpack.c.l.b16 %v2615
        %v2659 = vunpack.c.l.b16 %v2616
        %v2660 = vunpack.c.l.b16 %v2617
        %v2661 = vunpack.c.l.b16 %v2618
        %v2662 = vunpack.c.l.b16 %v2619
        %v2663 = vunpack.c.l.b16 %v2620
        %v2664 = vunpack.c.l.b16 %v2621
        %v2665 = vpack.c.b16 %v2650, %v2649
        %v2666 = vpack.c.b16 %v2652, %v2651
        %v2667 = vpack.c.b16 %v2654, %v2653
        %v2668 = vpack.c.b16 %v2656, %v2655
        %v2669 = vpack.c.b16 %v2658, %v2657
        %v2670 = vpack.c.b16 %v2660, %v2659
        %v2671 = vpack.c.b16 %v2662, %v2661
        %v2672 = vpack.c.b16 %v2664, %v2663
        %2681 = vmatprep.subr.bf16.mxu0 0
        %2682 = vmatpush1.bf16.msra.mxu0 %v2665
        %2683 = vmatprep.subr.bf16.mxu0 0
        %2684 = vmatpush1.bf16.msra.mxu0 %v2666
        %2685 = vmatprep.subr.bf16.mxu0 0
        %2686 = vmatpush1.bf16.msra.mxu0 %v2667
        %2687 = vmatprep.subr.bf16.mxu0 0
        %2688 = vmatpush1.bf16.msra.mxu0 %v2668
        %2689 = vmatprep.subr.bf16.mxu0 0
        %2690 = vmatpush1.bf16.msra.mxu0 %v2669
        %2691 = vmatprep.subr.bf16.mxu0 0
        %2692 = vmatpush1.bf16.msra.mxu0 %v2670
        %2693 = vmatprep.subr.bf16.mxu0 0
        %2694 = vmatpush1.bf16.msra.mxu0 %v2671
        %2695 = vmatprep.subr.bf16.mxu0 0
        %2696 = vmatpush1.bf16.msra.mxu0 %v2672
        %2697 = vmatprep.subr.bf16.mxu0 0
        %2698 = vmatpush1.bf16.msra.mxu0 0
        %2699 = vmatprep.subr.bf16.mxu0 0
        %2700 = vmatpush1.bf16.msra.mxu0 0
        %2701 = vmatprep.subr.bf16.mxu0 0
        %2702 = vmatpush1.bf16.msra.mxu0 0
        %2703 = vmatprep.subr.bf16.mxu0 0
        %2704 = vmatpush1.bf16.msra.mxu0 0
        %2705 = vmatprep.subr.bf16.mxu0 0
        %2706 = vmatpush1.bf16.msra.mxu0 0
        %2707 = vmatprep.subr.bf16.mxu0 0
        %2708 = vmatpush1.bf16.msra.mxu0 0
        %2709 = vmatprep.subr.bf16.mxu0 0
        %2710 = vmatpush1.bf16.msra.mxu0 0
        %2711 = vmatprep.subr.bf16.mxu0 0
        %2712 = vmatpush1.bf16.msra.mxu0 0
        %2713 = vmatprep.mubr.bf16.mxu0 0
        %2714 = vmatmul.mubr.bf16.gmra.mrb[0].mxu0 %v2627
        %v2715 = vpop.f32.mrb[0].mxu0
        %v2716 = vadd.f32 0.0, %v2715
        %v2717 = vpop.f32.mrb[0].mxu0
        %v2718 = vpop.f32.mrb[0].mxu0
        %v2719 = vadd.f32 0.0, %v2718
        %v2720 = vpop.f32.mrb[0].mxu0
        %2721 = vmatprep.mubr.bf16.mxu0 0
        %2722 = vmatmul.mubr.bf16.gmra.mrb[0].mxu0 %v2629
        %v2723 = vpop.f32.mrb[0].mxu0
        %v2724 = vadd.f32 0.0, %v2723
        %v2725 = vpop.f32.mrb[0].mxu0
        %v2726 = vpop.f32.mrb[0].mxu0
        %v2727 = vadd.f32 0.0, %v2726
        %v2728 = vpop.f32.mrb[0].mxu0
        %2729 = vmatprep.mubr.bf16.mxu0 0
        %2730 = vmatmul.mubr.bf16.gmra.mrb[0].mxu0 %v2628
        %v2731 = vpop.f32.mrb[0].mxu0
        %v2732 = vadd.f32 0.0, %v2731
        %v2733 = vpop.f32.mrb[0].mxu0
        %v2734 = vpop.f32.mrb[0].mxu0
        %v2735 = vadd.f32 0.0, %v2734
        %v2736 = vpop.f32.mrb[0].mxu0
        %2737 = vdwg.mxu0
        %v2738 = vadd.f32 %v2583, %v2716
        %v2739 = vadd.f32 %v2586, %v2719
        %v2740 = vadd.f32 %v2591, %v2724
        %v2741 = vadd.f32 %v2594, %v2727
        %v2742 = vadd.f32 %v2599, %v2732
        %v2743 = vadd.f32 %v2602, %v2735
        %v2744 = vld [vmem:[%s8] sm:$0x1]
        %v2746 = vlaneseq
        %v2747 = vshrl.u32 %v2746, 7
        %v2748 = vsub.s32 0, %v2747
        %v2749 = vrot.slane %v2744, %v2748
        %v2751 = vadd.f32 %v2738, %v2749
        %v2752 = vadd.f32 %v2739, %v2749
        %v2753 = vadd.f32 %v2740, %v2749
        %v2754 = vadd.f32 %v2741, %v2749
        %v2755 = vadd.f32 %v2742, %v2749
        %v2756 = vadd.f32 %v2743, %v2749
        %v2757 = vmax.f32 %v2751, 0.0
        %v2758 = vmax.f32 %v2752, 0.0
        %v2759 = vmax.f32 %v2753, 0.0
        %v2760 = vmax.f32 %v2754, 0.0
        %v2761 = vmax.f32 %v2755, 0.0
        %v2762 = vmax.f32 %v2756, 0.0
        %vm2763 = vcmask 1041408
        %v2764 = vsel %vm2763, %v2762, 0.0
        %vm2765 = vcmp.lt.s32.totalorder %v1406, 18
        %vm2766 = vcmp.lt.s32.totalorder %v1407, 18
        %vm2767 = vcmp.lt.s32.totalorder %v1408, 18
        %v2768 = vsel %vm2765, 1, 0
        %v2769 = vsel %vm2766, 1, 0
        %v2770 = vsel %vm2767, 1, 0
        %vm2771 = vcmp.eq.s32.totalorder %v2768, 1
        %vm2772 = vcmp.eq.s32.totalorder %v2769, 1
        %vm2773 = vcmp.eq.s32.totalorder %v2770, 1
        %v2774 = vsel %vm2771, %v2757, 0.0
        %v2775 = vsel %vm2772, %v2758, 0.0
        %v2776 = vsel %vm2773, %v2759, 0.0
        %v2777 = vsel %vm2771, %v2760, 0.0
        %v2778 = vsel %vm2772, %v2761, 0.0
        %v2779 = vsel %vm2773, %v2764, 0.0
        %v2780 = vmax.f32 %v2774, %v2776
        %v2781 = vmax.f32 %v2780, %v2775
        %v2782 = vrot.slane %v2781, 4
        %v2783 = vmax.f32 %v2781, %v2782
        %v2784 = vrot.slane %v2783, 2
        %v2785 = vmax.f32 %v2783, %v2784
        %v2786 = vrot.slane %v2785, 1
        %v2787 = vmax.f32 %v2785, %v2786
        %v2788 = vmax.f32 %v2777, %v2779
        %v2789 = vmax.f32 %v2788, %v2778
        %v2790 = vrot.slane %v2789, 4
        %v2791 = vmax.f32 %v2789, %v2790
        %v2792 = vrot.slane %v2791, 2
        %v2793 = vmax.f32 %v2791, %v2792
        %v2794 = vrot.slane %v2793, 1
        %v2795 = vmax.f32 %v2793, %v2794
        %vm2798 = vcmask 1041409
        %v2799 = vsel %vm2798, %v1439, %v1431
        %v2803 = vsel %vm2798, %v1902, %v1894
        %v2807 = vsel %vm2798, %v2795, %v2787
        %v2809 = vpack.c.bf16 %v2799, %v2799
        %v2810 = vpack.c.bf16 %v2803, %v2803
        %v2811 = vpack.c.bf16 %v2807, %v2807
        %v2812 = vld [vmem:[#allocation6] sm:$0xf]
        %v2813 = vld [vmem:[#allocation6 + $0x4] sm:$0xf]
        %v2814 = vld [vmem:[#allocation6 + $0x8] sm:$0xf]
        %v2815 = vld [vmem:[#allocation6 + $0xc] sm:$0xf]
        %v2816 = vld [vmem:[#allocation6 + $0x10] sm:$0xf]
        %v2817 = vld [vmem:[#allocation6 + $0x14] sm:$0xf]
        %v2818 = vld [vmem:[#allocation6 + $0x18] sm:$0xf]
        %v2819 = vld [vmem:[#allocation6 + $0x1c] sm:$0xf]
        %v2820 = vld [vmem:[#allocation6 + $0x20] sm:$0xf]
        %v2821 = vld [vmem:[#allocation6 + $0x24] sm:$0xf]
        %v2822 = vld [vmem:[#allocation6 + $0x28] sm:$0xf]
        %v2823 = vld [vmem:[#allocation6 + $0x2c] sm:$0xf]
        %v2824 = vld [vmem:[#allocation6 + $0x30] sm:$0xf]
        %v2825 = vld [vmem:[#allocation6 + $0x34] sm:$0xf]
        %v2826 = vld [vmem:[#allocation6 + $0x38] sm:$0xf]
        %v2827 = vld [vmem:[#allocation6 + $0x3c] sm:$0xf]
        %v2828 = vld [vmem:[#allocation6 + $0x40] sm:$0xf]
        %v2829 = vld [vmem:[#allocation6 + $0x44] sm:$0xf]
        %v2830 = vld [vmem:[#allocation6 + $0x48] sm:$0xf]
        %v2831 = vld [vmem:[#allocation6 + $0x4c] sm:$0xf]
        %v2832 = vld [vmem:[#allocation6 + $0x50] sm:$0xf]
        %v2833 = vld [vmem:[#allocation6 + $0x54] sm:$0xf]
        %v2834 = vld [vmem:[#allocation6 + $0x58] sm:$0xf]
        %v2835 = vld [vmem:[#allocation6 + $0x5c] sm:$0xf]
        %v2836 = vld [vmem:[#allocation6 + $0x60] sm:$0xf]
        %v2837 = vld [vmem:[#allocation6 + $0x64] sm:$0xf]
        %v2838 = vld [vmem:[#allocation6 + $0x68] sm:$0xf]
        %v2839 = vld [vmem:[#allocation6 + $0x6c] sm:$0xf]
        %v2840 = vld [vmem:[#allocation6 + $0x70] sm:$0xf]
        %v2841 = vld [vmem:[#allocation6 + $0x74] sm:$0xf]
        %v2842 = vld [vmem:[#allocation6 + $0x78] sm:$0xf]
        %v2843 = vld [vmem:[#allocation6 + $0x7c] sm:$0xf]
        %v2844 = vld [vmem:[#allocation6 + $0x80] sm:$0xf]
        %v2845 = vld [vmem:[#allocation6 + $0x84] sm:$0xf]
        %v2846 = vld [vmem:[#allocation6 + $0x88] sm:$0xf]
        %v2847 = vld [vmem:[#allocation6 + $0x8c] sm:$0xf]
        %v2848 = vld [vmem:[#allocation6 + $0x90] sm:$0xf]
        %v2849 = vld [vmem:[#allocation6 + $0x94] sm:$0xf]
        %v2850 = vld [vmem:[#allocation6 + $0x98] sm:$0xf]
        %v2851 = vld [vmem:[#allocation6 + $0x9c] sm:$0xf]
        %v2852 = vld [vmem:[#allocation6 + $0xa0] sm:$0xf]
        %v2853 = vld [vmem:[#allocation6 + $0xa4] sm:$0xf]
        %v2854 = vld [vmem:[#allocation6 + $0xa8] sm:$0xf]
        %v2855 = vld [vmem:[#allocation6 + $0xac] sm:$0xf]
        %v2856 = vld [vmem:[#allocation6 + $0xb0] sm:$0xf]
        %v2857 = vld [vmem:[#allocation6 + $0xb4] sm:$0xf]
        %v2858 = vld [vmem:[#allocation6 + $0xb8] sm:$0xf]
        %v2859 = vld [vmem:[#allocation6 + $0xbc] sm:$0xf]
        %v2860 = vld [vmem:[%s10] sm:$0x1]
        %v2862 = vlaneseq
        %v2863 = vshrl.u32 %v2862, 7
        %v2864 = vsub.s32 0, %v2863
        %v2865 = vrot.slane %v2860, %v2864
        %v2915 = vunpack.c.l.b16 %v2812
        %v2916 = vunpack.c.l.b16 %v2813
        %v2917 = vunpack.c.l.b16 %v2814
        %v2918 = vunpack.c.l.b16 %v2815
        %v2919 = vunpack.c.l.b16 %v2816
        %v2920 = vunpack.c.l.b16 %v2817
        %v2921 = vunpack.c.l.b16 %v2818
        %v2922 = vunpack.c.l.b16 %v2819
        %v2923 = vunpack.c.l.b16 %v2820
        %v2924 = vunpack.c.l.b16 %v2821
        %v2925 = vunpack.c.l.b16 %v2822
        %v2926 = vunpack.c.l.b16 %v2823
        %v2927 = vunpack.c.l.b16 %v2824
        %v2928 = vunpack.c.l.b16 %v2825
        %v2929 = vunpack.c.l.b16 %v2826
        %v2930 = vunpack.c.l.b16 %v2827
        %v2931 = vunpack.c.l.b16 %v2828
        %v2932 = vunpack.c.l.b16 %v2829
        %v2933 = vunpack.c.l.b16 %v2830
        %v2934 = vunpack.c.l.b16 %v2831
        %v2935 = vunpack.c.l.b16 %v2832
        %v2936 = vunpack.c.l.b16 %v2833
        %v2937 = vunpack.c.l.b16 %v2834
        %v2938 = vunpack.c.l.b16 %v2835
        %v2939 = vunpack.c.l.b16 %v2836
        %v2940 = vunpack.c.l.b16 %v2837
        %v2941 = vunpack.c.l.b16 %v2838
        %v2942 = vunpack.c.l.b16 %v2839
        %v2943 = vunpack.c.l.b16 %v2840
        %v2944 = vunpack.c.l.b16 %v2841
        %v2945 = vunpack.c.l.b16 %v2842
        %v2946 = vunpack.c.l.b16 %v2843
        %v2947 = vunpack.c.l.b16 %v2844
        %v2948 = vunpack.c.l.b16 %v2845
        %v2949 = vunpack.c.l.b16 %v2846
        %v2950 = vunpack.c.l.b16 %v2847
        %v2951 = vunpack.c.l.b16 %v2848
        %v2952 = vunpack.c.l.b16 %v2849
        %v2953 = vunpack.c.l.b16 %v2850
        %v2954 = vunpack.c.l.b16 %v2851
        %v2955 = vunpack.c.l.b16 %v2852
        %v2956 = vunpack.c.l.b16 %v2853
        %v2957 = vunpack.c.l.b16 %v2854
        %v2958 = vunpack.c.l.b16 %v2855
        %v2959 = vunpack.c.l.b16 %v2856
        %v2960 = vunpack.c.l.b16 %v2857
        %v2961 = vunpack.c.l.b16 %v2858
        %v2962 = vunpack.c.l.b16 %v2859
        %v2963 = vpack.c.b16 %v2916, %v2915
        %v2964 = vpack.c.b16 %v2918, %v2917
        %v2965 = vpack.c.b16 %v2920, %v2919
        %v2966 = vpack.c.b16 %v2922, %v2921
        %v2967 = vpack.c.b16 %v2924, %v2923
        %v2968 = vpack.c.b16 %v2926, %v2925
        %v2969 = vpack.c.b16 %v2928, %v2927
        %v2970 = vpack.c.b16 %v2930, %v2929
        %v2971 = vpack.c.b16 %v2932, %v2931
        %v2972 = vpack.c.b16 %v2934, %v2933
        %v2973 = vpack.c.b16 %v2936, %v2935
        %v2974 = vpack.c.b16 %v2938, %v2937
        %v2975 = vpack.c.b16 %v2940, %v2939
        %v2976 = vpack.c.b16 %v2942, %v2941
        %v2977 = vpack.c.b16 %v2944, %v2943
        %v2978 = vpack.c.b16 %v2946, %v2945
        %v2979 = vpack.c.b16 %v2948, %v2947
        %v2980 = vpack.c.b16 %v2950, %v2949
        %v2981 = vpack.c.b16 %v2952, %v2951
        %v2982 = vpack.c.b16 %v2954, %v2953
        %v2983 = vpack.c.b16 %v2956, %v2955
        %v2984 = vpack.c.b16 %v2958, %v2957
        %v2985 = vpack.c.b16 %v2960, %v2959
        %v2986 = vpack.c.b16 %v2962, %v2961
        %3011 = vmatprep.subr.bf16.mxu0 0
        %3012 = vmatpush1.bf16.msra.mxu0 %v2963
        %3013 = vmatprep.subr.bf16.mxu0 0
        %3014 = vmatpush1.bf16.msra.mxu0 %v2964
        %3015 = vmatprep.subr.bf16.mxu0 0
        %3016 = vmatpush1.bf16.msra.mxu0 %v2965
        %3017 = vmatprep.subr.bf16.mxu0 0
        %3018 = vmatpush1.bf16.msra.mxu0 %v2966
        %3019 = vmatprep.subr.bf16.mxu0 0
        %3020 = vmatpush1.bf16.msra.mxu0 %v2967
        %3021 = vmatprep.subr.bf16.mxu0 0
        %3022 = vmatpush1.bf16.msra.mxu0 %v2968
        %3023 = vmatprep.subr.bf16.mxu0 0
        %3024 = vmatpush1.bf16.msra.mxu0 %v2969
        %3025 = vmatprep.subr.bf16.mxu0 0
        %3026 = vmatpush1.bf16.msra.mxu0 %v2970
        %3027 = vmatprep.subr.bf16.mxu0 0
        %3028 = vmatpush1.bf16.msra.mxu0 %v2971
        %3029 = vmatprep.subr.bf16.mxu0 0
        %3030 = vmatpush1.bf16.msra.mxu0 %v2972
        %3031 = vmatprep.subr.bf16.mxu0 0
        %3032 = vmatpush1.bf16.msra.mxu0 %v2973
        %3033 = vmatprep.subr.bf16.mxu0 0
        %3034 = vmatpush1.bf16.msra.mxu0 %v2974
        %3035 = vmatprep.subr.bf16.mxu0 0
        %3036 = vmatpush1.bf16.msra.mxu0 %v2975
        %3037 = vmatprep.subr.bf16.mxu0 0
        %3038 = vmatpush1.bf16.msra.mxu0 %v2976
        %3039 = vmatprep.subr.bf16.mxu0 0
        %3040 = vmatpush1.bf16.msra.mxu0 %v2977
        %3041 = vmatprep.subr.bf16.mxu0 0
        %3042 = vmatpush1.bf16.msra.mxu0 %v2978
        %3043 = vmatprep.mubr.bf16.mxu0 %v2810
        %3044 = vmatmul.mubr.bf16.gmra.mrb[0].mxu0 %v2809
        %v3045 = vpop.f32.mrb[0].mxu0
        %v3046 = vadd.f32 %v2865, %v3045
        %v3047 = vpop.f32.mrb[0].mxu0
        %v3048 = vpop.f32.mrb[0].mxu0
        %v3049 = vpop.f32.mrb[0].mxu0
        %3050 = vdwg.mxu0
        %3051 = vmatprep.subr.bf16.mxu0 0
        %3052 = vmatpush1.bf16.msra.mxu0 %v2979
        %3053 = vmatprep.subr.bf16.mxu0 0
        %3054 = vmatpush1.bf16.msra.mxu0 %v2980
        %3055 = vmatprep.subr.bf16.mxu0 0
        %3056 = vmatpush1.bf16.msra.mxu0 %v2981
        %3057 = vmatprep.subr.bf16.mxu0 0
        %3058 = vmatpush1.bf16.msra.mxu0 %v2982
        %3059 = vmatprep.subr.bf16.mxu0 0
        %3060 = vmatpush1.bf16.msra.mxu0 %v2983
        %3061 = vmatprep.subr.bf16.mxu0 0
        %3062 = vmatpush1.bf16.msra.mxu0 %v2984
        %3063 = vmatprep.subr.bf16.mxu0 0
        %3064 = vmatpush1.bf16.msra.mxu0 %v2985
        %3065 = vmatprep.subr.bf16.mxu0 0
        %3066 = vmatpush1.bf16.msra.mxu0 %v2986
        %3067 = vmatprep.subr.bf16.mxu0 0
        %3068 = vmatpush1.bf16.msra.mxu0 0
        %3069 = vmatprep.subr.bf16.mxu0 0
        %3070 = vmatpush1.bf16.msra.mxu0 0
        %3071 = vmatprep.subr.bf16.mxu0 0
        %3072 = vmatpush1.bf16.msra.mxu0 0
        %3073 = vmatprep.subr.bf16.mxu0 0
        %3074 = vmatpush1.bf16.msra.mxu0 0
        %3075 = vmatprep.subr.bf16.mxu0 0
        %3076 = vmatpush1.bf16.msra.mxu0 0
        %3077 = vmatprep.subr.bf16.mxu0 0
        %3078 = vmatpush1.bf16.msra.mxu0 0
        %3079 = vmatprep.subr.bf16.mxu0 0
        %3080 = vmatpush1.bf16.msra.mxu0 0
        %3081 = vmatprep.subr.bf16.mxu0 0
        %3082 = vmatpush1.bf16.msra.mxu0 0
        %3083 = vmatprep.mubr.bf16.mxu0 0
        %3084 = vmatmul.mubr.bf16.gmra.mrb[0].mxu0 %v2811
        %v3085 = vpop.f32.mrb[0].mxu0
        %v3086 = vadd.f32 %v3046, %v3085
        %v3087 = vpop.f32.mrb[0].mxu0
        %v3088 = vpop.f32.mrb[0].mxu0
        %v3089 = vpop.f32.mrb[0].mxu0
        %3090 = vdwg.mxu0
        %3091 = vst [vmem:[%s428] sm:$0x3] %v3086
        %p3092 = scmp.lt.s32.totalorder %s24, 1
        %s3093 = scalar_select %p3092, %s24, 1
        %s3094 = smul.addr %s3093, 2
        %s3095 = scalar_lea.vmem %s11, %s3094
        // Predicated region
        $region77: #{tfusion_forward.3} parent=63 // pred_check
          %p3096 = pneg %p278
        $region78: #{tfusion_forward.3} parent=63 // pred_check_branch
          %3098 = sbr.rel (%p3096) target = $region80
        $region79: #{tfusion_forward.3} parent=63 // pred_region
          _
        $region80: #{tfusion_forward.3} parent=63 // pred_fallthru
          _
      $region64: #{tfusion_forward.3} parent=5 // pred_fallthru
        _
      %p3099 = scmp.le.s32.totalorder 2, %s19
      // Predicated region
      $region81: #{tfusion_forward.3} parent=5 // pred_check
        %p3100 = pneg %p3099
      $region82: #{tfusion_forward.3} parent=5 // pred_check_branch
        %3102 = sbr.rel (%p3100) target = $region84
      $region83: #{tfusion_forward.3} parent=5 // pred_region
        %s3103 = ssub.s32 %s19, 2
        // Predicated region
        $region85: #{tfusion_forward.3} parent=83 // pred_check
          %p3104 = pneg %p284
        $region86: #{tfusion_forward.3} parent=83 // pred_check_branch
          %3106 = sbr.rel (%p3104) target = $region88
        $region87: #{tfusion_forward.3} parent=83 // pred_region
          %p3107 = scmp.lt.s32.totalorder %s25, 1
          %s3108 = scalar_select %p3107, %s25, 1
          %s3109 = smul.addr %s3108, 2
          %s3110 = scalar_lea.vmem %s11, %s3109
        $region88: #{tfusion_forward.3} parent=83 // pred_fallthru
          _
      $region84: #{tfusion_forward.3} parent=5 // pred_fallthru
        _
    $region6: #{tfusion_forward.3} parent=1 // loop_footer
      %s23 = sadd.s32 1, %s19
    $region7: #{tfusion_forward.3} parent=1 // loop_footer_branch
      %18 = sbr.rel target = $region3
    $region8: #{tfusion_forward.3} parent=1 // loop_exit
      _
    %3111 = vsyncpa [#allocation3], 1
    %s3112 = scalar_lea.sflag [#allocation3], 1
    %3113 = vsyncpa %s3112, 1
    %3114 = vsyncpa [#allocation5], 1

// kernel: tfusion_forward.5
$region0: #{tfusion_forward.5}
  #allocation0 [shape = 'u32[]', space=smem, size = 0x4, offset = 0x4, fixed_abs, tag = 'smem constant byte address 0x4 - core index']
  #allocation1 [shape = 'u32[144,128]{1,0:T(1,128)}', space=vmem, size = 0x12000, scoped, tag = 'internal scratch']
  %s0 = inlined_call_operand.vmem [shape: f32[4,128], index: 0, kind: input, shape index: {}]
  %s1 = inlined_call_operand.vmem [shape: f32[4,128], index: 1, kind: input, shape index: {}]
  %s2 = inlined_call_operand.vmem [shape: bf16[256,2048], index: 2, kind: input, shape index: {}]
  %s3 = inlined_call_operand.vmem [shape: f32[1,2048], index: 3, kind: input, shape index: {}]
  %s4 = inlined_call_operand.hbm [shape: bf16[2048,256], index: 4, kind: input, shape index: {}]
  %s5 = inlined_call_operand.vmem [shape: f32[1,256], index: 5, kind: input, shape index: {}]
  %s6 = inlined_call_operand.vmem [shape: bf16[256,256], index: 6, kind: input, shape index: {}]
  %s7 = inlined_call_operand.vmem [shape: f32[1,256], index: 7, kind: input, shape index: {}]
  %s8 = inlined_call_operand.vmem [shape: f32[4,1], index: 8, kind: output, shape index: {}]
  %s9 = sld [smem:[#allocation0]]
  $region46: #{tfusion_forward.5} parent=0
    _
  %s11 = ssub.s32 1, %s9
  %s12 = scalar_select 0, %s11, %s9
  $region1: #{tfusion_forward.5} parent=0
    #allocation2 [shape = 'u8[1048576]{0}', space=vmem, size = 0x100000, scoped, tag = 'input window, operand 4, single buffered']
    #allocation3 [shape = 's32[1]{0}', space=sflag, size = 0x4, scoped, tag = 'scoped memory for tfusion_forward.5']
    %13 = vsyncpa [#allocation3], 0
    // Predicated region
    $region2: #{tfusion_forward.5} parent=1 // pred_check
      _
    $region3: #{tfusion_forward.5} parent=1 // pred_check_branch
      %15 = sbr.rel (0) target = $region5
    $region4: #{tfusion_forward.5} parent=1 // pred_region
      _
    $region5: #{tfusion_forward.5} parent=1 // pred_fallthru
      _
    // Predicated region
    $region6: #{tfusion_forward.5} parent=1 // pred_check
      _
    $region7: #{tfusion_forward.5} parent=1 // pred_check_branch
      %17 = sbr.rel (0) target = $region9
    $region8: #{tfusion_forward.5} parent=1 // pred_region
      _
    $region9: #{tfusion_forward.5} parent=1 // pred_fallthru
      _
    // Predicated region
    $region10: #{tfusion_forward.5} parent=1 // pred_check
      _
    $region11: #{tfusion_forward.5} parent=1 // pred_check_branch
      %19 = sbr.rel (0) target = $region13
    $region12: #{tfusion_forward.5} parent=1 // pred_region
      _
    $region13: #{tfusion_forward.5} parent=1 // pred_fallthru
      _
    // Predicated region
    $region14: #{tfusion_forward.5} parent=1 // pred_check
      _
    $region15: #{tfusion_forward.5} parent=1 // pred_check_branch
      %21 = sbr.rel (0) target = $region17
    $region16: #{tfusion_forward.5} parent=1 // pred_region
      _
    $region17: #{tfusion_forward.5} parent=1 // pred_fallthru
      _
    // Predicated region
    $region18: #{tfusion_forward.5} parent=1 // pred_check
      _
    $region19: #{tfusion_forward.5} parent=1 // pred_check_branch
      %23 = sbr.rel (0) target = $region21
    $region20: #{tfusion_forward.5} parent=1 // pred_region
      %s25 = ssub.s32 32768, 32768
      %26 = vsyncadd [#allocation3], %s25
      %s27 = sshll.u32 [#allocation2], 4
      %s28 = int_to_ptr.vmem [resolvable:$true] %s27
      %33 = dma.hbm_to_vmem [thread:$0]  %s4, 32768, %s28, [#allocation3], 128, 128, 8
    $region21: #{tfusion_forward.5} parent=1 // pred_fallthru
      _
    // Predicated region
    $region22: #{tfusion_forward.5} parent=1 // pred_check
      _
    $region23: #{tfusion_forward.5} parent=1 // pred_check_branch
      %35 = sbr.rel (0) target = $region25
    $region24: #{tfusion_forward.5} parent=1 // pred_region
      _
    $region25: #{tfusion_forward.5} parent=1 // pred_fallthru
      _
    // Predicated region
    $region26: #{tfusion_forward.5} parent=1 // pred_check
      _
    $region27: #{tfusion_forward.5} parent=1 // pred_check_branch
      %37 = sbr.rel (0) target = $region29
    $region28: #{tfusion_forward.5} parent=1 // pred_region
      _
    $region29: #{tfusion_forward.5} parent=1 // pred_fallthru
      _
    // Predicated region
    $region30: #{tfusion_forward.5} parent=1 // pred_check
      _
    $region31: #{tfusion_forward.5} parent=1 // pred_check_branch
      %39 = sbr.rel (0) target = $region33
    $region32: #{tfusion_forward.5} parent=1 // pred_region
      _
    $region33: #{tfusion_forward.5} parent=1 // pred_fallthru
      _
    // Predicated region
    $region34: #{tfusion_forward.5} parent=1 // pred_check
      _
    $region35: #{tfusion_forward.5} parent=1 // pred_check_branch
      %41 = sbr.rel (0) target = $region37
    $region36: #{tfusion_forward.5} parent=1 // pred_region
      %42 = dma.done [#allocation3], 32768
    $region37: #{tfusion_forward.5} parent=1 // pred_fallthru
      _
    %v44 = vld [vmem:[%s0] sm:$0xf]
    %v45 = vpack.c.bf16 %v44, %v44
    %v46 = vld [vmem:[%s1] sm:$0xf]
    %v47 = vpack.c.bf16 %v46, %v46
    %v48 = vld [vmem:[%s2] sm:$0xff]
    %v49 = vld [vmem:[%s2 + $0x8] sm:$0xff]
    %v50 = vld [vmem:[%s2 + $0x10] sm:$0xff]
    %v51 = vld [vmem:[%s2 + $0x18] sm:$0xff]
    %v52 = vld [vmem:[%s2 + $0x20] sm:$0xff]
    %v53 = vld [vmem:[%s2 + $0x28] sm:$0xff]
    %v54 = vld [vmem:[%s2 + $0x30] sm:$0xff]
    %v55 = vld [vmem:[%s2 + $0x38] sm:$0xff]
    %v56 = vld [vmem:[%s2 + $0x40] sm:$0xff]
    %v57 = vld [vmem:[%s2 + $0x48] sm:$0xff]
    %v58 = vld [vmem:[%s2 + $0x50] sm:$0xff]
    %v59 = vld [vmem:[%s2 + $0x58] sm:$0xff]
    %v60 = vld [vmem:[%s2 + $0x60] sm:$0xff]
    %v61 = vld [vmem:[%s2 + $0x68] sm:$0xff]
    %v62 = vld [vmem:[%s2 + $0x70] sm:$0xff]
    %v63 = vld [vmem:[%s2 + $0x78] sm:$0xff]
    %v64 = vld [vmem:[%s2 + $0x80] sm:$0xff]
    %v65 = vld [vmem:[%s2 + $0x88] sm:$0xff]
    %v66 = vld [vmem:[%s2 + $0x90] sm:$0xff]
    %v67 = vld [vmem:[%s2 + $0x98] sm:$0xff]
    %v68 = vld [vmem:[%s2 + $0xa0] sm:$0xff]
    %v69 = vld [vmem:[%s2 + $0xa8] sm:$0xff]
    %v70 = vld [vmem:[%s2 + $0xb0] sm:$0xff]
    %v71 = vld [vmem:[%s2 + $0xb8] sm:$0xff]
    %v72 = vld [vmem:[%s2 + $0xc0] sm:$0xff]
    %v73 = vld [vmem:[%s2 + $0xc8] sm:$0xff]
    %v74 = vld [vmem:[%s2 + $0xd0] sm:$0xff]
    %v75 = vld [vmem:[%s2 + $0xd8] sm:$0xff]
    %v76 = vld [vmem:[%s2 + $0xe0] sm:$0xff]
    %v77 = vld [vmem:[%s2 + $0xe8] sm:$0xff]
    %v78 = vld [vmem:[%s2 + $0xf0] sm:$0xff]
    %v79 = vld [vmem:[%s2 + $0xf8] sm:$0xff]
    %v80 = vld [vmem:[%s2 + $0x100] sm:$0xff]
    %v81 = vld [vmem:[%s2 + $0x108] sm:$0xff]
    %v82 = vld [vmem:[%s2 + $0x110] sm:$0xff]
    %v83 = vld [vmem:[%s2 + $0x118] sm:$0xff]
    %v84 = vld [vmem:[%s2 + $0x120] sm:$0xff]
    %v85 = vld [vmem:[%s2 + $0x128] sm:$0xff]
    %v86 = vld [vmem:[%s2 + $0x130] sm:$0xff]
    %v87 = vld [vmem:[%s2 + $0x138] sm:$0xff]
    %v88 = vld [vmem:[%s2 + $0x140] sm:$0xff]
    %v89 = vld [vmem:[%s2 + $0x148] sm:$0xff]
    %v90 = vld [vmem:[%s2 + $0x150] sm:$0xff]
    %v91 = vld [vmem:[%s2 + $0x158] sm:$0xff]
    %v92 = vld [vmem:[%s2 + $0x160] sm:$0xff]
    %v93 = vld [vmem:[%s2 + $0x168] sm:$0xff]
    %v94 = vld [vmem:[%s2 + $0x170] sm:$0xff]
    %v95 = vld [vmem:[%s2 + $0x178] sm:$0xff]
    %v96 = vld [vmem:[%s2 + $0x180] sm:$0xff]
    %v97 = vld [vmem:[%s2 + $0x188] sm:$0xff]
    %v98 = vld [vmem:[%s2 + $0x190] sm:$0xff]
    %v99 = vld [vmem:[%s2 + $0x198] sm:$0xff]
    %v100 = vld [vmem:[%s2 + $0x1a0] sm:$0xff]
    %v101 = vld [vmem:[%s2 + $0x1a8] sm:$0xff]
    %v102 = vld [vmem:[%s2 + $0x1b0] sm:$0xff]
    %v103 = vld [vmem:[%s2 + $0x1b8] sm:$0xff]
    %v104 = vld [vmem:[%s2 + $0x1c0] sm:$0xff]
    %v105 = vld [vmem:[%s2 + $0x1c8] sm:$0xff]
    %v106 = vld [vmem:[%s2 + $0x1d0] sm:$0xff]
    %v107 = vld [vmem:[%s2 + $0x1d8] sm:$0xff]
    %v108 = vld [vmem:[%s2 + $0x1e0] sm:$0xff]
    %v109 = vld [vmem:[%s2 + $0x1e8] sm:$0xff]
    %v110 = vld [vmem:[%s2 + $0x1f0] sm:$0xff]
    %v111 = vld [vmem:[%s2 + $0x1f8] sm:$0xff]
    %v112 = vld [vmem:[%s2 + $0x200] sm:$0xff]
    %v113 = vld [vmem:[%s2 + $0x208] sm:$0xff]
    %v114 = vld [vmem:[%s2 + $0x210] sm:$0xff]
    %v115 = vld [vmem:[%s2 + $0x218] sm:$0xff]
    %v116 = vld [vmem:[%s2 + $0x220] sm:$0xff]
    %v117 = vld [vmem:[%s2 + $0x228] sm:$0xff]
    %v118 = vld [vmem:[%s2 + $0x230] sm:$0xff]
    %v119 = vld [vmem:[%s2 + $0x238] sm:$0xff]
    %v120 = vld [vmem:[%s2 + $0x240] sm:$0xff]
    %v121 = vld [vmem:[%s2 + $0x248] sm:$0xff]
    %v122 = vld [vmem:[%s2 + $0x250] sm:$0xff]
    %v123 = vld [vmem:[%s2 + $0x258] sm:$0xff]
    %v124 = vld [vmem:[%s2 + $0x260] sm:$0xff]
    %v125 = vld [vmem:[%s2 + $0x268] sm:$0xff]
    %v126 = vld [vmem:[%s2 + $0x270] sm:$0xff]
    %v127 = vld [vmem:[%s2 + $0x278] sm:$0xff]
    %v128 = vld [vmem:[%s2 + $0x280] sm:$0xff]
    %v129 = vld [vmem:[%s2 + $0x288] sm:$0xff]
    %v130 = vld [vmem:[%s2 + $0x290] sm:$0xff]
    %v131 = vld [vmem:[%s2 + $0x298] sm:$0xff]
    %v132 = vld [vmem:[%s2 + $0x2a0] sm:$0xff]
    %v133 = vld [vmem:[%s2 + $0x2a8] sm:$0xff]
    %v134 = vld [vmem:[%s2 + $0x2b0] sm:$0xff]
    %v135 = vld [vmem:[%s2 + $0x2b8] sm:$0xff]
    %v136 = vld [vmem:[%s2 + $0x2c0] sm:$0xff]
    %v137 = vld [vmem:[%s2 + $0x2c8] sm:$0xff]
    %v138 = vld [vmem:[%s2 + $0x2d0] sm:$0xff]
    %v139 = vld [vmem:[%s2 + $0x2d8] sm:$0xff]
    %v140 = vld [vmem:[%s2 + $0x2e0] sm:$0xff]
    %v141 = vld [vmem:[%s2 + $0x2e8] sm:$0xff]
    %v142 = vld [vmem:[%s2 + $0x2f0] sm:$0xff]
    %v143 = vld [vmem:[%s2 + $0x2f8] sm:$0xff]
    %v144 = vld [vmem:[%s2 + $0x300] sm:$0xff]
    %v145 = vld [vmem:[%s2 + $0x308] sm:$0xff]
    %v146 = vld [vmem:[%s2 + $0x310] sm:$0xff]
    %v147 = vld [vmem:[%s2 + $0x318] sm:$0xff]
    %v148 = vld [vmem:[%s2 + $0x320] sm:$0xff]
    %v149 = vld [vmem:[%s2 + $0x328] sm:$0xff]
    %v150 = vld [vmem:[%s2 + $0x330] sm:$0xff]
    %v151 = vld [vmem:[%s2 + $0x338] sm:$0xff]
    %v152 = vld [vmem:[%s2 + $0x340] sm:$0xff]
    %v153 = vld [vmem:[%s2 + $0x348] sm:$0xff]
    %v154 = vld [vmem:[%s2 + $0x350] sm:$0xff]
    %v155 = vld [vmem:[%s2 + $0x358] sm:$0xff]
    %v156 = vld [vmem:[%s2 + $0x360] sm:$0xff]
    %v157 = vld [vmem:[%s2 + $0x368] sm:$0xff]
    %v158 = vld [vmem:[%s2 + $0x370] sm:$0xff]
    %v159 = vld [vmem:[%s2 + $0x378] sm:$0xff]
    %v160 = vld [vmem:[%s2 + $0x380] sm:$0xff]
    %v161 = vld [vmem:[%s2 + $0x388] sm:$0xff]
    %v162 = vld [vmem:[%s2 + $0x390] sm:$0xff]
    %v163 = vld [vmem:[%s2 + $0x398] sm:$0xff]
    %v164 = vld [vmem:[%s2 + $0x3a0] sm:$0xff]
    %v165 = vld [vmem:[%s2 + $0x3a8] sm:$0xff]
    %v166 = vld [vmem:[%s2 + $0x3b0] sm:$0xff]
    %v167 = vld [vmem:[%s2 + $0x3b8] sm:$0xff]
    %v168 = vld [vmem:[%s2 + $0x3c0] sm:$0xff]
    %v169 = vld [vmem:[%s2 + $0x3c8] sm:$0xff]
    %v170 = vld [vmem:[%s2 + $0x3d0] sm:$0xff]
    %v171 = vld [vmem:[%s2 + $0x3d8] sm:$0xff]
    %v172 = vld [vmem:[%s2 + $0x3e0] sm:$0xff]
    %v173 = vld [vmem:[%s2 + $0x3e8] sm:$0xff]
    %v174 = vld [vmem:[%s2 + $0x3f0] sm:$0xff]
    %v175 = vld [vmem:[%s2 + $0x3f8] sm:$0xff]
    %v176 = vld [vmem:[%s2 + $0x400] sm:$0xff]
    %v177 = vld [vmem:[%s2 + $0x408] sm:$0xff]
    %v178 = vld [vmem:[%s2 + $0x410] sm:$0xff]
    %v179 = vld [vmem:[%s2 + $0x418] sm:$0xff]
    %v180 = vld [vmem:[%s2 + $0x420] sm:$0xff]
    %v181 = vld [vmem:[%s2 + $0x428] sm:$0xff]
    %v182 = vld [vmem:[%s2 + $0x430] sm:$0xff]
    %v183 = vld [vmem:[%s2 + $0x438] sm:$0xff]
    %v184 = vld [vmem:[%s2 + $0x440] sm:$0xff]
    %v185 = vld [vmem:[%s2 + $0x448] sm:$0xff]
    %v186 = vld [vmem:[%s2 + $0x450] sm:$0xff]
    %v187 = vld [vmem:[%s2 + $0x458] sm:$0xff]
    %v188 = vld [vmem:[%s2 + $0x460] sm:$0xff]
    %v189 = vld [vmem:[%s2 + $0x468] sm:$0xff]
    %v190 = vld [vmem:[%s2 + $0x470] sm:$0xff]
    %v191 = vld [vmem:[%s2 + $0x478] sm:$0xff]
    %v192 = vld [vmem:[%s2 + $0x480] sm:$0xff]
    %v193 = vld [vmem:[%s2 + $0x488] sm:$0xff]
    %v194 = vld [vmem:[%s2 + $0x490] sm:$0xff]
    %v195 = vld [vmem:[%s2 + $0x498] sm:$0xff]
    %v196 = vld [vmem:[%s2 + $0x4a0] sm:$0xff]
    %v197 = vld [vmem:[%s2 + $0x4a8] sm:$0xff]
    %v198 = vld [vmem:[%s2 + $0x4b0] sm:$0xff]
    %v199 = vld [vmem:[%s2 + $0x4b8] sm:$0xff]
    %v200 = vld [vmem:[%s2 + $0x4c0] sm:$0xff]
    %v201 = vld [vmem:[%s2 + $0x4c8] sm:$0xff]
    %v202 = vld [vmem:[%s2 + $0x4d0] sm:$0xff]
    %v203 = vld [vmem:[%s2 + $0x4d8] sm:$0xff]
    %v204 = vld [vmem:[%s2 + $0x4e0] sm:$0xff]
    %v205 = vld [vmem:[%s2 + $0x4e8] sm:$0xff]
    %v206 = vld [vmem:[%s2 + $0x4f0] sm:$0xff]
    %v207 = vld [vmem:[%s2 + $0x4f8] sm:$0xff]
    %v208 = vld [vmem:[%s2 + $0x500] sm:$0xff]
    %v209 = vld [vmem:[%s2 + $0x508] sm:$0xff]
    %v210 = vld [vmem:[%s2 + $0x510] sm:$0xff]
    %v211 = vld [vmem:[%s2 + $0x518] sm:$0xff]
    %v212 = vld [vmem:[%s2 + $0x520] sm:$0xff]
    %v213 = vld [vmem:[%s2 + $0x528] sm:$0xff]
    %v214 = vld [vmem:[%s2 + $0x530] sm:$0xff]
    %v215 = vld [vmem:[%s2 + $0x538] sm:$0xff]
    %v216 = vld [vmem:[%s2 + $0x540] sm:$0xff]
    %v217 = vld [vmem:[%s2 + $0x548] sm:$0xff]
    %v218 = vld [vmem:[%s2 + $0x550] sm:$0xff]
    %v219 = vld [vmem:[%s2 + $0x558] sm:$0xff]
    %v220 = vld [vmem:[%s2 + $0x560] sm:$0xff]
    %v221 = vld [vmem:[%s2 + $0x568] sm:$0xff]
    %v222 = vld [vmem:[%s2 + $0x570] sm:$0xff]
    %v223 = vld [vmem:[%s2 + $0x578] sm:$0xff]
    %v224 = vld [vmem:[%s2 + $0x580] sm:$0xff]
    %v225 = vld [vmem:[%s2 + $0x588] sm:$0xff]
    %v226 = vld [vmem:[%s2 + $0x590] sm:$0xff]
    %v227 = vld [vmem:[%s2 + $0x598] sm:$0xff]
    %v228 = vld [vmem:[%s2 + $0x5a0] sm:$0xff]
    %v229 = vld [vmem:[%s2 + $0x5a8] sm:$0xff]
    %v230 = vld [vmem:[%s2 + $0x5b0] sm:$0xff]
    %v231 = vld [vmem:[%s2 + $0x5b8] sm:$0xff]
    %v232 = vld [vmem:[%s2 + $0x5c0] sm:$0xff]
    %v233 = vld [vmem:[%s2 + $0x5c8] sm:$0xff]
    %v234 = vld [vmem:[%s2 + $0x5d0] sm:$0xff]
    %v235 = vld [vmem:[%s2 + $0x5d8] sm:$0xff]
    %v236 = vld [vmem:[%s2 + $0x5e0] sm:$0xff]
    %v237 = vld [vmem:[%s2 + $0x5e8] sm:$0xff]
    %v238 = vld [vmem:[%s2 + $0x5f0] sm:$0xff]
    %v239 = vld [vmem:[%s2 + $0x5f8] sm:$0xff]
    %v240 = vld [vmem:[%s2 + $0x600] sm:$0xff]
    %v241 = vld [vmem:[%s2 + $0x608] sm:$0xff]
    %v242 = vld [vmem:[%s2 + $0x610] sm:$0xff]
    %v243 = vld [vmem:[%s2 + $0x618] sm:$0xff]
    %v244 = vld [vmem:[%s2 + $0x620] sm:$0xff]
    %v245 = vld [vmem:[%s2 + $0x628] sm:$0xff]
    %v246 = vld [vmem:[%s2 + $0x630] sm:$0xff]
    %v247 = vld [vmem:[%s2 + $0x638] sm:$0xff]
    %v248 = vld [vmem:[%s2 + $0x640] sm:$0xff]
    %v249 = vld [vmem:[%s2 + $0x648] sm:$0xff]
    %v250 = vld [vmem:[%s2 + $0x650] sm:$0xff]
    %v251 = vld [vmem:[%s2 + $0x658] sm:$0xff]
    %v252 = vld [vmem:[%s2 + $0x660] sm:$0xff]
    %v253 = vld [vmem:[%s2 + $0x668] sm:$0xff]
    %v254 = vld [vmem:[%s2 + $0x670] sm:$0xff]
    %v255 = vld [vmem:[%s2 + $0x678] sm:$0xff]
    %v256 = vld [vmem:[%s2 + $0x680] sm:$0xff]
    %v257 = vld [vmem:[%s2 + $0x688] sm:$0xff]
    %v258 = vld [vmem:[%s2 + $0x690] sm:$0xff]
    %v259 = vld [vmem:[%s2 + $0x698] sm:$0xff]
    %v260 = vld [vmem:[%s2 + $0x6a0] sm:$0xff]
    %v261 = vld [vmem:[%s2 + $0x6a8] sm:$0xff]
    %v262 = vld [vmem:[%s2 + $0x6b0] sm:$0xff]
    %v263 = vld [vmem:[%s2 + $0x6b8] sm:$0xff]
    %v264 = vld [vmem:[%s2 + $0x6c0] sm:$0xff]
    %v265 = vld [vmem:[%s2 + $0x6c8] sm:$0xff]
    %v266 = vld [vmem:[%s2 + $0x6d0] sm:$0xff]
    %v267 = vld [vmem:[%s2 + $0x6d8] sm:$0xff]
    %v268 = vld [vmem:[%s2 + $0x6e0] sm:$0xff]
    %v269 = vld [vmem:[%s2 + $0x6e8] sm:$0xff]
    %v270 = vld [vmem:[%s2 + $0x6f0] sm:$0xff]
    %v271 = vld [vmem:[%s2 + $0x6f8] sm:$0xff]
    %v272 = vld [vmem:[%s2 + $0x700] sm:$0xff]
    %v273 = vld [vmem:[%s2 + $0x708] sm:$0xff]
    %v274 = vld [vmem:[%s2 + $0x710] sm:$0xff]
    %v275 = vld [vmem:[%s2 + $0x718] sm:$0xff]
    %v276 = vld [vmem:[%s2 + $0x720] sm:$0xff]
    %v277 = vld [vmem:[%s2 + $0x728] sm:$0xff]
    %v278 = vld [vmem:[%s2 + $0x730] sm:$0xff]
    %v279 = vld [vmem:[%s2 + $0x738] sm:$0xff]
    %v280 = vld [vmem:[%s2 + $0x740] sm:$0xff]
    %v281 = vld [vmem:[%s2 + $0x748] sm:$0xff]
    %v282 = vld [vmem:[%s2 + $0x750] sm:$0xff]
    %v283 = vld [vmem:[%s2 + $0x758] sm:$0xff]
    %v284 = vld [vmem:[%s2 + $0x760] sm:$0xff]
    %v285 = vld [vmem:[%s2 + $0x768] sm:$0xff]
    %v286 = vld [vmem:[%s2 + $0x770] sm:$0xff]
    %v287 = vld [vmem:[%s2 + $0x778] sm:$0xff]
    %v288 = vld [vmem:[%s2 + $0x780] sm:$0xff]
    %v289 = vld [vmem:[%s2 + $0x788] sm:$0xff]
    %v290 = vld [vmem:[%s2 + $0x790] sm:$0xff]
    %v291 = vld [vmem:[%s2 + $0x798] sm:$0xff]
    %v292 = vld [vmem:[%s2 + $0x7a0] sm:$0xff]
    %v293 = vld [vmem:[%s2 + $0x7a8] sm:$0xff]
    %v294 = vld [vmem:[%s2 + $0x7b0] sm:$0xff]
    %v295 = vld [vmem:[%s2 + $0x7b8] sm:$0xff]
    %v296 = vld [vmem:[%s2 + $0x7c0] sm:$0xff]
    %v297 = vld [vmem:[%s2 + $0x7c8] sm:$0xff]
    %v298 = vld [vmem:[%s2 + $0x7d0] sm:$0xff]
    %v299 = vld [vmem:[%s2 + $0x7d8] sm:$0xff]
    %v300 = vld [vmem:[%s2 + $0x7e0] sm:$0xff]
    %v301 = vld [vmem:[%s2 + $0x7e8] sm:$0xff]
    %v302 = vld [vmem:[%s2 + $0x7f0] sm:$0xff]
    %v303 = vld [vmem:[%s2 + $0x7f8] sm:$0xff]
    %v432 = vunpack.c.l.b16 %v176
    %v433 = vunpack.c.h.b16 %v176
    %v434 = vunpack.c.l.b16 %v177
    %v435 = vunpack.c.h.b16 %v177
    %v436 = vunpack.c.l.b16 %v178
    %v437 = vunpack.c.h.b16 %v178
    %v438 = vunpack.c.l.b16 %v179
    %v439 = vunpack.c.h.b16 %v179
    %v440 = vunpack.c.l.b16 %v180
    %v441 = vunpack.c.h.b16 %v180
    %v442 = vunpack.c.l.b16 %v181
    %v443 = vunpack.c.h.b16 %v181
    %v444 = vunpack.c.l.b16 %v182
    %v445 = vunpack.c.h.b16 %v182
    %v446 = vunpack.c.l.b16 %v183
    %v447 = vunpack.c.h.b16 %v183
    %v448 = vunpack.c.l.b16 %v184
    %v449 = vunpack.c.h.b16 %v184
    %v450 = vunpack.c.l.b16 %v185
    %v451 = vunpack.c.h.b16 %v185
    %v452 = vunpack.c.l.b16 %v186
    %v453 = vunpack.c.h.b16 %v186
    %v454 = vunpack.c.l.b16 %v187
    %v455 = vunpack.c.h.b16 %v187
    %v456 = vunpack.c.l.b16 %v188
    %v457 = vunpack.c.h.b16 %v188
    %v458 = vunpack.c.l.b16 %v189
    %v459 = vunpack.c.h.b16 %v189
    %v460 = vunpack.c.l.b16 %v190
    %v461 = vunpack.c.h.b16 %v190
    %v462 = vunpack.c.l.b16 %v191
    %v463 = vunpack.c.h.b16 %v191
    %v464 = vunpack.c.l.b16 %v192
    %v465 = vunpack.c.h.b16 %v192
    %v466 = vunpack.c.l.b16 %v193
    %v467 = vunpack.c.h.b16 %v193
    %v468 = vunpack.c.l.b16 %v194
    %v469 = vunpack.c.h.b16 %v194
    %v470 = vunpack.c.l.b16 %v195
    %v471 = vunpack.c.h.b16 %v195
    %v472 = vunpack.c.l.b16 %v196
    %v473 = vunpack.c.h.b16 %v196
    %v474 = vunpack.c.l.b16 %v197
    %v475 = vunpack.c.h.b16 %v197
    %v476 = vunpack.c.l.b16 %v198
    %v477 = vunpack.c.h.b16 %v198
    %v478 = vunpack.c.l.b16 %v199
    %v479 = vunpack.c.h.b16 %v199
    %v480 = vunpack.c.l.b16 %v200
    %v481 = vunpack.c.h.b16 %v200
    %v482 = vunpack.c.l.b16 %v201
    %v483 = vunpack.c.h.b16 %v201
    %v484 = vunpack.c.l.b16 %v202
    %v485 = vunpack.c.h.b16 %v202
    %v486 = vunpack.c.l.b16 %v203
    %v487 = vunpack.c.h.b16 %v203
    %v488 = vunpack.c.l.b16 %v204
    %v489 = vunpack.c.h.b16 %v204
    %v490 = vunpack.c.l.b16 %v205
    %v491 = vunpack.c.h.b16 %v205
    %v492 = vunpack.c.l.b16 %v206
    %v493 = vunpack.c.h.b16 %v206
    %v494 = vunpack.c.l.b16 %v207
    %v495 = vunpack.c.h.b16 %v207
    %v496 = vunpack.c.l.b16 %v208
    %v497 = vunpack.c.h.b16 %v208
    %v498 = vunpack.c.l.b16 %v209
    %v499 = vunpack.c.h.b16 %v209
    %v500 = vunpack.c.l.b16 %v210
    %v501 = vunpack.c.h.b16 %v210
    %v502 = vunpack.c.l.b16 %v211
    %v503 = vunpack.c.h.b16 %v211
    %v504 = vunpack.c.l.b16 %v212
    %v505 = vunpack.c.h.b16 %v212
    %v506 = vunpack.c.l.b16 %v213
    %v507 = vunpack.c.h.b16 %v213
    %v508 = vunpack.c.l.b16 %v214
    %v509 = vunpack.c.h.b16 %v214
    %v510 = vunpack.c.l.b16 %v215
    %v511 = vunpack.c.h.b16 %v215
    %v512 = vunpack.c.l.b16 %v216
    %v513 = vunpack.c.h.b16 %v216
    %v514 = vunpack.c.l.b16 %v217
    %v515 = vunpack.c.h.b16 %v217
    %v516 = vunpack.c.l.b16 %v218
    %v517 = vunpack.c.h.b16 %v218
    %v518 = vunpack.c.l.b16 %v219
    %v519 = vunpack.c.h.b16 %v219
    %v520 = vunpack.c.l.b16 %v220
    %v521 = vunpack.c.h.b16 %v220
    %v522 = vunpack.c.l.b16 %v221
    %v523 = vunpack.c.h.b16 %v221
    %v524 = vunpack.c.l.b16 %v222
    %v525 = vunpack.c.h.b16 %v222
    %v526 = vunpack.c.l.b16 %v223
    %v527 = vunpack.c.h.b16 %v223
    %v528 = vunpack.c.l.b16 %v224
    %v529 = vunpack.c.h.b16 %v224
    %v530 = vunpack.c.l.b16 %v225
    %v531 = vunpack.c.h.b16 %v225
    %v532 = vunpack.c.l.b16 %v226
    %v533 = vunpack.c.h.b16 %v226
    %v534 = vunpack.c.l.b16 %v227
    %v535 = vunpack.c.h.b16 %v227
    %v536 = vunpack.c.l.b16 %v228
    %v537 = vunpack.c.h.b16 %v228
    %v538 = vunpack.c.l.b16 %v229
    %v539 = vunpack.c.h.b16 %v229
    %v540 = vunpack.c.l.b16 %v230
    %v541 = vunpack.c.h.b16 %v230
    %v542 = vunpack.c.l.b16 %v231
    %v543 = vunpack.c.h.b16 %v231
    %v544 = vunpack.c.l.b16 %v232
    %v545 = vunpack.c.h.b16 %v232
    %v546 = vunpack.c.l.b16 %v233
    %v547 = vunpack.c.h.b16 %v233
    %v548 = vunpack.c.l.b16 %v234
    %v549 = vunpack.c.h.b16 %v234
    %v550 = vunpack.c.l.b16 %v235
    %v551 = vunpack.c.h.b16 %v235
    %v552 = vunpack.c.l.b16 %v236
    %v553 = vunpack.c.h.b16 %v236
    %v554 = vunpack.c.l.b16 %v237
    %v555 = vunpack.c.h.b16 %v237
    %v556 = vunpack.c.l.b16 %v238
    %v557 = vunpack.c.h.b16 %v238
    %v558 = vunpack.c.l.b16 %v239
    %v559 = vunpack.c.h.b16 %v239
    %v560 = vunpack.c.l.b16 %v240
    %v561 = vunpack.c.h.b16 %v240
    %v562 = vunpack.c.l.b16 %v241
    %v563 = vunpack.c.h.b16 %v241
    %v564 = vunpack.c.l.b16 %v242
    %v565 = vunpack.c.h.b16 %v242
    %v566 = vunpack.c.l.b16 %v243
    %v567 = vunpack.c.h.b16 %v243
    %v568 = vunpack.c.l.b16 %v244
    %v569 = vunpack.c.h.b16 %v244
    %v570 = vunpack.c.l.b16 %v245
    %v571 = vunpack.c.h.b16 %v245
    %v572 = vunpack.c.l.b16 %v246
    %v573 = vunpack.c.h.b16 %v246
    %v574 = vunpack.c.l.b16 %v247
    %v575 = vunpack.c.h.b16 %v247
    %v576 = vunpack.c.l.b16 %v248
    %v577 = vunpack.c.h.b16 %v248
    %v578 = vunpack.c.l.b16 %v249
    %v579 = vunpack.c.h.b16 %v249
    %v580 = vunpack.c.l.b16 %v250
    %v581 = vunpack.c.h.b16 %v250
    %v582 = vunpack.c.l.b16 %v251
    %v583 = vunpack.c.h.b16 %v251
    %v584 = vunpack.c.l.b16 %v252
    %v585 = vunpack.c.h.b16 %v252
    %v586 = vunpack.c.l.b16 %v253
    %v587 = vunpack.c.h.b16 %v253
    %v588 = vunpack.c.l.b16 %v254
    %v589 = vunpack.c.h.b16 %v254
    %v590 = vunpack.c.l.b16 %v255
    %v591 = vunpack.c.h.b16 %v255
    %v592 = vunpack.c.l.b16 %v256
    %v593 = vunpack.c.h.b16 %v256
    %v594 = vunpack.c.l.b16 %v257
    %v595 = vunpack.c.h.b16 %v257
    %v596 = vunpack.c.l.b16 %v258
    %v597 = vunpack.c.h.b16 %v258
    %v598 = vunpack.c.l.b16 %v259
    %v599 = vunpack.c.h.b16 %v259
    %v600 = vunpack.c.l.b16 %v260
    %v601 = vunpack.c.h.b16 %v260
    %v602 = vunpack.c.l.b16 %v261
    %v603 = vunpack.c.h.b16 %v261
    %v604 = vunpack.c.l.b16 %v262
    %v605 = vunpack.c.h.b16 %v262
    %v606 = vunpack.c.l.b16 %v263
    %v607 = vunpack.c.h.b16 %v263
    %v608 = vunpack.c.l.b16 %v264
    %v609 = vunpack.c.h.b16 %v264
    %v610 = vunpack.c.l.b16 %v265
    %v611 = vunpack.c.h.b16 %v265
    %v612 = vunpack.c.l.b16 %v266
    %v613 = vunpack.c.h.b16 %v266
    %v614 = vunpack.c.l.b16 %v267
    %v615 = vunpack.c.h.b16 %v267
    %v616 = vunpack.c.l.b16 %v268
    %v617 = vunpack.c.h.b16 %v268
    %v618 = vunpack.c.l.b16 %v269
    %v619 = vunpack.c.h.b16 %v269
    %v620 = vunpack.c.l.b16 %v270
    %v621 = vunpack.c.h.b16 %v270
    %v622 = vunpack.c.l.b16 %v271
    %v623 = vunpack.c.h.b16 %v271
    %v624 = vunpack.c.l.b16 %v272
    %v625 = vunpack.c.h.b16 %v272
    %v626 = vunpack.c.l.b16 %v273
    %v627 = vunpack.c.h.b16 %v273
    %v628 = vunpack.c.l.b16 %v274
    %v629 = vunpack.c.h.b16 %v274
    %v630 = vunpack.c.l.b16 %v275
    %v631 = vunpack.c.h.b16 %v275
    %v632 = vunpack.c.l.b16 %v276
    %v633 = vunpack.c.h.b16 %v276
    %v634 = vunpack.c.l.b16 %v277
    %v635 = vunpack.c.h.b16 %v277
    %v636 = vunpack.c.l.b16 %v278
    %v637 = vunpack.c.h.b16 %v278
    %v638 = vunpack.c.l.b16 %v279
    %v639 = vunpack.c.h.b16 %v279
    %v640 = vunpack.c.l.b16 %v280
    %v641 = vunpack.c.h.b16 %v280
    %v642 = vunpack.c.l.b16 %v281
    %v643 = vunpack.c.h.b16 %v281
    %v644 = vunpack.c.l.b16 %v282
    %v645 = vunpack.c.h.b16 %v282
    %v646 = vunpack.c.l.b16 %v283
    %v647 = vunpack.c.h.b16 %v283
    %v648 = vunpack.c.l.b16 %v284
    %v649 = vunpack.c.h.b16 %v284
    %v650 = vunpack.c.l.b16 %v285
    %v651 = vunpack.c.h.b16 %v285
    %v652 = vunpack.c.l.b16 %v286
    %v653 = vunpack.c.h.b16 %v286
    %v654 = vunpack.c.l.b16 %v287
    %v655 = vunpack.c.h.b16 %v287
    %v656 = vunpack.c.l.b16 %v288
    %v657 = vunpack.c.h.b16 %v288
    %v658 = vunpack.c.l.b16 %v289
    %v659 = vunpack.c.h.b16 %v289
    %v660 = vunpack.c.l.b16 %v290
    %v661 = vunpack.c.h.b16 %v290
    %v662 = vunpack.c.l.b16 %v291
    %v663 = vunpack.c.h.b16 %v291
    %v664 = vunpack.c.l.b16 %v292
    %v665 = vunpack.c.h.b16 %v292
    %v666 = vunpack.c.l.b16 %v293
    %v667 = vunpack.c.h.b16 %v293
    %v668 = vunpack.c.l.b16 %v294
    %v669 = vunpack.c.h.b16 %v294
    %v670 = vunpack.c.l.b16 %v295
    %v671 = vunpack.c.h.b16 %v295
    %v672 = vunpack.c.l.b16 %v296
    %v673 = vunpack.c.h.b16 %v296
    %v674 = vunpack.c.l.b16 %v297
    %v675 = vunpack.c.h.b16 %v297
    %v676 = vunpack.c.l.b16 %v298
    %v677 = vunpack.c.h.b16 %v298
    %v678 = vunpack.c.l.b16 %v299
    %v679 = vunpack.c.h.b16 %v299
    %v680 = vunpack.c.l.b16 %v300
    %v681 = vunpack.c.h.b16 %v300
    %v682 = vunpack.c.l.b16 %v301
    %v683 = vunpack.c.h.b16 %v301
    %v684 = vunpack.c.l.b16 %v302
    %v685 = vunpack.c.h.b16 %v302
    %v686 = vunpack.c.l.b16 %v303
    %v687 = vunpack.c.h.b16 %v303
    %v688 = vpack.c.b16 %v448, %v432
    %v689 = vpack.c.b16 %v449, %v433
    %v690 = vpack.c.b16 %v450, %v434
    %v691 = vpack.c.b16 %v451, %v435
    %v692 = vpack.c.b16 %v452, %v436
    %v693 = vpack.c.b16 %v453, %v437
    %v694 = vpack.c.b16 %v454, %v438
    %v695 = vpack.c.b16 %v455, %v439
    %v696 = vpack.c.b16 %v456, %v440
    %v697 = vpack.c.b16 %v457, %v441
    %v698 = vpack.c.b16 %v458, %v442
    %v699 = vpack.c.b16 %v459, %v443
    %v700 = vpack.c.b16 %v460, %v444
    %v701 = vpack.c.b16 %v461, %v445
    %v702 = vpack.c.b16 %v462, %v446
    %v703 = vpack.c.b16 %v463, %v447
    %v704 = vpack.c.b16 %v480, %v464
    %v705 = vpack.c.b16 %v481, %v465
    %v706 = vpack.c.b16 %v482, %v466
    %v707 = vpack.c.b16 %v483, %v467
    %v708 = vpack.c.b16 %v484, %v468
    %v709 = vpack.c.b16 %v485, %v469
    %v710 = vpack.c.b16 %v486, %v470
    %v711 = vpack.c.b16 %v487, %v471
    %v712 = vpack.c.b16 %v488, %v472
    %v713 = vpack.c.b16 %v489, %v473
    %v714 = vpack.c.b16 %v490, %v474
    %v715 = vpack.c.b16 %v491, %v475
    %v716 = vpack.c.b16 %v492, %v476
    %v717 = vpack.c.b16 %v493, %v477
    %v718 = vpack.c.b16 %v494, %v478
    %v719 = vpack.c.b16 %v495, %v479
    %v720 = vpack.c.b16 %v512, %v496
    %v721 = vpack.c.b16 %v513, %v497
    %v722 = vpack.c.b16 %v514, %v498
    %v723 = vpack.c.b16 %v515, %v499
    %v724 = vpack.c.b16 %v516, %v500
    %v725 = vpack.c.b16 %v517, %v501
    %v726 = vpack.c.b16 %v518, %v502
    %v727 = vpack.c.b16 %v519, %v503
    %v728 = vpack.c.b16 %v520, %v504
    %v729 = vpack.c.b16 %v521, %v505
    %v730 = vpack.c.b16 %v522, %v506
    %v731 = vpack.c.b16 %v523, %v507
    %v732 = vpack.c.b16 %v524, %v508
    %v733 = vpack.c.b16 %v525, %v509
    %v734 = vpack.c.b16 %v526, %v510
    %v735 = vpack.c.b16 %v527, %v511
    %v736 = vpack.c.b16 %v544, %v528
    %v737 = vpack.c.b16 %v545, %v529
    %v738 = vpack.c.b16 %v546, %v530
    %v739 = vpack.c.b16 %v547, %v531
    %v740 = vpack.c.b16 %v548, %v532
    %v741 = vpack.c.b16 %v549, %v533
    %v742 = vpack.c.b16 %v550, %v534
    %v743 = vpack.c.b16 %v551, %v535
    %v744 = vpack.c.b16 %v552, %v536
    %v745 = vpack.c.b16 %v553, %v537
    %v746 = vpack.c.b16 %v554, %v538
    %v747 = vpack.c.b16 %v555, %v539
    %v748 = vpack.c.b16 %v556, %v540
    %v749 = vpack.c.b16 %v557, %v541
    %v750 = vpack.c.b16 %v558, %v542
    %v751 = vpack.c.b16 %v559, %v543
    %v752 = vpack.c.b16 %v576, %v560
    %v753 = vpack.c.b16 %v577, %v561
    %v754 = vpack.c.b16 %v578, %v562
    %v755 = vpack.c.b16 %v579, %v563
    %v756 = vpack.c.b16 %v580, %v564
    %v757 = vpack.c.b16 %v581, %v565
    %v758 = vpack.c.b16 %v582, %v566
    %v759 = vpack.c.b16 %v583, %v567
    %v760 = vpack.c.b16 %v584, %v568
    %v761 = vpack.c.b16 %v585, %v569
    %v762 = vpack.c.b16 %v586, %v570
    %v763 = vpack.c.b16 %v587, %v571
    %v764 = vpack.c.b16 %v588, %v572
    %v765 = vpack.c.b16 %v589, %v573
    %v766 = vpack.c.b16 %v590, %v574
    %v767 = vpack.c.b16 %v591, %v575
    %v768 = vpack.c.b16 %v608, %v592
    %v769 = vpack.c.b16 %v609, %v593
    %v770 = vpack.c.b16 %v610, %v594
    %v771 = vpack.c.b16 %v611, %v595
    %v772 = vpack.c.b16 %v612, %v596
    %v773 = vpack.c.b16 %v613, %v597
    %v774 = vpack.c.b16 %v614, %v598
    %v775 = vpack.c.b16 %v615, %v599
    %v776 = vpack.c.b16 %v616, %v600
    %v777 = vpack.c.b16 %v617, %v601
    %v778 = vpack.c.b16 %v618, %v602
    %v779 = vpack.c.b16 %v619, %v603
    %v780 = vpack.c.b16 %v620, %v604
    %v781 = vpack.c.b16 %v621, %v605
    %v782 = vpack.c.b16 %v622, %v606
    %v783 = vpack.c.b16 %v623, %v607
    %v784 = vpack.c.b16 %v640, %v624
    %v785 = vpack.c.b16 %v641, %v625
    %v786 = vpack.c.b16 %v642, %v626
    %v787 = vpack.c.b16 %v643, %v627
    %v788 = vpack.c.b16 %v644, %v628
    %v789 = vpack.c.b16 %v645, %v629
    %v790 = vpack.c.b16 %v646, %v630
    %v791 = vpack.c.b16 %v647, %v631
    %v792 = vpack.c.b16 %v648, %v632
    %v793 = vpack.c.b16 %v649, %v633
    %v794 = vpack.c.b16 %v650, %v634
    %v795 = vpack.c.b16 %v651, %v635
    %v796 = vpack.c.b16 %v652, %v636
    %v797 = vpack.c.b16 %v653, %v637
    %v798 = vpack.c.b16 %v654, %v638
    %v799 = vpack.c.b16 %v655, %v639
    %v800 = vpack.c.b16 %v672, %v656
    %v801 = vpack.c.b16 %v673, %v657
    %v802 = vpack.c.b16 %v674, %v658
    %v803 = vpack.c.b16 %v675, %v659
    %v804 = vpack.c.b16 %v676, %v660
    %v805 = vpack.c.b16 %v677, %v661
    %v806 = vpack.c.b16 %v678, %v662
    %v807 = vpack.c.b16 %v679, %v663
    %v808 = vpack.c.b16 %v680, %v664
    %v809 = vpack.c.b16 %v681, %v665
    %v810 = vpack.c.b16 %v682, %v666
    %v811 = vpack.c.b16 %v683, %v667
    %v812 = vpack.c.b16 %v684, %v668
    %v813 = vpack.c.b16 %v685, %v669
    %v814 = vpack.c.b16 %v686, %v670
    %v815 = vpack.c.b16 %v687, %v671
    %944 = vmatprep.subr.bf16.mxu0 %v689
    %945 = vmatpush1.bf16.msra.mxu0 %v688
    %946 = vmatprep.subr.bf16.mxu0 %v705
    %947 = vmatpush1.bf16.msra.mxu0 %v704
    %948 = vmatprep.subr.bf16.mxu0 %v721
    %949 = vmatpush1.bf16.msra.mxu0 %v720
    %950 = vmatprep.subr.bf16.mxu0 %v737
    %951 = vmatpush1.bf16.msra.mxu0 %v736
    %952 = vmatprep.subr.bf16.mxu0 %v753
    %953 = vmatpush1.bf16.msra.mxu0 %v752
    %954 = vmatprep.subr.bf16.mxu0 %v769
    %955 = vmatpush1.bf16.msra.mxu0 %v768
    %956 = vmatprep.subr.bf16.mxu0 %v785
    %957 = vmatpush1.bf16.msra.mxu0 %v784
    %958 = vmatprep.subr.bf16.mxu0 %v801
    %959 = vmatpush1.bf16.msra.mxu0 %v800
    %960 = vmatprep.subr.bf16.mxu0 0
    %961 = vmatpush1.bf16.msra.mxu0 0
    %962 = vmatprep.subr.bf16.mxu0 0
    %963 = vmatpush1.bf16.msra.mxu0 0
    %964 = vmatprep.subr.bf16.mxu0 0
    %965 = vmatpush1.bf16.msra.mxu0 0
    %966 = vmatprep.subr.bf16.mxu0 0
    %967 = vmatpush1.bf16.msra.mxu0 0
    %968 = vmatprep.subr.bf16.mxu0 0
    %969 = vmatpush1.bf16.msra.mxu0 0
    %970 = vmatprep.subr.bf16.mxu0 0
    %971 = vmatpush1.bf16.msra.mxu0 0
    %972 = vmatprep.subr.bf16.mxu0 0
    %973 = vmatpush1.bf16.msra.mxu0 0
    %974 = vmatprep.subr.bf16.mxu0 0
    %975 = vmatpush1.bf16.msra.mxu0 0
    %976 = vmatprep.mubr.bf16.mxu0 0
    %977 = vmatmul.mubr.bf16.gmra.mrb[0].mxu0 %v47
    %v978 = vpop.f32.mrb[0].mxu0
    %v979 = vadd.f32 0.0, %v978
    %v980 = vpop.f32.mrb[0].mxu0
    %v981 = vadd.f32 0.0, %v980
    %v982 = vpop.f32.mrb[0].mxu0
    %v983 = vpop.f32.mrb[0].mxu0
    %984 = vdwg.mxu0
    %985 = vmatprep.subr.bf16.mxu0 %v691
    %986 = vmatpush1.bf16.msra.mxu0 %v690
    %987 = vmatprep.subr.bf16.mxu0 %v707
    %988 = vmatpush1.bf16.msra.mxu0 %v706
    %989 = vmatprep.subr.bf16.mxu0 %v723
    %990 = vmatpush1.bf16.msra.mxu0 %v722
    %991 = vmatprep.subr.bf16.mxu0 %v739
    %992 = vmatpush1.bf16.msra.mxu0 %v738
    %993 = vmatprep.subr.bf16.mxu0 %v755
    %994 = vmatpush1.bf16.msra.mxu0 %v754
    %995 = vmatprep.subr.bf16.mxu0 %v771
    %996 = vmatpush1.bf16.msra.mxu0 %v770
    %997 = vmatprep.subr.bf16.mxu0 %v787
    %998 = vmatpush1.bf16.msra.mxu0 %v786
    %999 = vmatprep.subr.bf16.mxu0 %v803
    %1000 = vmatpush1.bf16.msra.mxu0 %v802
    %1001 = vmatprep.subr.bf16.mxu0 0
    %1002 = vmatpush1.bf16.msra.mxu0 0
    %1003 = vmatprep.subr.bf16.mxu0 0
    %1004 = vmatpush1.bf16.msra.mxu0 0
    %1005 = vmatprep.subr.bf16.mxu0 0
    %1006 = vmatpush1.bf16.msra.mxu0 0
    %1007 = vmatprep.subr.bf16.mxu0 0
    %1008 = vmatpush1.bf16.msra.mxu0 0
    %1009 = vmatprep.subr.bf16.mxu0 0
    %1010 = vmatpush1.bf16.msra.mxu0 0
    %1011 = vmatprep.subr.bf16.mxu0 0
    %1012 = vmatpush1.bf16.msra.mxu0 0
    %1013 = vmatprep.subr.bf16.mxu0 0
    %1014 = vmatpush1.bf16.msra.mxu0 0
    %1015 = vmatprep.subr.bf16.mxu0 0
    %1016 = vmatpush1.bf16.msra.mxu0 0
    %1017 = vmatprep.mubr.bf16.mxu0 0
    %1018 = vmatmul.mubr.bf16.gmra.mrb[0].mxu0 %v47
    %v1019 = vpop.f32.mrb[0].mxu0
    %v1020 = vadd.f32 0.0, %v1019
    %v1021 = vpop.f32.mrb[0].mxu0
    %v1022 = vadd.f32 0.0, %v1021
    %v1023 = vpop.f32.mrb[0].mxu0
    %v1024 = vpop.f32.mrb[0].mxu0
    %1025 = vdwg.mxu0
    %1026 = vmatprep.subr.bf16.mxu0 %v693
    %1027 = vmatpush1.bf16.msra.mxu0 %v692
    %1028 = vmatprep.subr.bf16.mxu0 %v709
    %1029 = vmatpush1.bf16.msra.mxu0 %v708
    %1030 = vmatprep.subr.bf16.mxu0 %v725
    %1031 = vmatpush1.bf16.msra.mxu0 %v724
    %1032 = vmatprep.subr.bf16.mxu0 %v741
    %1033 = vmatpush1.bf16.msra.mxu0 %v740
    %1034 = vmatprep.subr.bf16.mxu0 %v757
    %1035 = vmatpush1.bf16.msra.mxu0 %v756
    %1036 = vmatprep.subr.bf16.mxu0 %v773
    %1037 = vmatpush1.bf16.msra.mxu0 %v772
    %1038 = vmatprep.subr.bf16.mxu0 %v789
    %1039 = vmatpush1.bf16.msra.mxu0 %v788
    %1040 = vmatprep.subr.bf16.mxu0 %v805
    %1041 = vmatpush1.bf16.msra.mxu0 %v804
    %1042 = vmatprep.subr.bf16.mxu0 0
    %1043 = vmatpush1.bf16.msra.mxu0 0
    %1044 = vmatprep.subr.bf16.mxu0 0
    %1045 = vmatpush1.bf16.msra.mxu0 0
    %1046 = vmatprep.subr.bf16.mxu0 0
    %1047 = vmatpush1.bf16.msra.mxu0 0
    %1048 = vmatprep.subr.bf16.mxu0 0
    %1049 = vmatpush1.bf16.msra.mxu0 0
    %1050 = vmatprep.subr.bf16.mxu0 0
    %1051 = vmatpush1.bf16.msra.mxu0 0
    %1052 = vmatprep.subr.bf16.mxu0 0
    %1053 = vmatpush1.bf16.msra.mxu0 0
    %1054 = vmatprep.subr.bf16.mxu0 0
    %1055 = vmatpush1.bf16.msra.mxu0 0
    %1056 = vmatprep.subr.bf16.mxu0 0
    %1057 = vmatpush1.bf16.msra.mxu0 0
    %1058 = vmatprep.mubr.bf16.mxu0 0
    %1059 = vmatmul.mubr.bf16.gmra.mrb[0].mxu0 %v47
    %v1060 = vpop.f32.mrb[0].mxu0
    %v1061 = vadd.f32 0.0, %v1060
    %v1062 = vpop.f32.mrb[0].mxu0
    %v1063 = vadd.f32 0.0, %v1062
    %v1064 = vpop.f32.mrb[0].mxu0
    %v1065 = vpop.f32.mrb[0].mxu0
    %1066 = vdwg.mxu0
    %1067 = vmatprep.subr.bf16.mxu0 %v695
    %1068 = vmatpush1.bf16.msra.mxu0 %v694
    %1069 = vmatprep.subr.bf16.mxu0 %v711
    %1070 = vmatpush1.bf16.msra.mxu0 %v710
    %1071 = vmatprep.subr.bf16.mxu0 %v727
    %1072 = vmatpush1.bf16.msra.mxu0 %v726
    %1073 = vmatprep.subr.bf16.mxu0 %v743
    %1074 = vmatpush1.bf16.msra.mxu0 %v742
    %1075 = vmatprep.subr.bf16.mxu0 %v759
    %1076 = vmatpush1.bf16.msra.mxu0 %v758
    %1077 = vmatprep.subr.bf16.mxu0 %v775
    %1078 = vmatpush1.bf16.msra.mxu0 %v774
    %1079 = vmatprep.subr.bf16.mxu0 %v791
    %1080 = vmatpush1.bf16.msra.mxu0 %v790
    %1081 = vmatprep.subr.bf16.mxu0 %v807
    %1082 = vmatpush1.bf16.msra.mxu0 %v806
    %1083 = vmatprep.subr.bf16.mxu0 0
    %1084 = vmatpush1.bf16.msra.mxu0 0
    %1085 = vmatprep.subr.bf16.mxu0 0
    %1086 = vmatpush1.bf16.msra.mxu0 0
    %1087 = vmatprep.subr.bf16.mxu0 0
    %1088 = vmatpush1.bf16.msra.mxu0 0
    %1089 = vmatprep.subr.bf16.mxu0 0
    %1090 = vmatpush1.bf16.msra.mxu0 0
    %1091 = vmatprep.subr.bf16.mxu0 0
    %1092 = vmatpush1.bf16.msra.mxu0 0
    %1093 = vmatprep.subr.bf16.mxu0 0
    %1094 = vmatpush1.bf16.msra.mxu0 0
    %1095 = vmatprep.subr.bf16.mxu0 0
    %1096 = vmatpush1.bf16.msra.mxu0 0
    %1097 = vmatprep.subr.bf16.mxu0 0
    %1098 = vmatpush1.bf16.msra.mxu0 0
    %1099 = vmatprep.mubr.bf16.mxu0 0
    %1100 = vmatmul.mubr.bf16.gmra.mrb[0].mxu0 %v47
    %v1101 = vpop.f32.mrb[0].mxu0
    %v1102 = vadd.f32 0.0, %v1101
    %v1103 = vpop.f32.mrb[0].mxu0
    %v1104 = vadd.f32 0.0, %v1103
    %v1105 = vpop.f32.mrb[0].mxu0
    %v1106 = vpop.f32.mrb[0].mxu0
    %1107 = vdwg.mxu0
    %1108 = vmatprep.subr.bf16.mxu0 %v697
    %1109 = vmatpush1.bf16.msra.mxu0 %v696
    %1110 = vmatprep.subr.bf16.mxu0 %v713
    %1111 = vmatpush1.bf16.msra.mxu0 %v712
    %1112 = vmatprep.subr.bf16.mxu0 %v729
    %1113 = vmatpush1.bf16.msra.mxu0 %v728
    %1114 = vmatprep.subr.bf16.mxu0 %v745
    %1115 = vmatpush1.bf16.msra.mxu0 %v744
    %1116 = vmatprep.subr.bf16.mxu0 %v761
    %1117 = vmatpush1.bf16.msra.mxu0 %v760
    %1118 = vmatprep.subr.bf16.mxu0 %v777
    %1119 = vmatpush1.bf16.msra.mxu0 %v776
    %1120 = vmatprep.subr.bf16.mxu0 %v793
    %1121 = vmatpush1.bf16.msra.mxu0 %v792
    %1122 = vmatprep.subr.bf16.mxu0 %v809
    %1123 = vmatpush1.bf16.msra.mxu0 %v808
    %1124 = vmatprep.subr.bf16.mxu0 0
    %1125 = vmatpush1.bf16.msra.mxu0 0
    %1126 = vmatprep.subr.bf16.mxu0 0
    %1127 = vmatpush1.bf16.msra.mxu0 0
    %1128 = vmatprep.subr.bf16.mxu0 0
    %1129 = vmatpush1.bf16.msra.mxu0 0
    %1130 = vmatprep.subr.bf16.mxu0 0
    %1131 = vmatpush1.bf16.msra.mxu0 0
    %1132 = vmatprep.subr.bf16.mxu0 0
    %1133 = vmatpush1.bf16.msra.mxu0 0
    %1134 = vmatprep.subr.bf16.mxu0 0
    %1135 = vmatpush1.bf16.msra.mxu0 0
    %1136 = vmatprep.subr.bf16.mxu0 0
    %1137 = vmatpush1.bf16.msra.mxu0 0
    %1138 = vmatprep.subr.bf16.mxu0 0
    %1139 = vmatpush1.bf16.msra.mxu0 0
    %1140 = vmatprep.mubr.bf16.mxu0 0
    %1141 = vmatmul.mubr.bf16.gmra.mrb[0].mxu0 %v47
    %v1142 = vpop.f32.mrb[0].mxu0
    %v1143 = vadd.f32 0.0, %v1142
    %v1144 = vpop.f32.mrb[0].mxu0
    %v1145 = vadd.f32 0.0, %v1144
    %v1146 = vpop.f32.mrb[0].mxu0
    %v1147 = vpop.f32.mrb[0].mxu0
    %1148 = vdwg.mxu0
    %1149 = vmatprep.subr.bf16.mxu0 %v699
    %1150 = vmatpush1.bf16.msra.mxu0 %v698
    %1151 = vmatprep.subr.bf16.mxu0 %v715
    %1152 = vmatpush1.bf16.msra.mxu0 %v714
    %1153 = vmatprep.subr.bf16.mxu0 %v731
    %1154 = vmatpush1.bf16.msra.mxu0 %v730
    %1155 = vmatprep.subr.bf16.mxu0 %v747
    %1156 = vmatpush1.bf16.msra.mxu0 %v746
    %1157 = vmatprep.subr.bf16.mxu0 %v763
    %1158 = vmatpush1.bf16.msra.mxu0 %v762
    %1159 = vmatprep.subr.bf16.mxu0 %v779
    %1160 = vmatpush1.bf16.msra.mxu0 %v778
    %1161 = vmatprep.subr.bf16.mxu0 %v795
    %1162 = vmatpush1.bf16.msra.mxu0 %v794
    %1163 = vmatprep.subr.bf16.mxu0 %v811
    %1164 = vmatpush1.bf16.msra.mxu0 %v810
    %1165 = vmatprep.subr.bf16.mxu0 0
    %1166 = vmatpush1.bf16.msra.mxu0 0
    %1167 = vmatprep.subr.bf16.mxu0 0
    %1168 = vmatpush1.bf16.msra.mxu0 0
    %1169 = vmatprep.subr.bf16.mxu0 0
    %1170 = vmatpush1.bf16.msra.mxu0 0
    %1171 = vmatprep.subr.bf16.mxu0 0
    %1172 = vmatpush1.bf16.msra.mxu0 0
    %1173 = vmatprep.subr.bf16.mxu0 0
    %1174 = vmatpush1.bf16.msra.mxu0 0
    %1175 = vmatprep.subr.bf16.mxu0 0
    %1176 = vmatpush1.bf16.msra.mxu0 0
    %1177 = vmatprep.subr.bf16.mxu0 0
    %1178 = vmatpush1.bf16.msra.mxu0 0
    %1179 = vmatprep.subr.bf16.mxu0 0
    %1180 = vmatpush1.bf16.msra.mxu0 0
    %1181 = vmatprep.mubr.bf16.mxu0 0
    %1182 = vmatmul.mubr.bf16.gmra.mrb[0].mxu0 %v47
    %v1183 = vpop.f32.mrb[0].mxu0
    %v1184 = vadd.f32 0.0, %v1183
    %v1185 = vpop.f32.mrb[0].mxu0
    %v1186 = vadd.f32 0.0, %v1185
    %v1187 = vpop.f32.mrb[0].mxu0
    %v1188 = vpop.f32.mrb[0].mxu0
    %1189 = vdwg.mxu0
    %1190 = vmatprep.subr.bf16.mxu0 %v701
    %1191 = vmatpush1.bf16.msra.mxu0 %v700
    %1192 = vmatprep.subr.bf16.mxu0 %v717
    %1193 = vmatpush1.bf16.msra.mxu0 %v716
    %1194 = vmatprep.subr.bf16.mxu0 %v733
    %1195 = vmatpush1.bf16.msra.mxu0 %v732
    %1196 = vmatprep.subr.bf16.mxu0 %v749
    %1197 = vmatpush1.bf16.msra.mxu0 %v748
    %1198 = vmatprep.subr.bf16.mxu0 %v765
    %1199 = vmatpush1.bf16.msra.mxu0 %v764
    %1200 = vmatprep.subr.bf16.mxu0 %v781
    %1201 = vmatpush1.bf16.msra.mxu0 %v780
    %1202 = vmatprep.subr.bf16.mxu0 %v797
    %1203 = vmatpush1.bf16.msra.mxu0 %v796
    %1204 = vmatprep.subr.bf16.mxu0 %v813
    %1205 = vmatpush1.bf16.msra.mxu0 %v812
    %1206 = vmatprep.subr.bf16.mxu0 0
    %1207 = vmatpush1.bf16.msra.mxu0 0
    %1208 = vmatprep.subr.bf16.mxu0 0
    %1209 = vmatpush1.bf16.msra.mxu0 0
    %1210 = vmatprep.subr.bf16.mxu0 0
    %1211 = vmatpush1.bf16.msra.mxu0 0
    %1212 = vmatprep.subr.bf16.mxu0 0
    %1213 = vmatpush1.bf16.msra.mxu0 0
    %1214 = vmatprep.subr.bf16.mxu0 0
    %1215 = vmatpush1.bf16.msra.mxu0 0
    %1216 = vmatprep.subr.bf16.mxu0 0
    %1217 = vmatpush1.bf16.msra.mxu0 0
    %1218 = vmatprep.subr.bf16.mxu0 0
    %1219 = vmatpush1.bf16.msra.mxu0 0
    %1220 = vmatprep.subr.bf16.mxu0 0
    %1221 = vmatpush1.bf16.msra.mxu0 0
    %1222 = vmatprep.mubr.bf16.mxu0 0
    %1223 = vmatmul.mubr.bf16.gmra.mrb[0].mxu0 %v47
    %v1224 = vpop.f32.mrb[0].mxu0
    %v1225 = vadd.f32 0.0, %v1224
    %v1226 = vpop.f32.mrb[0].mxu0
    %v1227 = vadd.f32 0.0, %v1226
    %v1228 = vpop.f32.mrb[0].mxu0
    %v1229 = vpop.f32.mrb[0].mxu0
    %1230 = vdwg.mxu0
    %1231 = vmatprep.subr.bf16.mxu0 %v703
    %1232 = vmatpush1.bf16.msra.mxu0 %v702
    %1233 = vmatprep.subr.bf16.mxu0 %v719
    %1234 = vmatpush1.bf16.msra.mxu0 %v718
    %1235 = vmatprep.subr.bf16.mxu0 %v735
    %1236 = vmatpush1.bf16.msra.mxu0 %v734
    %1237 = vmatprep.subr.bf16.mxu0 %v751
    %1238 = vmatpush1.bf16.msra.mxu0 %v750
    %1239 = vmatprep.subr.bf16.mxu0 %v767
    %1240 = vmatpush1.bf16.msra.mxu0 %v766
    %1241 = vmatprep.subr.bf16.mxu0 %v783
    %1242 = vmatpush1.bf16.msra.mxu0 %v782
    %1243 = vmatprep.subr.bf16.mxu0 %v799
    %1244 = vmatpush1.bf16.msra.mxu0 %v798
    %1245 = vmatprep.subr.bf16.mxu0 %v815
    %1246 = vmatpush1.bf16.msra.mxu0 %v814
    %1247 = vmatprep.subr.bf16.mxu0 0
    %1248 = vmatpush1.bf16.msra.mxu0 0
    %1249 = vmatprep.subr.bf16.mxu0 0
    %1250 = vmatpush1.bf16.msra.mxu0 0
    %1251 = vmatprep.subr.bf16.mxu0 0
    %1252 = vmatpush1.bf16.msra.mxu0 0
    %1253 = vmatprep.subr.bf16.mxu0 0
    %1254 = vmatpush1.bf16.msra.mxu0 0
    %1255 = vmatprep.subr.bf16.mxu0 0
    %1256 = vmatpush1.bf16.msra.mxu0 0
    %1257 = vmatprep.subr.bf16.mxu0 0
    %1258 = vmatpush1.bf16.msra.mxu0 0
    %1259 = vmatprep.subr.bf16.mxu0 0
    %1260 = vmatpush1.bf16.msra.mxu0 0
    %1261 = vmatprep.subr.bf16.mxu0 0
    %1262 = vmatpush1.bf16.msra.mxu0 0
    %1263 = vmatprep.mubr.bf16.mxu0 0
    %1264 = vmatmul.mubr.bf16.gmra.mrb[0].mxu0 %v47
    %v1265 = vpop.f32.mrb[0].mxu0
    %v1266 = vadd.f32 0.0, %v1265
    %v1267 = vpop.f32.mrb[0].mxu0
    %v1268 = vadd.f32 0.0, %v1267
    %v1269 = vpop.f32.mrb[0].mxu0
    %v1270 = vpop.f32.mrb[0].mxu0
    %1271 = vdwg.mxu0
    %v1400 = vunpack.c.l.b16 %v48
    %v1401 = vunpack.c.h.b16 %v48
    %v1402 = vunpack.c.l.b16 %v49
    %v1403 = vunpack.c.h.b16 %v49
    %v1404 = vunpack.c.l.b16 %v50
    %v1405 = vunpack.c.h.b16 %v50
    %v1406 = vunpack.c.l.b16 %v51
    %v1407 = vunpack.c.h.b16 %v51
    %v1408 = vunpack.c.l.b16 %v52
    %v1409 = vunpack.c.h.b16 %v52
    %v1410 = vunpack.c.l.b16 %v53
    %v1411 = vunpack.c.h.b16 %v53
    %v1412 = vunpack.c.l.b16 %v54
    %v1413 = vunpack.c.h.b16 %v54
    %v1414 = vunpack.c.l.b16 %v55
    %v1415 = vunpack.c.h.b16 %v55
    %v1416 = vunpack.c.l.b16 %v56
    %v1417 = vunpack.c.h.b16 %v56
    %v1418 = vunpack.c.l.b16 %v57
    %v1419 = vunpack.c.h.b16 %v57
    %v1420 = vunpack.c.l.b16 %v58
    %v1421 = vunpack.c.h.b16 %v58
    %v1422 = vunpack.c.l.b16 %v59
    %v1423 = vunpack.c.h.b16 %v59
    %v1424 = vunpack.c.l.b16 %v60
    %v1425 = vunpack.c.h.b16 %v60
    %v1426 = vunpack.c.l.b16 %v61
    %v1427 = vunpack.c.h.b16 %v61
    %v1428 = vunpack.c.l.b16 %v62
    %v1429 = vunpack.c.h.b16 %v62
    %v1430 = vunpack.c.l.b16 %v63
    %v1431 = vunpack.c.h.b16 %v63
    %v1432 = vunpack.c.l.b16 %v64
    %v1433 = vunpack.c.h.b16 %v64
    %v1434 = vunpack.c.l.b16 %v65
    %v1435 = vunpack.c.h.b16 %v65
    %v1436 = vunpack.c.l.b16 %v66
    %v1437 = vunpack.c.h.b16 %v66
    %v1438 = vunpack.c.l.b16 %v67
    %v1439 = vunpack.c.h.b16 %v67
    %v1440 = vunpack.c.l.b16 %v68
    %v1441 = vunpack.c.h.b16 %v68
    %v1442 = vunpack.c.l.b16 %v69
    %v1443 = vunpack.c.h.b16 %v69
    %v1444 = vunpack.c.l.b16 %v70
    %v1445 = vunpack.c.h.b16 %v70
    %v1446 = vunpack.c.l.b16 %v71
    %v1447 = vunpack.c.h.b16 %v71
    %v1448 = vunpack.c.l.b16 %v72
    %v1449 = vunpack.c.h.b16 %v72
    %v1450 = vunpack.c.l.b16 %v73
    %v1451 = vunpack.c.h.b16 %v73
    %v1452 = vunpack.c.l.b16 %v74
    %v1453 = vunpack.c.h.b16 %v74
    %v1454 = vunpack.c.l.b16 %v75
    %v1455 = vunpack.c.h.b16 %v75
    %v1456 = vunpack.c.l.b16 %v76
    %v1457 = vunpack.c.h.b16 %v76
    %v1458 = vunpack.c.l.b16 %v77
    %v1459 = vunpack.c.h.b16 %v77
    %v1460 = vunpack.c.l.b16 %v78
    %v1461 = vunpack.c.h.b16 %v78
    %v1462 = vunpack.c.l.b16 %v79
    %v1463 = vunpack.c.h.b16 %v79
    %v1464 = vunpack.c.l.b16 %v80
    %v1465 = vunpack.c.h.b16 %v80
    %v1466 = vunpack.c.l.b16 %v81
    %v1467 = vunpack.c.h.b16 %v81
    %v1468 = vunpack.c.l.b16 %v82
    %v1469 = vunpack.c.h.b16 %v82
    %v1470 = vunpack.c.l.b16 %v83
    %v1471 = vunpack.c.h.b16 %v83
    %v1472 = vunpack.c.l.b16 %v84
    %v1473 = vunpack.c.h.b16 %v84
    %v1474 = vunpack.c.l.b16 %v85
    %v1475 = vunpack.c.h.b16 %v85
    %v1476 = vunpack.c.l.b16 %v86
    %v1477 = vunpack.c.h.b16 %v86
    %v1478 = vunpack.c.l.b16 %v87
    %v1479 = vunpack.c.h.b16 %v87
    %v1480 = vunpack.c.l.b16 %v88
    %v1481 = vunpack.c.h.b16 %v88
    %v1482 = vunpack.c.l.b16 %v89
    %v1483 = vunpack.c.h.b16 %v89
    %v1484 = vunpack.c.l.b16 %v90
    %v1485 = vunpack.c.h.b16 %v90
    %v1486 = vunpack.c.l.b16 %v91
    %v1487 = vunpack.c.h.b16 %v91
    %v1488 = vunpack.c.l.b16 %v92
    %v1489 = vunpack.c.h.b16 %v92
    %v1490 = vunpack.c.l.b16 %v93
    %v1491 = vunpack.c.h.b16 %v93
    %v1492 = vunpack.c.l.b16 %v94
    %v1493 = vunpack.c.h.b16 %v94
    %v1494 = vunpack.c.l.b16 %v95
    %v1495 = vunpack.c.h.b16 %v95
    %v1496 = vunpack.c.l.b16 %v96
    %v1497 = vunpack.c.h.b16 %v96
    %v1498 = vunpack.c.l.b16 %v97
    %v1499 = vunpack.c.h.b16 %v97
    %v1500 = vunpack.c.l.b16 %v98
    %v1501 = vunpack.c.h.b16 %v98
    %v1502 = vunpack.c.l.b16 %v99
    %v1503 = vunpack.c.h.b16 %v99
    %v1504 = vunpack.c.l.b16 %v100
    %v1505 = vunpack.c.h.b16 %v100
    %v1506 = vunpack.c.l.b16 %v101
    %v1507 = vunpack.c.h.b16 %v101
    %v1508 = vunpack.c.l.b16 %v102
    %v1509 = vunpack.c.h.b16 %v102
    %v1510 = vunpack.c.l.b16 %v103
    %v1511 = vunpack.c.h.b16 %v103
    %v1512 = vunpack.c.l.b16 %v104
    %v1513 = vunpack.c.h.b16 %v104
    %v1514 = vunpack.c.l.b16 %v105
    %v1515 = vunpack.c.h.b16 %v105
    %v1516 = vunpack.c.l.b16 %v106
    %v1517 = vunpack.c.h.b16 %v106
    %v1518 = vunpack.c.l.b16 %v107
    %v1519 = vunpack.c.h.b16 %v107
    %v1520 = vunpack.c.l.b16 %v108
    %v1521 = vunpack.c.h.b16 %v108
    %v1522 = vunpack.c.l.b16 %v109
    %v1523 = vunpack.c.h.b16 %v109
    %v1524 = vunpack.c.l.b16 %v110
    %v1525 = vunpack.c.h.b16 %v110
    %v1526 = vunpack.c.l.b16 %v111
    %v1527 = vunpack.c.h.b16 %v111
    %v1528 = vunpack.c.l.b16 %v112
    %v1529 = vunpack.c.h.b16 %v112
    %v1530 = vunpack.c.l.b16 %v113
    %v1531 = vunpack.c.h.b16 %v113
    %v1532 = vunpack.c.l.b16 %v114
    %v1533 = vunpack.c.h.b16 %v114
    %v1534 = vunpack.c.l.b16 %v115
    %v1535 = vunpack.c.h.b16 %v115
    %v1536 = vunpack.c.l.b16 %v116
    %v1537 = vunpack.c.h.b16 %v116
    %v1538 = vunpack.c.l.b16 %v117
    %v1539 = vunpack.c.h.b16 %v117
    %v1540 = vunpack.c.l.b16 %v118
    %v1541 = vunpack.c.h.b16 %v118
    %v1542 = vunpack.c.l.b16 %v119
    %v1543 = vunpack.c.h.b16 %v119
    %v1544 = vunpack.c.l.b16 %v120
    %v1545 = vunpack.c.h.b16 %v120
    %v1546 = vunpack.c.l.b16 %v121
    %v1547 = vunpack.c.h.b16 %v121
    %v1548 = vunpack.c.l.b16 %v122
    %v1549 = vunpack.c.h.b16 %v122
    %v1550 = vunpack.c.l.b16 %v123
    %v1551 = vunpack.c.h.b16 %v123
    %v1552 = vunpack.c.l.b16 %v124
    %v1553 = vunpack.c.h.b16 %v124
    %v1554 = vunpack.c.l.b16 %v125
    %v1555 = vunpack.c.h.b16 %v125
    %v1556 = vunpack.c.l.b16 %v126
    %v1557 = vunpack.c.h.b16 %v126
    %v1558 = vunpack.c.l.b16 %v127
    %v1559 = vunpack.c.h.b16 %v127
    %v1560 = vunpack.c.l.b16 %v128
    %v1561 = vunpack.c.h.b16 %v128
    %v1562 = vunpack.c.l.b16 %v129
    %v1563 = vunpack.c.h.b16 %v129
    %v1564 = vunpack.c.l.b16 %v130
    %v1565 = vunpack.c.h.b16 %v130
    %v1566 = vunpack.c.l.b16 %v131
    %v1567 = vunpack.c.h.b16 %v131
    %v1568 = vunpack.c.l.b16 %v132
    %v1569 = vunpack.c.h.b16 %v132
    %v1570 = vunpack.c.l.b16 %v133
    %v1571 = vunpack.c.h.b16 %v133
    %v1572 = vunpack.c.l.b16 %v134
    %v1573 = vunpack.c.h.b16 %v134
    %v1574 = vunpack.c.l.b16 %v135
    %v1575 = vunpack.c.h.b16 %v135
    %v1576 = vunpack.c.l.b16 %v136
    %v1577 = vunpack.c.h.b16 %v136
    %v1578 = vunpack.c.l.b16 %v137
    %v1579 = vunpack.c.h.b16 %v137
    %v1580 = vunpack.c.l.b16 %v138
    %v1581 = vunpack.c.h.b16 %v138
    %v1582 = vunpack.c.l.b16 %v139
    %v1583 = vunpack.c.h.b16 %v139
    %v1584 = vunpack.c.l.b16 %v140
    %v1585 = vunpack.c.h.b16 %v140
    %v1586 = vunpack.c.l.b16 %v141
    %v1587 = vunpack.c.h.b16 %v141
    %v1588 = vunpack.c.l.b16 %v142
    %v1589 = vunpack.c.h.b16 %v142
    %v1590 = vunpack.c.l.b16 %v143
    %v1591 = vunpack.c.h.b16 %v143
    %v1592 = vunpack.c.l.b16 %v144
    %v1593 = vunpack.c.h.b16 %v144
    %v1594 = vunpack.c.l.b16 %v145
    %v1595 = vunpack.c.h.b16 %v145
    %v1596 = vunpack.c.l.b16 %v146
    %v1597 = vunpack.c.h.b16 %v146
    %v1598 = vunpack.c.l.b16 %v147
    %v1599 = vunpack.c.h.b16 %v147
    %v1600 = vunpack.c.l.b16 %v148
    %v1601 = vunpack.c.h.b16 %v148
    %v1602 = vunpack.c.l.b16 %v149
    %v1603 = vunpack.c.h.b16 %v149
    %v1604 = vunpack.c.l.b16 %v150
    %v1605 = vunpack.c.h.b16 %v150
    %v1606 = vunpack.c.l.b16 %v151
    %v1607 = vunpack.c.h.b16 %v151
    %v1608 = vunpack.c.l.b16 %v152
    %v1609 = vunpack.c.h.b16 %v152
    %v1610 = vunpack.c.l.b16 %v153
    %v1611 = vunpack.c.h.b16 %v153
    %v1612 = vunpack.c.l.b16 %v154
    %v1613 = vunpack.c.h.b16 %v154
    %v1614 = vunpack.c.l.b16 %v155
    %v1615 = vunpack.c.h.b16 %v155
    %v1616 = vunpack.c.l.b16 %v156
    %v1617 = vunpack.c.h.b16 %v156
    %v1618 = vunpack.c.l.b16 %v157
    %v1619 = vunpack.c.h.b16 %v157
    %v1620 = vunpack.c.l.b16 %v158
    %v1621 = vunpack.c.h.b16 %v158
    %v1622 = vunpack.c.l.b16 %v159
    %v1623 = vunpack.c.h.b16 %v159
    %v1624 = vunpack.c.l.b16 %v160
    %v1625 = vunpack.c.h.b16 %v160
    %v1626 = vunpack.c.l.b16 %v161
    %v1627 = vunpack.c.h.b16 %v161
    %v1628 = vunpack.c.l.b16 %v162
    %v1629 = vunpack.c.h.b16 %v162
    %v1630 = vunpack.c.l.b16 %v163
    %v1631 = vunpack.c.h.b16 %v163
    %v1632 = vunpack.c.l.b16 %v164
    %v1633 = vunpack.c.h.b16 %v164
    %v1634 = vunpack.c.l.b16 %v165
    %v1635 = vunpack.c.h.b16 %v165
    %v1636 = vunpack.c.l.b16 %v166
    %v1637 = vunpack.c.h.b16 %v166
    %v1638 = vunpack.c.l.b16 %v167
    %v1639 = vunpack.c.h.b16 %v167
    %v1640 = vunpack.c.l.b16 %v168
    %v1641 = vunpack.c.h.b16 %v168
    %v1642 = vunpack.c.l.b16 %v169
    %v1643 = vunpack.c.h.b16 %v169
    %v1644 = vunpack.c.l.b16 %v170
    %v1645 = vunpack.c.h.b16 %v170
    %v1646 = vunpack.c.l.b16 %v171
    %v1647 = vunpack.c.h.b16 %v171
    %v1648 = vunpack.c.l.b16 %v172
    %v1649 = vunpack.c.h.b16 %v172
    %v1650 = vunpack.c.l.b16 %v173
    %v1651 = vunpack.c.h.b16 %v173
    %v1652 = vunpack.c.l.b16 %v174
    %v1653 = vunpack.c.h.b16 %v174
    %v1654 = vunpack.c.l.b16 %v175
    %v1655 = vunpack.c.h.b16 %v175
    %v1656 = vpack.c.b16 %v1416, %v1400
    %v1657 = vpack.c.b16 %v1417, %v1401
    %v1658 = vpack.c.b16 %v1418, %v1402
    %v1659 = vpack.c.b16 %v1419, %v1403
    %v1660 = vpack.c.b16 %v1420, %v1404
    %v1661 = vpack.c.b16 %v1421, %v1405
    %v1662 = vpack.c.b16 %v1422, %v1406
    %v1663 = vpack.c.b16 %v1423, %v1407
    %v1664 = vpack.c.b16 %v1424, %v1408
    %v1665 = vpack.c.b16 %v1425, %v1409
    %v1666 = vpack.c.b16 %v1426, %v1410
    %v1667 = vpack.c.b16 %v1427, %v1411
    %v1668 = vpack.c.b16 %v1428, %v1412
    %v1669 = vpack.c.b16 %v1429, %v1413
    %v1670 = vpack.c.b16 %v1430, %v1414
    %v1671 = vpack.c.b16 %v1431, %v1415
    %v1672 = vpack.c.b16 %v1448, %v1432
    %v1673 = vpack.c.b16 %v1449, %v1433
    %v1674 = vpack.c.b16 %v1450, %v1434
    %v1675 = vpack.c.b16 %v1451, %v1435
    %v1676 = vpack.c.b16 %v1452, %v1436
    %v1677 = vpack.c.b16 %v1453, %v1437
    %v1678 = vpack.c.b16 %v1454, %v1438
    %v1679 = vpack.c.b16 %v1455, %v1439
    %v1680 = vpack.c.b16 %v1456, %v1440
    %v1681 = vpack.c.b16 %v1457, %v1441
    %v1682 = vpack.c.b16 %v1458, %v1442
    %v1683 = vpack.c.b16 %v1459, %v1443
    %v1684 = vpack.c.b16 %v1460, %v1444
    %v1685 = vpack.c.b16 %v1461, %v1445
    %v1686 = vpack.c.b16 %v1462, %v1446
    %v1687 = vpack.c.b16 %v1463, %v1447
    %v1688 = vpack.c.b16 %v1480, %v1464
    %v1689 = vpack.c.b16 %v1481, %v1465
    %v1690 = vpack.c.b16 %v1482, %v1466
    %v1691 = vpack.c.b16 %v1483, %v1467
    %v1692 = vpack.c.b16 %v1484, %v1468
    %v1693 = vpack.c.b16 %v1485, %v1469
    %v1694 = vpack.c.b16 %v1486, %v1470
    %v1695 = vpack.c.b16 %v1487, %v1471
    %v1696 = vpack.c.b16 %v1488, %v1472
    %v1697 = vpack.c.b16 %v1489, %v1473
    %v1698 = vpack.c.b16 %v1490, %v1474
    %v1699 = vpack.c.b16 %v1491, %v1475
    %v1700 = vpack.c.b16 %v1492, %v1476
    %v1701 = vpack.c.b16 %v1493, %v1477
    %v1702 = vpack.c.b16 %v1494, %v1478
    %v1703 = vpack.c.b16 %v1495, %v1479
    %v1704 = vpack.c.b16 %v1512, %v1496
    %v1705 = vpack.c.b16 %v1513, %v1497
    %v1706 = vpack.c.b16 %v1514, %v1498
    %v1707 = vpack.c.b16 %v1515, %v1499
    %v1708 = vpack.c.b16 %v1516, %v1500
    %v1709 = vpack.c.b16 %v1517, %v1501
    %v1710 = vpack.c.b16 %v1518, %v1502
    %v1711 = vpack.c.b16 %v1519, %v1503
    %v1712 = vpack.c.b16 %v1520, %v1504
    %v1713 = vpack.c.b16 %v1521, %v1505
    %v1714 = vpack.c.b16 %v1522, %v1506
    %v1715 = vpack.c.b16 %v1523, %v1507
    %v1716 = vpack.c.b16 %v1524, %v1508
    %v1717 = vpack.c.b16 %v1525, %v1509
    %v1718 = vpack.c.b16 %v1526, %v1510
    %v1719 = vpack.c.b16 %v1527, %v1511
    %v1720 = vpack.c.b16 %v1544, %v1528
    %v1721 = vpack.c.b16 %v1545, %v1529
    %v1722 = vpack.c.b16 %v1546, %v1530
    %v1723 = vpack.c.b16 %v1547, %v1531
    %v1724 = vpack.c.b16 %v1548, %v1532
    %v1725 = vpack.c.b16 %v1549, %v1533
    %v1726 = vpack.c.b16 %v1550, %v1534
    %v1727 = vpack.c.b16 %v1551, %v1535
    %v1728 = vpack.c.b16 %v1552, %v1536
    %v1729 = vpack.c.b16 %v1553, %v1537
    %v1730 = vpack.c.b16 %v1554, %v1538
    %v1731 = vpack.c.b16 %v1555, %v1539
    %v1732 = vpack.c.b16 %v1556, %v1540
    %v1733 = vpack.c.b16 %v1557, %v1541
    %v1734 = vpack.c.b16 %v1558, %v1542
    %v1735 = vpack.c.b16 %v1559, %v1543
    %v1736 = vpack.c.b16 %v1576, %v1560
    %v1737 = vpack.c.b16 %v1577, %v1561
    %v1738 = vpack.c.b16 %v1578, %v1562
    %v1739 = vpack.c.b16 %v1579, %v1563
    %v1740 = vpack.c.b16 %v1580, %v1564
    %v1741 = vpack.c.b16 %v1581, %v1565
    %v1742 = vpack.c.b16 %v1582, %v1566
    %v1743 = vpack.c.b16 %v1583, %v1567
    %v1744 = vpack.c.b16 %v1584, %v1568
    %v1745 = vpack.c.b16 %v1585, %v1569
    %v1746 = vpack.c.b16 %v1586, %v1570
    %v1747 = vpack.c.b16 %v1587, %v1571
    %v1748 = vpack.c.b16 %v1588, %v1572
    %v1749 = vpack.c.b16 %v1589, %v1573
    %v1750 = vpack.c.b16 %v1590, %v1574
    %v1751 = vpack.c.b16 %v1591, %v1575
    %v1752 = vpack.c.b16 %v1608, %v1592
    %v1753 = vpack.c.b16 %v1609, %v1593
    %v1754 = vpack.c.b16 %v1610, %v1594
    %v1755 = vpack.c.b16 %v1611, %v1595
    %v1756 = vpack.c.b16 %v1612, %v1596
    %v1757 = vpack.c.b16 %v1613, %v1597
    %v1758 = vpack.c.b16 %v1614, %v1598
    %v1759 = vpack.c.b16 %v1615, %v1599
    %v1760 = vpack.c.b16 %v1616, %v1600
    %v1761 = vpack.c.b16 %v1617, %v1601
    %v1762 = vpack.c.b16 %v1618, %v1602
    %v1763 = vpack.c.b16 %v1619, %v1603
    %v1764 = vpack.c.b16 %v1620, %v1604
    %v1765 = vpack.c.b16 %v1621, %v1605
    %v1766 = vpack.c.b16 %v1622, %v1606
    %v1767 = vpack.c.b16 %v1623, %v1607
    %v1768 = vpack.c.b16 %v1640, %v1624
    %v1769 = vpack.c.b16 %v1641, %v1625
    %v1770 = vpack.c.b16 %v1642, %v1626
    %v1771 = vpack.c.b16 %v1643, %v1627
    %v1772 = vpack.c.b16 %v1644, %v1628
    %v1773 = vpack.c.b16 %v1645, %v1629
    %v1774 = vpack.c.b16 %v1646, %v1630
    %v1775 = vpack.c.b16 %v1647, %v1631
    %v1776 = vpack.c.b16 %v1648, %v1632
    %v1777 = vpack.c.b16 %v1649, %v1633
    %v1778 = vpack.c.b16 %v1650, %v1634
    %v1779 = vpack.c.b16 %v1651, %v1635
    %v1780 = vpack.c.b16 %v1652, %v1636
    %v1781 = vpack.c.b16 %v1653, %v1637
    %v1782 = vpack.c.b16 %v1654, %v1638
    %v1783 = vpack.c.b16 %v1655, %v1639
    %1912 = vmatprep.subr.bf16.mxu0 %v1657
    %1913 = vmatpush1.bf16.msra.mxu0 %v1656
    %1914 = vmatprep.subr.bf16.mxu0 %v1673
    %1915 = vmatpush1.bf16.msra.mxu0 %v1672
    %1916 = vmatprep.subr.bf16.mxu0 %v1689
    %1917 = vmatpush1.bf16.msra.mxu0 %v1688
    %1918 = vmatprep.subr.bf16.mxu0 %v1705
    %1919 = vmatpush1.bf16.msra.mxu0 %v1704
    %1920 = vmatprep.subr.bf16.mxu0 %v1721
    %1921 = vmatpush1.bf16.msra.mxu0 %v1720
    %1922 = vmatprep.subr.bf16.mxu0 %v1737
    %1923 = vmatpush1.bf16.msra.mxu0 %v1736
    %1924 = vmatprep.subr.bf16.mxu0 %v1753
    %1925 = vmatpush1.bf16.msra.mxu0 %v1752
    %1926 = vmatprep.subr.bf16.mxu0 %v1769
    %1927 = vmatpush1.bf16.msra.mxu0 %v1768
    %1928 = vmatprep.subr.bf16.mxu0 0
    %1929 = vmatpush1.bf16.msra.mxu0 0
    %1930 = vmatprep.subr.bf16.mxu0 0
    %1931 = vmatpush1.bf16.msra.mxu0 0
    %1932 = vmatprep.subr.bf16.mxu0 0
    %1933 = vmatpush1.bf16.msra.mxu0 0
    %1934 = vmatprep.subr.bf16.mxu0 0
    %1935 = vmatpush1.bf16.msra.mxu0 0
    %1936 = vmatprep.subr.bf16.mxu0 0
    %1937 = vmatpush1.bf16.msra.mxu0 0
    %1938 = vmatprep.subr.bf16.mxu0 0
    %1939 = vmatpush1.bf16.msra.mxu0 0
    %1940 = vmatprep.subr.bf16.mxu0 0
    %1941 = vmatpush1.bf16.msra.mxu0 0
    %1942 = vmatprep.subr.bf16.mxu0 0
    %1943 = vmatpush1.bf16.msra.mxu0 0
    %1944 = vmatprep.mubr.bf16.mxu0 0
    %1945 = vmatmul.mubr.bf16.gmra.mrb[0].mxu0 %v45
    %v1946 = vpop.f32.mrb[0].mxu0
    %v1947 = vadd.f32 %v979, %v1946
    %v1948 = vpop.f32.mrb[0].mxu0
    %v1949 = vadd.f32 %v981, %v1948
    %v1950 = vpop.f32.mrb[0].mxu0
    %v1951 = vpop.f32.mrb[0].mxu0
    %1952 = vdwg.mxu0
    %1953 = vmatprep.subr.bf16.mxu0 %v1659
    %1954 = vmatpush1.bf16.msra.mxu0 %v1658
    %1955 = vmatprep.subr.bf16.mxu0 %v1675
    %1956 = vmatpush1.bf16.msra.mxu0 %v1674
    %1957 = vmatprep.subr.bf16.mxu0 %v1691
    %1958 = vmatpush1.bf16.msra.mxu0 %v1690
    %1959 = vmatprep.subr.bf16.mxu0 %v1707
    %1960 = vmatpush1.bf16.msra.mxu0 %v1706
    %1961 = vmatprep.subr.bf16.mxu0 %v1723
    %1962 = vmatpush1.bf16.msra.mxu0 %v1722
    %1963 = vmatprep.subr.bf16.mxu0 %v1739
    %1964 = vmatpush1.bf16.msra.mxu0 %v1738
    %1965 = vmatprep.subr.bf16.mxu0 %v1755
    %1966 = vmatpush1.bf16.msra.mxu0 %v1754
    %1967 = vmatprep.subr.bf16.mxu0 %v1771
    %1968 = vmatpush1.bf16.msra.mxu0 %v1770
    %1969 = vmatprep.subr.bf16.mxu0 0
    %1970 = vmatpush1.bf16.msra.mxu0 0
    %1971 = vmatprep.subr.bf16.mxu0 0
    %1972 = vmatpush1.bf16.msra.mxu0 0
    %1973 = vmatprep.subr.bf16.mxu0 0
    %1974 = vmatpush1.bf16.msra.mxu0 0
    %1975 = vmatprep.subr.bf16.mxu0 0
    %1976 = vmatpush1.bf16.msra.mxu0 0
    %1977 = vmatprep.subr.bf16.mxu0 0
    %1978 = vmatpush1.bf16.msra.mxu0 0
    %1979 = vmatprep.subr.bf16.mxu0 0
    %1980 = vmatpush1.bf16.msra.mxu0 0
    %1981 = vmatprep.subr.bf16.mxu0 0
    %1982 = vmatpush1.bf16.msra.mxu0 0
    %1983 = vmatprep.subr.bf16.mxu0 0
    %1984 = vmatpush1.bf16.msra.mxu0 0
    %1985 = vmatprep.mubr.bf16.mxu0 0
    %1986 = vmatmul.mubr.bf16.gmra.mrb[0].mxu0 %v45
    %v1987 = vpop.f32.mrb[0].mxu0
    %v1988 = vadd.f32 %v1020, %v1987
    %v1989 = vpop.f32.mrb[0].mxu0
    %v1990 = vadd.f32 %v1022, %v1989
    %v1991 = vpop.f32.mrb[0].mxu0
    %v1992 = vpop.f32.mrb[0].mxu0
    %1993 = vdwg.mxu0
    %1994 = vmatprep.subr.bf16.mxu0 %v1661
    %1995 = vmatpush1.bf16.msra.mxu0 %v1660
    %1996 = vmatprep.subr.bf16.mxu0 %v1677
    %1997 = vmatpush1.bf16.msra.mxu0 %v1676
    %1998 = vmatprep.subr.bf16.mxu0 %v1693
    %1999 = vmatpush1.bf16.msra.mxu0 %v1692
    %2000 = vmatprep.subr.bf16.mxu0 %v1709
    %2001 = vmatpush1.bf16.msra.mxu0 %v1708
    %2002 = vmatprep.subr.bf16.mxu0 %v1725
    %2003 = vmatpush1.bf16.msra.mxu0 %v1724
    %2004 = vmatprep.subr.bf16.mxu0 %v1741
    %2005 = vmatpush1.bf16.msra.mxu0 %v1740
    %2006 = vmatprep.subr.bf16.mxu0 %v1757
    %2007 = vmatpush1.bf16.msra.mxu0 %v1756
    %2008 = vmatprep.subr.bf16.mxu0 %v1773
    %2009 = vmatpush1.bf16.msra.mxu0 %v1772
    %2010 = vmatprep.subr.bf16.mxu0 0
    %2011 = vmatpush1.bf16.msra.mxu0 0
    %2012 = vmatprep.subr.bf16.mxu0 0
    %2013 = vmatpush1.bf16.msra.mxu0 0
    %2014 = vmatprep.subr.bf16.mxu0 0
    %2015 = vmatpush1.bf16.msra.mxu0 0
    %2016 = vmatprep.subr.bf16.mxu0 0
    %2017 = vmatpush1.bf16.msra.mxu0 0
    %2018 = vmatprep.subr.bf16.mxu0 0
    %2019 = vmatpush1.bf16.msra.mxu0 0
    %2020 = vmatprep.subr.bf16.mxu0 0
    %2021 = vmatpush1.bf16.msra.mxu0 0
    %2022 = vmatprep.subr.bf16.mxu0 0
    %2023 = vmatpush1.bf16.msra.mxu0 0
    %2024 = vmatprep.subr.bf16.mxu0 0
    %2025 = vmatpush1.bf16.msra.mxu0 0
    %2026 = vmatprep.mubr.bf16.mxu0 0
    %2027 = vmatmul.mubr.bf16.gmra.mrb[0].mxu0 %v45
    %v2028 = vpop.f32.mrb[0].mxu0
    %v2029 = vadd.f32 %v1061, %v2028
    %v2030 = vpop.f32.mrb[0].mxu0
    %v2031 = vadd.f32 %v1063, %v2030
    %v2032 = vpop.f32.mrb[0].mxu0
    %v2033 = vpop.f32.mrb[0].mxu0
    %2034 = vdwg.mxu0
    %2035 = vmatprep.subr.bf16.mxu0 %v1663
    %2036 = vmatpush1.bf16.msra.mxu0 %v1662
    %2037 = vmatprep.subr.bf16.mxu0 %v1679
    %2038 = vmatpush1.bf16.msra.mxu0 %v1678
    %2039 = vmatprep.subr.bf16.mxu0 %v1695
    %2040 = vmatpush1.bf16.msra.mxu0 %v1694
    %2041 = vmatprep.subr.bf16.mxu0 %v1711
    %2042 = vmatpush1.bf16.msra.mxu0 %v1710
    %2043 = vmatprep.subr.bf16.mxu0 %v1727
    %2044 = vmatpush1.bf16.msra.mxu0 %v1726
    %2045 = vmatprep.subr.bf16.mxu0 %v1743
    %2046 = vmatpush1.bf16.msra.mxu0 %v1742
    %2047 = vmatprep.subr.bf16.mxu0 %v1759
    %2048 = vmatpush1.bf16.msra.mxu0 %v1758
    %2049 = vmatprep.subr.bf16.mxu0 %v1775
    %2050 = vmatpush1.bf16.msra.mxu0 %v1774
    %2051 = vmatprep.subr.bf16.mxu0 0
    %2052 = vmatpush1.bf16.msra.mxu0 0
    %2053 = vmatprep.subr.bf16.mxu0 0
    %2054 = vmatpush1.bf16.msra.mxu0 0
    %2055 = vmatprep.subr.bf16.mxu0 0
    %2056 = vmatpush1.bf16.msra.mxu0 0
    %2057 = vmatprep.subr.bf16.mxu0 0
    %2058 = vmatpush1.bf16.msra.mxu0 0
    %2059 = vmatprep.subr.bf16.mxu0 0
    %2060 = vmatpush1.bf16.msra.mxu0 0
    %2061 = vmatprep.subr.bf16.mxu0 0
    %2062 = vmatpush1.bf16.msra.mxu0 0
    %2063 = vmatprep.subr.bf16.mxu0 0
    %2064 = vmatpush1.bf16.msra.mxu0 0
    %2065 = vmatprep.subr.bf16.mxu0 0
    %2066 = vmatpush1.bf16.msra.mxu0 0
    %2067 = vmatprep.mubr.bf16.mxu0 0
    %2068 = vmatmul.mubr.bf16.gmra.mrb[0].mxu0 %v45
    %v2069 = vpop.f32.mrb[0].mxu0
    %v2070 = vadd.f32 %v1102, %v2069
    %v2071 = vpop.f32.mrb[0].mxu0
    %v2072 = vadd.f32 %v1104, %v2071
    %v2073 = vpop.f32.mrb[0].mxu0
    %v2074 = vpop.f32.mrb[0].mxu0
    %2075 = vdwg.mxu0
    %2076 = vmatprep.subr.bf16.mxu0 %v1665
    %2077 = vmatpush1.bf16.msra.mxu0 %v1664
    %2078 = vmatprep.subr.bf16.mxu0 %v1681
    %2079 = vmatpush1.bf16.msra.mxu0 %v1680
    %2080 = vmatprep.subr.bf16.mxu0 %v1697
    %2081 = vmatpush1.bf16.msra.mxu0 %v1696
    %2082 = vmatprep.subr.bf16.mxu0 %v1713
    %2083 = vmatpush1.bf16.msra.mxu0 %v1712
    %2084 = vmatprep.subr.bf16.mxu0 %v1729
    %2085 = vmatpush1.bf16.msra.mxu0 %v1728
    %2086 = vmatprep.subr.bf16.mxu0 %v1745
    %2087 = vmatpush1.bf16.msra.mxu0 %v1744
    %2088 = vmatprep.subr.bf16.mxu0 %v1761
    %2089 = vmatpush1.bf16.msra.mxu0 %v1760
    %2090 = vmatprep.subr.bf16.mxu0 %v1777
    %2091 = vmatpush1.bf16.msra.mxu0 %v1776
    %2092 = vmatprep.subr.bf16.mxu0 0
    %2093 = vmatpush1.bf16.msra.mxu0 0
    %2094 = vmatprep.subr.bf16.mxu0 0
    %2095 = vmatpush1.bf16.msra.mxu0 0
    %2096 = vmatprep.subr.bf16.mxu0 0
    %2097 = vmatpush1.bf16.msra.mxu0 0
    %2098 = vmatprep.subr.bf16.mxu0 0
    %2099 = vmatpush1.bf16.msra.mxu0 0
    %2100 = vmatprep.subr.bf16.mxu0 0
    %2101 = vmatpush1.bf16.msra.mxu0 0
    %2102 = vmatprep.subr.bf16.mxu0 0
    %2103 = vmatpush1.bf16.msra.mxu0 0
    %2104 = vmatprep.subr.bf16.mxu0 0
    %2105 = vmatpush1.bf16.msra.mxu0 0
    %2106 = vmatprep.subr.bf16.mxu0 0
    %2107 = vmatpush1.bf16.msra.mxu0 0
    %2108 = vmatprep.mubr.bf16.mxu0 0
    %2109 = vmatmul.mubr.bf16.gmra.mrb[0].mxu0 %v45
    %v2110 = vpop.f32.mrb[0].mxu0
    %v2111 = vadd.f32 %v1143, %v2110
    %v2112 = vpop.f32.mrb[0].mxu0
    %v2113 = vadd.f32 %v1145, %v2112
    %v2114 = vpop.f32.mrb[0].mxu0
    %v2115 = vpop.f32.mrb[0].mxu0
    %2116 = vdwg.mxu0
    %2117 = vmatprep.subr.bf16.mxu0 %v1667
    %2118 = vmatpush1.bf16.msra.mxu0 %v1666
    %2119 = vmatprep.subr.bf16.mxu0 %v1683
    %2120 = vmatpush1.bf16.msra.mxu0 %v1682
    %2121 = vmatprep.subr.bf16.mxu0 %v1699
    %2122 = vmatpush1.bf16.msra.mxu0 %v1698
    %2123 = vmatprep.subr.bf16.mxu0 %v1715
    %2124 = vmatpush1.bf16.msra.mxu0 %v1714
    %2125 = vmatprep.subr.bf16.mxu0 %v1731
    %2126 = vmatpush1.bf16.msra.mxu0 %v1730
    %2127 = vmatprep.subr.bf16.mxu0 %v1747
    %2128 = vmatpush1.bf16.msra.mxu0 %v1746
    %2129 = vmatprep.subr.bf16.mxu0 %v1763
    %2130 = vmatpush1.bf16.msra.mxu0 %v1762
    %2131 = vmatprep.subr.bf16.mxu0 %v1779
    %2132 = vmatpush1.bf16.msra.mxu0 %v1778
    %2133 = vmatprep.subr.bf16.mxu0 0
    %2134 = vmatpush1.bf16.msra.mxu0 0
    %2135 = vmatprep.subr.bf16.mxu0 0
    %2136 = vmatpush1.bf16.msra.mxu0 0
    %2137 = vmatprep.subr.bf16.mxu0 0
    %2138 = vmatpush1.bf16.msra.mxu0 0
    %2139 = vmatprep.subr.bf16.mxu0 0
    %2140 = vmatpush1.bf16.msra.mxu0 0
    %2141 = vmatprep.subr.bf16.mxu0 0
    %2142 = vmatpush1.bf16.msra.mxu0 0
    %2143 = vmatprep.subr.bf16.mxu0 0
    %2144 = vmatpush1.bf16.msra.mxu0 0
    %2145 = vmatprep.subr.bf16.mxu0 0
    %2146 = vmatpush1.bf16.msra.mxu0 0
    %2147 = vmatprep.subr.bf16.mxu0 0
    %2148 = vmatpush1.bf16.msra.mxu0 0
    %2149 = vmatprep.mubr.bf16.mxu0 0
    %2150 = vmatmul.mubr.bf16.gmra.mrb[0].mxu0 %v45
    %v2151 = vpop.f32.mrb[0].mxu0
    %v2152 = vadd.f32 %v1184, %v2151
    %v2153 = vpop.f32.mrb[0].mxu0
    %v2154 = vadd.f32 %v1186, %v2153
    %v2155 = vpop.f32.mrb[0].mxu0
    %v2156 = vpop.f32.mrb[0].mxu0
    %2157 = vdwg.mxu0
    %2158 = vmatprep.subr.bf16.mxu0 %v1669
    %2159 = vmatpush1.bf16.msra.mxu0 %v1668
    %2160 = vmatprep.subr.bf16.mxu0 %v1685
    %2161 = vmatpush1.bf16.msra.mxu0 %v1684
    %2162 = vmatprep.subr.bf16.mxu0 %v1701
    %2163 = vmatpush1.bf16.msra.mxu0 %v1700
    %2164 = vmatprep.subr.bf16.mxu0 %v1717
    %2165 = vmatpush1.bf16.msra.mxu0 %v1716
    %2166 = vmatprep.subr.bf16.mxu0 %v1733
    %2167 = vmatpush1.bf16.msra.mxu0 %v1732
    %2168 = vmatprep.subr.bf16.mxu0 %v1749
    %2169 = vmatpush1.bf16.msra.mxu0 %v1748
    %2170 = vmatprep.subr.bf16.mxu0 %v1765
    %2171 = vmatpush1.bf16.msra.mxu0 %v1764
    %2172 = vmatprep.subr.bf16.mxu0 %v1781
    %2173 = vmatpush1.bf16.msra.mxu0 %v1780
    %2174 = vmatprep.subr.bf16.mxu0 0
    %2175 = vmatpush1.bf16.msra.mxu0 0
    %2176 = vmatprep.subr.bf16.mxu0 0
    %2177 = vmatpush1.bf16.msra.mxu0 0
    %2178 = vmatprep.subr.bf16.mxu0 0
    %2179 = vmatpush1.bf16.msra.mxu0 0
    %2180 = vmatprep.subr.bf16.mxu0 0
    %2181 = vmatpush1.bf16.msra.mxu0 0
    %2182 = vmatprep.subr.bf16.mxu0 0
    %2183 = vmatpush1.bf16.msra.mxu0 0
    %2184 = vmatprep.subr.bf16.mxu0 0
    %2185 = vmatpush1.bf16.msra.mxu0 0
    %2186 = vmatprep.subr.bf16.mxu0 0
    %2187 = vmatpush1.bf16.msra.mxu0 0
    %2188 = vmatprep.subr.bf16.mxu0 0
    %2189 = vmatpush1.bf16.msra.mxu0 0
    %2190 = vmatprep.mubr.bf16.mxu0 0
    %2191 = vmatmul.mubr.bf16.gmra.mrb[0].mxu0 %v45
    %v2192 = vpop.f32.mrb[0].mxu0
    %v2193 = vadd.f32 %v1225, %v2192
    %v2194 = vpop.f32.mrb[0].mxu0
    %v2195 = vadd.f32 %v1227, %v2194
    %v2196 = vpop.f32.mrb[0].mxu0
    %v2197 = vpop.f32.mrb[0].mxu0
    %2198 = vdwg.mxu0
    %2199 = vmatprep.subr.bf16.mxu0 %v1671
    %2200 = vmatpush1.bf16.msra.mxu0 %v1670
    %2201 = vmatprep.subr.bf16.mxu0 %v1687
    %2202 = vmatpush1.bf16.msra.mxu0 %v1686
    %2203 = vmatprep.subr.bf16.mxu0 %v1703
    %2204 = vmatpush1.bf16.msra.mxu0 %v1702
    %2205 = vmatprep.subr.bf16.mxu0 %v1719
    %2206 = vmatpush1.bf16.msra.mxu0 %v1718
    %2207 = vmatprep.subr.bf16.mxu0 %v1735
    %2208 = vmatpush1.bf16.msra.mxu0 %v1734
    %2209 = vmatprep.subr.bf16.mxu0 %v1751
    %2210 = vmatpush1.bf16.msra.mxu0 %v1750
    %2211 = vmatprep.subr.bf16.mxu0 %v1767
    %2212 = vmatpush1.bf16.msra.mxu0 %v1766
    %2213 = vmatprep.subr.bf16.mxu0 %v1783
    %2214 = vmatpush1.bf16.msra.mxu0 %v1782
    %2215 = vmatprep.subr.bf16.mxu0 0
    %2216 = vmatpush1.bf16.msra.mxu0 0
    %2217 = vmatprep.subr.bf16.mxu0 0
    %2218 = vmatpush1.bf16.msra.mxu0 0
    %2219 = vmatprep.subr.bf16.mxu0 0
    %2220 = vmatpush1.bf16.msra.mxu0 0
    %2221 = vmatprep.subr.bf16.mxu0 0
    %2222 = vmatpush1.bf16.msra.mxu0 0
    %2223 = vmatprep.subr.bf16.mxu0 0
    %2224 = vmatpush1.bf16.msra.mxu0 0
    %2225 = vmatprep.subr.bf16.mxu0 0
    %2226 = vmatpush1.bf16.msra.mxu0 0
    %2227 = vmatprep.subr.bf16.mxu0 0
    %2228 = vmatpush1.bf16.msra.mxu0 0
    %2229 = vmatprep.subr.bf16.mxu0 0
    %2230 = vmatpush1.bf16.msra.mxu0 0
    %2231 = vmatprep.mubr.bf16.mxu0 0
    %2232 = vmatmul.mubr.bf16.gmra.mrb[0].mxu0 %v45
    %v2233 = vpop.f32.mrb[0].mxu0
    %v2234 = vadd.f32 %v1266, %v2233
    %v2235 = vpop.f32.mrb[0].mxu0
    %v2236 = vadd.f32 %v1268, %v2235
    %v2237 = vpop.f32.mrb[0].mxu0
    %v2238 = vpop.f32.mrb[0].mxu0
    %2239 = vdwg.mxu0
    %v2240 = vld [vmem:[%s3] sm:$0xff]
    %v2241 = vld [vmem:[%s3 + $0x8] sm:$0xff]
    %v2244 = vlaneseq
    %v2245 = vshrl.u32 %v2244, 7
    %v2246 = vsub.s32 0, %v2245
    %v2247 = vrot.slane %v2240, %v2246
    %v2248 = vlaneseq
    %v2249 = vshrl.u32 %v2248, 7
    %v2250 = vsub.s32 1, %v2249
    %v2251 = vrot.slane %v2240, %v2250
    %v2252 = vlaneseq
    %v2253 = vshrl.u32 %v2252, 7
    %v2254 = vsub.s32 2, %v2253
    %v2255 = vrot.slane %v2240, %v2254
    %v2256 = vlaneseq
    %v2257 = vshrl.u32 %v2256, 7
    %v2258 = vsub.s32 3, %v2257
    %v2259 = vrot.slane %v2240, %v2258
    %v2260 = vlaneseq
    %v2261 = vshrl.u32 %v2260, 7
    %v2262 = vsub.s32 4, %v2261
    %v2263 = vrot.slane %v2240, %v2262
    %v2264 = vlaneseq
    %v2265 = vshrl.u32 %v2264, 7
    %v2266 = vsub.s32 5, %v2265
    %v2267 = vrot.slane %v2240, %v2266
    %v2268 = vlaneseq
    %v2269 = vshrl.u32 %v2268, 7
    %v2270 = vsub.s32 6, %v2269
    %v2271 = vrot.slane %v2240, %v2270
    %v2272 = vlaneseq
    %v2273 = vshrl.u32 %v2272, 7
    %v2274 = vsub.s32 7, %v2273
    %v2275 = vrot.slane %v2240, %v2274
    %v2276 = vlaneseq
    %v2277 = vshrl.u32 %v2276, 7
    %v2278 = vsub.s32 0, %v2277
    %v2279 = vrot.slane %v2241, %v2278
    %v2280 = vlaneseq
    %v2281 = vshrl.u32 %v2280, 7
    %v2282 = vsub.s32 1, %v2281
    %v2283 = vrot.slane %v2241, %v2282
    %v2284 = vlaneseq
    %v2285 = vshrl.u32 %v2284, 7
    %v2286 = vsub.s32 2, %v2285
    %v2287 = vrot.slane %v2241, %v2286
    %v2288 = vlaneseq
    %v2289 = vshrl.u32 %v2288, 7
    %v2290 = vsub.s32 3, %v2289
    %v2291 = vrot.slane %v2241, %v2290
    %v2292 = vlaneseq
    %v2293 = vshrl.u32 %v2292, 7
    %v2294 = vsub.s32 4, %v2293
    %v2295 = vrot.slane %v2241, %v2294
    %v2296 = vlaneseq
    %v2297 = vshrl.u32 %v2296, 7
    %v2298 = vsub.s32 5, %v2297
    %v2299 = vrot.slane %v2241, %v2298
    %v2300 = vlaneseq
    %v2301 = vshrl.u32 %v2300, 7
    %v2302 = vsub.s32 6, %v2301
    %v2303 = vrot.slane %v2241, %v2302
    %v2304 = vlaneseq
    %v2305 = vshrl.u32 %v2304, 7
    %v2306 = vsub.s32 7, %v2305
    %v2307 = vrot.slane %v2241, %v2306
    %v2324 = vadd.f32 %v1947, %v2247
    %v2325 = vadd.f32 %v1949, %v2251
    %v2326 = vadd.f32 %v1988, %v2255
    %v2327 = vadd.f32 %v1990, %v2259
    %v2328 = vadd.f32 %v2029, %v2263
    %v2329 = vadd.f32 %v2031, %v2267
    %v2330 = vadd.f32 %v2070, %v2271
    %v2331 = vadd.f32 %v2072, %v2275
    %v2332 = vadd.f32 %v2111, %v2279
    %v2333 = vadd.f32 %v2113, %v2283
    %v2334 = vadd.f32 %v2152, %v2287
    %v2335 = vadd.f32 %v2154, %v2291
    %v2336 = vadd.f32 %v2193, %v2295
    %v2337 = vadd.f32 %v2195, %v2299
    %v2338 = vadd.f32 %v2234, %v2303
    %v2339 = vadd.f32 %v2236, %v2307
    %v2340 = vmax.f32 %v2324, 0.0
    %v2341 = vmax.f32 %v2325, 0.0
    %v2342 = vmax.f32 %v2326, 0.0
    %v2343 = vmax.f32 %v2327, 0.0
    %v2344 = vmax.f32 %v2328, 0.0
    %v2345 = vmax.f32 %v2329, 0.0
    %v2346 = vmax.f32 %v2330, 0.0
    %v2347 = vmax.f32 %v2331, 0.0
    %v2348 = vmax.f32 %v2332, 0.0
    %v2349 = vmax.f32 %v2333, 0.0
    %v2350 = vmax.f32 %v2334, 0.0
    %v2351 = vmax.f32 %v2335, 0.0
    %v2352 = vmax.f32 %v2336, 0.0
    %v2353 = vmax.f32 %v2337, 0.0
    %v2354 = vmax.f32 %v2338, 0.0
    %v2355 = vmax.f32 %v2339, 0.0
    %v2356 = vpack.c.bf16 %v2340, %v2340
    %v2357 = vpack.c.bf16 %v2341, %v2341
    %v2358 = vpack.c.bf16 %v2342, %v2342
    %v2359 = vpack.c.bf16 %v2343, %v2343
    %v2360 = vpack.c.bf16 %v2344, %v2344
    %v2361 = vpack.c.bf16 %v2345, %v2345
    %v2362 = vpack.c.bf16 %v2346, %v2346
    %v2363 = vpack.c.bf16 %v2347, %v2347
    %v2364 = vpack.c.bf16 %v2348, %v2348
    %v2365 = vpack.c.bf16 %v2349, %v2349
    %v2366 = vpack.c.bf16 %v2350, %v2350
    %v2367 = vpack.c.bf16 %v2351, %v2351
    %v2368 = vpack.c.bf16 %v2352, %v2352
    %v2369 = vpack.c.bf16 %v2353, %v2353
    %v2370 = vpack.c.bf16 %v2354, %v2354
    %v2371 = vpack.c.bf16 %v2355, %v2355
    %v2372 = vld [vmem:[#allocation2] sm:$0xff]
    %v2373 = vld [vmem:[#allocation2 + $0x8] sm:$0xff]
    %v2374 = vld [vmem:[#allocation2 + $0x10] sm:$0xff]
    %v2375 = vld [vmem:[#allocation2 + $0x18] sm:$0xff]
    %v2376 = vld [vmem:[#allocation2 + $0x20] sm:$0xff]
    %v2377 = vld [vmem:[#allocation2 + $0x28] sm:$0xff]
    %v2378 = vld [vmem:[#allocation2 + $0x30] sm:$0xff]
    %v2379 = vld [vmem:[#allocation2 + $0x38] sm:$0xff]
    %v2380 = vld [vmem:[#allocation2 + $0x40] sm:$0xff]
    %v2381 = vld [vmem:[#allocation2 + $0x48] sm:$0xff]
    %v2382 = vld [vmem:[#allocation2 + $0x50] sm:$0xff]
    %v2383 = vld [vmem:[#allocation2 + $0x58] sm:$0xff]
    %v2384 = vld [vmem:[#allocation2 + $0x60] sm:$0xff]
    %v2385 = vld [vmem:[#allocation2 + $0x68] sm:$0xff]
    %v2386 = vld [vmem:[#allocation2 + $0x70] sm:$0xff]
    %v2387 = vld [vmem:[#allocation2 + $0x78] sm:$0xff]
    %v2388 = vld [vmem:[#allocation2 + $0x80] sm:$0xff]
    %v2389 = vld [vmem:[#allocation2 + $0x88] sm:$0xff]
    %v2390 = vld [vmem:[#allocation2 + $0x90] sm:$0xff]
    %v2391 = vld [vmem:[#allocation2 + $0x98] sm:$0xff]
    %v2392 = vld [vmem:[#allocation2 + $0xa0] sm:$0xff]
    %v2393 = vld [vmem:[#allocation2 + $0xa8] sm:$0xff]
    %v2394 = vld [vmem:[#allocation2 + $0xb0] sm:$0xff]
    %v2395 = vld [vmem:[#allocation2 + $0xb8] sm:$0xff]
    %v2396 = vld [vmem:[#allocation2 + $0xc0] sm:$0xff]
    %v2397 = vld [vmem:[#allocation2 + $0xc8] sm:$0xff]
    %v2398 = vld [vmem:[#allocation2 + $0xd0] sm:$0xff]
    %v2399 = vld [vmem:[#allocation2 + $0xd8] sm:$0xff]
    %v2400 = vld [vmem:[#allocation2 + $0xe0] sm:$0xff]
    %v2401 = vld [vmem:[#allocation2 + $0xe8] sm:$0xff]
    %v2402 = vld [vmem:[#allocation2 + $0xf0] sm:$0xff]
    %v2403 = vld [vmem:[#allocation2 + $0xf8] sm:$0xff]
    %v2404 = vld [vmem:[#allocation2 + $0x100] sm:$0xff]
    %v2405 = vld [vmem:[#allocation2 + $0x108] sm:$0xff]
    %v2406 = vld [vmem:[#allocation2 + $0x110] sm:$0xff]
    %v2407 = vld [vmem:[#allocation2 + $0x118] sm:$0xff]
    %v2408 = vld [vmem:[#allocation2 + $0x120] sm:$0xff]
    %v2409 = vld [vmem:[#allocation2 + $0x128] sm:$0xff]
    %v2410 = vld [vmem:[#allocation2 + $0x130] sm:$0xff]
    %v2411 = vld [vmem:[#allocation2 + $0x138] sm:$0xff]
    %v2412 = vld [vmem:[#allocation2 + $0x140] sm:$0xff]
    %v2413 = vld [vmem:[#allocation2 + $0x148] sm:$0xff]
    %v2414 = vld [vmem:[#allocation2 + $0x150] sm:$0xff]
    %v2415 = vld [vmem:[#allocation2 + $0x158] sm:$0xff]
    %v2416 = vld [vmem:[#allocation2 + $0x160] sm:$0xff]
    %v2417 = vld [vmem:[#allocation2 + $0x168] sm:$0xff]
    %v2418 = vld [vmem:[#allocation2 + $0x170] sm:$0xff]
    %v2419 = vld [vmem:[#allocation2 + $0x178] sm:$0xff]
    %v2420 = vld [vmem:[#allocation2 + $0x180] sm:$0xff]
    %v2421 = vld [vmem:[#allocation2 + $0x188] sm:$0xff]
    %v2422 = vld [vmem:[#allocation2 + $0x190] sm:$0xff]
    %v2423 = vld [vmem:[#allocation2 + $0x198] sm:$0xff]
    %v2424 = vld [vmem:[#allocation2 + $0x1a0] sm:$0xff]
    %v2425 = vld [vmem:[#allocation2 + $0x1a8] sm:$0xff]
    %v2426 = vld [vmem:[#allocation2 + $0x1b0] sm:$0xff]
    %v2427 = vld [vmem:[#allocation2 + $0x1b8] sm:$0xff]
    %v2428 = vld [vmem:[#allocation2 + $0x1c0] sm:$0xff]
    %v2429 = vld [vmem:[#allocation2 + $0x1c8] sm:$0xff]
    %v2430 = vld [vmem:[#allocation2 + $0x1d0] sm:$0xff]
    %v2431 = vld [vmem:[#allocation2 + $0x1d8] sm:$0xff]
    %v2432 = vld [vmem:[#allocation2 + $0x1e0] sm:$0xff]
    %v2433 = vld [vmem:[#allocation2 + $0x1e8] sm:$0xff]
    %v2434 = vld [vmem:[#allocation2 + $0x1f0] sm:$0xff]
    %v2435 = vld [vmem:[#allocation2 + $0x1f8] sm:$0xff]
    %v2436 = vld [vmem:[#allocation2 + $0x200] sm:$0xff]
    %v2437 = vld [vmem:[#allocation2 + $0x208] sm:$0xff]
    %v2438 = vld [vmem:[#allocation2 + $0x210] sm:$0xff]
    %v2439 = vld [vmem:[#allocation2 + $0x218] sm:$0xff]
    %v2440 = vld [vmem:[#allocation2 + $0x220] sm:$0xff]
    %v2441 = vld [vmem:[#allocation2 + $0x228] sm:$0xff]
    %v2442 = vld [vmem:[#allocation2 + $0x230] sm:$0xff]
    %v2443 = vld [vmem:[#allocation2 + $0x238] sm:$0xff]
    %v2444 = vld [vmem:[#allocation2 + $0x240] sm:$0xff]
    %v2445 = vld [vmem:[#allocation2 + $0x248] sm:$0xff]
    %v2446 = vld [vmem:[#allocation2 + $0x250] sm:$0xff]
    %v2447 = vld [vmem:[#allocation2 + $0x258] sm:$0xff]
    %v2448 = vld [vmem:[#allocation2 + $0x260] sm:$0xff]
    %v2449 = vld [vmem:[#allocation2 + $0x268] sm:$0xff]
    %v2450 = vld [vmem:[#allocation2 + $0x270] sm:$0xff]
    %v2451 = vld [vmem:[#allocation2 + $0x278] sm:$0xff]
    %v2452 = vld [vmem:[#allocation2 + $0x280] sm:$0xff]
    %v2453 = vld [vmem:[#allocation2 + $0x288] sm:$0xff]
    %v2454 = vld [vmem:[#allocation2 + $0x290] sm:$0xff]
    %v2455 = vld [vmem:[#allocation2 + $0x298] sm:$0xff]
    %v2456 = vld [vmem:[#allocation2 + $0x2a0] sm:$0xff]
    %v2457 = vld [vmem:[#allocation2 + $0x2a8] sm:$0xff]
    %v2458 = vld [vmem:[#allocation2 + $0x2b0] sm:$0xff]
    %v2459 = vld [vmem:[#allocation2 + $0x2b8] sm:$0xff]
    %v2460 = vld [vmem:[#allocation2 + $0x2c0] sm:$0xff]
    %v2461 = vld [vmem:[#allocation2 + $0x2c8] sm:$0xff]
    %v2462 = vld [vmem:[#allocation2 + $0x2d0] sm:$0xff]
    %v2463 = vld [vmem:[#allocation2 + $0x2d8] sm:$0xff]
    %v2464 = vld [vmem:[#allocation2 + $0x2e0] sm:$0xff]
    %v2465 = vld [vmem:[#allocation2 + $0x2e8] sm:$0xff]
    %v2466 = vld [vmem:[#allocation2 + $0x2f0] sm:$0xff]
    %v2467 = vld [vmem:[#allocation2 + $0x2f8] sm:$0xff]
    %v2468 = vld [vmem:[#allocation2 + $0x300] sm:$0xff]
    %v2469 = vld [vmem:[#allocation2 + $0x308] sm:$0xff]
    %v2470 = vld [vmem:[#allocation2 + $0x310] sm:$0xff]
    %v2471 = vld [vmem:[#allocation2 + $0x318] sm:$0xff]
    %v2472 = vld [vmem:[#allocation2 + $0x320] sm:$0xff]
    %v2473 = vld [vmem:[#allocation2 + $0x328] sm:$0xff]
    %v2474 = vld [vmem:[#allocation2 + $0x330] sm:$0xff]
    %v2475 = vld [vmem:[#allocation2 + $0x338] sm:$0xff]
    %v2476 = vld [vmem:[#allocation2 + $0x340] sm:$0xff]
    %v2477 = vld [vmem:[#allocation2 + $0x348] sm:$0xff]
    %v2478 = vld [vmem:[#allocation2 + $0x350] sm:$0xff]
    %v2479 = vld [vmem:[#allocation2 + $0x358] sm:$0xff]
    %v2480 = vld [vmem:[#allocation2 + $0x360] sm:$0xff]
    %v2481 = vld [vmem:[#allocation2 + $0x368] sm:$0xff]
    %v2482 = vld [vmem:[#allocation2 + $0x370] sm:$0xff]
    %v2483 = vld [vmem:[#allocation2 + $0x378] sm:$0xff]
    %v2484 = vld [vmem:[#allocation2 + $0x380] sm:$0xff]
    %v2485 = vld [vmem:[#allocation2 + $0x388] sm:$0xff]
    %v2486 = vld [vmem:[#allocation2 + $0x390] sm:$0xff]
    %v2487 = vld [vmem:[#allocation2 + $0x398] sm:$0xff]
    %v2488 = vld [vmem:[#allocation2 + $0x3a0] sm:$0xff]
    %v2489 = vld [vmem:[#allocation2 + $0x3a8] sm:$0xff]
    %v2490 = vld [vmem:[#allocation2 + $0x3b0] sm:$0xff]
    %v2491 = vld [vmem:[#allocation2 + $0x3b8] sm:$0xff]
    %v2492 = vld [vmem:[#allocation2 + $0x3c0] sm:$0xff]
    %v2493 = vld [vmem:[#allocation2 + $0x3c8] sm:$0xff]
    %v2494 = vld [vmem:[#allocation2 + $0x3d0] sm:$0xff]
    %v2495 = vld [vmem:[#allocation2 + $0x3d8] sm:$0xff]
    %v2496 = vld [vmem:[#allocation2 + $0x3e0] sm:$0xff]
    %v2497 = vld [vmem:[#allocation2 + $0x3e8] sm:$0xff]
    %v2498 = vld [vmem:[#allocation2 + $0x3f0] sm:$0xff]
    %v2499 = vld [vmem:[#allocation2 + $0x3f8] sm:$0xff]
    %v2500 = vld [vmem:[#allocation2 + $0x400] sm:$0xff]
    %v2501 = vld [vmem:[#allocation2 + $0x408] sm:$0xff]
    %v2502 = vld [vmem:[#allocation2 + $0x410] sm:$0xff]
    %v2503 = vld [vmem:[#allocation2 + $0x418] sm:$0xff]
    %v2504 = vld [vmem:[#allocation2 + $0x420] sm:$0xff]
    %v2505 = vld [vmem:[#allocation2 + $0x428] sm:$0xff]
    %v2506 = vld [vmem:[#allocation2 + $0x430] sm:$0xff]
    %v2507 = vld [vmem:[#allocation2 + $0x438] sm:$0xff]
    %v2508 = vld [vmem:[#allocation2 + $0x440] sm:$0xff]
    %v2509 = vld [vmem:[#allocation2 + $0x448] sm:$0xff]
    %v2510 = vld [vmem:[#allocation2 + $0x450] sm:$0xff]
    %v2511 = vld [vmem:[#allocation2 + $0x458] sm:$0xff]
    %v2512 = vld [vmem:[#allocation2 + $0x460] sm:$0xff]
    %v2513 = vld [vmem:[#allocation2 + $0x468] sm:$0xff]
    %v2514 = vld [vmem:[#allocation2 + $0x470] sm:$0xff]
    %v2515 = vld [vmem:[#allocation2 + $0x478] sm:$0xff]
    %v2516 = vld [vmem:[#allocation2 + $0x480] sm:$0xff]
    %v2517 = vld [vmem:[#allocation2 + $0x488] sm:$0xff]
    %v2518 = vld [vmem:[#allocation2 + $0x490] sm:$0xff]
    %v2519 = vld [vmem:[#allocation2 + $0x498] sm:$0xff]
    %v2520 = vld [vmem:[#allocation2 + $0x4a0] sm:$0xff]
    %v2521 = vld [vmem:[#allocation2 + $0x4a8] sm:$0xff]
    %v2522 = vld [vmem:[#allocation2 + $0x4b0] sm:$0xff]
    %v2523 = vld [vmem:[#allocation2 + $0x4b8] sm:$0xff]
    %v2524 = vld [vmem:[#allocation2 + $0x4c0] sm:$0xff]
    %v2525 = vld [vmem:[#allocation2 + $0x4c8] sm:$0xff]
    %v2526 = vld [vmem:[#allocation2 + $0x4d0] sm:$0xff]
    %v2527 = vld [vmem:[#allocation2 + $0x4d8] sm:$0xff]
    %v2528 = vld [vmem:[#allocation2 + $0x4e0] sm:$0xff]
    %v2529 = vld [vmem:[#allocation2 + $0x4e8] sm:$0xff]
    %v2530 = vld [vmem:[#allocation2 + $0x4f0] sm:$0xff]
    %v2531 = vld [vmem:[#allocation2 + $0x4f8] sm:$0xff]
    %v2532 = vld [vmem:[#allocation2 + $0x500] sm:$0xff]
    %v2533 = vld [vmem:[#allocation2 + $0x508] sm:$0xff]
    %v2534 = vld [vmem:[#allocation2 + $0x510] sm:$0xff]
    %v2535 = vld [vmem:[#allocation2 + $0x518] sm:$0xff]
    %v2536 = vld [vmem:[#allocation2 + $0x520] sm:$0xff]
    %v2537 = vld [vmem:[#allocation2 + $0x528] sm:$0xff]
    %v2538 = vld [vmem:[#allocation2 + $0x530] sm:$0xff]
    %v2539 = vld [vmem:[#allocation2 + $0x538] sm:$0xff]
    %v2540 = vld [vmem:[#allocation2 + $0x540] sm:$0xff]
    %v2541 = vld [vmem:[#allocation2 + $0x548] sm:$0xff]
    %v2542 = vld [vmem:[#allocation2 + $0x550] sm:$0xff]
    %v2543 = vld [vmem:[#allocation2 + $0x558] sm:$0xff]
    %v2544 = vld [vmem:[#allocation2 + $0x560] sm:$0xff]
    %v2545 = vld [vmem:[#allocation2 + $0x568] sm:$0xff]
    %v2546 = vld [vmem:[#allocation2 + $0x570] sm:$0xff]
    %v2547 = vld [vmem:[#allocation2 + $0x578] sm:$0xff]
    %v2548 = vld [vmem:[#allocation2 + $0x580] sm:$0xff]
    %v2549 = vld [vmem:[#allocation2 + $0x588] sm:$0xff]
    %v2550 = vld [vmem:[#allocation2 + $0x590] sm:$0xff]
    %v2551 = vld [vmem:[#allocation2 + $0x598] sm:$0xff]
    %v2552 = vld [vmem:[#allocation2 + $0x5a0] sm:$0xff]
    %v2553 = vld [vmem:[#allocation2 + $0x5a8] sm:$0xff]
    %v2554 = vld [vmem:[#allocation2 + $0x5b0] sm:$0xff]
    %v2555 = vld [vmem:[#allocation2 + $0x5b8] sm:$0xff]
    %v2556 = vld [vmem:[#allocation2 + $0x5c0] sm:$0xff]
    %v2557 = vld [vmem:[#allocation2 + $0x5c8] sm:$0xff]
    %v2558 = vld [vmem:[#allocation2 + $0x5d0] sm:$0xff]
    %v2559 = vld [vmem:[#allocation2 + $0x5d8] sm:$0xff]
    %v2560 = vld [vmem:[#allocation2 + $0x5e0] sm:$0xff]
    %v2561 = vld [vmem:[#allocation2 + $0x5e8] sm:$0xff]
    %v2562 = vld [vmem:[#allocation2 + $0x5f0] sm:$0xff]
    %v2563 = vld [vmem:[#allocation2 + $0x5f8] sm:$0xff]
    %v2564 = vld [vmem:[#allocation2 + $0x600] sm:$0xff]
    %v2565 = vld [vmem:[#allocation2 + $0x608] sm:$0xff]
    %v2566 = vld [vmem:[#allocation2 + $0x610] sm:$0xff]
    %v2567 = vld [vmem:[#allocation2 + $0x618] sm:$0xff]
    %v2568 = vld [vmem:[#allocation2 + $0x620] sm:$0xff]
    %v2569 = vld [vmem:[#allocation2 + $0x628] sm:$0xff]
    %v2570 = vld [vmem:[#allocation2 + $0x630] sm:$0xff]
    %v2571 = vld [vmem:[#allocation2 + $0x638] sm:$0xff]
    %v2572 = vld [vmem:[#allocation2 + $0x640] sm:$0xff]
    %v2573 = vld [vmem:[#allocation2 + $0x648] sm:$0xff]
    %v2574 = vld [vmem:[#allocation2 + $0x650] sm:$0xff]
    %v2575 = vld [vmem:[#allocation2 + $0x658] sm:$0xff]
    %v2576 = vld [vmem:[#allocation2 + $0x660] sm:$0xff]
    %v2577 = vld [vmem:[#allocation2 + $0x668] sm:$0xff]
    %v2578 = vld [vmem:[#allocation2 + $0x670] sm:$0xff]
    %v2579 = vld [vmem:[#allocation2 + $0x678] sm:$0xff]
    %v2580 = vld [vmem:[#allocation2 + $0x680] sm:$0xff]
    %v2581 = vld [vmem:[#allocation2 + $0x688] sm:$0xff]
    %v2582 = vld [vmem:[#allocation2 + $0x690] sm:$0xff]
    %v2583 = vld [vmem:[#allocation2 + $0x698] sm:$0xff]
    %v2584 = vld [vmem:[#allocation2 + $0x6a0] sm:$0xff]
    %v2585 = vld [vmem:[#allocation2 + $0x6a8] sm:$0xff]
    %v2586 = vld [vmem:[#allocation2 + $0x6b0] sm:$0xff]
    %v2587 = vld [vmem:[#allocation2 + $0x6b8] sm:$0xff]
    %v2588 = vld [vmem:[#allocation2 + $0x6c0] sm:$0xff]
    %v2589 = vld [vmem:[#allocation2 + $0x6c8] sm:$0xff]
    %v2590 = vld [vmem:[#allocation2 + $0x6d0] sm:$0xff]
    %v2591 = vld [vmem:[#allocation2 + $0x6d8] sm:$0xff]
    %v2592 = vld [vmem:[#allocation2 + $0x6e0] sm:$0xff]
    %v2593 = vld [vmem:[#allocation2 + $0x6e8] sm:$0xff]
    %v2594 = vld [vmem:[#allocation2 + $0x6f0] sm:$0xff]
    %v2595 = vld [vmem:[#allocation2 + $0x6f8] sm:$0xff]
    %v2596 = vld [vmem:[#allocation2 + $0x700] sm:$0xff]
    %v2597 = vld [vmem:[#allocation2 + $0x708] sm:$0xff]
    %v2598 = vld [vmem:[#allocation2 + $0x710] sm:$0xff]
    %v2599 = vld [vmem:[#allocation2 + $0x718] sm:$0xff]
    %v2600 = vld [vmem:[#allocation2 + $0x720] sm:$0xff]
    %v2601 = vld [vmem:[#allocation2 + $0x728] sm:$0xff]
    %v2602 = vld [vmem:[#allocation2 + $0x730] sm:$0xff]
    %v2603 = vld [vmem:[#allocation2 + $0x738] sm:$0xff]
    %v2604 = vld [vmem:[#allocation2 + $0x740] sm:$0xff]
    %v2605 = vld [vmem:[#allocation2 + $0x748] sm:$0xff]
    %v2606 = vld [vmem:[#allocation2 + $0x750] sm:$0xff]
    %v2607 = vld [vmem:[#allocation2 + $0x758] sm:$0xff]
    %v2608 = vld [vmem:[#allocation2 + $0x760] sm:$0xff]
    %v2609 = vld [vmem:[#allocation2 + $0x768] sm:$0xff]
    %v2610 = vld [vmem:[#allocation2 + $0x770] sm:$0xff]
    %v2611 = vld [vmem:[#allocation2 + $0x778] sm:$0xff]
    %v2612 = vld [vmem:[#allocation2 + $0x780] sm:$0xff]
    %v2613 = vld [vmem:[#allocation2 + $0x788] sm:$0xff]
    %v2614 = vld [vmem:[#allocation2 + $0x790] sm:$0xff]
    %v2615 = vld [vmem:[#allocation2 + $0x798] sm:$0xff]
    %v2616 = vld [vmem:[#allocation2 + $0x7a0] sm:$0xff]
    %v2617 = vld [vmem:[#allocation2 + $0x7a8] sm:$0xff]
    %v2618 = vld [vmem:[#allocation2 + $0x7b0] sm:$0xff]
    %v2619 = vld [vmem:[#allocation2 + $0x7b8] sm:$0xff]
    %v2620 = vld [vmem:[#allocation2 + $0x7c0] sm:$0xff]
    %v2621 = vld [vmem:[#allocation2 + $0x7c8] sm:$0xff]
    %v2622 = vld [vmem:[#allocation2 + $0x7d0] sm:$0xff]
    %v2623 = vld [vmem:[#allocation2 + $0x7d8] sm:$0xff]
    %v2624 = vld [vmem:[#allocation2 + $0x7e0] sm:$0xff]
    %v2625 = vld [vmem:[#allocation2 + $0x7e8] sm:$0xff]
    %v2626 = vld [vmem:[#allocation2 + $0x7f0] sm:$0xff]
    %v2627 = vld [vmem:[#allocation2 + $0x7f8] sm:$0xff]
    %v2628 = vld [vmem:[%s5] sm:$0x3]
    %v2630 = vlaneseq
    %v2631 = vshrl.u32 %v2630, 7
    %v2632 = vsub.s32 0, %v2631
    %v2633 = vrot.slane %v2628, %v2632
    %v2634 = vlaneseq
    %v2635 = vshrl.u32 %v2634, 7
    %v2636 = vsub.s32 1, %v2635
    %v2637 = vrot.slane %v2628, %v2636
    %v2896 = vunpack.c.l.b16 %v2372
    %v2897 = vunpack.c.h.b16 %v2372
    %v2898 = vunpack.c.l.b16 %v2373
    %v2899 = vunpack.c.h.b16 %v2373
    %v2900 = vunpack.c.l.b16 %v2374
    %v2901 = vunpack.c.h.b16 %v2374
    %v2902 = vunpack.c.l.b16 %v2375
    %v2903 = vunpack.c.h.b16 %v2375
    %v2904 = vunpack.c.l.b16 %v2376
    %v2905 = vunpack.c.h.b16 %v2376
    %v2906 = vunpack.c.l.b16 %v2377
    %v2907 = vunpack.c.h.b16 %v2377
    %v2908 = vunpack.c.l.b16 %v2378
    %v2909 = vunpack.c.h.b16 %v2378
    %v2910 = vunpack.c.l.b16 %v2379
    %v2911 = vunpack.c.h.b16 %v2379
    %v2912 = vunpack.c.l.b16 %v2380
    %v2913 = vunpack.c.h.b16 %v2380
    %v2914 = vunpack.c.l.b16 %v2381
    %v2915 = vunpack.c.h.b16 %v2381
    %v2916 = vunpack.c.l.b16 %v2382
    %v2917 = vunpack.c.h.b16 %v2382
    %v2918 = vunpack.c.l.b16 %v2383
    %v2919 = vunpack.c.h.b16 %v2383
    %v2920 = vunpack.c.l.b16 %v2384
    %v2921 = vunpack.c.h.b16 %v2384
    %v2922 = vunpack.c.l.b16 %v2385
    %v2923 = vunpack.c.h.b16 %v2385
    %v2924 = vunpack.c.l.b16 %v2386
    %v2925 = vunpack.c.h.b16 %v2386
    %v2926 = vunpack.c.l.b16 %v2387
    %v2927 = vunpack.c.h.b16 %v2387
    %v2928 = vunpack.c.l.b16 %v2388
    %v2929 = vunpack.c.h.b16 %v2388
    %v2930 = vunpack.c.l.b16 %v2389
    %v2931 = vunpack.c.h.b16 %v2389
    %v2932 = vunpack.c.l.b16 %v2390
    %v2933 = vunpack.c.h.b16 %v2390
    %v2934 = vunpack.c.l.b16 %v2391
    %v2935 = vunpack.c.h.b16 %v2391
    %v2936 = vunpack.c.l.b16 %v2392
    %v2937 = vunpack.c.h.b16 %v2392
    %v2938 = vunpack.c.l.b16 %v2393
    %v2939 = vunpack.c.h.b16 %v2393
    %v2940 = vunpack.c.l.b16 %v2394
    %v2941 = vunpack.c.h.b16 %v2394
    %v2942 = vunpack.c.l.b16 %v2395
    %v2943 = vunpack.c.h.b16 %v2395
    %v2944 = vunpack.c.l.b16 %v2396
    %v2945 = vunpack.c.h.b16 %v2396
    %v2946 = vunpack.c.l.b16 %v2397
    %v2947 = vunpack.c.h.b16 %v2397
    %v2948 = vunpack.c.l.b16 %v2398
    %v2949 = vunpack.c.h.b16 %v2398
    %v2950 = vunpack.c.l.b16 %v2399
    %v2951 = vunpack.c.h.b16 %v2399
    %v2952 = vunpack.c.l.b16 %v2400
    %v2953 = vunpack.c.h.b16 %v2400
    %v2954 = vunpack.c.l.b16 %v2401
    %v2955 = vunpack.c.h.b16 %v2401
    %v2956 = vunpack.c.l.b16 %v2402
    %v2957 = vunpack.c.h.b16 %v2402
    %v2958 = vunpack.c.l.b16 %v2403
    %v2959 = vunpack.c.h.b16 %v2403
    %v2960 = vunpack.c.l.b16 %v2404
    %v2961 = vunpack.c.h.b16 %v2404
    %v2962 = vunpack.c.l.b16 %v2405
    %v2963 = vunpack.c.h.b16 %v2405
    %v2964 = vunpack.c.l.b16 %v2406
    %v2965 = vunpack.c.h.b16 %v2406
    %v2966 = vunpack.c.l.b16 %v2407
    %v2967 = vunpack.c.h.b16 %v2407
    %v2968 = vunpack.c.l.b16 %v2408
    %v2969 = vunpack.c.h.b16 %v2408
    %v2970 = vunpack.c.l.b16 %v2409
    %v2971 = vunpack.c.h.b16 %v2409
    %v2972 = vunpack.c.l.b16 %v2410
    %v2973 = vunpack.c.h.b16 %v2410
    %v2974 = vunpack.c.l.b16 %v2411
    %v2975 = vunpack.c.h.b16 %v2411
    %v2976 = vunpack.c.l.b16 %v2412
    %v2977 = vunpack.c.h.b16 %v2412
    %v2978 = vunpack.c.l.b16 %v2413
    %v2979 = vunpack.c.h.b16 %v2413
    %v2980 = vunpack.c.l.b16 %v2414
    %v2981 = vunpack.c.h.b16 %v2414
    %v2982 = vunpack.c.l.b16 %v2415
    %v2983 = vunpack.c.h.b16 %v2415
    %v2984 = vunpack.c.l.b16 %v2416
    %v2985 = vunpack.c.h.b16 %v2416
    %v2986 = vunpack.c.l.b16 %v2417
    %v2987 = vunpack.c.h.b16 %v2417
    %v2988 = vunpack.c.l.b16 %v2418
    %v2989 = vunpack.c.h.b16 %v2418
    %v2990 = vunpack.c.l.b16 %v2419
    %v2991 = vunpack.c.h.b16 %v2419
    %v2992 = vunpack.c.l.b16 %v2420
    %v2993 = vunpack.c.h.b16 %v2420
    %v2994 = vunpack.c.l.b16 %v2421
    %v2995 = vunpack.c.h.b16 %v2421
    %v2996 = vunpack.c.l.b16 %v2422
    %v2997 = vunpack.c.h.b16 %v2422
    %v2998 = vunpack.c.l.b16 %v2423
    %v2999 = vunpack.c.h.b16 %v2423
    %v3000 = vunpack.c.l.b16 %v2424
    %v3001 = vunpack.c.h.b16 %v2424
    %v3002 = vunpack.c.l.b16 %v2425
    %v3003 = vunpack.c.h.b16 %v2425
    %v3004 = vunpack.c.l.b16 %v2426
    %v3005 = vunpack.c.h.b16 %v2426
    %v3006 = vunpack.c.l.b16 %v2427
    %v3007 = vunpack.c.h.b16 %v2427
    %v3008 = vunpack.c.l.b16 %v2428
    %v3009 = vunpack.c.h.b16 %v2428
    %v3010 = vunpack.c.l.b16 %v2429
    %v3011 = vunpack.c.h.b16 %v2429
    %v3012 = vunpack.c.l.b16 %v2430
    %v3013 = vunpack.c.h.b16 %v2430
    %v3014 = vunpack.c.l.b16 %v2431
    %v3015 = vunpack.c.h.b16 %v2431
    %v3016 = vunpack.c.l.b16 %v2432
    %v3017 = vunpack.c.h.b16 %v2432
    %v3018 = vunpack.c.l.b16 %v2433
    %v3019 = vunpack.c.h.b16 %v2433
    %v3020 = vunpack.c.l.b16 %v2434
    %v3021 = vunpack.c.h.b16 %v2434
    %v3022 = vunpack.c.l.b16 %v2435
    %v3023 = vunpack.c.h.b16 %v2435
    %v3024 = vunpack.c.l.b16 %v2436
    %v3025 = vunpack.c.h.b16 %v2436
    %v3026 = vunpack.c.l.b16 %v2437
    %v3027 = vunpack.c.h.b16 %v2437
    %v3028 = vunpack.c.l.b16 %v2438
    %v3029 = vunpack.c.h.b16 %v2438
    %v3030 = vunpack.c.l.b16 %v2439
    %v3031 = vunpack.c.h.b16 %v2439
    %v3032 = vunpack.c.l.b16 %v2440
    %v3033 = vunpack.c.h.b16 %v2440
    %v3034 = vunpack.c.l.b16 %v2441
    %v3035 = vunpack.c.h.b16 %v2441
    %v3036 = vunpack.c.l.b16 %v2442
    %v3037 = vunpack.c.h.b16 %v2442
    %v3038 = vunpack.c.l.b16 %v2443
    %v3039 = vunpack.c.h.b16 %v2443
    %v3040 = vunpack.c.l.b16 %v2444
    %v3041 = vunpack.c.h.b16 %v2444
    %v3042 = vunpack.c.l.b16 %v2445
    %v3043 = vunpack.c.h.b16 %v2445
    %v3044 = vunpack.c.l.b16 %v2446
    %v3045 = vunpack.c.h.b16 %v2446
    %v3046 = vunpack.c.l.b16 %v2447
    %v3047 = vunpack.c.h.b16 %v2447
    %v3048 = vunpack.c.l.b16 %v2448
    %v3049 = vunpack.c.h.b16 %v2448
    %v3050 = vunpack.c.l.b16 %v2449
    %v3051 = vunpack.c.h.b16 %v2449
    %v3052 = vunpack.c.l.b16 %v2450
    %v3053 = vunpack.c.h.b16 %v2450
    %v3054 = vunpack.c.l.b16 %v2451
    %v3055 = vunpack.c.h.b16 %v2451
    %v3056 = vunpack.c.l.b16 %v2452
    %v3057 = vunpack.c.h.b16 %v2452
    %v3058 = vunpack.c.l.b16 %v2453
    %v3059 = vunpack.c.h.b16 %v2453
    %v3060 = vunpack.c.l.b16 %v2454
    %v3061 = vunpack.c.h.b16 %v2454
    %v3062 = vunpack.c.l.b16 %v2455
    %v3063 = vunpack.c.h.b16 %v2455
    %v3064 = vunpack.c.l.b16 %v2456
    %v3065 = vunpack.c.h.b16 %v2456
    %v3066 = vunpack.c.l.b16 %v2457
    %v3067 = vunpack.c.h.b16 %v2457
    %v3068 = vunpack.c.l.b16 %v2458
    %v3069 = vunpack.c.h.b16 %v2458
    %v3070 = vunpack.c.l.b16 %v2459
    %v3071 = vunpack.c.h.b16 %v2459
    %v3072 = vunpack.c.l.b16 %v2460
    %v3073 = vunpack.c.h.b16 %v2460
    %v3074 = vunpack.c.l.b16 %v2461
    %v3075 = vunpack.c.h.b16 %v2461
    %v3076 = vunpack.c.l.b16 %v2462
    %v3077 = vunpack.c.h.b16 %v2462
    %v3078 = vunpack.c.l.b16 %v2463
    %v3079 = vunpack.c.h.b16 %v2463
    %v3080 = vunpack.c.l.b16 %v2464
    %v3081 = vunpack.c.h.b16 %v2464
    %v3082 = vunpack.c.l.b16 %v2465
    %v3083 = vunpack.c.h.b16 %v2465
    %v3084 = vunpack.c.l.b16 %v2466
    %v3085 = vunpack.c.h.b16 %v2466
    %v3086 = vunpack.c.l.b16 %v2467
    %v3087 = vunpack.c.h.b16 %v2467
    %v3088 = vunpack.c.l.b16 %v2468
    %v3089 = vunpack.c.h.b16 %v2468
    %v3090 = vunpack.c.l.b16 %v2469
    %v3091 = vunpack.c.h.b16 %v2469
    %v3092 = vunpack.c.l.b16 %v2470
    %v3093 = vunpack.c.h.b16 %v2470
    %v3094 = vunpack.c.l.b16 %v2471
    %v3095 = vunpack.c.h.b16 %v2471
    %v3096 = vunpack.c.l.b16 %v2472
    %v3097 = vunpack.c.h.b16 %v2472
    %v3098 = vunpack.c.l.b16 %v2473
    %v3099 = vunpack.c.h.b16 %v2473
    %v3100 = vunpack.c.l.b16 %v2474
    %v3101 = vunpack.c.h.b16 %v2474
    %v3102 = vunpack.c.l.b16 %v2475
    %v3103 = vunpack.c.h.b16 %v2475
    %v3104 = vunpack.c.l.b16 %v2476
    %v3105 = vunpack.c.h.b16 %v2476
    %v3106 = vunpack.c.l.b16 %v2477
    %v3107 = vunpack.c.h.b16 %v2477
    %v3108 = vunpack.c.l.b16 %v2478
    %v3109 = vunpack.c.h.b16 %v2478
    %v3110 = vunpack.c.l.b16 %v2479
    %v3111 = vunpack.c.h.b16 %v2479
    %v3112 = vunpack.c.l.b16 %v2480
    %v3113 = vunpack.c.h.b16 %v2480
    %v3114 = vunpack.c.l.b16 %v2481
    %v3115 = vunpack.c.h.b16 %v2481
    %v3116 = vunpack.c.l.b16 %v2482
    %v3117 = vunpack.c.h.b16 %v2482
    %v3118 = vunpack.c.l.b16 %v2483
    %v3119 = vunpack.c.h.b16 %v2483
    %v3120 = vunpack.c.l.b16 %v2484
    %v3121 = vunpack.c.h.b16 %v2484
    %v3122 = vunpack.c.l.b16 %v2485
    %v3123 = vunpack.c.h.b16 %v2485
    %v3124 = vunpack.c.l.b16 %v2486
    %v3125 = vunpack.c.h.b16 %v2486
    %v3126 = vunpack.c.l.b16 %v2487
    %v3127 = vunpack.c.h.b16 %v2487
    %v3128 = vunpack.c.l.b16 %v2488
    %v3129 = vunpack.c.h.b16 %v2488
    %v3130 = vunpack.c.l.b16 %v2489
    %v3131 = vunpack.c.h.b16 %v2489
    %v3132 = vunpack.c.l.b16 %v2490
    %v3133 = vunpack.c.h.b16 %v2490
    %v3134 = vunpack.c.l.b16 %v2491
    %v3135 = vunpack.c.h.b16 %v2491
    %v3136 = vunpack.c.l.b16 %v2492
    %v3137 = vunpack.c.h.b16 %v2492
    %v3138 = vunpack.c.l.b16 %v2493
    %v3139 = vunpack.c.h.b16 %v2493
    %v3140 = vunpack.c.l.b16 %v2494
    %v3141 = vunpack.c.h.b16 %v2494
    %v3142 = vunpack.c.l.b16 %v2495
    %v3143 = vunpack.c.h.b16 %v2495
    %v3144 = vunpack.c.l.b16 %v2496
    %v3145 = vunpack.c.h.b16 %v2496
    %v3146 = vunpack.c.l.b16 %v2497
    %v3147 = vunpack.c.h.b16 %v2497
    %v3148 = vunpack.c.l.b16 %v2498
    %v3149 = vunpack.c.h.b16 %v2498
    %v3150 = vunpack.c.l.b16 %v2499
    %v3151 = vunpack.c.h.b16 %v2499
    %v3152 = vunpack.c.l.b16 %v2500
    %v3153 = vunpack.c.h.b16 %v2500
    %v3154 = vunpack.c.l.b16 %v2501
    %v3155 = vunpack.c.h.b16 %v2501
    %v3156 = vunpack.c.l.b16 %v2502
    %v3157 = vunpack.c.h.b16 %v2502
    %v3158 = vunpack.c.l.b16 %v2503
    %v3159 = vunpack.c.h.b16 %v2503
    %v3160 = vunpack.c.l.b16 %v2504
    %v3161 = vunpack.c.h.b16 %v2504
    %v3162 = vunpack.c.l.b16 %v2505
    %v3163 = vunpack.c.h.b16 %v2505
    %v3164 = vunpack.c.l.b16 %v2506
    %v3165 = vunpack.c.h.b16 %v2506
    %v3166 = vunpack.c.l.b16 %v2507
    %v3167 = vunpack.c.h.b16 %v2507
    %v3168 = vunpack.c.l.b16 %v2508
    %v3169 = vunpack.c.h.b16 %v2508
    %v3170 = vunpack.c.l.b16 %v2509
    %v3171 = vunpack.c.h.b16 %v2509
    %v3172 = vunpack.c.l.b16 %v2510
    %v3173 = vunpack.c.h.b16 %v2510
    %v3174 = vunpack.c.l.b16 %v2511
    %v3175 = vunpack.c.h.b16 %v2511
    %v3176 = vunpack.c.l.b16 %v2512
    %v3177 = vunpack.c.h.b16 %v2512
    %v3178 = vunpack.c.l.b16 %v2513
    %v3179 = vunpack.c.h.b16 %v2513
    %v3180 = vunpack.c.l.b16 %v2514
    %v3181 = vunpack.c.h.b16 %v2514
    %v3182 = vunpack.c.l.b16 %v2515
    %v3183 = vunpack.c.h.b16 %v2515
    %v3184 = vunpack.c.l.b16 %v2516
    %v3185 = vunpack.c.h.b16 %v2516
    %v3186 = vunpack.c.l.b16 %v2517
    %v3187 = vunpack.c.h.b16 %v2517
    %v3188 = vunpack.c.l.b16 %v2518
    %v3189 = vunpack.c.h.b16 %v2518
    %v3190 = vunpack.c.l.b16 %v2519
    %v3191 = vunpack.c.h.b16 %v2519
    %v3192 = vunpack.c.l.b16 %v2520
    %v3193 = vunpack.c.h.b16 %v2520
    %v3194 = vunpack.c.l.b16 %v2521
    %v3195 = vunpack.c.h.b16 %v2521
    %v3196 = vunpack.c.l.b16 %v2522
    %v3197 = vunpack.c.h.b16 %v2522
    %v3198 = vunpack.c.l.b16 %v2523
    %v3199 = vunpack.c.h.b16 %v2523
    %v3200 = vunpack.c.l.b16 %v2524
    %v3201 = vunpack.c.h.b16 %v2524
    %v3202 = vunpack.c.l.b16 %v2525
    %v3203 = vunpack.c.h.b16 %v2525
    %v3204 = vunpack.c.l.b16 %v2526
    %v3205 = vunpack.c.h.b16 %v2526
    %v3206 = vunpack.c.l.b16 %v2527
    %v3207 = vunpack.c.h.b16 %v2527
    %v3208 = vunpack.c.l.b16 %v2528
    %v3209 = vunpack.c.h.b16 %v2528
    %v3210 = vunpack.c.l.b16 %v2529
    %v3211 = vunpack.c.h.b16 %v2529
    %v3212 = vunpack.c.l.b16 %v2530
    %v3213 = vunpack.c.h.b16 %v2530
    %v3214 = vunpack.c.l.b16 %v2531
    %v3215 = vunpack.c.h.b16 %v2531
    %v3216 = vunpack.c.l.b16 %v2532
    %v3217 = vunpack.c.h.b16 %v2532
    %v3218 = vunpack.c.l.b16 %v2533
    %v3219 = vunpack.c.h.b16 %v2533
    %v3220 = vunpack.c.l.b16 %v2534
    %v3221 = vunpack.c.h.b16 %v2534
    %v3222 = vunpack.c.l.b16 %v2535
    %v3223 = vunpack.c.h.b16 %v2535
    %v3224 = vunpack.c.l.b16 %v2536
    %v3225 = vunpack.c.h.b16 %v2536
    %v3226 = vunpack.c.l.b16 %v2537
    %v3227 = vunpack.c.h.b16 %v2537
    %v3228 = vunpack.c.l.b16 %v2538
    %v3229 = vunpack.c.h.b16 %v2538
    %v3230 = vunpack.c.l.b16 %v2539
    %v3231 = vunpack.c.h.b16 %v2539
    %v3232 = vunpack.c.l.b16 %v2540
    %v3233 = vunpack.c.h.b16 %v2540
    %v3234 = vunpack.c.l.b16 %v2541
    %v3235 = vunpack.c.h.b16 %v2541
    %v3236 = vunpack.c.l.b16 %v2542
    %v3237 = vunpack.c.h.b16 %v2542
    %v3238 = vunpack.c.l.b16 %v2543
    %v3239 = vunpack.c.h.b16 %v2543
    %v3240 = vunpack.c.l.b16 %v2544
    %v3241 = vunpack.c.h.b16 %v2544
    %v3242 = vunpack.c.l.b16 %v2545
    %v3243 = vunpack.c.h.b16 %v2545
    %v3244 = vunpack.c.l.b16 %v2546
    %v3245 = vunpack.c.h.b16 %v2546
    %v3246 = vunpack.c.l.b16 %v2547
    %v3247 = vunpack.c.h.b16 %v2547
    %v3248 = vunpack.c.l.b16 %v2548
    %v3249 = vunpack.c.h.b16 %v2548
    %v3250 = vunpack.c.l.b16 %v2549
    %v3251 = vunpack.c.h.b16 %v2549
    %v3252 = vunpack.c.l.b16 %v2550
    %v3253 = vunpack.c.h.b16 %v2550
    %v3254 = vunpack.c.l.b16 %v2551
    %v3255 = vunpack.c.h.b16 %v2551
    %v3256 = vunpack.c.l.b16 %v2552
    %v3257 = vunpack.c.h.b16 %v2552
    %v3258 = vunpack.c.l.b16 %v2553
    %v3259 = vunpack.c.h.b16 %v2553
    %v3260 = vunpack.c.l.b16 %v2554
    %v3261 = vunpack.c.h.b16 %v2554
    %v3262 = vunpack.c.l.b16 %v2555
    %v3263 = vunpack.c.h.b16 %v2555
    %v3264 = vunpack.c.l.b16 %v2556
    %v3265 = vunpack.c.h.b16 %v2556
    %v3266 = vunpack.c.l.b16 %v2557
    %v3267 = vunpack.c.h.b16 %v2557
    %v3268 = vunpack.c.l.b16 %v2558
    %v3269 = vunpack.c.h.b16 %v2558
    %v3270 = vunpack.c.l.b16 %v2559
    %v3271 = vunpack.c.h.b16 %v2559
    %v3272 = vunpack.c.l.b16 %v2560
    %v3273 = vunpack.c.h.b16 %v2560
    %v3274 = vunpack.c.l.b16 %v2561
    %v3275 = vunpack.c.h.b16 %v2561
    %v3276 = vunpack.c.l.b16 %v2562
    %v3277 = vunpack.c.h.b16 %v2562
    %v3278 = vunpack.c.l.b16 %v2563
    %v3279 = vunpack.c.h.b16 %v2563
    %v3280 = vunpack.c.l.b16 %v2564
    %v3281 = vunpack.c.h.b16 %v2564
    %v3282 = vunpack.c.l.b16 %v2565
    %v3283 = vunpack.c.h.b16 %v2565
    %v3284 = vunpack.c.l.b16 %v2566
    %v3285 = vunpack.c.h.b16 %v2566
    %v3286 = vunpack.c.l.b16 %v2567
    %v3287 = vunpack.c.h.b16 %v2567
    %v3288 = vunpack.c.l.b16 %v2568
    %v3289 = vunpack.c.h.b16 %v2568
    %v3290 = vunpack.c.l.b16 %v2569
    %v3291 = vunpack.c.h.b16 %v2569
    %v3292 = vunpack.c.l.b16 %v2570
    %v3293 = vunpack.c.h.b16 %v2570
    %v3294 = vunpack.c.l.b16 %v2571
    %v3295 = vunpack.c.h.b16 %v2571
    %v3296 = vunpack.c.l.b16 %v2572
    %v3297 = vunpack.c.h.b16 %v2572
    %v3298 = vunpack.c.l.b16 %v2573
    %v3299 = vunpack.c.h.b16 %v2573
    %v3300 = vunpack.c.l.b16 %v2574
    %v3301 = vunpack.c.h.b16 %v2574
    %v3302 = vunpack.c.l.b16 %v2575
    %v3303 = vunpack.c.h.b16 %v2575
    %v3304 = vunpack.c.l.b16 %v2576
    %v3305 = vunpack.c.h.b16 %v2576
    %v3306 = vunpack.c.l.b16 %v2577
    %v3307 = vunpack.c.h.b16 %v2577
    %v3308 = vunpack.c.l.b16 %v2578
    %v3309 = vunpack.c.h.b16 %v2578
    %v3310 = vunpack.c.l.b16 %v2579
    %v3311 = vunpack.c.h.b16 %v2579
    %v3312 = vunpack.c.l.b16 %v2580
    %v3313 = vunpack.c.h.b16 %v2580
    %v3314 = vunpack.c.l.b16 %v2581
    %v3315 = vunpack.c.h.b16 %v2581
    %v3316 = vunpack.c.l.b16 %v2582
    %v3317 = vunpack.c.h.b16 %v2582
    %v3318 = vunpack.c.l.b16 %v2583
    %v3319 = vunpack.c.h.b16 %v2583
    %v3320 = vunpack.c.l.b16 %v2584
    %v3321 = vunpack.c.h.b16 %v2584
    %v3322 = vunpack.c.l.b16 %v2585
    %v3323 = vunpack.c.h.b16 %v2585
    %v3324 = vunpack.c.l.b16 %v2586
    %v3325 = vunpack.c.h.b16 %v2586
    %v3326 = vunpack.c.l.b16 %v2587
    %v3327 = vunpack.c.h.b16 %v2587
    %v3328 = vunpack.c.l.b16 %v2588
    %v3329 = vunpack.c.h.b16 %v2588
    %v3330 = vunpack.c.l.b16 %v2589
    %v3331 = vunpack.c.h.b16 %v2589
    %v3332 = vunpack.c.l.b16 %v2590
    %v3333 = vunpack.c.h.b16 %v2590
    %v3334 = vunpack.c.l.b16 %v2591
    %v3335 = vunpack.c.h.b16 %v2591
    %v3336 = vunpack.c.l.b16 %v2592
    %v3337 = vunpack.c.h.b16 %v2592
    %v3338 = vunpack.c.l.b16 %v2593
    %v3339 = vunpack.c.h.b16 %v2593
    %v3340 = vunpack.c.l.b16 %v2594
    %v3341 = vunpack.c.h.b16 %v2594
    %v3342 = vunpack.c.l.b16 %v2595
    %v3343 = vunpack.c.h.b16 %v2595
    %v3344 = vunpack.c.l.b16 %v2596
    %v3345 = vunpack.c.h.b16 %v2596
    %v3346 = vunpack.c.l.b16 %v2597
    %v3347 = vunpack.c.h.b16 %v2597
    %v3348 = vunpack.c.l.b16 %v2598
    %v3349 = vunpack.c.h.b16 %v2598
    %v3350 = vunpack.c.l.b16 %v2599
    %v3351 = vunpack.c.h.b16 %v2599
    %v3352 = vunpack.c.l.b16 %v2600
    %v3353 = vunpack.c.h.b16 %v2600
    %v3354 = vunpack.c.l.b16 %v2601
    %v3355 = vunpack.c.h.b16 %v2601
    %v3356 = vunpack.c.l.b16 %v2602
    %v3357 = vunpack.c.h.b16 %v2602
    %v3358 = vunpack.c.l.b16 %v2603
    %v3359 = vunpack.c.h.b16 %v2603
    %v3360 = vunpack.c.l.b16 %v2604
    %v3361 = vunpack.c.h.b16 %v2604
    %v3362 = vunpack.c.l.b16 %v2605
    %v3363 = vunpack.c.h.b16 %v2605
    %v3364 = vunpack.c.l.b16 %v2606
    %v3365 = vunpack.c.h.b16 %v2606
    %v3366 = vunpack.c.l.b16 %v2607
    %v3367 = vunpack.c.h.b16 %v2607
    %v3368 = vunpack.c.l.b16 %v2608
    %v3369 = vunpack.c.h.b16 %v2608
    %v3370 = vunpack.c.l.b16 %v2609
    %v3371 = vunpack.c.h.b16 %v2609
    %v3372 = vunpack.c.l.b16 %v2610
    %v3373 = vunpack.c.h.b16 %v2610
    %v3374 = vunpack.c.l.b16 %v2611
    %v3375 = vunpack.c.h.b16 %v2611
    %v3376 = vunpack.c.l.b16 %v2612
    %v3377 = vunpack.c.h.b16 %v2612
    %v3378 = vunpack.c.l.b16 %v2613
    %v3379 = vunpack.c.h.b16 %v2613
    %v3380 = vunpack.c.l.b16 %v2614
    %v3381 = vunpack.c.h.b16 %v2614
    %v3382 = vunpack.c.l.b16 %v2615
    %v3383 = vunpack.c.h.b16 %v2615
    %v3384 = vunpack.c.l.b16 %v2616
    %v3385 = vunpack.c.h.b16 %v2616
    %v3386 = vunpack.c.l.b16 %v2617
    %v3387 = vunpack.c.h.b16 %v2617
    %v3388 = vunpack.c.l.b16 %v2618
    %v3389 = vunpack.c.h.b16 %v2618
    %v3390 = vunpack.c.l.b16 %v2619
    %v3391 = vunpack.c.h.b16 %v2619
    %v3392 = vunpack.c.l.b16 %v2620
    %v3393 = vunpack.c.h.b16 %v2620
    %v3394 = vunpack.c.l.b16 %v2621
    %v3395 = vunpack.c.h.b16 %v2621
    %v3396 = vunpack.c.l.b16 %v2622
    %v3397 = vunpack.c.h.b16 %v2622
    %v3398 = vunpack.c.l.b16 %v2623
    %v3399 = vunpack.c.h.b16 %v2623
    %v3400 = vunpack.c.l.b16 %v2624
    %v3401 = vunpack.c.h.b16 %v2624
    %v3402 = vunpack.c.l.b16 %v2625
    %v3403 = vunpack.c.h.b16 %v2625
    %v3404 = vunpack.c.l.b16 %v2626
    %v3405 = vunpack.c.h.b16 %v2626
    %v3406 = vunpack.c.l.b16 %v2627
    %v3407 = vunpack.c.h.b16 %v2627
    %v3408 = vpack.c.b16 %v2898, %v2896
    %v3409 = vpack.c.b16 %v2899, %v2897
    %v3410 = vpack.c.b16 %v2902, %v2900
    %v3411 = vpack.c.b16 %v2903, %v2901
    %v3412 = vpack.c.b16 %v2906, %v2904
    %v3413 = vpack.c.b16 %v2907, %v2905
    %v3414 = vpack.c.b16 %v2910, %v2908
    %v3415 = vpack.c.b16 %v2911, %v2909
    %v3416 = vpack.c.b16 %v2914, %v2912
    %v3417 = vpack.c.b16 %v2915, %v2913
    %v3418 = vpack.c.b16 %v2918, %v2916
    %v3419 = vpack.c.b16 %v2919, %v2917
    %v3420 = vpack.c.b16 %v2922, %v2920
    %v3421 = vpack.c.b16 %v2923, %v2921
    %v3422 = vpack.c.b16 %v2926, %v2924
    %v3423 = vpack.c.b16 %v2927, %v2925
    %v3424 = vpack.c.b16 %v2930, %v2928
    %v3425 = vpack.c.b16 %v2931, %v2929
    %v3426 = vpack.c.b16 %v2934, %v2932
    %v3427 = vpack.c.b16 %v2935, %v2933
    %v3428 = vpack.c.b16 %v2938, %v2936
    %v3429 = vpack.c.b16 %v2939, %v2937
    %v3430 = vpack.c.b16 %v2942, %v2940
    %v3431 = vpack.c.b16 %v2943, %v2941
    %v3432 = vpack.c.b16 %v2946, %v2944
    %v3433 = vpack.c.b16 %v2947, %v2945
    %v3434 = vpack.c.b16 %v2950, %v2948
    %v3435 = vpack.c.b16 %v2951, %v2949
    %v3436 = vpack.c.b16 %v2954, %v2952
    %v3437 = vpack.c.b16 %v2955, %v2953
    %v3438 = vpack.c.b16 %v2958, %v2956
    %v3439 = vpack.c.b16 %v2959, %v2957
    %v3440 = vpack.c.b16 %v2962, %v2960
    %v3441 = vpack.c.b16 %v2963, %v2961
    %v3442 = vpack.c.b16 %v2966, %v2964
    %v3443 = vpack.c.b16 %v2967, %v2965
    %v3444 = vpack.c.b16 %v2970, %v2968
    %v3445 = vpack.c.b16 %v2971, %v2969
    %v3446 = vpack.c.b16 %v2974, %v2972
    %v3447 = vpack.c.b16 %v2975, %v2973
    %v3448 = vpack.c.b16 %v2978, %v2976
    %v3449 = vpack.c.b16 %v2979, %v2977
    %v3450 = vpack.c.b16 %v2982, %v2980
    %v3451 = vpack.c.b16 %v2983, %v2981
    %v3452 = vpack.c.b16 %v2986, %v2984
    %v3453 = vpack.c.b16 %v2987, %v2985
    %v3454 = vpack.c.b16 %v2990, %v2988
    %v3455 = vpack.c.b16 %v2991, %v2989
    %v3456 = vpack.c.b16 %v2994, %v2992
    %v3457 = vpack.c.b16 %v2995, %v2993
    %v3458 = vpack.c.b16 %v2998, %v2996
    %v3459 = vpack.c.b16 %v2999, %v2997
    %v3460 = vpack.c.b16 %v3002, %v3000
    %v3461 = vpack.c.b16 %v3003, %v3001
    %v3462 = vpack.c.b16 %v3006, %v3004
    %v3463 = vpack.c.b16 %v3007, %v3005
    %v3464 = vpack.c.b16 %v3010, %v3008
    %v3465 = vpack.c.b16 %v3011, %v3009
    %v3466 = vpack.c.b16 %v3014, %v3012
    %v3467 = vpack.c.b16 %v3015, %v3013
    %v3468 = vpack.c.b16 %v3018, %v3016
    %v3469 = vpack.c.b16 %v3019, %v3017
    %v3470 = vpack.c.b16 %v3022, %v3020
    %v3471 = vpack.c.b16 %v3023, %v3021
    %v3472 = vpack.c.b16 %v3026, %v3024
    %v3473 = vpack.c.b16 %v3027, %v3025
    %v3474 = vpack.c.b16 %v3030, %v3028
    %v3475 = vpack.c.b16 %v3031, %v3029
    %v3476 = vpack.c.b16 %v3034, %v3032
    %v3477 = vpack.c.b16 %v3035, %v3033
    %v3478 = vpack.c.b16 %v3038, %v3036
    %v3479 = vpack.c.b16 %v3039, %v3037
    %v3480 = vpack.c.b16 %v3042, %v3040
    %v3481 = vpack.c.b16 %v3043, %v3041
    %v3482 = vpack.c.b16 %v3046, %v3044
    %v3483 = vpack.c.b16 %v3047, %v3045
    %v3484 = vpack.c.b16 %v3050, %v3048
    %v3485 = vpack.c.b16 %v3051, %v3049
    %v3486 = vpack.c.b16 %v3054, %v3052
    %v3487 = vpack.c.b16 %v3055, %v3053
    %v3488 = vpack.c.b16 %v3058, %v3056
    %v3489 = vpack.c.b16 %v3059, %v3057
    %v3490 = vpack.c.b16 %v3062, %v3060
    %v3491 = vpack.c.b16 %v3063, %v3061
    %v3492 = vpack.c.b16 %v3066, %v3064
    %v3493 = vpack.c.b16 %v3067, %v3065
    %v3494 = vpack.c.b16 %v3070, %v3068
    %v3495 = vpack.c.b16 %v3071, %v3069
    %v3496 = vpack.c.b16 %v3074, %v3072
    %v3497 = vpack.c.b16 %v3075, %v3073
    %v3498 = vpack.c.b16 %v3078, %v3076
    %v3499 = vpack.c.b16 %v3079, %v3077
    %v3500 = vpack.c.b16 %v3082, %v3080
    %v3501 = vpack.c.b16 %v3083, %v3081
    %v3502 = vpack.c.b16 %v3086, %v3084
    %v3503 = vpack.c.b16 %v3087, %v3085
    %v3504 = vpack.c.b16 %v3090, %v3088
    %v3505 = vpack.c.b16 %v3091, %v3089
    %v3506 = vpack.c.b16 %v3094, %v3092
    %v3507 = vpack.c.b16 %v3095, %v3093
    %v3508 = vpack.c.b16 %v3098, %v3096
    %v3509 = vpack.c.b16 %v3099, %v3097
    %v3510 = vpack.c.b16 %v3102, %v3100
    %v3511 = vpack.c.b16 %v3103, %v3101
    %v3512 = vpack.c.b16 %v3106, %v3104
    %v3513 = vpack.c.b16 %v3107, %v3105
    %v3514 = vpack.c.b16 %v3110, %v3108
    %v3515 = vpack.c.b16 %v3111, %v3109
    %v3516 = vpack.c.b16 %v3114, %v3112
    %v3517 = vpack.c.b16 %v3115, %v3113
    %v3518 = vpack.c.b16 %v3118, %v3116
    %v3519 = vpack.c.b16 %v3119, %v3117
    %v3520 = vpack.c.b16 %v3122, %v3120
    %v3521 = vpack.c.b16 %v3123, %v3121
    %v3522 = vpack.c.b16 %v3126, %v3124
    %v3523 = vpack.c.b16 %v3127, %v3125
    %v3524 = vpack.c.b16 %v3130, %v3128
    %v3525 = vpack.c.b16 %v3131, %v3129
    %v3526 = vpack.c.b16 %v3134, %v3132
    %v3527 = vpack.c.b16 %v3135, %v3133
    %v3528 = vpack.c.b16 %v3138, %v3136
    %v3529 = vpack.c.b16 %v3139, %v3137
    %v3530 = vpack.c.b16 %v3142, %v3140
    %v3531 = vpack.c.b16 %v3143, %v3141
    %v3532 = vpack.c.b16 %v3146, %v3144
    %v3533 = vpack.c.b16 %v3147, %v3145
    %v3534 = vpack.c.b16 %v3150, %v3148
    %v3535 = vpack.c.b16 %v3151, %v3149
    %v3536 = vpack.c.b16 %v3154, %v3152
    %v3537 = vpack.c.b16 %v3155, %v3153
    %v3538 = vpack.c.b16 %v3158, %v3156
    %v3539 = vpack.c.b16 %v3159, %v3157
    %v3540 = vpack.c.b16 %v3162, %v3160
    %v3541 = vpack.c.b16 %v3163, %v3161
    %v3542 = vpack.c.b16 %v3166, %v3164
    %v3543 = vpack.c.b16 %v3167, %v3165
    %v3544 = vpack.c.b16 %v3170, %v3168
    %v3545 = vpack.c.b16 %v3171, %v3169
    %v3546 = vpack.c.b16 %v3174, %v3172
    %v3547 = vpack.c.b16 %v3175, %v3173
    %v3548 = vpack.c.b16 %v3178, %v3176
    %v3549 = vpack.c.b16 %v3179, %v3177
    %v3550 = vpack.c.b16 %v3182, %v3180
    %v3551 = vpack.c.b16 %v3183, %v3181
    %v3552 = vpack.c.b16 %v3186, %v3184
    %v3553 = vpack.c.b16 %v3187, %v3185
    %v3554 = vpack.c.b16 %v3190, %v3188
    %v3555 = vpack.c.b16 %v3191, %v3189
    %v3556 = vpack.c.b16 %v3194, %v3192
    %v3557 = vpack.c.b16 %v3195, %v3193
    %v3558 = vpack.c.b16 %v3198, %v3196
    %v3559 = vpack.c.b16 %v3199, %v3197
    %v3560 = vpack.c.b16 %v3202, %v3200
    %v3561 = vpack.c.b16 %v3203, %v3201
    %v3562 = vpack.c.b16 %v3206, %v3204
    %v3563 = vpack.c.b16 %v3207, %v3205
    %v3564 = vpack.c.b16 %v3210, %v3208
    %v3565 = vpack.c.b16 %v3211, %v3209
    %v3566 = vpack.c.b16 %v3214, %v3212
    %v3567 = vpack.c.b16 %v3215, %v3213
    %v3568 = vpack.c.b16 %v3218, %v3216
    %v3569 = vpack.c.b16 %v3219, %v3217
    %v3570 = vpack.c.b16 %v3222, %v3220
    %v3571 = vpack.c.b16 %v3223, %v3221
    %v3572 = vpack.c.b16 %v3226, %v3224
    %v3573 = vpack.c.b16 %v3227, %v3225
    %v3574 = vpack.c.b16 %v3230, %v3228
    %v3575 = vpack.c.b16 %v3231, %v3229
    %v3576 = vpack.c.b16 %v3234, %v3232
    %v3577 = vpack.c.b16 %v3235, %v3233
    %v3578 = vpack.c.b16 %v3238, %v3236
    %v3579 = vpack.c.b16 %v3239, %v3237
    %v3580 = vpack.c.b16 %v3242, %v3240
    %v3581 = vpack.c.b16 %v3243, %v3241
    %v3582 = vpack.c.b16 %v3246, %v3244
    %v3583 = vpack.c.b16 %v3247, %v3245
    %v3584 = vpack.c.b16 %v3250, %v3248
    %v3585 = vpack.c.b16 %v3251, %v3249
    %v3586 = vpack.c.b16 %v3254, %v3252
    %v3587 = vpack.c.b16 %v3255, %v3253
    %v3588 = vpack.c.b16 %v3258, %v3256
    %v3589 = vpack.c.b16 %v3259, %v3257
    %v3590 = vpack.c.b16 %v3262, %v3260
    %v3591 = vpack.c.b16 %v3263, %v3261
    %v3592 = vpack.c.b16 %v3266, %v3264
    %v3593 = vpack.c.b16 %v3267, %v3265
    %v3594 = vpack.c.b16 %v3270, %v3268
    %v3595 = vpack.c.b16 %v3271, %v3269
    %v3596 = vpack.c.b16 %v3274, %v3272
    %v3597 = vpack.c.b16 %v3275, %v3273
    %v3598 = vpack.c.b16 %v3278, %v3276
    %v3599 = vpack.c.b16 %v3279, %v3277
    %v3600 = vpack.c.b16 %v3282, %v3280
    %v3601 = vpack.c.b16 %v3283, %v3281
    %v3602 = vpack.c.b16 %v3286, %v3284
    %v3603 = vpack.c.b16 %v3287, %v3285
    %v3604 = vpack.c.b16 %v3290, %v3288
    %v3605 = vpack.c.b16 %v3291, %v3289
    %v3606 = vpack.c.b16 %v3294, %v3292
    %v3607 = vpack.c.b16 %v3295, %v3293
    %v3608 = vpack.c.b16 %v3298, %v3296
    %v3609 = vpack.c.b16 %v3299, %v3297
    %v3610 = vpack.c.b16 %v3302, %v3300
    %v3611 = vpack.c.b16 %v3303, %v3301
    %v3612 = vpack.c.b16 %v3306, %v3304
    %v3613 = vpack.c.b16 %v3307, %v3305
    %v3614 = vpack.c.b16 %v3310, %v3308
    %v3615 = vpack.c.b16 %v3311, %v3309
    %v3616 = vpack.c.b16 %v3314, %v3312
    %v3617 = vpack.c.b16 %v3315, %v3313
    %v3618 = vpack.c.b16 %v3318, %v3316
    %v3619 = vpack.c.b16 %v3319, %v3317
    %v3620 = vpack.c.b16 %v3322, %v3320
    %v3621 = vpack.c.b16 %v3323, %v3321
    %v3622 = vpack.c.b16 %v3326, %v3324
    %v3623 = vpack.c.b16 %v3327, %v3325
    %v3624 = vpack.c.b16 %v3330, %v3328
    %v3625 = vpack.c.b16 %v3331, %v3329
    %v3626 = vpack.c.b16 %v3334, %v3332
    %v3627 = vpack.c.b16 %v3335, %v3333
    %v3628 = vpack.c.b16 %v3338, %v3336
    %v3629 = vpack.c.b16 %v3339, %v3337
    %v3630 = vpack.c.b16 %v3342, %v3340
    %v3631 = vpack.c.b16 %v3343, %v3341
    %v3632 = vpack.c.b16 %v3346, %v3344
    %v3633 = vpack.c.b16 %v3347, %v3345
    %v3634 = vpack.c.b16 %v3350, %v3348
    %v3635 = vpack.c.b16 %v3351, %v3349
    %v3636 = vpack.c.b16 %v3354, %v3352
    %v3637 = vpack.c.b16 %v3355, %v3353
    %v3638 = vpack.c.b16 %v3358, %v3356
    %v3639 = vpack.c.b16 %v3359, %v3357
    %v3640 = vpack.c.b16 %v3362, %v3360
    %v3641 = vpack.c.b16 %v3363, %v3361
    %v3642 = vpack.c.b16 %v3366, %v3364
    %v3643 = vpack.c.b16 %v3367, %v3365
    %v3644 = vpack.c.b16 %v3370, %v3368
    %v3645 = vpack.c.b16 %v3371, %v3369
    %v3646 = vpack.c.b16 %v3374, %v3372
    %v3647 = vpack.c.b16 %v3375, %v3373
    %v3648 = vpack.c.b16 %v3378, %v3376
    %v3649 = vpack.c.b16 %v3379, %v3377
    %v3650 = vpack.c.b16 %v3382, %v3380
    %v3651 = vpack.c.b16 %v3383, %v3381
    %v3652 = vpack.c.b16 %v3386, %v3384
    %v3653 = vpack.c.b16 %v3387, %v3385
    %v3654 = vpack.c.b16 %v3390, %v3388
    %v3655 = vpack.c.b16 %v3391, %v3389
    %v3656 = vpack.c.b16 %v3394, %v3392
    %v3657 = vpack.c.b16 %v3395, %v3393
    %v3658 = vpack.c.b16 %v3398, %v3396
    %v3659 = vpack.c.b16 %v3399, %v3397
    %v3660 = vpack.c.b16 %v3402, %v3400
    %v3661 = vpack.c.b16 %v3403, %v3401
    %v3662 = vpack.c.b16 %v3406, %v3404
    %v3663 = vpack.c.b16 %v3407, %v3405
    %3920 = vmatprep.subr.bf16.mxu0 %v3409
    %3921 = vmatpush1.bf16.msra.mxu0 %v3408
    %3922 = vmatprep.subr.bf16.mxu0 %v3411
    %3923 = vmatpush1.bf16.msra.mxu0 %v3410
    %3924 = vmatprep.subr.bf16.mxu0 %v3413
    %3925 = vmatpush1.bf16.msra.mxu0 %v3412
    %3926 = vmatprep.subr.bf16.mxu0 %v3415
    %3927 = vmatpush1.bf16.msra.mxu0 %v3414
    %3928 = vmatprep.subr.bf16.mxu0 %v3417
    %3929 = vmatpush1.bf16.msra.mxu0 %v3416
    %3930 = vmatprep.subr.bf16.mxu0 %v3419
    %3931 = vmatpush1.bf16.msra.mxu0 %v3418
    %3932 = vmatprep.subr.bf16.mxu0 %v3421
    %3933 = vmatpush1.bf16.msra.mxu0 %v3420
    %3934 = vmatprep.subr.bf16.mxu0 %v3423
    %3935 = vmatpush1.bf16.msra.mxu0 %v3422
    %3936 = vmatprep.subr.bf16.mxu0 %v3425
    %3937 = vmatpush1.bf16.msra.mxu0 %v3424
    %3938 = vmatprep.subr.bf16.mxu0 %v3427
    %3939 = vmatpush1.bf16.msra.mxu0 %v3426
    %3940 = vmatprep.subr.bf16.mxu0 %v3429
    %3941 = vmatpush1.bf16.msra.mxu0 %v3428
    %3942 = vmatprep.subr.bf16.mxu0 %v3431
    %3943 = vmatpush1.bf16.msra.mxu0 %v3430
    %3944 = vmatprep.subr.bf16.mxu0 %v3433
    %3945 = vmatpush1.bf16.msra.mxu0 %v3432
    %3946 = vmatprep.subr.bf16.mxu0 %v3435
    %3947 = vmatpush1.bf16.msra.mxu0 %v3434
    %3948 = vmatprep.subr.bf16.mxu0 %v3437
    %3949 = vmatpush1.bf16.msra.mxu0 %v3436
    %3950 = vmatprep.subr.bf16.mxu0 %v3439
    %3951 = vmatpush1.bf16.msra.mxu0 %v3438
    %3952 = vmatprep.mubr.bf16.mxu0 %v2357
    %3953 = vmatmul.mubr.bf16.gmra.mrb[0].mxu0 %v2356
    %v3954 = vpop.f32.mrb[0].mxu0
    %v3955 = vadd.f32 %v2633, %v3954
    %v3956 = vpop.f32.mrb[0].mxu0
    %v3957 = vadd.f32 %v2637, %v3956
    %v3958 = vpop.f32.mrb[0].mxu0
    %v3959 = vpop.f32.mrb[0].mxu0
    %3960 = vdwg.mxu0
    %3961 = vmatprep.subr.bf16.mxu0 %v3441
    %3962 = vmatpush1.bf16.msra.mxu0 %v3440
    %3963 = vmatprep.subr.bf16.mxu0 %v3443
    %3964 = vmatpush1.bf16.msra.mxu0 %v3442
    %3965 = vmatprep.subr.bf16.mxu0 %v3445
    %3966 = vmatpush1.bf16.msra.mxu0 %v3444
    %3967 = vmatprep.subr.bf16.mxu0 %v3447
    %3968 = vmatpush1.bf16.msra.mxu0 %v3446
    %3969 = vmatprep.subr.bf16.mxu0 %v3449
    %3970 = vmatpush1.bf16.msra.mxu0 %v3448
    %3971 = vmatprep.subr.bf16.mxu0 %v3451
    %3972 = vmatpush1.bf16.msra.mxu0 %v3450
    %3973 = vmatprep.subr.bf16.mxu0 %v3453
    %3974 = vmatpush1.bf16.msra.mxu0 %v3452
    %3975 = vmatprep.subr.bf16.mxu0 %v3455
    %3976 = vmatpush1.bf16.msra.mxu0 %v3454
    %3977 = vmatprep.subr.bf16.mxu0 %v3457
    %3978 = vmatpush1.bf16.msra.mxu0 %v3456
    %3979 = vmatprep.subr.bf16.mxu0 %v3459
    %3980 = vmatpush1.bf16.msra.mxu0 %v3458
    %3981 = vmatprep.subr.bf16.mxu0 %v3461
    %3982 = vmatpush1.bf16.msra.mxu0 %v3460
    %3983 = vmatprep.subr.bf16.mxu0 %v3463
    %3984 = vmatpush1.bf16.msra.mxu0 %v3462
    %3985 = vmatprep.subr.bf16.mxu0 %v3465
    %3986 = vmatpush1.bf16.msra.mxu0 %v3464
    %3987 = vmatprep.subr.bf16.mxu0 %v3467
    %3988 = vmatpush1.bf16.msra.mxu0 %v3466
    %3989 = vmatprep.subr.bf16.mxu0 %v3469
    %3990 = vmatpush1.bf16.msra.mxu0 %v3468
    %3991 = vmatprep.subr.bf16.mxu0 %v3471
    %3992 = vmatpush1.bf16.msra.mxu0 %v3470
    %3993 = vmatprep.mubr.bf16.mxu0 %v2359
    %3994 = vmatmul.mubr.bf16.gmra.mrb[0].mxu0 %v2358
    %v3995 = vpop.f32.mrb[0].mxu0
    %v3996 = vadd.f32 %v3955, %v3995
    %v3997 = vpop.f32.mrb[0].mxu0
    %v3998 = vadd.f32 %v3957, %v3997
    %v3999 = vpop.f32.mrb[0].mxu0
    %v4000 = vpop.f32.mrb[0].mxu0
    %4001 = vdwg.mxu0
    %4002 = vmatprep.subr.bf16.mxu0 %v3473
    %4003 = vmatpush1.bf16.msra.mxu0 %v3472
    %4004 = vmatprep.subr.bf16.mxu0 %v3475
    %4005 = vmatpush1.bf16.msra.mxu0 %v3474
    %4006 = vmatprep.subr.bf16.mxu0 %v3477
    %4007 = vmatpush1.bf16.msra.mxu0 %v3476
    %4008 = vmatprep.subr.bf16.mxu0 %v3479
    %4009 = vmatpush1.bf16.msra.mxu0 %v3478
    %4010 = vmatprep.subr.bf16.mxu0 %v3481
    %4011 = vmatpush1.bf16.msra.mxu0 %v3480
    %4012 = vmatprep.subr.bf16.mxu0 %v3483
    %4013 = vmatpush1.bf16.msra.mxu0 %v3482
    %4014 = vmatprep.subr.bf16.mxu0 %v3485
    %4015 = vmatpush1.bf16.msra.mxu0 %v3484
    %4016 = vmatprep.subr.bf16.mxu0 %v3487
    %4017 = vmatpush1.bf16.msra.mxu0 %v3486
    %4018 = vmatprep.subr.bf16.mxu0 %v3489
    %4019 = vmatpush1.bf16.msra.mxu0 %v3488
    %4020 = vmatprep.subr.bf16.mxu0 %v3491
    %4021 = vmatpush1.bf16.msra.mxu0 %v3490
    %4022 = vmatprep.subr.bf16.mxu0 %v3493
    %4023 = vmatpush1.bf16.msra.mxu0 %v3492
    %4024 = vmatprep.subr.bf16.mxu0 %v3495
    %4025 = vmatpush1.bf16.msra.mxu0 %v3494
    %4026 = vmatprep.subr.bf16.mxu0 %v3497
    %4027 = vmatpush1.bf16.msra.mxu0 %v3496
    %4028 = vmatprep.subr.bf16.mxu0 %v3499
    %4029 = vmatpush1.bf16.msra.mxu0 %v3498
    %4030 = vmatprep.subr.bf16.mxu0 %v3501
    %4031 = vmatpush1.bf16.msra.mxu0 %v3500
    %4032 = vmatprep.subr.bf16.mxu0 %v3503
    %4033 = vmatpush1.bf16.msra.mxu0 %v3502
    %4034 = vmatprep.mubr.bf16.mxu0 %v2361
    %4035 = vmatmul.mubr.bf16.gmra.mrb[0].mxu0 %v2360
    %v4036 = vpop.f32.mrb[0].mxu0
    %v4037 = vadd.f32 %v3996, %v4036
    %v4038 = vpop.f32.mrb[0].mxu0
    %v4039 = vadd.f32 %v3998, %v4038
    %v4040 = vpop.f32.mrb[0].mxu0
    %v4041 = vpop.f32.mrb[0].mxu0
    %4042 = vdwg.mxu0
    %4043 = vmatprep.subr.bf16.mxu0 %v3505
    %4044 = vmatpush1.bf16.msra.mxu0 %v3504
    %4045 = vmatprep.subr.bf16.mxu0 %v3507
    %4046 = vmatpush1.bf16.msra.mxu0 %v3506
    %4047 = vmatprep.subr.bf16.mxu0 %v3509
    %4048 = vmatpush1.bf16.msra.mxu0 %v3508
    %4049 = vmatprep.subr.bf16.mxu0 %v3511
    %4050 = vmatpush1.bf16.msra.mxu0 %v3510
    %4051 = vmatprep.subr.bf16.mxu0 %v3513
    %4052 = vmatpush1.bf16.msra.mxu0 %v3512
    %4053 = vmatprep.subr.bf16.mxu0 %v3515
    %4054 = vmatpush1.bf16.msra.mxu0 %v3514
    %4055 = vmatprep.subr.bf16.mxu0 %v3517
    %4056 = vmatpush1.bf16.msra.mxu0 %v3516
    %4057 = vmatprep.subr.bf16.mxu0 %v3519
    %4058 = vmatpush1.bf16.msra.mxu0 %v3518
    %4059 = vmatprep.subr.bf16.mxu0 %v3521
    %4060 = vmatpush1.bf16.msra.mxu0 %v3520
    %4061 = vmatprep.subr.bf16.mxu0 %v3523
    %4062 = vmatpush1.bf16.msra.mxu0 %v3522
    %4063 = vmatprep.subr.bf16.mxu0 %v3525
    %4064 = vmatpush1.bf16.msra.mxu0 %v3524
    %4065 = vmatprep.subr.bf16.mxu0 %v3527
    %4066 = vmatpush1.bf16.msra.mxu0 %v3526
    %4067 = vmatprep.subr.bf16.mxu0 %v3529
    %4068 = vmatpush1.bf16.msra.mxu0 %v3528
    %4069 = vmatprep.subr.bf16.mxu0 %v3531
    %4070 = vmatpush1.bf16.msra.mxu0 %v3530
    %4071 = vmatprep.subr.bf16.mxu0 %v3533
    %4072 = vmatpush1.bf16.msra.mxu0 %v3532
    %4073 = vmatprep.subr.bf16.mxu0 %v3535
    %4074 = vmatpush1.bf16.msra.mxu0 %v3534
    %4075 = vmatprep.mubr.bf16.mxu0 %v2363
    %4076 = vmatmul.mubr.bf16.gmra.mrb[0].mxu0 %v2362
    %v4077 = vpop.f32.mrb[0].mxu0
    %v4078 = vadd.f32 %v4037, %v4077
    %v4079 = vpop.f32.mrb[0].mxu0
    %v4080 = vadd.f32 %v4039, %v4079
    %v4081 = vpop.f32.mrb[0].mxu0
    %v4082 = vpop.f32.mrb[0].mxu0
    %4083 = vdwg.mxu0
    %4084 = vmatprep.subr.bf16.mxu0 %v3537
    %4085 = vmatpush1.bf16.msra.mxu0 %v3536
    %4086 = vmatprep.subr.bf16.mxu0 %v3539
    %4087 = vmatpush1.bf16.msra.mxu0 %v3538
    %4088 = vmatprep.subr.bf16.mxu0 %v3541
    %4089 = vmatpush1.bf16.msra.mxu0 %v3540
    %4090 = vmatprep.subr.bf16.mxu0 %v3543
    %4091 = vmatpush1.bf16.msra.mxu0 %v3542
    %4092 = vmatprep.subr.bf16.mxu0 %v3545
    %4093 = vmatpush1.bf16.msra.mxu0 %v3544
    %4094 = vmatprep.subr.bf16.mxu0 %v3547
    %4095 = vmatpush1.bf16.msra.mxu0 %v3546
    %4096 = vmatprep.subr.bf16.mxu0 %v3549
    %4097 = vmatpush1.bf16.msra.mxu0 %v3548
    %4098 = vmatprep.subr.bf16.mxu0 %v3551
    %4099 = vmatpush1.bf16.msra.mxu0 %v3550
    %4100 = vmatprep.subr.bf16.mxu0 %v3553
    %4101 = vmatpush1.bf16.msra.mxu0 %v3552
    %4102 = vmatprep.subr.bf16.mxu0 %v3555
    %4103 = vmatpush1.bf16.msra.mxu0 %v3554
    %4104 = vmatprep.subr.bf16.mxu0 %v3557
    %4105 = vmatpush1.bf16.msra.mxu0 %v3556
    %4106 = vmatprep.subr.bf16.mxu0 %v3559
    %4107 = vmatpush1.bf16.msra.mxu0 %v3558
    %4108 = vmatprep.subr.bf16.mxu0 %v3561
    %4109 = vmatpush1.bf16.msra.mxu0 %v3560
    %4110 = vmatprep.subr.bf16.mxu0 %v3563
    %4111 = vmatpush1.bf16.msra.mxu0 %v3562
    %4112 = vmatprep.subr.bf16.mxu0 %v3565
    %4113 = vmatpush1.bf16.msra.mxu0 %v3564
    %4114 = vmatprep.subr.bf16.mxu0 %v3567
    %4115 = vmatpush1.bf16.msra.mxu0 %v3566
    %4116 = vmatprep.mubr.bf16.mxu0 %v2365
    %4117 = vmatmul.mubr.bf16.gmra.mrb[0].mxu0 %v2364
    %v4118 = vpop.f32.mrb[0].mxu0
    %v4119 = vadd.f32 %v4078, %v4118
    %v4120 = vpop.f32.mrb[0].mxu0
    %v4121 = vadd.f32 %v4080, %v4120
    %v4122 = vpop.f32.mrb[0].mxu0
    %v4123 = vpop.f32.mrb[0].mxu0
    %4124 = vdwg.mxu0
    %4125 = vmatprep.subr.bf16.mxu0 %v3569
    %4126 = vmatpush1.bf16.msra.mxu0 %v3568
    %4127 = vmatprep.subr.bf16.mxu0 %v3571
    %4128 = vmatpush1.bf16.msra.mxu0 %v3570
    %4129 = vmatprep.subr.bf16.mxu0 %v3573
    %4130 = vmatpush1.bf16.msra.mxu0 %v3572
    %4131 = vmatprep.subr.bf16.mxu0 %v3575
    %4132 = vmatpush1.bf16.msra.mxu0 %v3574
    %4133 = vmatprep.subr.bf16.mxu0 %v3577
    %4134 = vmatpush1.bf16.msra.mxu0 %v3576
    %4135 = vmatprep.subr.bf16.mxu0 %v3579
    %4136 = vmatpush1.bf16.msra.mxu0 %v3578
    %4137 = vmatprep.subr.bf16.mxu0 %v3581
    %4138 = vmatpush1.bf16.msra.mxu0 %v3580
    %4139 = vmatprep.subr.bf16.mxu0 %v3583
    %4140 = vmatpush1.bf16.msra.mxu0 %v3582
    %4141 = vmatprep.subr.bf16.mxu0 %v3585
    %4142 = vmatpush1.bf16.msra.mxu0 %v3584
    %4143 = vmatprep.subr.bf16.mxu0 %v3587
    %4144 = vmatpush1.bf16.msra.mxu0 %v3586
    %4145 = vmatprep.subr.bf16.mxu0 %v3589
    %4146 = vmatpush1.bf16.msra.mxu0 %v3588
    %4147 = vmatprep.subr.bf16.mxu0 %v3591
    %4148 = vmatpush1.bf16.msra.mxu0 %v3590
    %4149 = vmatprep.subr.bf16.mxu0 %v3593
    %4150 = vmatpush1.bf16.msra.mxu0 %v3592
    %4151 = vmatprep.subr.bf16.mxu0 %v3595
    %4152 = vmatpush1.bf16.msra.mxu0 %v3594
    %4153 = vmatprep.subr.bf16.mxu0 %v3597
    %4154 = vmatpush1.bf16.msra.mxu0 %v3596
    %4155 = vmatprep.subr.bf16.mxu0 %v3599
    %4156 = vmatpush1.bf16.msra.mxu0 %v3598
    %4157 = vmatprep.mubr.bf16.mxu0 %v2367
    %4158 = vmatmul.mubr.bf16.gmra.mrb[0].mxu0 %v2366
    %v4159 = vpop.f32.mrb[0].mxu0
    %v4160 = vadd.f32 %v4119, %v4159
    %v4161 = vpop.f32.mrb[0].mxu0
    %v4162 = vadd.f32 %v4121, %v4161
    %v4163 = vpop.f32.mrb[0].mxu0
    %v4164 = vpop.f32.mrb[0].mxu0
    %4165 = vdwg.mxu0
    %4166 = vmatprep.subr.bf16.mxu0 %v3601
    %4167 = vmatpush1.bf16.msra.mxu0 %v3600
    %4168 = vmatprep.subr.bf16.mxu0 %v3603
    %4169 = vmatpush1.bf16.msra.mxu0 %v3602
    %4170 = vmatprep.subr.bf16.mxu0 %v3605
    %4171 = vmatpush1.bf16.msra.mxu0 %v3604
    %4172 = vmatprep.subr.bf16.mxu0 %v3607
    %4173 = vmatpush1.bf16.msra.mxu0 %v3606
    %4174 = vmatprep.subr.bf16.mxu0 %v3609
    %4175 = vmatpush1.bf16.msra.mxu0 %v3608
    %4176 = vmatprep.subr.bf16.mxu0 %v3611
    %4177 = vmatpush1.bf16.msra.mxu0 %v3610
    %4178 = vmatprep.subr.bf16.mxu0 %v3613
    %4179 = vmatpush1.bf16.msra.mxu0 %v3612
    %4180 = vmatprep.subr.bf16.mxu0 %v3615
    %4181 = vmatpush1.bf16.msra.mxu0 %v3614
    %4182 = vmatprep.subr.bf16.mxu0 %v3617
    %4183 = vmatpush1.bf16.msra.mxu0 %v3616
    %4184 = vmatprep.subr.bf16.mxu0 %v3619
    %4185 = vmatpush1.bf16.msra.mxu0 %v3618
    %4186 = vmatprep.subr.bf16.mxu0 %v3621
    %4187 = vmatpush1.bf16.msra.mxu0 %v3620
    %4188 = vmatprep.subr.bf16.mxu0 %v3623
    %4189 = vmatpush1.bf16.msra.mxu0 %v3622
    %4190 = vmatprep.subr.bf16.mxu0 %v3625
    %4191 = vmatpush1.bf16.msra.mxu0 %v3624
    %4192 = vmatprep.subr.bf16.mxu0 %v3627
    %4193 = vmatpush1.bf16.msra.mxu0 %v3626
    %4194 = vmatprep.subr.bf16.mxu0 %v3629
    %4195 = vmatpush1.bf16.msra.mxu0 %v3628
    %4196 = vmatprep.subr.bf16.mxu0 %v3631
    %4197 = vmatpush1.bf16.msra.mxu0 %v3630
    %4198 = vmatprep.mubr.bf16.mxu0 %v2369
    %4199 = vmatmul.mubr.bf16.gmra.mrb[0].mxu0 %v2368
    %v4200 = vpop.f32.mrb[0].mxu0
    %v4201 = vadd.f32 %v4160, %v4200
    %v4202 = vpop.f32.mrb[0].mxu0
    %v4203 = vadd.f32 %v4162, %v4202
    %v4204 = vpop.f32.mrb[0].mxu0
    %v4205 = vpop.f32.mrb[0].mxu0
    %4206 = vdwg.mxu0
    %4207 = vmatprep.subr.bf16.mxu0 %v3633
    %4208 = vmatpush1.bf16.msra.mxu0 %v3632
    %4209 = vmatprep.subr.bf16.mxu0 %v3635
    %4210 = vmatpush1.bf16.msra.mxu0 %v3634
    %4211 = vmatprep.subr.bf16.mxu0 %v3637
    %4212 = vmatpush1.bf16.msra.mxu0 %v3636
    %4213 = vmatprep.subr.bf16.mxu0 %v3639
    %4214 = vmatpush1.bf16.msra.mxu0 %v3638
    %4215 = vmatprep.subr.bf16.mxu0 %v3641
    %4216 = vmatpush1.bf16.msra.mxu0 %v3640
    %4217 = vmatprep.subr.bf16.mxu0 %v3643
    %4218 = vmatpush1.bf16.msra.mxu0 %v3642
    %4219 = vmatprep.subr.bf16.mxu0 %v3645
    %4220 = vmatpush1.bf16.msra.mxu0 %v3644
    %4221 = vmatprep.subr.bf16.mxu0 %v3647
    %4222 = vmatpush1.bf16.msra.mxu0 %v3646
    %4223 = vmatprep.subr.bf16.mxu0 %v3649
    %4224 = vmatpush1.bf16.msra.mxu0 %v3648
    %4225 = vmatprep.subr.bf16.mxu0 %v3651
    %4226 = vmatpush1.bf16.msra.mxu0 %v3650
    %4227 = vmatprep.subr.bf16.mxu0 %v3653
    %4228 = vmatpush1.bf16.msra.mxu0 %v3652
    %4229 = vmatprep.subr.bf16.mxu0 %v3655
    %4230 = vmatpush1.bf16.msra.mxu0 %v3654
    %4231 = vmatprep.subr.bf16.mxu0 %v3657
    %4232 = vmatpush1.bf16.msra.mxu0 %v3656
    %4233 = vmatprep.subr.bf16.mxu0 %v3659
    %4234 = vmatpush1.bf16.msra.mxu0 %v3658
    %4235 = vmatprep.subr.bf16.mxu0 %v3661
    %4236 = vmatpush1.bf16.msra.mxu0 %v3660
    %4237 = vmatprep.subr.bf16.mxu0 %v3663
    %4238 = vmatpush1.bf16.msra.mxu0 %v3662
    %4239 = vmatprep.mubr.bf16.mxu0 %v2371
    %4240 = vmatmul.mubr.bf16.gmra.mrb[0].mxu0 %v2370
    %v4241 = vpop.f32.mrb[0].mxu0
    %v4242 = vadd.f32 %v4201, %v4241
    %v4243 = vpop.f32.mrb[0].mxu0
    %v4244 = vadd.f32 %v4203, %v4243
    %v4245 = vpop.f32.mrb[0].mxu0
    %v4246 = vpop.f32.mrb[0].mxu0
    %4247 = vdwg.mxu0
    %v4248 = vmax.f32 %v4242, 0.0
    %v4249 = vmax.f32 %v4244, 0.0
    %v4250 = vpack.c.bf16 %v4248, %v4248
    %v4251 = vpack.c.bf16 %v4249, %v4249
    %v4252 = vld [vmem:[%s6] sm:$0xff]
    %v4253 = vld [vmem:[%s6 + $0x8] sm:$0xff]
    %v4254 = vld [vmem:[%s6 + $0x10] sm:$0xff]
    %v4255 = vld [vmem:[%s6 + $0x18] sm:$0xff]
    %v4256 = vld [vmem:[%s6 + $0x20] sm:$0xff]
    %v4257 = vld [vmem:[%s6 + $0x28] sm:$0xff]
    %v4258 = vld [vmem:[%s6 + $0x30] sm:$0xff]
    %v4259 = vld [vmem:[%s6 + $0x38] sm:$0xff]
    %v4260 = vld [vmem:[%s6 + $0x40] sm:$0xff]
    %v4261 = vld [vmem:[%s6 + $0x48] sm:$0xff]
    %v4262 = vld [vmem:[%s6 + $0x50] sm:$0xff]
    %v4263 = vld [vmem:[%s6 + $0x58] sm:$0xff]
    %v4264 = vld [vmem:[%s6 + $0x60] sm:$0xff]
    %v4265 = vld [vmem:[%s6 + $0x68] sm:$0xff]
    %v4266 = vld [vmem:[%s6 + $0x70] sm:$0xff]
    %v4267 = vld [vmem:[%s6 + $0x78] sm:$0xff]
    %v4268 = vld [vmem:[%s6 + $0x80] sm:$0xff]
    %v4269 = vld [vmem:[%s6 + $0x88] sm:$0xff]
    %v4270 = vld [vmem:[%s6 + $0x90] sm:$0xff]
    %v4271 = vld [vmem:[%s6 + $0x98] sm:$0xff]
    %v4272 = vld [vmem:[%s6 + $0xa0] sm:$0xff]
    %v4273 = vld [vmem:[%s6 + $0xa8] sm:$0xff]
    %v4274 = vld [vmem:[%s6 + $0xb0] sm:$0xff]
    %v4275 = vld [vmem:[%s6 + $0xb8] sm:$0xff]
    %v4276 = vld [vmem:[%s6 + $0xc0] sm:$0xff]
    %v4277 = vld [vmem:[%s6 + $0xc8] sm:$0xff]
    %v4278 = vld [vmem:[%s6 + $0xd0] sm:$0xff]
    %v4279 = vld [vmem:[%s6 + $0xd8] sm:$0xff]
    %v4280 = vld [vmem:[%s6 + $0xe0] sm:$0xff]
    %v4281 = vld [vmem:[%s6 + $0xe8] sm:$0xff]
    %v4282 = vld [vmem:[%s6 + $0xf0] sm:$0xff]
    %v4283 = vld [vmem:[%s6 + $0xf8] sm:$0xff]
    %v4284 = vld [vmem:[%s7] sm:$0x3]
    %v4286 = vlaneseq
    %v4287 = vshrl.u32 %v4286, 7
    %v4288 = vsub.s32 0, %v4287
    %v4289 = vrot.slane %v4284, %v4288
    %v4290 = vlaneseq
    %v4291 = vshrl.u32 %v4290, 7
    %v4292 = vsub.s32 1, %v4291
    %v4293 = vrot.slane %v4284, %v4292
    %v4328 = vunpack.c.l.b16 %v4252
    %v4329 = vunpack.c.h.b16 %v4252
    %v4330 = vunpack.c.l.b16 %v4253
    %v4331 = vunpack.c.h.b16 %v4253
    %v4332 = vunpack.c.l.b16 %v4254
    %v4333 = vunpack.c.h.b16 %v4254
    %v4334 = vunpack.c.l.b16 %v4255
    %v4335 = vunpack.c.h.b16 %v4255
    %v4336 = vunpack.c.l.b16 %v4256
    %v4337 = vunpack.c.h.b16 %v4256
    %v4338 = vunpack.c.l.b16 %v4257
    %v4339 = vunpack.c.h.b16 %v4257
    %v4340 = vunpack.c.l.b16 %v4258
    %v4341 = vunpack.c.h.b16 %v4258
    %v4342 = vunpack.c.l.b16 %v4259
    %v4343 = vunpack.c.h.b16 %v4259
    %v4344 = vunpack.c.l.b16 %v4260
    %v4345 = vunpack.c.h.b16 %v4260
    %v4346 = vunpack.c.l.b16 %v4261
    %v4347 = vunpack.c.h.b16 %v4261
    %v4348 = vunpack.c.l.b16 %v4262
    %v4349 = vunpack.c.h.b16 %v4262
    %v4350 = vunpack.c.l.b16 %v4263
    %v4351 = vunpack.c.h.b16 %v4263
    %v4352 = vunpack.c.l.b16 %v4264
    %v4353 = vunpack.c.h.b16 %v4264
    %v4354 = vunpack.c.l.b16 %v4265
    %v4355 = vunpack.c.h.b16 %v4265
    %v4356 = vunpack.c.l.b16 %v4266
    %v4357 = vunpack.c.h.b16 %v4266
    %v4358 = vunpack.c.l.b16 %v4267
    %v4359 = vunpack.c.h.b16 %v4267
    %v4360 = vunpack.c.l.b16 %v4268
    %v4361 = vunpack.c.h.b16 %v4268
    %v4362 = vunpack.c.l.b16 %v4269
    %v4363 = vunpack.c.h.b16 %v4269
    %v4364 = vunpack.c.l.b16 %v4270
    %v4365 = vunpack.c.h.b16 %v4270
    %v4366 = vunpack.c.l.b16 %v4271
    %v4367 = vunpack.c.h.b16 %v4271
    %v4368 = vunpack.c.l.b16 %v4272
    %v4369 = vunpack.c.h.b16 %v4272
    %v4370 = vunpack.c.l.b16 %v4273
    %v4371 = vunpack.c.h.b16 %v4273
    %v4372 = vunpack.c.l.b16 %v4274
    %v4373 = vunpack.c.h.b16 %v4274
    %v4374 = vunpack.c.l.b16 %v4275
    %v4375 = vunpack.c.h.b16 %v4275
    %v4376 = vunpack.c.l.b16 %v4276
    %v4377 = vunpack.c.h.b16 %v4276
    %v4378 = vunpack.c.l.b16 %v4277
    %v4379 = vunpack.c.h.b16 %v4277
    %v4380 = vunpack.c.l.b16 %v4278
    %v4381 = vunpack.c.h.b16 %v4278
    %v4382 = vunpack.c.l.b16 %v4279
    %v4383 = vunpack.c.h.b16 %v4279
    %v4384 = vunpack.c.l.b16 %v4280
    %v4385 = vunpack.c.h.b16 %v4280
    %v4386 = vunpack.c.l.b16 %v4281
    %v4387 = vunpack.c.h.b16 %v4281
    %v4388 = vunpack.c.l.b16 %v4282
    %v4389 = vunpack.c.h.b16 %v4282
    %v4390 = vunpack.c.l.b16 %v4283
    %v4391 = vunpack.c.h.b16 %v4283
    %v4392 = vpack.c.b16 %v4330, %v4328
    %v4393 = vpack.c.b16 %v4331, %v4329
    %v4394 = vpack.c.b16 %v4334, %v4332
    %v4395 = vpack.c.b16 %v4335, %v4333
    %v4396 = vpack.c.b16 %v4338, %v4336
    %v4397 = vpack.c.b16 %v4339, %v4337
    %v4398 = vpack.c.b16 %v4342, %v4340
    %v4399 = vpack.c.b16 %v4343, %v4341
    %v4400 = vpack.c.b16 %v4346, %v4344
    %v4401 = vpack.c.b16 %v4347, %v4345
    %v4402 = vpack.c.b16 %v4350, %v4348
    %v4403 = vpack.c.b16 %v4351, %v4349
    %v4404 = vpack.c.b16 %v4354, %v4352
    %v4405 = vpack.c.b16 %v4355, %v4353
    %v4406 = vpack.c.b16 %v4358, %v4356
    %v4407 = vpack.c.b16 %v4359, %v4357
    %v4408 = vpack.c.b16 %v4362, %v4360
    %v4409 = vpack.c.b16 %v4363, %v4361
    %v4410 = vpack.c.b16 %v4366, %v4364
    %v4411 = vpack.c.b16 %v4367, %v4365
    %v4412 = vpack.c.b16 %v4370, %v4368
    %v4413 = vpack.c.b16 %v4371, %v4369
    %v4414 = vpack.c.b16 %v4374, %v4372
    %v4415 = vpack.c.b16 %v4375, %v4373
    %v4416 = vpack.c.b16 %v4378, %v4376
    %v4417 = vpack.c.b16 %v4379, %v4377
    %v4418 = vpack.c.b16 %v4382, %v4380
    %v4419 = vpack.c.b16 %v4383, %v4381
    %v4420 = vpack.c.b16 %v4386, %v4384
    %v4421 = vpack.c.b16 %v4387, %v4385
    %v4422 = vpack.c.b16 %v4390, %v4388
    %v4423 = vpack.c.b16 %v4391, %v4389
    %4456 = vmatprep.subr.bf16.mxu0 %v4393
    %4457 = vmatpush1.bf16.msra.mxu0 %v4392
    %4458 = vmatprep.subr.bf16.mxu0 %v4395
    %4459 = vmatpush1.bf16.msra.mxu0 %v4394
    %4460 = vmatprep.subr.bf16.mxu0 %v4397
    %4461 = vmatpush1.bf16.msra.mxu0 %v4396
    %4462 = vmatprep.subr.bf16.mxu0 %v4399
    %4463 = vmatpush1.bf16.msra.mxu0 %v4398
    %4464 = vmatprep.subr.bf16.mxu0 %v4401
    %4465 = vmatpush1.bf16.msra.mxu0 %v4400
    %4466 = vmatprep.subr.bf16.mxu0 %v4403
    %4467 = vmatpush1.bf16.msra.mxu0 %v4402
    %4468 = vmatprep.subr.bf16.mxu0 %v4405
    %4469 = vmatpush1.bf16.msra.mxu0 %v4404
    %4470 = vmatprep.subr.bf16.mxu0 %v4407
    %4471 = vmatpush1.bf16.msra.mxu0 %v4406
    %4472 = vmatprep.subr.bf16.mxu0 %v4409
    %4473 = vmatpush1.bf16.msra.mxu0 %v4408
    %4474 = vmatprep.subr.bf16.mxu0 %v4411
    %4475 = vmatpush1.bf16.msra.mxu0 %v4410
    %4476 = vmatprep.subr.bf16.mxu0 %v4413
    %4477 = vmatpush1.bf16.msra.mxu0 %v4412
    %4478 = vmatprep.subr.bf16.mxu0 %v4415
    %4479 = vmatpush1.bf16.msra.mxu0 %v4414
    %4480 = vmatprep.subr.bf16.mxu0 %v4417
    %4481 = vmatpush1.bf16.msra.mxu0 %v4416
    %4482 = vmatprep.subr.bf16.mxu0 %v4419
    %4483 = vmatpush1.bf16.msra.mxu0 %v4418
    %4484 = vmatprep.subr.bf16.mxu0 %v4421
    %4485 = vmatpush1.bf16.msra.mxu0 %v4420
    %4486 = vmatprep.subr.bf16.mxu0 %v4423
    %4487 = vmatpush1.bf16.msra.mxu0 %v4422
    %4488 = vmatprep.mubr.bf16.mxu0 %v4251
    %4489 = vmatmul.mubr.bf16.gmra.mrb[0].mxu0 %v4250
    %v4490 = vpop.f32.mrb[0].mxu0
    %v4491 = vadd.f32 %v4289, %v4490
    %v4492 = vpop.f32.mrb[0].mxu0
    %v4493 = vadd.f32 %v4293, %v4492
    %v4494 = vpop.f32.mrb[0].mxu0
    %v4495 = vpop.f32.mrb[0].mxu0
    %4496 = vdwg.mxu0
    %v4497 = vmul.f32 %v4491, %v4491
    %v4498 = vmul.f32 %v4493, %v4493
    %vm4499 = vcmask 1043456
    %v4500 = vsel %vm4499, %v4497, 0.0
    %v4501 = vsel %vm4499, %v4498, 0.0
    %v4502 = vadd.f32 %v4500, %v4501
    %4503 = vadd.xlane.f32.xlu0 %v4502
    %v4504 = vpop.xlane.xlu0 %4503
    %v4505 = vrsqrt.pop %v4504
    %v4506 = vmul.f32 %v4504, %v4505
    %vm4507 = vcmp.eq.f32.partialorder %v4504, inf
    %v4508 = vsel %vm4507, %v4504, %v4506
    %vm4509 = vcmp.eq.f32.partialorder %v4504, 0.0
    %v4510 = vand.u32 %v4504, 2147483648
    %v4511 = vsel %vm4509, %v4510, %v4508
    %vm4512 = vcmask 3072
    %4513 = vst.msk [vmem:[%s8] sm:$0xf] %vm4512, %v4511
    // Predicated region
    $region38: #{tfusion_forward.5} parent=1 // pred_check
      _
    $region39: #{tfusion_forward.5} parent=1 // pred_check_branch
      %4515 = sbr.rel (0) target = $region41
    $region40: #{tfusion_forward.5} parent=1 // pred_region
      _
    $region41: #{tfusion_forward.5} parent=1 // pred_fallthru
      _
    // Predicated region
    $region42: #{tfusion_forward.5} parent=1 // pred_check
      _
    $region43: #{tfusion_forward.5} parent=1 // pred_check_branch
      %4517 = sbr.rel (0) target = $region45
    $region44: #{tfusion_forward.5} parent=1 // pred_region
      _
    $region45: #{tfusion_forward.5} parent=1 // pred_fallthru
      _
    %4518 = vsyncpa [#allocation3], 1

</llo_original>
